<compile_context>
chip_gen: v7x
topology: tpu7x:2x2x1
jax: 0.10.0
libtpu: 0.0.40
codegen_flags: <defaults>
</compile_context>

<pallas_src>
import functools

import jax
import jax.numpy as jnp
from jax.experimental import pallas as pl
from jax.experimental.pallas import tpu as pltpu


def basic_block_kernel(x_ref, w1_ref, s1_ref, b1_ref, w2_ref, s2_ref, b2_ref,
                       o_ref, pad1_ref, pad2_ref, col_ref):
    """One B_tile-image block per grid step.

    x_ref  : (B, H, W, C)        unpadded input block
    w1_ref : (9*C, C)            conv1 weight, im2col-flattened (dy, dx, cin)
    w2_ref : (9*C, C)            conv2 weight, im2col-flattened
    s*/b*  : (1, C)              folded BatchNorm scale / bias
    o_ref  : (B, H, W, C)        output block
    pad1/2 : (B, H+2, W+2, C)    VMEM zero-bordered staging for conv1 / conv2
    col_ref: (B*H*W, 9*C)        VMEM im2col slab (reused by both convs)
    """
    B, H, W, C = o_ref.shape
    M = B * H * W
    f32 = jnp.float32

    def zero_borders(pad_ref):
        # Only the 2 border rows + 2 border columns; the interior is fully
        # overwritten below (no full-scratch re-zero pass).
        pad_ref[:, 0:1, :, :] = jnp.zeros((B, 1, W + 2, C), f32)
        pad_ref[:, H + 1:H + 2, :, :] = jnp.zeros((B, 1, W + 2, C), f32)
        pad_ref[:, 1:H + 1, 0:1, :] = jnp.zeros((B, H, 1, C), f32)
        pad_ref[:, 1:H + 1, W + 1:W + 2, :] = jnp.zeros((B, H, 1, C), f32)

    def conv3x3(pad_ref, w_ref):
        # Build the im2col slab once, then a single MXU GEMM with K = 9*C.
        for dy in range(3):
            for dx in range(3):
                k = dy * 3 + dx
                col_ref[:, k * C:(k + 1) * C] = (
                    pad_ref[:, dy:dy + H, dx:dx + W, :].reshape(M, C))
        return jnp.dot(col_ref[...], w_ref[...], preferred_element_type=f32)

    zero_borders(pad1_ref)
    zero_borders(pad2_ref)

    # Stage input into the padded scratch (interior only; borders stay zero).
    pad1_ref[:, 1:H + 1, 1:W + 1, :] = x_ref[...].astype(f32)

    # ---- conv1 -> bn1 (folded) -> relu ----
    acc1 = conv3x3(pad1_ref, w1_ref)
    y1 = jnp.maximum(acc1 * s1_ref[...] + b1_ref[...], 0.0)

    # ---- stage intermediate for conv2 ----
    pad2_ref[:, 1:H + 1, 1:W + 1, :] = y1.reshape(B, H, W, C)

    # ---- conv2 -> bn2 (folded) ----
    acc2 = conv3x3(pad2_ref, w2_ref)
    y2 = acc2 * s2_ref[...] + b2_ref[...]

    # ---- residual add (aligned reuse of the unpadded VMEM input) + relu ----
    identity = x_ref[...].reshape(M, C).astype(f32)
    out = jnp.maximum(y2 + identity, 0.0)
    o_ref[...] = out.reshape(B, H, W, C).astype(o_ref.dtype)


@jax.jit
def basic_block_forward(x, w1, scale1, bias1, w2, scale2, bias2):
    """x: (N, H, W, Cin) NHWC; w*: (3, 3, Cin/Cout, Cout) HWIO. -> (N, H, W, Cout)."""
    N, H, W, Cin = x.shape
    Cout = w1.shape[-1]
    if Cin != Cout:
        raise NotImplementedError(
            "BasicBlock downsample path (Cin != Cout / stride > 1) is not "
            "implemented; identity residual requires Cin == Cout.")

    # Fold batch into the GEMM M dimension: B_tile images per grid step.
    b_tile = 1
    for cand in range(1, min(N, 8) + 1):
        if N % cand == 0:
            b_tile = cand
    grid = (N // b_tile,)

    # Pre-flatten weights to the im2col layout (dy, dx, cin) x cout.
    w1_2d = w1.reshape(9 * Cin, Cout)
    w2_2d = w2.reshape(9 * Cout, Cout)
    s1 = scale1.reshape(1, Cout)
    b1 = bias1.reshape(1, Cout)
    s2 = scale2.reshape(1, Cout)
    b2 = bias2.reshape(1, Cout)

    return pl.pallas_call(
        basic_block_kernel,
        out_shape=jax.ShapeDtypeStruct((N, H, W, Cout), x.dtype),
        grid_spec=pltpu.PrefetchScalarGridSpec(
            num_scalar_prefetch=0,
            grid=grid,
            in_specs=[
                pl.BlockSpec((b_tile, H, W, Cin), lambda n: (n, 0, 0, 0)),
                pl.BlockSpec((9 * Cin, Cout), lambda n: (0, 0)),
                pl.BlockSpec((1, Cout), lambda n: (0, 0)),
                pl.BlockSpec((1, Cout), lambda n: (0, 0)),
                pl.BlockSpec((9 * Cout, Cout), lambda n: (0, 0)),
                pl.BlockSpec((1, Cout), lambda n: (0, 0)),
                pl.BlockSpec((1, Cout), lambda n: (0, 0)),
            ],
            out_specs=pl.BlockSpec((b_tile, H, W, Cout),
                                   lambda n: (n, 0, 0, 0)),
            scratch_shapes=[
                pltpu.VMEM((b_tile, H + 2, W + 2, Cin), jnp.float32),
                pltpu.VMEM((b_tile, H + 2, W + 2, Cout), jnp.float32),
                pltpu.VMEM((b_tile * H * W, 9 * Cout), jnp.float32),
            ],
        ),
        compiler_params=pltpu.CompilerParams(
            dimension_semantics=("parallel",)),
    )(x, w1_2d, s1, b1, w2_2d, s2, b2)


def reference_forward(x, w1, scale1, bias1, w2, scale2, bias2):
    """Pure-JAX reference (NHWC / HWIO)."""
    dn = jax.lax.conv_dimension_numbers(x.shape, w1.shape,
                                        ('NHWC', 'HWIO', 'NHWC'))
    y = jax.lax.conv_general_dilated(x, w1, (1, 1), 'SAME',
                                     dimension_numbers=dn)
    y = y * scale1.reshape(1, 1, 1, -1) + bias1.reshape(1, 1, 1, -1)
    y = jnp.maximum(y, 0.0)
    dn2 = jax.lax.conv_dimension_numbers(y.shape, w2.shape,
                                         ('NHWC', 'HWIO', 'NHWC'))
    z = jax.lax.conv_general_dilated(y, w2, (1, 1), 'SAME',
                                     dimension_numbers=dn2)
    z = z * scale2.reshape(1, 1, 1, -1) + bias2.reshape(1, 1, 1, -1)
    return jnp.maximum(z + x, 0.0)


if __name__ == "__main__":
    N, H, W = 2, 16, 16
    Cin = Cout = 4        # stride=1, in_channels == out_channels -> no downsample
    eps = 1e-5

    key = jax.random.PRNGKey(0)
    keys = jax.random.split(key, 11)

    x = jax.random.normal(keys[0], (N, H, W, Cin), jnp.float32)

    # conv weights (HWIO), no bias (matches bias=False)
    w1 = jax.random.normal(keys[1], (3, 3, Cin, Cout), jnp.float32) * 0.1
    w2 = jax.random.normal(keys[2], (3, 3, Cout, Cout), jnp.float32) * 0.1

    # BatchNorm (eval mode) parameters, folded into scale/bias
    gamma1 = jax.random.uniform(keys[3], (Cout,), minval=0.5, maxval=1.5)
    beta1 = jax.random.normal(keys[4], (Cout,)) * 0.1
    rmean1 = jax.random.normal(keys[5], (Cout,)) * 0.1
    rvar1 = jax.random.uniform(keys[6], (Cout,), minval=0.5, maxval=1.5)
    gamma2 = jax.random.uniform(keys[7], (Cout,), minval=0.5, maxval=1.5)
    beta2 = jax.random.normal(keys[8], (Cout,)) * 0.1
    rmean2 = jax.random.normal(keys[9], (Cout,)) * 0.1
    rvar2 = jax.random.uniform(keys[10], (Cout,), minval=0.5, maxval=1.5)

    scale1 = gamma1 / jnp.sqrt(rvar1 + eps)
    bias1 = beta1 - rmean1 * scale1
    scale2 = gamma2 / jnp.sqrt(rvar2 + eps)
    bias2 = beta2 - rmean2 * scale2

    out = basic_block_forward(x, w1, scale1, bias1, w2, scale2, bias2)
    out = jax.block_until_ready(out)

    ref = reference_forward(x, w1, scale1, bias1, w2, scale2, bias2)
    assert out.shape == (N, H, W, Cout)
    assert jnp.allclose(out, ref, atol=1e-4, rtol=1e-4), \
        f"max err {jnp.max(jnp.abs(out - ref))}"

    print("KERNEL_OK")
</pallas_src>

<mosaic_0001>
module attributes {stable_mosaic.version = 11 : i64} {
  func.func @basic_block_kernel(%arg0: i32, %arg1: memref<2x16x16x4xf32, #tpu.memory_space<vmem>>, %arg2: memref<36x4xf32, #tpu.memory_space<vmem>>, %arg3: memref<1x4xf32, #tpu.memory_space<vmem>>, %arg4: memref<1x4xf32, #tpu.memory_space<vmem>>, %arg5: memref<36x4xf32, #tpu.memory_space<vmem>>, %arg6: memref<1x4xf32, #tpu.memory_space<vmem>>, %arg7: memref<1x4xf32, #tpu.memory_space<vmem>>, %arg8: memref<2x16x16x4xf32, #tpu.memory_space<vmem>>, %arg9: memref<2x18x18x4xf32, #tpu.memory_space<vmem>>, %arg10: memref<2x18x18x4xf32, #tpu.memory_space<vmem>>, %arg11: memref<512x36xf32, #tpu.memory_space<vmem>>) attributes {dimension_semantics = [#tpu.dimension_semantics<parallel>], iteration_bounds = array<i64: 1>, scalar_prefetch = 0 : i64, scratch_operands = 3 : i64, tpu.core_type = #tpu.core_type<tc>, window_params = [{transform_indices = @transform_0, window_bounds = array<i64: 2, 16, 16, 4>}, {pipeline_mode = #tpu.pipeline_mode<synchronous>, transform_indices = @transform_1, window_bounds = array<i64: 36, 4>}, {pipeline_mode = #tpu.pipeline_mode<synchronous>, transform_indices = @transform_2, window_bounds = array<i64: 1, 4>}, {pipeline_mode = #tpu.pipeline_mode<synchronous>, transform_indices = @transform_3, window_bounds = array<i64: 1, 4>}, {pipeline_mode = #tpu.pipeline_mode<synchronous>, transform_indices = @transform_4, window_bounds = array<i64: 36, 4>}, {pipeline_mode = #tpu.pipeline_mode<synchronous>, transform_indices = @transform_5, window_bounds = array<i64: 1, 4>}, {pipeline_mode = #tpu.pipeline_mode<synchronous>, transform_indices = @transform_6, window_bounds = array<i64: 1, 4>}, {transform_indices = @transform_7, window_bounds = array<i64: 2, 16, 16, 4>}]} {
    %cst = arith.constant 0.000000e+00 : f32
    %0 = vector.broadcast %cst : f32 to vector<2x1x18x4xf32>
    %c0 = arith.constant 0 : index
    %c0_0 = arith.constant 0 : index
    %c0_1 = arith.constant 0 : index
    %c0_2 = arith.constant 0 : index
    %1 = vector.load %arg9[%c0, %c0_0, %c0_1, %c0_2] : memref<2x18x18x4xf32, #tpu.memory_space<vmem>>, vector<2x1x18x4xf32>
    tpu.vector_store %arg9[%c0, %c0_0, %c0_1, %c0_2], %0 {strides = array<i32>} : memref<2x18x18x4xf32, #tpu.memory_space<vmem>>, vector<2x1x18x4xf32>,
    %cst_3 = arith.constant 0.000000e+00 : f32
    %2 = vector.broadcast %cst_3 : f32 to vector<2x1x18x4xf32>
    %c0_4 = arith.constant 0 : index
    %c17 = arith.constant 17 : index
    %c0_5 = arith.constant 0 : index
    %c0_6 = arith.constant 0 : index
    %3 = vector.load %arg9[%c0_4, %c17, %c0_5, %c0_6] : memref<2x18x18x4xf32, #tpu.memory_space<vmem>>, vector<2x1x18x4xf32>
    tpu.vector_store %arg9[%c0_4, %c17, %c0_5, %c0_6], %2 {strides = array<i32>} : memref<2x18x18x4xf32, #tpu.memory_space<vmem>>, vector<2x1x18x4xf32>,
    %cst_7 = arith.constant 0.000000e+00 : f32
    %4 = vector.broadcast %cst_7 : f32 to vector<2x16x1x4xf32>
    %c0_8 = arith.constant 0 : index
    %c1 = arith.constant 1 : index
    %c0_9 = arith.constant 0 : index
    %c0_10 = arith.constant 0 : index
    %5 = vector.load %arg9[%c0_8, %c1, %c0_9, %c0_10] : memref<2x18x18x4xf32, #tpu.memory_space<vmem>>, vector<2x16x1x4xf32>
    tpu.vector_store %arg9[%c0_8, %c1, %c0_9, %c0_10], %4 {strides = array<i32>} : memref<2x18x18x4xf32, #tpu.memory_space<vmem>>, vector<2x16x1x4xf32>,
    %cst_11 = arith.constant 0.000000e+00 : f32
    %6 = vector.broadcast %cst_11 : f32 to vector<2x16x1x4xf32>
    %c0_12 = arith.constant 0 : index
    %c1_13 = arith.constant 1 : index
    %c17_14 = arith.constant 17 : index
    %c0_15 = arith.constant 0 : index
    %7 = vector.load %arg9[%c0_12, %c1_13, %c17_14, %c0_15] : memref<2x18x18x4xf32, #tpu.memory_space<vmem>>, vector<2x16x1x4xf32>
    tpu.vector_store %arg9[%c0_12, %c1_13, %c17_14, %c0_15], %6 {strides = array<i32>} : memref<2x18x18x4xf32, #tpu.memory_space<vmem>>, vector<2x16x1x4xf32>,
    %cst_16 = arith.constant 0.000000e+00 : f32
    %8 = vector.broadcast %cst_16 : f32 to vector<2x1x18x4xf32>
    %c0_17 = arith.constant 0 : index
    %c0_18 = arith.constant 0 : index
    %c0_19 = arith.constant 0 : index
    %c0_20 = arith.constant 0 : index
    %9 = vector.load %arg10[%c0_17, %c0_18, %c0_19, %c0_20] : memref<2x18x18x4xf32, #tpu.memory_space<vmem>>, vector<2x1x18x4xf32>
    tpu.vector_store %arg10[%c0_17, %c0_18, %c0_19, %c0_20], %8 {strides = array<i32>} : memref<2x18x18x4xf32, #tpu.memory_space<vmem>>, vector<2x1x18x4xf32>,
    %cst_21 = arith.constant 0.000000e+00 : f32
    %10 = vector.broadcast %cst_21 : f32 to vector<2x1x18x4xf32>
    %c0_22 = arith.constant 0 : index
    %c17_23 = arith.constant 17 : index
    %c0_24 = arith.constant 0 : index
    %c0_25 = arith.constant 0 : index
    %11 = vector.load %arg10[%c0_22, %c17_23, %c0_24, %c0_25] : memref<2x18x18x4xf32, #tpu.memory_space<vmem>>, vector<2x1x18x4xf32>
    tpu.vector_store %arg10[%c0_22, %c17_23, %c0_24, %c0_25], %10 {strides = array<i32>} : memref<2x18x18x4xf32, #tpu.memory_space<vmem>>, vector<2x1x18x4xf32>,
    %cst_26 = arith.constant 0.000000e+00 : f32
    %12 = vector.broadcast %cst_26 : f32 to vector<2x16x1x4xf32>
    %c0_27 = arith.constant 0 : index
    %c1_28 = arith.constant 1 : index
    %c0_29 = arith.constant 0 : index
    %c0_30 = arith.constant 0 : index
    %13 = vector.load %arg10[%c0_27, %c1_28, %c0_29, %c0_30] : memref<2x18x18x4xf32, #tpu.memory_space<vmem>>, vector<2x16x1x4xf32>
    tpu.vector_store %arg10[%c0_27, %c1_28, %c0_29, %c0_30], %12 {strides = array<i32>} : memref<2x18x18x4xf32, #tpu.memory_space<vmem>>, vector<2x16x1x4xf32>,
    %cst_31 = arith.constant 0.000000e+00 : f32
    %14 = vector.broadcast %cst_31 : f32 to vector<2x16x1x4xf32>
    %c0_32 = arith.constant 0 : index
    %c1_33 = arith.constant 1 : index
    %c17_34 = arith.constant 17 : index
    %c0_35 = arith.constant 0 : index
    %15 = vector.load %arg10[%c0_32, %c1_33, %c17_34, %c0_35] : memref<2x18x18x4xf32, #tpu.memory_space<vmem>>, vector<2x16x1x4xf32>
    tpu.vector_store %arg10[%c0_32, %c1_33, %c17_34, %c0_35], %14 {strides = array<i32>} : memref<2x18x18x4xf32, #tpu.memory_space<vmem>>, vector<2x16x1x4xf32>,
    %c0_36 = arith.constant 0 : index
    %c0_37 = arith.constant 0 : index
    %c0_38 = arith.constant 0 : index
    %c0_39 = arith.constant 0 : index
    %16 = vector.load %arg1[%c0_36, %c0_37, %c0_38, %c0_39] : memref<2x16x16x4xf32, #tpu.memory_space<vmem>>, vector<2x16x16x4xf32>
    %c0_40 = arith.constant 0 : index
    %c1_41 = arith.constant 1 : index
    %c1_42 = arith.constant 1 : index
    %c0_43 = arith.constant 0 : index
    %17 = vector.load %arg9[%c0_40, %c1_41, %c1_42, %c0_43] : memref<2x18x18x4xf32, #tpu.memory_space<vmem>>, vector<2x16x16x4xf32>
    tpu.vector_store %arg9[%c0_40, %c1_41, %c1_42, %c0_43], %16 {strides = array<i32>} : memref<2x18x18x4xf32, #tpu.memory_space<vmem>>, vector<2x16x16x4xf32>,
    %c0_44 = arith.constant 0 : index
    %c0_45 = arith.constant 0 : index
    %c0_46 = arith.constant 0 : index
    %c0_47 = arith.constant 0 : index
    %18 = vector.load %arg9[%c0_44, %c0_45, %c0_46, %c0_47] : memref<2x18x18x4xf32, #tpu.memory_space<vmem>>, vector<2x16x16x4xf32>
    %19 = vector.shape_cast %18 : vector<2x16x16x4xf32> to vector<512x4xf32>
    %c0_48 = arith.constant 0 : index
    %c0_49 = arith.constant 0 : index
    %20 = vector.load %arg11[%c0_48, %c0_49] : memref<512x36xf32, #tpu.memory_space<vmem>>, vector<512x4xf32>
    tpu.vector_store %arg11[%c0_48, %c0_49], %19 {strides = array<i32>} : memref<512x36xf32, #tpu.memory_space<vmem>>, vector<512x4xf32>,
    %c0_50 = arith.constant 0 : index
    %c0_51 = arith.constant 0 : index
    %c1_52 = arith.constant 1 : index
    %c0_53 = arith.constant 0 : index
    %21 = vector.load %arg9[%c0_50, %c0_51, %c1_52, %c0_53] : memref<2x18x18x4xf32, #tpu.memory_space<vmem>>, vector<2x16x16x4xf32>
    %22 = vector.shape_cast %21 : vector<2x16x16x4xf32> to vector<512x4xf32>
    %c0_54 = arith.constant 0 : index
    %c4 = arith.constant 4 : index
    %23 = vector.load %arg11[%c0_54, %c4] : memref<512x36xf32, #tpu.memory_space<vmem>>, vector<512x4xf32>
    tpu.vector_store %arg11[%c0_54, %c4], %22 {strides = array<i32>} : memref<512x36xf32, #tpu.memory_space<vmem>>, vector<512x4xf32>,
    %c0_55 = arith.constant 0 : index
    %c0_56 = arith.constant 0 : index
    %c2 = arith.constant 2 : index
    %c0_57 = arith.constant 0 : index
    %24 = vector.load %arg9[%c0_55, %c0_56, %c2, %c0_57] : memref<2x18x18x4xf32, #tpu.memory_space<vmem>>, vector<2x16x16x4xf32>
    %25 = vector.shape_cast %24 : vector<2x16x16x4xf32> to vector<512x4xf32>
    %c0_58 = arith.constant 0 : index
    %c8 = arith.constant 8 : index
    %26 = vector.load %arg11[%c0_58, %c8] : memref<512x36xf32, #tpu.memory_space<vmem>>, vector<512x4xf32>
    tpu.vector_store %arg11[%c0_58, %c8], %25 {strides = array<i32>} : memref<512x36xf32, #tpu.memory_space<vmem>>, vector<512x4xf32>,
    %c0_59 = arith.constant 0 : index
    %c1_60 = arith.constant 1 : index
    %c0_61 = arith.constant 0 : index
    %c0_62 = arith.constant 0 : index
    %27 = vector.load %arg9[%c0_59, %c1_60, %c0_61, %c0_62] : memref<2x18x18x4xf32, #tpu.memory_space<vmem>>, vector<2x16x16x4xf32>
    %28 = vector.shape_cast %27 : vector<2x16x16x4xf32> to vector<512x4xf32>
    %c0_63 = arith.constant 0 : index
    %c12 = arith.constant 12 : index
    %29 = vector.load %arg11[%c0_63, %c12] : memref<512x36xf32, #tpu.memory_space<vmem>>, vector<512x4xf32>
    tpu.vector_store %arg11[%c0_63, %c12], %28 {strides = array<i32>} : memref<512x36xf32, #tpu.memory_space<vmem>>, vector<512x4xf32>,
    %c0_64 = arith.constant 0 : index
    %c1_65 = arith.constant 1 : index
    %c1_66 = arith.constant 1 : index
    %c0_67 = arith.constant 0 : index
    %30 = vector.load %arg9[%c0_64, %c1_65, %c1_66, %c0_67] : memref<2x18x18x4xf32, #tpu.memory_space<vmem>>, vector<2x16x16x4xf32>
    %31 = vector.shape_cast %30 : vector<2x16x16x4xf32> to vector<512x4xf32>
    %c0_68 = arith.constant 0 : index
    %c16 = arith.constant 16 : index
    %32 = vector.load %arg11[%c0_68, %c16] : memref<512x36xf32, #tpu.memory_space<vmem>>, vector<512x4xf32>
    tpu.vector_store %arg11[%c0_68, %c16], %31 {strides = array<i32>} : memref<512x36xf32, #tpu.memory_space<vmem>>, vector<512x4xf32>,
    %c0_69 = arith.constant 0 : index
    %c1_70 = arith.constant 1 : index
    %c2_71 = arith.constant 2 : index
    %c0_72 = arith.constant 0 : index
    %33 = vector.load %arg9[%c0_69, %c1_70, %c2_71, %c0_72] : memref<2x18x18x4xf32, #tpu.memory_space<vmem>>, vector<2x16x16x4xf32>
    %34 = vector.shape_cast %33 : vector<2x16x16x4xf32> to vector<512x4xf32>
    %c0_73 = arith.constant 0 : index
    %c20 = arith.constant 20 : index
    %35 = vector.load %arg11[%c0_73, %c20] : memref<512x36xf32, #tpu.memory_space<vmem>>, vector<512x4xf32>
    tpu.vector_store %arg11[%c0_73, %c20], %34 {strides = array<i32>} : memref<512x36xf32, #tpu.memory_space<vmem>>, vector<512x4xf32>,
    %c0_74 = arith.constant 0 : index
    %c2_75 = arith.constant 2 : index
    %c0_76 = arith.constant 0 : index
    %c0_77 = arith.constant 0 : index
    %36 = vector.load %arg9[%c0_74, %c2_75, %c0_76, %c0_77] : memref<2x18x18x4xf32, #tpu.memory_space<vmem>>, vector<2x16x16x4xf32>
    %37 = vector.shape_cast %36 : vector<2x16x16x4xf32> to vector<512x4xf32>
    %c0_78 = arith.constant 0 : index
    %c24 = arith.constant 24 : index
    %38 = vector.load %arg11[%c0_78, %c24] : memref<512x36xf32, #tpu.memory_space<vmem>>, vector<512x4xf32>
    tpu.vector_store %arg11[%c0_78, %c24], %37 {strides = array<i32>} : memref<512x36xf32, #tpu.memory_space<vmem>>, vector<512x4xf32>,
    %c0_79 = arith.constant 0 : index
    %c2_80 = arith.constant 2 : index
    %c1_81 = arith.constant 1 : index
    %c0_82 = arith.constant 0 : index
    %39 = vector.load %arg9[%c0_79, %c2_80, %c1_81, %c0_82] : memref<2x18x18x4xf32, #tpu.memory_space<vmem>>, vector<2x16x16x4xf32>
    %40 = vector.shape_cast %39 : vector<2x16x16x4xf32> to vector<512x4xf32>
    %c0_83 = arith.constant 0 : index
    %c28 = arith.constant 28 : index
    %41 = vector.load %arg11[%c0_83, %c28] : memref<512x36xf32, #tpu.memory_space<vmem>>, vector<512x4xf32>
    tpu.vector_store %arg11[%c0_83, %c28], %40 {strides = array<i32>} : memref<512x36xf32, #tpu.memory_space<vmem>>, vector<512x4xf32>,
    %c0_84 = arith.constant 0 : index
    %c2_85 = arith.constant 2 : index
    %c2_86 = arith.constant 2 : index
    %c0_87 = arith.constant 0 : index
    %42 = vector.load %arg9[%c0_84, %c2_85, %c2_86, %c0_87] : memref<2x18x18x4xf32, #tpu.memory_space<vmem>>, vector<2x16x16x4xf32>
    %43 = vector.shape_cast %42 : vector<2x16x16x4xf32> to vector<512x4xf32>
    %c0_88 = arith.constant 0 : index
    %c32 = arith.constant 32 : index
    %44 = vector.load %arg11[%c0_88, %c32] : memref<512x36xf32, #tpu.memory_space<vmem>>, vector<512x4xf32>
    tpu.vector_store %arg11[%c0_88, %c32], %43 {strides = array<i32>} : memref<512x36xf32, #tpu.memory_space<vmem>>, vector<512x4xf32>,
    %c0_89 = arith.constant 0 : index
    %c0_90 = arith.constant 0 : index
    %45 = vector.load %arg11[%c0_89, %c0_90] : memref<512x36xf32, #tpu.memory_space<vmem>>, vector<512x36xf32>
    %c0_91 = arith.constant 0 : index
    %c0_92 = arith.constant 0 : index
    %46 = vector.load %arg2[%c0_91, %c0_92] : memref<36x4xf32, #tpu.memory_space<vmem>>, vector<36x4xf32>
    %cst_93 = arith.constant dense<0.000000e+00> : vector<512x4xf32>
    %47 = tpu.matmul %45, %46, %cst_93 {dimension_numbers = #tpu.dot_dimension_numbers<[1], [0], [0], [1], [0, 0, 1, 1], [], []>} : vector<512x36xf32>, vector<36x4xf32>, vector<512x4xf32> -> vector<512x4xf32>
    %c0_94 = arith.constant 0 : index
    %c0_95 = arith.constant 0 : index
    %48 = vector.load %arg3[%c0_94, %c0_95] : memref<1x4xf32, #tpu.memory_space<vmem>>, vector<1x4xf32>
    %49 = vector.broadcast %48 : vector<1x4xf32> to vector<512x4xf32>
    %50 = arith.mulf %47, %49 : vector<512x4xf32>
    %c0_96 = arith.constant 0 : index
    %c0_97 = arith.constant 0 : index
    %51 = vector.load %arg4[%c0_96, %c0_97] : memref<1x4xf32, #tpu.memory_space<vmem>>, vector<1x4xf32>
    %52 = vector.broadcast %51 : vector<1x4xf32> to vector<512x4xf32>
    %53 = arith.addf %50, %52 : vector<512x4xf32>
    %cst_98 = arith.constant 0.000000e+00 : f32
    %54 = vector.broadcast %cst_98 : f32 to vector<512x4xf32>
    %55 = arith.maximumf %53, %54 : vector<512x4xf32>
    %56 = vector.shape_cast %55 : vector<512x4xf32> to vector<2x16x16x4xf32>
    %c0_99 = arith.constant 0 : index
    %c1_100 = arith.constant 1 : index
    %c1_101 = arith.constant 1 : index
    %c0_102 = arith.constant 0 : index
    %57 = vector.load %arg10[%c0_99, %c1_100, %c1_101, %c0_102] : memref<2x18x18x4xf32, #tpu.memory_space<vmem>>, vector<2x16x16x4xf32>
    tpu.vector_store %arg10[%c0_99, %c1_100, %c1_101, %c0_102], %56 {strides = array<i32>} : memref<2x18x18x4xf32, #tpu.memory_space<vmem>>, vector<2x16x16x4xf32>,
    %c0_103 = arith.constant 0 : index
    %c0_104 = arith.constant 0 : index
    %c0_105 = arith.constant 0 : index
    %c0_106 = arith.constant 0 : index
    %58 = vector.load %arg10[%c0_103, %c0_104, %c0_105, %c0_106] : memref<2x18x18x4xf32, #tpu.memory_space<vmem>>, vector<2x16x16x4xf32>
    %59 = vector.shape_cast %58 : vector<2x16x16x4xf32> to vector<512x4xf32>
    %c0_107 = arith.constant 0 : index
    %c0_108 = arith.constant 0 : index
    %60 = vector.load %arg11[%c0_107, %c0_108] : memref<512x36xf32, #tpu.memory_space<vmem>>, vector<512x4xf32>
    tpu.vector_store %arg11[%c0_107, %c0_108], %59 {strides = array<i32>} : memref<512x36xf32, #tpu.memory_space<vmem>>, vector<512x4xf32>,
    %c0_109 = arith.constant 0 : index
    %c0_110 = arith.constant 0 : index
    %c1_111 = arith.constant 1 : index
    %c0_112 = arith.constant 0 : index
    %61 = vector.load %arg10[%c0_109, %c0_110, %c1_111, %c0_112] : memref<2x18x18x4xf32, #tpu.memory_space<vmem>>, vector<2x16x16x4xf32>
    %62 = vector.shape_cast %61 : vector<2x16x16x4xf32> to vector<512x4xf32>
    %c0_113 = arith.constant 0 : index
    %c4_114 = arith.constant 4 : index
    %63 = vector.load %arg11[%c0_113, %c4_114] : memref<512x36xf32, #tpu.memory_space<vmem>>, vector<512x4xf32>
    tpu.vector_store %arg11[%c0_113, %c4_114], %62 {strides = array<i32>} : memref<512x36xf32, #tpu.memory_space<vmem>>, vector<512x4xf32>,
    %c0_115 = arith.constant 0 : index
    %c0_116 = arith.constant 0 : index
    %c2_117 = arith.constant 2 : index
    %c0_118 = arith.constant 0 : index
    %64 = vector.load %arg10[%c0_115, %c0_116, %c2_117, %c0_118] : memref<2x18x18x4xf32, #tpu.memory_space<vmem>>, vector<2x16x16x4xf32>
    %65 = vector.shape_cast %64 : vector<2x16x16x4xf32> to vector<512x4xf32>
    %c0_119 = arith.constant 0 : index
    %c8_120 = arith.constant 8 : index
    %66 = vector.load %arg11[%c0_119, %c8_120] : memref<512x36xf32, #tpu.memory_space<vmem>>, vector<512x4xf32>
    tpu.vector_store %arg11[%c0_119, %c8_120], %65 {strides = array<i32>} : memref<512x36xf32, #tpu.memory_space<vmem>>, vector<512x4xf32>,
    %c0_121 = arith.constant 0 : index
    %c1_122 = arith.constant 1 : index
    %c0_123 = arith.constant 0 : index
    %c0_124 = arith.constant 0 : index
    %67 = vector.load %arg10[%c0_121, %c1_122, %c0_123, %c0_124] : memref<2x18x18x4xf32, #tpu.memory_space<vmem>>, vector<2x16x16x4xf32>
    %68 = vector.shape_cast %67 : vector<2x16x16x4xf32> to vector<512x4xf32>
    %c0_125 = arith.constant 0 : index
    %c12_126 = arith.constant 12 : index
    %69 = vector.load %arg11[%c0_125, %c12_126] : memref<512x36xf32, #tpu.memory_space<vmem>>, vector<512x4xf32>
    tpu.vector_store %arg11[%c0_125, %c12_126], %68 {strides = array<i32>} : memref<512x36xf32, #tpu.memory_space<vmem>>, vector<512x4xf32>,
    %c0_127 = arith.constant 0 : index
    %c1_128 = arith.constant 1 : index
    %c1_129 = arith.constant 1 : index
    %c0_130 = arith.constant 0 : index
    %70 = vector.load %arg10[%c0_127, %c1_128, %c1_129, %c0_130] : memref<2x18x18x4xf32, #tpu.memory_space<vmem>>, vector<2x16x16x4xf32>
    %71 = vector.shape_cast %70 : vector<2x16x16x4xf32> to vector<512x4xf32>
    %c0_131 = arith.constant 0 : index
    %c16_132 = arith.constant 16 : index
    %72 = vector.load %arg11[%c0_131, %c16_132] : memref<512x36xf32, #tpu.memory_space<vmem>>, vector<512x4xf32>
    tpu.vector_store %arg11[%c0_131, %c16_132], %71 {strides = array<i32>} : memref<512x36xf32, #tpu.memory_space<vmem>>, vector<512x4xf32>,
    %c0_133 = arith.constant 0 : index
    %c1_134 = arith.constant 1 : index
    %c2_135 = arith.constant 2 : index
    %c0_136 = arith.constant 0 : index
    %73 = vector.load %arg10[%c0_133, %c1_134, %c2_135, %c0_136] : memref<2x18x18x4xf32, #tpu.memory_space<vmem>>, vector<2x16x16x4xf32>
    %74 = vector.shape_cast %73 : vector<2x16x16x4xf32> to vector<512x4xf32>
    %c0_137 = arith.constant 0 : index
    %c20_138 = arith.constant 20 : index
    %75 = vector.load %arg11[%c0_137, %c20_138] : memref<512x36xf32, #tpu.memory_space<vmem>>, vector<512x4xf32>
    tpu.vector_store %arg11[%c0_137, %c20_138], %74 {strides = array<i32>} : memref<512x36xf32, #tpu.memory_space<vmem>>, vector<512x4xf32>,
    %c0_139 = arith.constant 0 : index
    %c2_140 = arith.constant 2 : index
    %c0_141 = arith.constant 0 : index
    %c0_142 = arith.constant 0 : index
    %76 = vector.load %arg10[%c0_139, %c2_140, %c0_141, %c0_142] : memref<2x18x18x4xf32, #tpu.memory_space<vmem>>, vector<2x16x16x4xf32>
    %77 = vector.shape_cast %76 : vector<2x16x16x4xf32> to vector<512x4xf32>
    %c0_143 = arith.constant 0 : index
    %c24_144 = arith.constant 24 : index
    %78 = vector.load %arg11[%c0_143, %c24_144] : memref<512x36xf32, #tpu.memory_space<vmem>>, vector<512x4xf32>
    tpu.vector_store %arg11[%c0_143, %c24_144], %77 {strides = array<i32>} : memref<512x36xf32, #tpu.memory_space<vmem>>, vector<512x4xf32>,
    %c0_145 = arith.constant 0 : index
    %c2_146 = arith.constant 2 : index
    %c1_147 = arith.constant 1 : index
    %c0_148 = arith.constant 0 : index
    %79 = vector.load %arg10[%c0_145, %c2_146, %c1_147, %c0_148] : memref<2x18x18x4xf32, #tpu.memory_space<vmem>>, vector<2x16x16x4xf32>
    %80 = vector.shape_cast %79 : vector<2x16x16x4xf32> to vector<512x4xf32>
    %c0_149 = arith.constant 0 : index
    %c28_150 = arith.constant 28 : index
    %81 = vector.load %arg11[%c0_149, %c28_150] : memref<512x36xf32, #tpu.memory_space<vmem>>, vector<512x4xf32>
    tpu.vector_store %arg11[%c0_149, %c28_150], %80 {strides = array<i32>} : memref<512x36xf32, #tpu.memory_space<vmem>>, vector<512x4xf32>,
    %c0_151 = arith.constant 0 : index
    %c2_152 = arith.constant 2 : index
    %c2_153 = arith.constant 2 : index
    %c0_154 = arith.constant 0 : index
    %82 = vector.load %arg10[%c0_151, %c2_152, %c2_153, %c0_154] : memref<2x18x18x4xf32, #tpu.memory_space<vmem>>, vector<2x16x16x4xf32>
    %83 = vector.shape_cast %82 : vector<2x16x16x4xf32> to vector<512x4xf32>
    %c0_155 = arith.constant 0 : index
    %c32_156 = arith.constant 32 : index
    %84 = vector.load %arg11[%c0_155, %c32_156] : memref<512x36xf32, #tpu.memory_space<vmem>>, vector<512x4xf32>
    tpu.vector_store %arg11[%c0_155, %c32_156], %83 {strides = array<i32>} : memref<512x36xf32, #tpu.memory_space<vmem>>, vector<512x4xf32>,
    %c0_157 = arith.constant 0 : index
    %c0_158 = arith.constant 0 : index
    %85 = vector.load %arg11[%c0_157, %c0_158] : memref<512x36xf32, #tpu.memory_space<vmem>>, vector<512x36xf32>
    %c0_159 = arith.constant 0 : index
    %c0_160 = arith.constant 0 : index
    %86 = vector.load %arg5[%c0_159, %c0_160] : memref<36x4xf32, #tpu.memory_space<vmem>>, vector<36x4xf32>
    %cst_161 = arith.constant dense<0.000000e+00> : vector<512x4xf32>
    %87 = tpu.matmul %85, %86, %cst_161 {dimension_numbers = #tpu.dot_dimension_numbers<[1], [0], [0], [1], [0, 0, 1, 1], [], []>} : vector<512x36xf32>, vector<36x4xf32>, vector<512x4xf32> -> vector<512x4xf32>
    %c0_162 = arith.constant 0 : index
    %c0_163 = arith.constant 0 : index
    %88 = vector.load %arg6[%c0_162, %c0_163] : memref<1x4xf32, #tpu.memory_space<vmem>>, vector<1x4xf32>
    %89 = vector.broadcast %88 : vector<1x4xf32> to vector<512x4xf32>
    %90 = arith.mulf %87, %89 : vector<512x4xf32>
    %c0_164 = arith.constant 0 : index
    %c0_165 = arith.constant 0 : index
    %91 = vector.load %arg7[%c0_164, %c0_165] : memref<1x4xf32, #tpu.memory_space<vmem>>, vector<1x4xf32>
    %92 = vector.broadcast %91 : vector<1x4xf32> to vector<512x4xf32>
    %93 = arith.addf %90, %92 : vector<512x4xf32>
    %c0_166 = arith.constant 0 : index
    %c0_167 = arith.constant 0 : index
    %c0_168 = arith.constant 0 : index
    %c0_169 = arith.constant 0 : index
    %94 = vector.load %arg1[%c0_166, %c0_167, %c0_168, %c0_169] : memref<2x16x16x4xf32, #tpu.memory_space<vmem>>, vector<2x16x16x4xf32>
    %95 = vector.shape_cast %94 : vector<2x16x16x4xf32> to vector<512x4xf32>
    %96 = arith.addf %93, %95 : vector<512x4xf32>
    %cst_170 = arith.constant 0.000000e+00 : f32
    %97 = vector.broadcast %cst_170 : f32 to vector<512x4xf32>
    %98 = arith.maximumf %96, %97 : vector<512x4xf32>
    %99 = vector.shape_cast %98 : vector<512x4xf32> to vector<2x16x16x4xf32>
    %c0_171 = arith.constant 0 : index
    %c0_172 = arith.constant 0 : index
    %c0_173 = arith.constant 0 : index
    %c0_174 = arith.constant 0 : index
    %100 = vector.load %arg8[%c0_171, %c0_172, %c0_173, %c0_174] : memref<2x16x16x4xf32, #tpu.memory_space<vmem>>, vector<2x16x16x4xf32>
    tpu.vector_store %arg8[%c0_171, %c0_172, %c0_173, %c0_174], %99 {strides = array<i32>} : memref<2x16x16x4xf32, #tpu.memory_space<vmem>>, vector<2x16x16x4xf32>,
    return
  }
  func.func @transform_0(%arg0: i32) -> (i32, i32, i32, i32) {
    %c0_i32 = arith.constant 0 : i32
    %c0_i32_0 = arith.constant 0 : i32
    %c0_i32_1 = arith.constant 0 : i32
    %c0_i32_2 = arith.constant 0 : i32
    return %arg0, %c0_i32, %c0_i32_0, %c0_i32_1 : i32, i32, i32, i32
  }
  func.func @transform_1(%arg0: i32) -> (i32, i32) {
    %c0_i32 = arith.constant 0 : i32
    %c0_i32_0 = arith.constant 0 : i32
    %c0_i32_1 = arith.constant 0 : i32
    return %c0_i32, %c0_i32_0 : i32, i32
  }
  func.func @transform_2(%arg0: i32) -> (i32, i32) {
    %c0_i32 = arith.constant 0 : i32
    %c0_i32_0 = arith.constant 0 : i32
    %c0_i32_1 = arith.constant 0 : i32
    return %c0_i32, %c0_i32_0 : i32, i32
  }
  func.func @transform_3(%arg0: i32) -> (i32, i32) {
    %c0_i32 = arith.constant 0 : i32
    %c0_i32_0 = arith.constant 0 : i32
    %c0_i32_1 = arith.constant 0 : i32
    return %c0_i32, %c0_i32_0 : i32, i32
  }
  func.func @transform_4(%arg0: i32) -> (i32, i32) {
    %c0_i32 = arith.constant 0 : i32
    %c0_i32_0 = arith.constant 0 : i32
    %c0_i32_1 = arith.constant 0 : i32
    return %c0_i32, %c0_i32_0 : i32, i32
  }
  func.func @transform_5(%arg0: i32) -> (i32, i32) {
    %c0_i32 = arith.constant 0 : i32
    %c0_i32_0 = arith.constant 0 : i32
    %c0_i32_1 = arith.constant 0 : i32
    return %c0_i32, %c0_i32_0 : i32, i32
  }
  func.func @transform_6(%arg0: i32) -> (i32, i32) {
    %c0_i32 = arith.constant 0 : i32
    %c0_i32_0 = arith.constant 0 : i32
    %c0_i32_1 = arith.constant 0 : i32
    return %c0_i32, %c0_i32_0 : i32, i32
  }
  func.func @transform_7(%arg0: i32) -> (i32, i32, i32, i32) {
    %c0_i32 = arith.constant 0 : i32
    %c0_i32_0 = arith.constant 0 : i32
    %c0_i32_1 = arith.constant 0 : i32
    %c0_i32_2 = arith.constant 0 : i32
    return %arg0, %c0_i32, %c0_i32_0, %c0_i32_1 : i32, i32, i32, i32
  }
}

</mosaic_0001>

<llo_original>
// kernel: basic_block_forward.1
$region0: #{basic_block_forward.1}
  #allocation0 [shape = 'u32[]', space=smem, size = 0x4, offset = 0x4, fixed_abs, tag = 'smem constant byte address 0x4 - core index']
  #allocation1 [shape = 'u32[144,128]{1,0:T(1,128)}', space=vmem, size = 0x12000, scoped, tag = 'internal scratch']
  #allocation2 [shape = 'f32[2,18,18,4]{3,2,1,0:T(8,128)}', space=vmem, size = 0x6c000, scoped, tag = 'scratch operand']
  #allocation3 [shape = 'f32[2,18,18,4]{3,2,1,0:T(8,128)}', space=vmem, size = 0x6c000, scoped, tag = 'scratch operand']
  #allocation4 [shape = 'f32[512,36]{1,0:T(8,128)}', space=vmem, size = 0x40000, scoped, tag = 'scratch operand']
  %s0 = inlined_call_operand.vmem [shape: f32[2,16,16,4], index: 0, kind: input, shape index: {}]
  %s1 = inlined_call_operand.vmem [shape: f32[36,4], index: 1, kind: input, shape index: {}]
  %s2 = inlined_call_operand.vmem [shape: f32[1,4], index: 2, kind: input, shape index: {}]
  %s3 = inlined_call_operand.vmem [shape: f32[1,4], index: 3, kind: input, shape index: {}]
  %s4 = inlined_call_operand.vmem [shape: f32[36,4], index: 4, kind: input, shape index: {}]
  %s5 = inlined_call_operand.vmem [shape: f32[1,4], index: 5, kind: input, shape index: {}]
  %s6 = inlined_call_operand.vmem [shape: f32[1,4], index: 6, kind: input, shape index: {}]
  %s7 = inlined_call_operand.vmem [shape: f32[2,16,16,4], index: 7, kind: output, shape index: {}]
  %s8 = sld [smem:[#allocation0]]
  $region38: #{basic_block_forward.1} parent=0
    _
  %s10 = ssub.s32 1, %s8
  %s11 = scalar_select 0, %s10, %s8
  // Predicated region
  $region2: #{basic_block_forward.1} parent=0 // pred_check
    _
  $region3: #{basic_block_forward.1} parent=0 // pred_check_branch
    %13 = sbr.rel (0) target = $region5
  $region4: #{basic_block_forward.1} parent=0 // pred_region
    _
  $region5: #{basic_block_forward.1} parent=0 // pred_fallthru
    _
  // Predicated region
  $region6: #{basic_block_forward.1} parent=0 // pred_check
    _
  $region7: #{basic_block_forward.1} parent=0 // pred_check_branch
    %15 = sbr.rel (0) target = $region9
  $region8: #{basic_block_forward.1} parent=0 // pred_region
    _
  $region9: #{basic_block_forward.1} parent=0 // pred_fallthru
    _
  // Predicated region
  $region10: #{basic_block_forward.1} parent=0 // pred_check
    _
  $region11: #{basic_block_forward.1} parent=0 // pred_check_branch
    %17 = sbr.rel (0) target = $region13
  $region12: #{basic_block_forward.1} parent=0 // pred_region
    _
  $region13: #{basic_block_forward.1} parent=0 // pred_fallthru
    _
  // Predicated region
  $region14: #{basic_block_forward.1} parent=0 // pred_check
    _
  $region15: #{basic_block_forward.1} parent=0 // pred_check_branch
    %19 = sbr.rel (0) target = $region17
  $region16: #{basic_block_forward.1} parent=0 // pred_region
    _
  $region17: #{basic_block_forward.1} parent=0 // pred_fallthru
    _
  // Predicated region
  $region18: #{basic_block_forward.1} parent=0 // pred_check
    _
  $region19: #{basic_block_forward.1} parent=0 // pred_check_branch
    %21 = sbr.rel (0) target = $region21
  $region20: #{basic_block_forward.1} parent=0 // pred_region
    _
  $region21: #{basic_block_forward.1} parent=0 // pred_fallthru
    _
  // Predicated region
  $region22: #{basic_block_forward.1} parent=0 // pred_check
    _
  $region23: #{basic_block_forward.1} parent=0 // pred_check_branch
    %23 = sbr.rel (0) target = $region25
  $region24: #{basic_block_forward.1} parent=0 // pred_region
    _
  $region25: #{basic_block_forward.1} parent=0 // pred_fallthru
    _
  // Predicated region
  $region26: #{basic_block_forward.1} parent=0 // pred_check
    _
  $region27: #{basic_block_forward.1} parent=0 // pred_check_branch
    %25 = sbr.rel (0) target = $region29
  $region28: #{basic_block_forward.1} parent=0 // pred_region
    _
  $region29: #{basic_block_forward.1} parent=0 // pred_fallthru
    _
  %vm26 = vcmask 31744
  %27 = vst.msk [vmem:[#allocation2] sm:$0xff] %vm26, 0.0
  %28 = vst.msk [vmem:[#allocation2 + $0x8] sm:$0xff] %vm26, 0.0
  %vm29 = vcmask 25600
  %30 = vst.msk [vmem:[#allocation2 + $0x10] sm:$0x3] %vm29, 0.0
  %31 = vst.msk [vmem:[#allocation2 + $0x1b0] sm:$0xff] %vm26, 0.0
  %32 = vst.msk [vmem:[#allocation2 + $0x1b8] sm:$0xff] %vm26, 0.0
  %33 = vst.msk [vmem:[#allocation2 + $0x1c0] sm:$0x3] %vm29, 0.0
  %s34 = scalar_lea.vmem [#allocation2], 408
  %35 = vst.msk [vmem:[%s34] sm:$0xff] %vm26, 0.0
  %36 = vst.msk [vmem:[%s34 + $0x8] sm:$0xff] %vm26, 0.0
  %37 = vst.msk [vmem:[%s34 + $0x10] sm:$0x3] %vm29, 0.0
  %38 = vst.msk [vmem:[%s34 + $0x1b0] sm:$0xff] %vm26, 0.0
  %39 = vst.msk [vmem:[%s34 + $0x1b8] sm:$0xff] %vm26, 0.0
  %40 = vst.msk [vmem:[%s34 + $0x1c0] sm:$0x3] %vm29, 0.0
  %s41 = scalar_lea.vmem [#allocation2], 24
  %vm42 = vcmask 24576
  %43 = vst.msk [vmem:[%s41] sm:$0x1] %vm42, 0.0
  %44 = vst.msk [vmem:[%s41 + $0x18] sm:$0x1] %vm42, 0.0
  %45 = vst.msk [vmem:[%s41 + $0x30] sm:$0x1] %vm42, 0.0
  %46 = vst.msk [vmem:[%s41 + $0x48] sm:$0x1] %vm42, 0.0
  %47 = vst.msk [vmem:[%s41 + $0x60] sm:$0x1] %vm42, 0.0
  %48 = vst.msk [vmem:[%s41 + $0x78] sm:$0x1] %vm42, 0.0
  %49 = vst.msk [vmem:[%s41 + $0x90] sm:$0x1] %vm42, 0.0
  %50 = vst.msk [vmem:[%s41 + $0xa8] sm:$0x1] %vm42, 0.0
  %51 = vst.msk [vmem:[%s41 + $0xc0] sm:$0x1] %vm42, 0.0
  %52 = vst.msk [vmem:[%s41 + $0xd8] sm:$0x1] %vm42, 0.0
  %53 = vst.msk [vmem:[%s41 + $0xf0] sm:$0x1] %vm42, 0.0
  %54 = vst.msk [vmem:[%s41 + $0x108] sm:$0x1] %vm42, 0.0
  %55 = vst.msk [vmem:[%s41 + $0x120] sm:$0x1] %vm42, 0.0
  %56 = vst.msk [vmem:[%s41 + $0x138] sm:$0x1] %vm42, 0.0
  %57 = vst.msk [vmem:[%s41 + $0x150] sm:$0x1] %vm42, 0.0
  %58 = vst.msk [vmem:[%s41 + $0x168] sm:$0x1] %vm42, 0.0
  %59 = vst.msk [vmem:[%s41 + $0x1b0] sm:$0x1] %vm42, 0.0
  %60 = vst.msk [vmem:[%s41 + $0x1c8] sm:$0x1] %vm42, 0.0
  %61 = vst.msk [vmem:[%s41 + $0x1e0] sm:$0x1] %vm42, 0.0
  %62 = vst.msk [vmem:[%s41 + $0x1f8] sm:$0x1] %vm42, 0.0
  %63 = vst.msk [vmem:[%s41 + $0x210] sm:$0x1] %vm42, 0.0
  %64 = vst.msk [vmem:[%s41 + $0x228] sm:$0x1] %vm42, 0.0
  %65 = vst.msk [vmem:[%s41 + $0x240] sm:$0x1] %vm42, 0.0
  %66 = vst.msk [vmem:[%s41 + $0x258] sm:$0x1] %vm42, 0.0
  %67 = vst.msk [vmem:[%s41 + $0x270] sm:$0x1] %vm42, 0.0
  %68 = vst.msk [vmem:[%s41 + $0x288] sm:$0x1] %vm42, 0.0
  %69 = vst.msk [vmem:[%s41 + $0x2a0] sm:$0x1] %vm42, 0.0
  %70 = vst.msk [vmem:[%s41 + $0x2b8] sm:$0x1] %vm42, 0.0
  %71 = vst.msk [vmem:[%s41 + $0x2d0] sm:$0x1] %vm42, 0.0
  %72 = vst.msk [vmem:[%s41 + $0x2e8] sm:$0x1] %vm42, 0.0
  %73 = vst.msk [vmem:[%s41 + $0x300] sm:$0x1] %vm42, 0.0
  %74 = vst.msk [vmem:[%s41 + $0x318] sm:$0x1] %vm42, 0.0
  %75 = vst.msk [vmem:[%s41 + $0x11] sm:$0x1] %vm42, 0.0
  %76 = vst.msk [vmem:[%s41 + $0x29] sm:$0x1] %vm42, 0.0
  %77 = vst.msk [vmem:[%s41 + $0x41] sm:$0x1] %vm42, 0.0
  %78 = vst.msk [vmem:[%s41 + $0x59] sm:$0x1] %vm42, 0.0
  %79 = vst.msk [vmem:[%s41 + $0x71] sm:$0x1] %vm42, 0.0
  %80 = vst.msk [vmem:[%s41 + $0x89] sm:$0x1] %vm42, 0.0
  %81 = vst.msk [vmem:[%s41 + $0xa1] sm:$0x1] %vm42, 0.0
  %82 = vst.msk [vmem:[%s41 + $0xb9] sm:$0x1] %vm42, 0.0
  %83 = vst.msk [vmem:[%s41 + $0xd1] sm:$0x1] %vm42, 0.0
  %84 = vst.msk [vmem:[%s41 + $0xe9] sm:$0x1] %vm42, 0.0
  %85 = vst.msk [vmem:[%s41 + $0x101] sm:$0x1] %vm42, 0.0
  %86 = vst.msk [vmem:[%s41 + $0x119] sm:$0x1] %vm42, 0.0
  %87 = vst.msk [vmem:[%s41 + $0x131] sm:$0x1] %vm42, 0.0
  %88 = vst.msk [vmem:[%s41 + $0x149] sm:$0x1] %vm42, 0.0
  %89 = vst.msk [vmem:[%s41 + $0x161] sm:$0x1] %vm42, 0.0
  %90 = vst.msk [vmem:[%s41 + $0x179] sm:$0x1] %vm42, 0.0
  %91 = vst.msk [vmem:[%s41 + $0x1c1] sm:$0x1] %vm42, 0.0
  %92 = vst.msk [vmem:[%s41 + $0x1d9] sm:$0x1] %vm42, 0.0
  %93 = vst.msk [vmem:[%s41 + $0x1f1] sm:$0x1] %vm42, 0.0
  %94 = vst.msk [vmem:[%s41 + $0x209] sm:$0x1] %vm42, 0.0
  %95 = vst.msk [vmem:[%s41 + $0x221] sm:$0x1] %vm42, 0.0
  %96 = vst.msk [vmem:[%s41 + $0x239] sm:$0x1] %vm42, 0.0
  %97 = vst.msk [vmem:[%s41 + $0x251] sm:$0x1] %vm42, 0.0
  %98 = vst.msk [vmem:[%s41 + $0x269] sm:$0x1] %vm42, 0.0
  %99 = vst.msk [vmem:[%s41 + $0x281] sm:$0x1] %vm42, 0.0
  %100 = vst.msk [vmem:[%s41 + $0x299] sm:$0x1] %vm42, 0.0
  %101 = vst.msk [vmem:[%s41 + $0x2b1] sm:$0x1] %vm42, 0.0
  %102 = vst.msk [vmem:[%s41 + $0x2c9] sm:$0x1] %vm42, 0.0
  %103 = vst.msk [vmem:[%s41 + $0x2e1] sm:$0x1] %vm42, 0.0
  %104 = vst.msk [vmem:[%s41 + $0x2f9] sm:$0x1] %vm42, 0.0
  %105 = vst.msk [vmem:[%s41 + $0x311] sm:$0x1] %vm42, 0.0
  %106 = vst.msk [vmem:[%s41 + $0x329] sm:$0x1] %vm42, 0.0
  %107 = vst.msk [vmem:[#allocation3] sm:$0xff] %vm26, 0.0
  %108 = vst.msk [vmem:[#allocation3 + $0x8] sm:$0xff] %vm26, 0.0
  %109 = vst.msk [vmem:[#allocation3 + $0x10] sm:$0x3] %vm29, 0.0
  %110 = vst.msk [vmem:[#allocation3 + $0x1b0] sm:$0xff] %vm26, 0.0
  %111 = vst.msk [vmem:[#allocation3 + $0x1b8] sm:$0xff] %vm26, 0.0
  %112 = vst.msk [vmem:[#allocation3 + $0x1c0] sm:$0x3] %vm29, 0.0
  %s113 = scalar_lea.vmem [#allocation3], 408
  %114 = vst.msk [vmem:[%s113] sm:$0xff] %vm26, 0.0
  %115 = vst.msk [vmem:[%s113 + $0x8] sm:$0xff] %vm26, 0.0
  %116 = vst.msk [vmem:[%s113 + $0x10] sm:$0x3] %vm29, 0.0
  %117 = vst.msk [vmem:[%s113 + $0x1b0] sm:$0xff] %vm26, 0.0
  %118 = vst.msk [vmem:[%s113 + $0x1b8] sm:$0xff] %vm26, 0.0
  %119 = vst.msk [vmem:[%s113 + $0x1c0] sm:$0x3] %vm29, 0.0
  %s120 = scalar_lea.vmem [#allocation3], 24
  %121 = vst.msk [vmem:[%s120] sm:$0x1] %vm42, 0.0
  %122 = vst.msk [vmem:[%s120 + $0x18] sm:$0x1] %vm42, 0.0
  %123 = vst.msk [vmem:[%s120 + $0x30] sm:$0x1] %vm42, 0.0
  %124 = vst.msk [vmem:[%s120 + $0x48] sm:$0x1] %vm42, 0.0
  %125 = vst.msk [vmem:[%s120 + $0x60] sm:$0x1] %vm42, 0.0
  %126 = vst.msk [vmem:[%s120 + $0x78] sm:$0x1] %vm42, 0.0
  %127 = vst.msk [vmem:[%s120 + $0x90] sm:$0x1] %vm42, 0.0
  %128 = vst.msk [vmem:[%s120 + $0xa8] sm:$0x1] %vm42, 0.0
  %129 = vst.msk [vmem:[%s120 + $0xc0] sm:$0x1] %vm42, 0.0
  %130 = vst.msk [vmem:[%s120 + $0xd8] sm:$0x1] %vm42, 0.0
  %131 = vst.msk [vmem:[%s120 + $0xf0] sm:$0x1] %vm42, 0.0
  %132 = vst.msk [vmem:[%s120 + $0x108] sm:$0x1] %vm42, 0.0
  %133 = vst.msk [vmem:[%s120 + $0x120] sm:$0x1] %vm42, 0.0
  %134 = vst.msk [vmem:[%s120 + $0x138] sm:$0x1] %vm42, 0.0
  %135 = vst.msk [vmem:[%s120 + $0x150] sm:$0x1] %vm42, 0.0
  %136 = vst.msk [vmem:[%s120 + $0x168] sm:$0x1] %vm42, 0.0
  %137 = vst.msk [vmem:[%s120 + $0x1b0] sm:$0x1] %vm42, 0.0
  %138 = vst.msk [vmem:[%s120 + $0x1c8] sm:$0x1] %vm42, 0.0
  %139 = vst.msk [vmem:[%s120 + $0x1e0] sm:$0x1] %vm42, 0.0
  %140 = vst.msk [vmem:[%s120 + $0x1f8] sm:$0x1] %vm42, 0.0
  %141 = vst.msk [vmem:[%s120 + $0x210] sm:$0x1] %vm42, 0.0
  %142 = vst.msk [vmem:[%s120 + $0x228] sm:$0x1] %vm42, 0.0
  %143 = vst.msk [vmem:[%s120 + $0x240] sm:$0x1] %vm42, 0.0
  %144 = vst.msk [vmem:[%s120 + $0x258] sm:$0x1] %vm42, 0.0
  %145 = vst.msk [vmem:[%s120 + $0x270] sm:$0x1] %vm42, 0.0
  %146 = vst.msk [vmem:[%s120 + $0x288] sm:$0x1] %vm42, 0.0
  %147 = vst.msk [vmem:[%s120 + $0x2a0] sm:$0x1] %vm42, 0.0
  %148 = vst.msk [vmem:[%s120 + $0x2b8] sm:$0x1] %vm42, 0.0
  %149 = vst.msk [vmem:[%s120 + $0x2d0] sm:$0x1] %vm42, 0.0
  %150 = vst.msk [vmem:[%s120 + $0x2e8] sm:$0x1] %vm42, 0.0
  %151 = vst.msk [vmem:[%s120 + $0x300] sm:$0x1] %vm42, 0.0
  %152 = vst.msk [vmem:[%s120 + $0x318] sm:$0x1] %vm42, 0.0
  %153 = vst.msk [vmem:[%s120 + $0x11] sm:$0x1] %vm42, 0.0
  %154 = vst.msk [vmem:[%s120 + $0x29] sm:$0x1] %vm42, 0.0
  %155 = vst.msk [vmem:[%s120 + $0x41] sm:$0x1] %vm42, 0.0
  %156 = vst.msk [vmem:[%s120 + $0x59] sm:$0x1] %vm42, 0.0
  %157 = vst.msk [vmem:[%s120 + $0x71] sm:$0x1] %vm42, 0.0
  %158 = vst.msk [vmem:[%s120 + $0x89] sm:$0x1] %vm42, 0.0
  %159 = vst.msk [vmem:[%s120 + $0xa1] sm:$0x1] %vm42, 0.0
  %160 = vst.msk [vmem:[%s120 + $0xb9] sm:$0x1] %vm42, 0.0
  %161 = vst.msk [vmem:[%s120 + $0xd1] sm:$0x1] %vm42, 0.0
  %162 = vst.msk [vmem:[%s120 + $0xe9] sm:$0x1] %vm42, 0.0
  %163 = vst.msk [vmem:[%s120 + $0x101] sm:$0x1] %vm42, 0.0
  %164 = vst.msk [vmem:[%s120 + $0x119] sm:$0x1] %vm42, 0.0
  %165 = vst.msk [vmem:[%s120 + $0x131] sm:$0x1] %vm42, 0.0
  %166 = vst.msk [vmem:[%s120 + $0x149] sm:$0x1] %vm42, 0.0
  %167 = vst.msk [vmem:[%s120 + $0x161] sm:$0x1] %vm42, 0.0
  %168 = vst.msk [vmem:[%s120 + $0x179] sm:$0x1] %vm42, 0.0
  %169 = vst.msk [vmem:[%s120 + $0x1c1] sm:$0x1] %vm42, 0.0
  %170 = vst.msk [vmem:[%s120 + $0x1d9] sm:$0x1] %vm42, 0.0
  %171 = vst.msk [vmem:[%s120 + $0x1f1] sm:$0x1] %vm42, 0.0
  %172 = vst.msk [vmem:[%s120 + $0x209] sm:$0x1] %vm42, 0.0
  %173 = vst.msk [vmem:[%s120 + $0x221] sm:$0x1] %vm42, 0.0
  %174 = vst.msk [vmem:[%s120 + $0x239] sm:$0x1] %vm42, 0.0
  %175 = vst.msk [vmem:[%s120 + $0x251] sm:$0x1] %vm42, 0.0
  %176 = vst.msk [vmem:[%s120 + $0x269] sm:$0x1] %vm42, 0.0
  %177 = vst.msk [vmem:[%s120 + $0x281] sm:$0x1] %vm42, 0.0
  %178 = vst.msk [vmem:[%s120 + $0x299] sm:$0x1] %vm42, 0.0
  %179 = vst.msk [vmem:[%s120 + $0x2b1] sm:$0x1] %vm42, 0.0
  %180 = vst.msk [vmem:[%s120 + $0x2c9] sm:$0x1] %vm42, 0.0
  %181 = vst.msk [vmem:[%s120 + $0x2e1] sm:$0x1] %vm42, 0.0
  %182 = vst.msk [vmem:[%s120 + $0x2f9] sm:$0x1] %vm42, 0.0
  %183 = vst.msk [vmem:[%s120 + $0x311] sm:$0x1] %vm42, 0.0
  %184 = vst.msk [vmem:[%s120 + $0x329] sm:$0x1] %vm42, 0.0
  %v185 = vld [vmem:[%s0] sm:$0xff]
  %v186 = vld [vmem:[%s0 + $0x8] sm:$0xff]
  %v187 = vld [vmem:[%s0 + $0x10] sm:$0xff]
  %v188 = vld [vmem:[%s0 + $0x18] sm:$0xff]
  %v189 = vld [vmem:[%s0 + $0x20] sm:$0xff]
  %v190 = vld [vmem:[%s0 + $0x28] sm:$0xff]
  %v191 = vld [vmem:[%s0 + $0x30] sm:$0xff]
  %v192 = vld [vmem:[%s0 + $0x38] sm:$0xff]
  %v193 = vld [vmem:[%s0 + $0x40] sm:$0xff]
  %v194 = vld [vmem:[%s0 + $0x48] sm:$0xff]
  %v195 = vld [vmem:[%s0 + $0x50] sm:$0xff]
  %v196 = vld [vmem:[%s0 + $0x58] sm:$0xff]
  %v197 = vld [vmem:[%s0 + $0x60] sm:$0xff]
  %v198 = vld [vmem:[%s0 + $0x68] sm:$0xff]
  %v199 = vld [vmem:[%s0 + $0x70] sm:$0xff]
  %v200 = vld [vmem:[%s0 + $0x78] sm:$0xff]
  %v201 = vld [vmem:[%s0 + $0x80] sm:$0xff]
  %v202 = vld [vmem:[%s0 + $0x88] sm:$0xff]
  %v203 = vld [vmem:[%s0 + $0x90] sm:$0xff]
  %v204 = vld [vmem:[%s0 + $0x98] sm:$0xff]
  %v205 = vld [vmem:[%s0 + $0xa0] sm:$0xff]
  %v206 = vld [vmem:[%s0 + $0xa8] sm:$0xff]
  %v207 = vld [vmem:[%s0 + $0xb0] sm:$0xff]
  %v208 = vld [vmem:[%s0 + $0xb8] sm:$0xff]
  %v209 = vld [vmem:[%s0 + $0xc0] sm:$0xff]
  %v210 = vld [vmem:[%s0 + $0xc8] sm:$0xff]
  %v211 = vld [vmem:[%s0 + $0xd0] sm:$0xff]
  %v212 = vld [vmem:[%s0 + $0xd8] sm:$0xff]
  %v213 = vld [vmem:[%s0 + $0xe0] sm:$0xff]
  %v214 = vld [vmem:[%s0 + $0xe8] sm:$0xff]
  %v215 = vld [vmem:[%s0 + $0xf0] sm:$0xff]
  %v216 = vld [vmem:[%s0 + $0xf8] sm:$0xff]
  %v217 = vld [vmem:[%s0 + $0x100] sm:$0xff]
  %v218 = vld [vmem:[%s0 + $0x108] sm:$0xff]
  %v219 = vld [vmem:[%s0 + $0x110] sm:$0xff]
  %v220 = vld [vmem:[%s0 + $0x118] sm:$0xff]
  %v221 = vld [vmem:[%s0 + $0x120] sm:$0xff]
  %v222 = vld [vmem:[%s0 + $0x128] sm:$0xff]
  %v223 = vld [vmem:[%s0 + $0x130] sm:$0xff]
  %v224 = vld [vmem:[%s0 + $0x138] sm:$0xff]
  %v225 = vld [vmem:[%s0 + $0x140] sm:$0xff]
  %v226 = vld [vmem:[%s0 + $0x148] sm:$0xff]
  %v227 = vld [vmem:[%s0 + $0x150] sm:$0xff]
  %v228 = vld [vmem:[%s0 + $0x158] sm:$0xff]
  %v229 = vld [vmem:[%s0 + $0x160] sm:$0xff]
  %v230 = vld [vmem:[%s0 + $0x168] sm:$0xff]
  %v231 = vld [vmem:[%s0 + $0x170] sm:$0xff]
  %v232 = vld [vmem:[%s0 + $0x178] sm:$0xff]
  %v233 = vld [vmem:[%s0 + $0x180] sm:$0xff]
  %v234 = vld [vmem:[%s0 + $0x188] sm:$0xff]
  %v235 = vld [vmem:[%s0 + $0x190] sm:$0xff]
  %v236 = vld [vmem:[%s0 + $0x198] sm:$0xff]
  %v237 = vld [vmem:[%s0 + $0x1a0] sm:$0xff]
  %v238 = vld [vmem:[%s0 + $0x1a8] sm:$0xff]
  %v239 = vld [vmem:[%s0 + $0x1b0] sm:$0xff]
  %v240 = vld [vmem:[%s0 + $0x1b8] sm:$0xff]
  %v241 = vld [vmem:[%s0 + $0x1c0] sm:$0xff]
  %v242 = vld [vmem:[%s0 + $0x1c8] sm:$0xff]
  %v243 = vld [vmem:[%s0 + $0x1d0] sm:$0xff]
  %v244 = vld [vmem:[%s0 + $0x1d8] sm:$0xff]
  %v245 = vld [vmem:[%s0 + $0x1e0] sm:$0xff]
  %v246 = vld [vmem:[%s0 + $0x1e8] sm:$0xff]
  %v247 = vld [vmem:[%s0 + $0x1f0] sm:$0xff]
  %v248 = vld [vmem:[%s0 + $0x1f8] sm:$0xff]
  %249 = vst.msk [vmem:[%s41 + $0x1] sm:$0xff] %vm26, %v185
  %250 = vst.msk [vmem:[%s41 + $0x9] sm:$0xff] %vm26, %v186
  %251 = vst.msk [vmem:[%s41 + $0x19] sm:$0xff] %vm26, %v187
  %252 = vst.msk [vmem:[%s41 + $0x21] sm:$0xff] %vm26, %v188
  %253 = vst.msk [vmem:[%s41 + $0x31] sm:$0xff] %vm26, %v189
  %254 = vst.msk [vmem:[%s41 + $0x39] sm:$0xff] %vm26, %v190
  %255 = vst.msk [vmem:[%s41 + $0x49] sm:$0xff] %vm26, %v191
  %256 = vst.msk [vmem:[%s41 + $0x51] sm:$0xff] %vm26, %v192
  %257 = vst.msk [vmem:[%s41 + $0x61] sm:$0xff] %vm26, %v193
  %258 = vst.msk [vmem:[%s41 + $0x69] sm:$0xff] %vm26, %v194
  %259 = vst.msk [vmem:[%s41 + $0x79] sm:$0xff] %vm26, %v195
  %260 = vst.msk [vmem:[%s41 + $0x81] sm:$0xff] %vm26, %v196
  %261 = vst.msk [vmem:[%s41 + $0x91] sm:$0xff] %vm26, %v197
  %262 = vst.msk [vmem:[%s41 + $0x99] sm:$0xff] %vm26, %v198
  %263 = vst.msk [vmem:[%s41 + $0xa9] sm:$0xff] %vm26, %v199
  %264 = vst.msk [vmem:[%s41 + $0xb1] sm:$0xff] %vm26, %v200
  %265 = vst.msk [vmem:[%s41 + $0xc1] sm:$0xff] %vm26, %v201
  %266 = vst.msk [vmem:[%s41 + $0xc9] sm:$0xff] %vm26, %v202
  %267 = vst.msk [vmem:[%s41 + $0xd9] sm:$0xff] %vm26, %v203
  %268 = vst.msk [vmem:[%s41 + $0xe1] sm:$0xff] %vm26, %v204
  %269 = vst.msk [vmem:[%s41 + $0xf1] sm:$0xff] %vm26, %v205
  %270 = vst.msk [vmem:[%s41 + $0xf9] sm:$0xff] %vm26, %v206
  %271 = vst.msk [vmem:[%s41 + $0x109] sm:$0xff] %vm26, %v207
  %272 = vst.msk [vmem:[%s41 + $0x111] sm:$0xff] %vm26, %v208
  %273 = vst.msk [vmem:[%s41 + $0x121] sm:$0xff] %vm26, %v209
  %274 = vst.msk [vmem:[%s41 + $0x129] sm:$0xff] %vm26, %v210
  %275 = vst.msk [vmem:[%s41 + $0x139] sm:$0xff] %vm26, %v211
  %276 = vst.msk [vmem:[%s41 + $0x141] sm:$0xff] %vm26, %v212
  %277 = vst.msk [vmem:[%s41 + $0x151] sm:$0xff] %vm26, %v213
  %278 = vst.msk [vmem:[%s41 + $0x159] sm:$0xff] %vm26, %v214
  %279 = vst.msk [vmem:[%s41 + $0x169] sm:$0xff] %vm26, %v215
  %280 = vst.msk [vmem:[%s41 + $0x171] sm:$0xff] %vm26, %v216
  %281 = vst.msk [vmem:[%s41 + $0x1b1] sm:$0xff] %vm26, %v217
  %282 = vst.msk [vmem:[%s41 + $0x1b9] sm:$0xff] %vm26, %v218
  %283 = vst.msk [vmem:[%s41 + $0x1c9] sm:$0xff] %vm26, %v219
  %284 = vst.msk [vmem:[%s41 + $0x1d1] sm:$0xff] %vm26, %v220
  %285 = vst.msk [vmem:[%s41 + $0x1e1] sm:$0xff] %vm26, %v221
  %286 = vst.msk [vmem:[%s41 + $0x1e9] sm:$0xff] %vm26, %v222
  %287 = vst.msk [vmem:[%s41 + $0x1f9] sm:$0xff] %vm26, %v223
  %288 = vst.msk [vmem:[%s41 + $0x201] sm:$0xff] %vm26, %v224
  %289 = vst.msk [vmem:[%s41 + $0x211] sm:$0xff] %vm26, %v225
  %290 = vst.msk [vmem:[%s41 + $0x219] sm:$0xff] %vm26, %v226
  %291 = vst.msk [vmem:[%s41 + $0x229] sm:$0xff] %vm26, %v227
  %292 = vst.msk [vmem:[%s41 + $0x231] sm:$0xff] %vm26, %v228
  %293 = vst.msk [vmem:[%s41 + $0x241] sm:$0xff] %vm26, %v229
  %294 = vst.msk [vmem:[%s41 + $0x249] sm:$0xff] %vm26, %v230
  %295 = vst.msk [vmem:[%s41 + $0x259] sm:$0xff] %vm26, %v231
  %296 = vst.msk [vmem:[%s41 + $0x261] sm:$0xff] %vm26, %v232
  %297 = vst.msk [vmem:[%s41 + $0x271] sm:$0xff] %vm26, %v233
  %298 = vst.msk [vmem:[%s41 + $0x279] sm:$0xff] %vm26, %v234
  %299 = vst.msk [vmem:[%s41 + $0x289] sm:$0xff] %vm26, %v235
  %300 = vst.msk [vmem:[%s41 + $0x291] sm:$0xff] %vm26, %v236
  %301 = vst.msk [vmem:[%s41 + $0x2a1] sm:$0xff] %vm26, %v237
  %302 = vst.msk [vmem:[%s41 + $0x2a9] sm:$0xff] %vm26, %v238
  %303 = vst.msk [vmem:[%s41 + $0x2b9] sm:$0xff] %vm26, %v239
  %304 = vst.msk [vmem:[%s41 + $0x2c1] sm:$0xff] %vm26, %v240
  %305 = vst.msk [vmem:[%s41 + $0x2d1] sm:$0xff] %vm26, %v241
  %306 = vst.msk [vmem:[%s41 + $0x2d9] sm:$0xff] %vm26, %v242
  %307 = vst.msk [vmem:[%s41 + $0x2e9] sm:$0xff] %vm26, %v243
  %308 = vst.msk [vmem:[%s41 + $0x2f1] sm:$0xff] %vm26, %v244
  %309 = vst.msk [vmem:[%s41 + $0x301] sm:$0xff] %vm26, %v245
  %310 = vst.msk [vmem:[%s41 + $0x309] sm:$0xff] %vm26, %v246
  %311 = vst.msk [vmem:[%s41 + $0x319] sm:$0xff] %vm26, %v247
  %312 = vst.msk [vmem:[%s41 + $0x321] sm:$0xff] %vm26, %v248
  %v313 = vld [vmem:[#allocation2] sm:$0xff]
  %v314 = vld [vmem:[#allocation2 + $0x8] sm:$0xff]
  %v315 = vld [vmem:[#allocation2 + $0x18] sm:$0xff]
  %v316 = vld [vmem:[#allocation2 + $0x20] sm:$0xff]
  %v317 = vld [vmem:[#allocation2 + $0x30] sm:$0xff]
  %v318 = vld [vmem:[#allocation2 + $0x38] sm:$0xff]
  %v319 = vld [vmem:[#allocation2 + $0x48] sm:$0xff]
  %v320 = vld [vmem:[#allocation2 + $0x50] sm:$0xff]
  %v321 = vld [vmem:[#allocation2 + $0x60] sm:$0xff]
  %v322 = vld [vmem:[#allocation2 + $0x68] sm:$0xff]
  %v323 = vld [vmem:[#allocation2 + $0x78] sm:$0xff]
  %v324 = vld [vmem:[#allocation2 + $0x80] sm:$0xff]
  %v325 = vld [vmem:[#allocation2 + $0x90] sm:$0xff]
  %v326 = vld [vmem:[#allocation2 + $0x98] sm:$0xff]
  %v327 = vld [vmem:[#allocation2 + $0xa8] sm:$0xff]
  %v328 = vld [vmem:[#allocation2 + $0xb0] sm:$0xff]
  %v329 = vld [vmem:[#allocation2 + $0xc0] sm:$0xff]
  %v330 = vld [vmem:[#allocation2 + $0xc8] sm:$0xff]
  %v331 = vld [vmem:[#allocation2 + $0xd8] sm:$0xff]
  %v332 = vld [vmem:[#allocation2 + $0xe0] sm:$0xff]
  %v333 = vld [vmem:[#allocation2 + $0xf0] sm:$0xff]
  %v334 = vld [vmem:[#allocation2 + $0xf8] sm:$0xff]
  %v335 = vld [vmem:[#allocation2 + $0x108] sm:$0xff]
  %v336 = vld [vmem:[#allocation2 + $0x110] sm:$0xff]
  %v337 = vld [vmem:[#allocation2 + $0x120] sm:$0xff]
  %v338 = vld [vmem:[#allocation2 + $0x128] sm:$0xff]
  %v339 = vld [vmem:[#allocation2 + $0x138] sm:$0xff]
  %v340 = vld [vmem:[#allocation2 + $0x140] sm:$0xff]
  %v341 = vld [vmem:[#allocation2 + $0x150] sm:$0xff]
  %v342 = vld [vmem:[#allocation2 + $0x158] sm:$0xff]
  %v343 = vld [vmem:[#allocation2 + $0x168] sm:$0xff]
  %v344 = vld [vmem:[#allocation2 + $0x170] sm:$0xff]
  %v345 = vld [vmem:[#allocation2 + $0x1b0] sm:$0xff]
  %v346 = vld [vmem:[#allocation2 + $0x1b8] sm:$0xff]
  %v347 = vld [vmem:[#allocation2 + $0x1c8] sm:$0xff]
  %v348 = vld [vmem:[#allocation2 + $0x1d0] sm:$0xff]
  %v349 = vld [vmem:[#allocation2 + $0x1e0] sm:$0xff]
  %v350 = vld [vmem:[#allocation2 + $0x1e8] sm:$0xff]
  %v351 = vld [vmem:[#allocation2 + $0x1f8] sm:$0xff]
  %v352 = vld [vmem:[#allocation2 + $0x200] sm:$0xff]
  %v353 = vld [vmem:[#allocation2 + $0x210] sm:$0xff]
  %v354 = vld [vmem:[#allocation2 + $0x218] sm:$0xff]
  %v355 = vld [vmem:[#allocation2 + $0x228] sm:$0xff]
  %v356 = vld [vmem:[#allocation2 + $0x230] sm:$0xff]
  %v357 = vld [vmem:[#allocation2 + $0x240] sm:$0xff]
  %v358 = vld [vmem:[#allocation2 + $0x248] sm:$0xff]
  %v359 = vld [vmem:[#allocation2 + $0x258] sm:$0xff]
  %v360 = vld [vmem:[#allocation2 + $0x260] sm:$0xff]
  %v361 = vld [vmem:[#allocation2 + $0x270] sm:$0xff]
  %v362 = vld [vmem:[#allocation2 + $0x278] sm:$0xff]
  %v363 = vld [vmem:[#allocation2 + $0x288] sm:$0xff]
  %v364 = vld [vmem:[#allocation2 + $0x290] sm:$0xff]
  %v365 = vld [vmem:[#allocation2 + $0x2a0] sm:$0xff]
  %v366 = vld [vmem:[#allocation2 + $0x2a8] sm:$0xff]
  %v367 = vld [vmem:[#allocation2 + $0x2b8] sm:$0xff]
  %v368 = vld [vmem:[#allocation2 + $0x2c0] sm:$0xff]
  %v369 = vld [vmem:[#allocation2 + $0x2d0] sm:$0xff]
  %v370 = vld [vmem:[#allocation2 + $0x2d8] sm:$0xff]
  %v371 = vld [vmem:[#allocation2 + $0x2e8] sm:$0xff]
  %v372 = vld [vmem:[#allocation2 + $0x2f0] sm:$0xff]
  %v373 = vld [vmem:[#allocation2 + $0x300] sm:$0xff]
  %v374 = vld [vmem:[#allocation2 + $0x308] sm:$0xff]
  %v375 = vld [vmem:[#allocation2 + $0x318] sm:$0xff]
  %v376 = vld [vmem:[#allocation2 + $0x320] sm:$0xff]
  %377 = vst.msk [vmem:[#allocation4] sm:$0xff] %vm26, %v313
  %378 = vst.msk [vmem:[#allocation4 + $0x8] sm:$0xff] %vm26, %v314
  %379 = vst.msk [vmem:[#allocation4 + $0x10] sm:$0xff] %vm26, %v315
  %380 = vst.msk [vmem:[#allocation4 + $0x18] sm:$0xff] %vm26, %v316
  %381 = vst.msk [vmem:[#allocation4 + $0x20] sm:$0xff] %vm26, %v317
  %382 = vst.msk [vmem:[#allocation4 + $0x28] sm:$0xff] %vm26, %v318
  %383 = vst.msk [vmem:[#allocation4 + $0x30] sm:$0xff] %vm26, %v319
  %384 = vst.msk [vmem:[#allocation4 + $0x38] sm:$0xff] %vm26, %v320
  %385 = vst.msk [vmem:[#allocation4 + $0x40] sm:$0xff] %vm26, %v321
  %386 = vst.msk [vmem:[#allocation4 + $0x48] sm:$0xff] %vm26, %v322
  %387 = vst.msk [vmem:[#allocation4 + $0x50] sm:$0xff] %vm26, %v323
  %388 = vst.msk [vmem:[#allocation4 + $0x58] sm:$0xff] %vm26, %v324
  %389 = vst.msk [vmem:[#allocation4 + $0x60] sm:$0xff] %vm26, %v325
  %390 = vst.msk [vmem:[#allocation4 + $0x68] sm:$0xff] %vm26, %v326
  %391 = vst.msk [vmem:[#allocation4 + $0x70] sm:$0xff] %vm26, %v327
  %392 = vst.msk [vmem:[#allocation4 + $0x78] sm:$0xff] %vm26, %v328
  %393 = vst.msk [vmem:[#allocation4 + $0x80] sm:$0xff] %vm26, %v329
  %394 = vst.msk [vmem:[#allocation4 + $0x88] sm:$0xff] %vm26, %v330
  %395 = vst.msk [vmem:[#allocation4 + $0x90] sm:$0xff] %vm26, %v331
  %396 = vst.msk [vmem:[#allocation4 + $0x98] sm:$0xff] %vm26, %v332
  %397 = vst.msk [vmem:[#allocation4 + $0xa0] sm:$0xff] %vm26, %v333
  %398 = vst.msk [vmem:[#allocation4 + $0xa8] sm:$0xff] %vm26, %v334
  %399 = vst.msk [vmem:[#allocation4 + $0xb0] sm:$0xff] %vm26, %v335
  %400 = vst.msk [vmem:[#allocation4 + $0xb8] sm:$0xff] %vm26, %v336
  %401 = vst.msk [vmem:[#allocation4 + $0xc0] sm:$0xff] %vm26, %v337
  %402 = vst.msk [vmem:[#allocation4 + $0xc8] sm:$0xff] %vm26, %v338
  %403 = vst.msk [vmem:[#allocation4 + $0xd0] sm:$0xff] %vm26, %v339
  %404 = vst.msk [vmem:[#allocation4 + $0xd8] sm:$0xff] %vm26, %v340
  %405 = vst.msk [vmem:[#allocation4 + $0xe0] sm:$0xff] %vm26, %v341
  %406 = vst.msk [vmem:[#allocation4 + $0xe8] sm:$0xff] %vm26, %v342
  %407 = vst.msk [vmem:[#allocation4 + $0xf0] sm:$0xff] %vm26, %v343
  %408 = vst.msk [vmem:[#allocation4 + $0xf8] sm:$0xff] %vm26, %v344
  %409 = vst.msk [vmem:[#allocation4 + $0x100] sm:$0xff] %vm26, %v345
  %410 = vst.msk [vmem:[#allocation4 + $0x108] sm:$0xff] %vm26, %v346
  %411 = vst.msk [vmem:[#allocation4 + $0x110] sm:$0xff] %vm26, %v347
  %412 = vst.msk [vmem:[#allocation4 + $0x118] sm:$0xff] %vm26, %v348
  %413 = vst.msk [vmem:[#allocation4 + $0x120] sm:$0xff] %vm26, %v349
  %414 = vst.msk [vmem:[#allocation4 + $0x128] sm:$0xff] %vm26, %v350
  %415 = vst.msk [vmem:[#allocation4 + $0x130] sm:$0xff] %vm26, %v351
  %416 = vst.msk [vmem:[#allocation4 + $0x138] sm:$0xff] %vm26, %v352
  %417 = vst.msk [vmem:[#allocation4 + $0x140] sm:$0xff] %vm26, %v353
  %418 = vst.msk [vmem:[#allocation4 + $0x148] sm:$0xff] %vm26, %v354
  %419 = vst.msk [vmem:[#allocation4 + $0x150] sm:$0xff] %vm26, %v355
  %420 = vst.msk [vmem:[#allocation4 + $0x158] sm:$0xff] %vm26, %v356
  %421 = vst.msk [vmem:[#allocation4 + $0x160] sm:$0xff] %vm26, %v357
  %422 = vst.msk [vmem:[#allocation4 + $0x168] sm:$0xff] %vm26, %v358
  %423 = vst.msk [vmem:[#allocation4 + $0x170] sm:$0xff] %vm26, %v359
  %424 = vst.msk [vmem:[#allocation4 + $0x178] sm:$0xff] %vm26, %v360
  %425 = vst.msk [vmem:[#allocation4 + $0x180] sm:$0xff] %vm26, %v361
  %426 = vst.msk [vmem:[#allocation4 + $0x188] sm:$0xff] %vm26, %v362
  %427 = vst.msk [vmem:[#allocation4 + $0x190] sm:$0xff] %vm26, %v363
  %428 = vst.msk [vmem:[#allocation4 + $0x198] sm:$0xff] %vm26, %v364
  %429 = vst.msk [vmem:[#allocation4 + $0x1a0] sm:$0xff] %vm26, %v365
  %430 = vst.msk [vmem:[#allocation4 + $0x1a8] sm:$0xff] %vm26, %v366
  %431 = vst.msk [vmem:[#allocation4 + $0x1b0] sm:$0xff] %vm26, %v367
  %432 = vst.msk [vmem:[#allocation4 + $0x1b8] sm:$0xff] %vm26, %v368
  %433 = vst.msk [vmem:[#allocation4 + $0x1c0] sm:$0xff] %vm26, %v369
  %434 = vst.msk [vmem:[#allocation4 + $0x1c8] sm:$0xff] %vm26, %v370
  %435 = vst.msk [vmem:[#allocation4 + $0x1d0] sm:$0xff] %vm26, %v371
  %436 = vst.msk [vmem:[#allocation4 + $0x1d8] sm:$0xff] %vm26, %v372
  %437 = vst.msk [vmem:[#allocation4 + $0x1e0] sm:$0xff] %vm26, %v373
  %438 = vst.msk [vmem:[#allocation4 + $0x1e8] sm:$0xff] %vm26, %v374
  %439 = vst.msk [vmem:[#allocation4 + $0x1f0] sm:$0xff] %vm26, %v375
  %440 = vst.msk [vmem:[#allocation4 + $0x1f8] sm:$0xff] %vm26, %v376
  %v441 = vld [vmem:[#allocation2 + $0x1] sm:$0xff]
  %v442 = vld [vmem:[#allocation2 + $0x9] sm:$0xff]
  %v443 = vld [vmem:[#allocation2 + $0x19] sm:$0xff]
  %v444 = vld [vmem:[#allocation2 + $0x21] sm:$0xff]
  %v445 = vld [vmem:[#allocation2 + $0x31] sm:$0xff]
  %v446 = vld [vmem:[#allocation2 + $0x39] sm:$0xff]
  %v447 = vld [vmem:[#allocation2 + $0x49] sm:$0xff]
  %v448 = vld [vmem:[#allocation2 + $0x51] sm:$0xff]
  %v449 = vld [vmem:[#allocation2 + $0x61] sm:$0xff]
  %v450 = vld [vmem:[#allocation2 + $0x69] sm:$0xff]
  %v451 = vld [vmem:[#allocation2 + $0x79] sm:$0xff]
  %v452 = vld [vmem:[#allocation2 + $0x81] sm:$0xff]
  %v453 = vld [vmem:[#allocation2 + $0x91] sm:$0xff]
  %v454 = vld [vmem:[#allocation2 + $0x99] sm:$0xff]
  %v455 = vld [vmem:[#allocation2 + $0xa9] sm:$0xff]
  %v456 = vld [vmem:[#allocation2 + $0xb1] sm:$0xff]
  %v457 = vld [vmem:[#allocation2 + $0xc1] sm:$0xff]
  %v458 = vld [vmem:[#allocation2 + $0xc9] sm:$0xff]
  %v459 = vld [vmem:[#allocation2 + $0xd9] sm:$0xff]
  %v460 = vld [vmem:[#allocation2 + $0xe1] sm:$0xff]
  %v461 = vld [vmem:[#allocation2 + $0xf1] sm:$0xff]
  %v462 = vld [vmem:[#allocation2 + $0xf9] sm:$0xff]
  %v463 = vld [vmem:[#allocation2 + $0x109] sm:$0xff]
  %v464 = vld [vmem:[#allocation2 + $0x111] sm:$0xff]
  %v465 = vld [vmem:[#allocation2 + $0x121] sm:$0xff]
  %v466 = vld [vmem:[#allocation2 + $0x129] sm:$0xff]
  %v467 = vld [vmem:[#allocation2 + $0x139] sm:$0xff]
  %v468 = vld [vmem:[#allocation2 + $0x141] sm:$0xff]
  %v469 = vld [vmem:[#allocation2 + $0x151] sm:$0xff]
  %v470 = vld [vmem:[#allocation2 + $0x159] sm:$0xff]
  %v471 = vld [vmem:[#allocation2 + $0x169] sm:$0xff]
  %v472 = vld [vmem:[#allocation2 + $0x171] sm:$0xff]
  %v473 = vld [vmem:[#allocation2 + $0x1b1] sm:$0xff]
  %v474 = vld [vmem:[#allocation2 + $0x1b9] sm:$0xff]
  %v475 = vld [vmem:[#allocation2 + $0x1c9] sm:$0xff]
  %v476 = vld [vmem:[#allocation2 + $0x1d1] sm:$0xff]
  %v477 = vld [vmem:[#allocation2 + $0x1e1] sm:$0xff]
  %v478 = vld [vmem:[#allocation2 + $0x1e9] sm:$0xff]
  %v479 = vld [vmem:[#allocation2 + $0x1f9] sm:$0xff]
  %v480 = vld [vmem:[#allocation2 + $0x201] sm:$0xff]
  %v481 = vld [vmem:[#allocation2 + $0x211] sm:$0xff]
  %v482 = vld [vmem:[#allocation2 + $0x219] sm:$0xff]
  %v483 = vld [vmem:[#allocation2 + $0x229] sm:$0xff]
  %v484 = vld [vmem:[#allocation2 + $0x231] sm:$0xff]
  %v485 = vld [vmem:[#allocation2 + $0x241] sm:$0xff]
  %v486 = vld [vmem:[#allocation2 + $0x249] sm:$0xff]
  %v487 = vld [vmem:[#allocation2 + $0x259] sm:$0xff]
  %v488 = vld [vmem:[#allocation2 + $0x261] sm:$0xff]
  %v489 = vld [vmem:[#allocation2 + $0x271] sm:$0xff]
  %v490 = vld [vmem:[#allocation2 + $0x279] sm:$0xff]
  %v491 = vld [vmem:[#allocation2 + $0x289] sm:$0xff]
  %v492 = vld [vmem:[#allocation2 + $0x291] sm:$0xff]
  %v493 = vld [vmem:[#allocation2 + $0x2a1] sm:$0xff]
  %v494 = vld [vmem:[#allocation2 + $0x2a9] sm:$0xff]
  %v495 = vld [vmem:[#allocation2 + $0x2b9] sm:$0xff]
  %v496 = vld [vmem:[#allocation2 + $0x2c1] sm:$0xff]
  %v497 = vld [vmem:[#allocation2 + $0x2d1] sm:$0xff]
  %v498 = vld [vmem:[#allocation2 + $0x2d9] sm:$0xff]
  %v499 = vld [vmem:[#allocation2 + $0x2e9] sm:$0xff]
  %v500 = vld [vmem:[#allocation2 + $0x2f1] sm:$0xff]
  %v501 = vld [vmem:[#allocation2 + $0x301] sm:$0xff]
  %v502 = vld [vmem:[#allocation2 + $0x309] sm:$0xff]
  %v503 = vld [vmem:[#allocation2 + $0x319] sm:$0xff]
  %v504 = vld [vmem:[#allocation2 + $0x321] sm:$0xff]
  %569 = vrot.lane.b32.xlu0 %v441, 4
  %v570 = vpop.permute.xlu0 %569
  %571 = vrot.lane.b32.xlu0 %v442, 4
  %v572 = vpop.permute.xlu0 %571
  %573 = vrot.lane.b32.xlu0 %v443, 4
  %v574 = vpop.permute.xlu0 %573
  %575 = vrot.lane.b32.xlu0 %v444, 4
  %v576 = vpop.permute.xlu0 %575
  %577 = vrot.lane.b32.xlu0 %v445, 4
  %v578 = vpop.permute.xlu0 %577
  %579 = vrot.lane.b32.xlu0 %v446, 4
  %v580 = vpop.permute.xlu0 %579
  %581 = vrot.lane.b32.xlu0 %v447, 4
  %v582 = vpop.permute.xlu0 %581
  %583 = vrot.lane.b32.xlu0 %v448, 4
  %v584 = vpop.permute.xlu0 %583
  %585 = vrot.lane.b32.xlu0 %v449, 4
  %v586 = vpop.permute.xlu0 %585
  %587 = vrot.lane.b32.xlu0 %v450, 4
  %v588 = vpop.permute.xlu0 %587
  %589 = vrot.lane.b32.xlu0 %v451, 4
  %v590 = vpop.permute.xlu0 %589
  %591 = vrot.lane.b32.xlu0 %v452, 4
  %v592 = vpop.permute.xlu0 %591
  %593 = vrot.lane.b32.xlu0 %v453, 4
  %v594 = vpop.permute.xlu0 %593
  %595 = vrot.lane.b32.xlu0 %v454, 4
  %v596 = vpop.permute.xlu0 %595
  %597 = vrot.lane.b32.xlu0 %v455, 4
  %v598 = vpop.permute.xlu0 %597
  %599 = vrot.lane.b32.xlu0 %v456, 4
  %v600 = vpop.permute.xlu0 %599
  %601 = vrot.lane.b32.xlu0 %v457, 4
  %v602 = vpop.permute.xlu0 %601
  %603 = vrot.lane.b32.xlu0 %v458, 4
  %v604 = vpop.permute.xlu0 %603
  %605 = vrot.lane.b32.xlu0 %v459, 4
  %v606 = vpop.permute.xlu0 %605
  %607 = vrot.lane.b32.xlu0 %v460, 4
  %v608 = vpop.permute.xlu0 %607
  %609 = vrot.lane.b32.xlu0 %v461, 4
  %v610 = vpop.permute.xlu0 %609
  %611 = vrot.lane.b32.xlu0 %v462, 4
  %v612 = vpop.permute.xlu0 %611
  %613 = vrot.lane.b32.xlu0 %v463, 4
  %v614 = vpop.permute.xlu0 %613
  %615 = vrot.lane.b32.xlu0 %v464, 4
  %v616 = vpop.permute.xlu0 %615
  %617 = vrot.lane.b32.xlu0 %v465, 4
  %v618 = vpop.permute.xlu0 %617
  %619 = vrot.lane.b32.xlu0 %v466, 4
  %v620 = vpop.permute.xlu0 %619
  %621 = vrot.lane.b32.xlu0 %v467, 4
  %v622 = vpop.permute.xlu0 %621
  %623 = vrot.lane.b32.xlu0 %v468, 4
  %v624 = vpop.permute.xlu0 %623
  %625 = vrot.lane.b32.xlu0 %v469, 4
  %v626 = vpop.permute.xlu0 %625
  %627 = vrot.lane.b32.xlu0 %v470, 4
  %v628 = vpop.permute.xlu0 %627
  %629 = vrot.lane.b32.xlu0 %v471, 4
  %v630 = vpop.permute.xlu0 %629
  %631 = vrot.lane.b32.xlu0 %v472, 4
  %v632 = vpop.permute.xlu0 %631
  %633 = vrot.lane.b32.xlu0 %v473, 4
  %v634 = vpop.permute.xlu0 %633
  %635 = vrot.lane.b32.xlu0 %v474, 4
  %v636 = vpop.permute.xlu0 %635
  %637 = vrot.lane.b32.xlu0 %v475, 4
  %v638 = vpop.permute.xlu0 %637
  %639 = vrot.lane.b32.xlu0 %v476, 4
  %v640 = vpop.permute.xlu0 %639
  %641 = vrot.lane.b32.xlu0 %v477, 4
  %v642 = vpop.permute.xlu0 %641
  %643 = vrot.lane.b32.xlu0 %v478, 4
  %v644 = vpop.permute.xlu0 %643
  %645 = vrot.lane.b32.xlu0 %v479, 4
  %v646 = vpop.permute.xlu0 %645
  %647 = vrot.lane.b32.xlu0 %v480, 4
  %v648 = vpop.permute.xlu0 %647
  %649 = vrot.lane.b32.xlu0 %v481, 4
  %v650 = vpop.permute.xlu0 %649
  %651 = vrot.lane.b32.xlu0 %v482, 4
  %v652 = vpop.permute.xlu0 %651
  %653 = vrot.lane.b32.xlu0 %v483, 4
  %v654 = vpop.permute.xlu0 %653
  %655 = vrot.lane.b32.xlu0 %v484, 4
  %v656 = vpop.permute.xlu0 %655
  %657 = vrot.lane.b32.xlu0 %v485, 4
  %v658 = vpop.permute.xlu0 %657
  %659 = vrot.lane.b32.xlu0 %v486, 4
  %v660 = vpop.permute.xlu0 %659
  %661 = vrot.lane.b32.xlu0 %v487, 4
  %v662 = vpop.permute.xlu0 %661
  %663 = vrot.lane.b32.xlu0 %v488, 4
  %v664 = vpop.permute.xlu0 %663
  %665 = vrot.lane.b32.xlu0 %v489, 4
  %v666 = vpop.permute.xlu0 %665
  %667 = vrot.lane.b32.xlu0 %v490, 4
  %v668 = vpop.permute.xlu0 %667
  %669 = vrot.lane.b32.xlu0 %v491, 4
  %v670 = vpop.permute.xlu0 %669
  %671 = vrot.lane.b32.xlu0 %v492, 4
  %v672 = vpop.permute.xlu0 %671
  %673 = vrot.lane.b32.xlu0 %v493, 4
  %v674 = vpop.permute.xlu0 %673
  %675 = vrot.lane.b32.xlu0 %v494, 4
  %v676 = vpop.permute.xlu0 %675
  %677 = vrot.lane.b32.xlu0 %v495, 4
  %v678 = vpop.permute.xlu0 %677
  %679 = vrot.lane.b32.xlu0 %v496, 4
  %v680 = vpop.permute.xlu0 %679
  %681 = vrot.lane.b32.xlu0 %v497, 4
  %v682 = vpop.permute.xlu0 %681
  %683 = vrot.lane.b32.xlu0 %v498, 4
  %v684 = vpop.permute.xlu0 %683
  %685 = vrot.lane.b32.xlu0 %v499, 4
  %v686 = vpop.permute.xlu0 %685
  %687 = vrot.lane.b32.xlu0 %v500, 4
  %v688 = vpop.permute.xlu0 %687
  %689 = vrot.lane.b32.xlu0 %v501, 4
  %v690 = vpop.permute.xlu0 %689
  %691 = vrot.lane.b32.xlu0 %v502, 4
  %v692 = vpop.permute.xlu0 %691
  %693 = vrot.lane.b32.xlu0 %v503, 4
  %v694 = vpop.permute.xlu0 %693
  %695 = vrot.lane.b32.xlu0 %v504, 4
  %v696 = vpop.permute.xlu0 %695
  %vm761 = vcmask 64544
  %762 = vst.msk [vmem:[#allocation4] sm:$0xff] %vm761, %v570
  %763 = vst.msk [vmem:[#allocation4 + $0x8] sm:$0xff] %vm761, %v572
  %764 = vst.msk [vmem:[#allocation4 + $0x10] sm:$0xff] %vm761, %v574
  %765 = vst.msk [vmem:[#allocation4 + $0x18] sm:$0xff] %vm761, %v576
  %766 = vst.msk [vmem:[#allocation4 + $0x20] sm:$0xff] %vm761, %v578
  %767 = vst.msk [vmem:[#allocation4 + $0x28] sm:$0xff] %vm761, %v580
  %768 = vst.msk [vmem:[#allocation4 + $0x30] sm:$0xff] %vm761, %v582
  %769 = vst.msk [vmem:[#allocation4 + $0x38] sm:$0xff] %vm761, %v584
  %770 = vst.msk [vmem:[#allocation4 + $0x40] sm:$0xff] %vm761, %v586
  %771 = vst.msk [vmem:[#allocation4 + $0x48] sm:$0xff] %vm761, %v588
  %772 = vst.msk [vmem:[#allocation4 + $0x50] sm:$0xff] %vm761, %v590
  %773 = vst.msk [vmem:[#allocation4 + $0x58] sm:$0xff] %vm761, %v592
  %774 = vst.msk [vmem:[#allocation4 + $0x60] sm:$0xff] %vm761, %v594
  %775 = vst.msk [vmem:[#allocation4 + $0x68] sm:$0xff] %vm761, %v596
  %776 = vst.msk [vmem:[#allocation4 + $0x70] sm:$0xff] %vm761, %v598
  %777 = vst.msk [vmem:[#allocation4 + $0x78] sm:$0xff] %vm761, %v600
  %778 = vst.msk [vmem:[#allocation4 + $0x80] sm:$0xff] %vm761, %v602
  %779 = vst.msk [vmem:[#allocation4 + $0x88] sm:$0xff] %vm761, %v604
  %780 = vst.msk [vmem:[#allocation4 + $0x90] sm:$0xff] %vm761, %v606
  %781 = vst.msk [vmem:[#allocation4 + $0x98] sm:$0xff] %vm761, %v608
  %782 = vst.msk [vmem:[#allocation4 + $0xa0] sm:$0xff] %vm761, %v610
  %783 = vst.msk [vmem:[#allocation4 + $0xa8] sm:$0xff] %vm761, %v612
  %784 = vst.msk [vmem:[#allocation4 + $0xb0] sm:$0xff] %vm761, %v614
  %785 = vst.msk [vmem:[#allocation4 + $0xb8] sm:$0xff] %vm761, %v616
  %786 = vst.msk [vmem:[#allocation4 + $0xc0] sm:$0xff] %vm761, %v618
  %787 = vst.msk [vmem:[#allocation4 + $0xc8] sm:$0xff] %vm761, %v620
  %788 = vst.msk [vmem:[#allocation4 + $0xd0] sm:$0xff] %vm761, %v622
  %789 = vst.msk [vmem:[#allocation4 + $0xd8] sm:$0xff] %vm761, %v624
  %790 = vst.msk [vmem:[#allocation4 + $0xe0] sm:$0xff] %vm761, %v626
  %791 = vst.msk [vmem:[#allocation4 + $0xe8] sm:$0xff] %vm761, %v628
  %792 = vst.msk [vmem:[#allocation4 + $0xf0] sm:$0xff] %vm761, %v630
  %793 = vst.msk [vmem:[#allocation4 + $0xf8] sm:$0xff] %vm761, %v632
  %794 = vst.msk [vmem:[#allocation4 + $0x100] sm:$0xff] %vm761, %v634
  %795 = vst.msk [vmem:[#allocation4 + $0x108] sm:$0xff] %vm761, %v636
  %796 = vst.msk [vmem:[#allocation4 + $0x110] sm:$0xff] %vm761, %v638
  %797 = vst.msk [vmem:[#allocation4 + $0x118] sm:$0xff] %vm761, %v640
  %798 = vst.msk [vmem:[#allocation4 + $0x120] sm:$0xff] %vm761, %v642
  %799 = vst.msk [vmem:[#allocation4 + $0x128] sm:$0xff] %vm761, %v644
  %800 = vst.msk [vmem:[#allocation4 + $0x130] sm:$0xff] %vm761, %v646
  %801 = vst.msk [vmem:[#allocation4 + $0x138] sm:$0xff] %vm761, %v648
  %802 = vst.msk [vmem:[#allocation4 + $0x140] sm:$0xff] %vm761, %v650
  %803 = vst.msk [vmem:[#allocation4 + $0x148] sm:$0xff] %vm761, %v652
  %804 = vst.msk [vmem:[#allocation4 + $0x150] sm:$0xff] %vm761, %v654
  %805 = vst.msk [vmem:[#allocation4 + $0x158] sm:$0xff] %vm761, %v656
  %806 = vst.msk [vmem:[#allocation4 + $0x160] sm:$0xff] %vm761, %v658
  %807 = vst.msk [vmem:[#allocation4 + $0x168] sm:$0xff] %vm761, %v660
  %808 = vst.msk [vmem:[#allocation4 + $0x170] sm:$0xff] %vm761, %v662
  %809 = vst.msk [vmem:[#allocation4 + $0x178] sm:$0xff] %vm761, %v664
  %810 = vst.msk [vmem:[#allocation4 + $0x180] sm:$0xff] %vm761, %v666
  %811 = vst.msk [vmem:[#allocation4 + $0x188] sm:$0xff] %vm761, %v668
  %812 = vst.msk [vmem:[#allocation4 + $0x190] sm:$0xff] %vm761, %v670
  %813 = vst.msk [vmem:[#allocation4 + $0x198] sm:$0xff] %vm761, %v672
  %814 = vst.msk [vmem:[#allocation4 + $0x1a0] sm:$0xff] %vm761, %v674
  %815 = vst.msk [vmem:[#allocation4 + $0x1a8] sm:$0xff] %vm761, %v676
  %816 = vst.msk [vmem:[#allocation4 + $0x1b0] sm:$0xff] %vm761, %v678
  %817 = vst.msk [vmem:[#allocation4 + $0x1b8] sm:$0xff] %vm761, %v680
  %818 = vst.msk [vmem:[#allocation4 + $0x1c0] sm:$0xff] %vm761, %v682
  %819 = vst.msk [vmem:[#allocation4 + $0x1c8] sm:$0xff] %vm761, %v684
  %820 = vst.msk [vmem:[#allocation4 + $0x1d0] sm:$0xff] %vm761, %v686
  %821 = vst.msk [vmem:[#allocation4 + $0x1d8] sm:$0xff] %vm761, %v688
  %822 = vst.msk [vmem:[#allocation4 + $0x1e0] sm:$0xff] %vm761, %v690
  %823 = vst.msk [vmem:[#allocation4 + $0x1e8] sm:$0xff] %vm761, %v692
  %824 = vst.msk [vmem:[#allocation4 + $0x1f0] sm:$0xff] %vm761, %v694
  %825 = vst.msk [vmem:[#allocation4 + $0x1f8] sm:$0xff] %vm761, %v696
  %v826 = vld [vmem:[#allocation2 + $0x2] sm:$0xff]
  %v827 = vld [vmem:[#allocation2 + $0xa] sm:$0xff]
  %v828 = vld [vmem:[#allocation2 + $0x1a] sm:$0xff]
  %v829 = vld [vmem:[#allocation2 + $0x22] sm:$0xff]
  %v830 = vld [vmem:[#allocation2 + $0x32] sm:$0xff]
  %v831 = vld [vmem:[#allocation2 + $0x3a] sm:$0xff]
  %v832 = vld [vmem:[#allocation2 + $0x4a] sm:$0xff]
  %v833 = vld [vmem:[#allocation2 + $0x52] sm:$0xff]
  %v834 = vld [vmem:[#allocation2 + $0x62] sm:$0xff]
  %v835 = vld [vmem:[#allocation2 + $0x6a] sm:$0xff]
  %v836 = vld [vmem:[#allocation2 + $0x7a] sm:$0xff]
  %v837 = vld [vmem:[#allocation2 + $0x82] sm:$0xff]
  %v838 = vld [vmem:[#allocation2 + $0x92] sm:$0xff]
  %v839 = vld [vmem:[#allocation2 + $0x9a] sm:$0xff]
  %v840 = vld [vmem:[#allocation2 + $0xaa] sm:$0xff]
  %v841 = vld [vmem:[#allocation2 + $0xb2] sm:$0xff]
  %v842 = vld [vmem:[#allocation2 + $0xc2] sm:$0xff]
  %v843 = vld [vmem:[#allocation2 + $0xca] sm:$0xff]
  %v844 = vld [vmem:[#allocation2 + $0xda] sm:$0xff]
  %v845 = vld [vmem:[#allocation2 + $0xe2] sm:$0xff]
  %v846 = vld [vmem:[#allocation2 + $0xf2] sm:$0xff]
  %v847 = vld [vmem:[#allocation2 + $0xfa] sm:$0xff]
  %v848 = vld [vmem:[#allocation2 + $0x10a] sm:$0xff]
  %v849 = vld [vmem:[#allocation2 + $0x112] sm:$0xff]
  %v850 = vld [vmem:[#allocation2 + $0x122] sm:$0xff]
  %v851 = vld [vmem:[#allocation2 + $0x12a] sm:$0xff]
  %v852 = vld [vmem:[#allocation2 + $0x13a] sm:$0xff]
  %v853 = vld [vmem:[#allocation2 + $0x142] sm:$0xff]
  %v854 = vld [vmem:[#allocation2 + $0x152] sm:$0xff]
  %v855 = vld [vmem:[#allocation2 + $0x15a] sm:$0xff]
  %v856 = vld [vmem:[#allocation2 + $0x16a] sm:$0xff]
  %v857 = vld [vmem:[#allocation2 + $0x172] sm:$0xff]
  %v858 = vld [vmem:[#allocation2 + $0x1b2] sm:$0xff]
  %v859 = vld [vmem:[#allocation2 + $0x1ba] sm:$0xff]
  %v860 = vld [vmem:[#allocation2 + $0x1ca] sm:$0xff]
  %v861 = vld [vmem:[#allocation2 + $0x1d2] sm:$0xff]
  %v862 = vld [vmem:[#allocation2 + $0x1e2] sm:$0xff]
  %v863 = vld [vmem:[#allocation2 + $0x1ea] sm:$0xff]
  %v864 = vld [vmem:[#allocation2 + $0x1fa] sm:$0xff]
  %v865 = vld [vmem:[#allocation2 + $0x202] sm:$0xff]
  %v866 = vld [vmem:[#allocation2 + $0x212] sm:$0xff]
  %v867 = vld [vmem:[#allocation2 + $0x21a] sm:$0xff]
  %v868 = vld [vmem:[#allocation2 + $0x22a] sm:$0xff]
  %v869 = vld [vmem:[#allocation2 + $0x232] sm:$0xff]
  %v870 = vld [vmem:[#allocation2 + $0x242] sm:$0xff]
  %v871 = vld [vmem:[#allocation2 + $0x24a] sm:$0xff]
  %v872 = vld [vmem:[#allocation2 + $0x25a] sm:$0xff]
  %v873 = vld [vmem:[#allocation2 + $0x262] sm:$0xff]
  %v874 = vld [vmem:[#allocation2 + $0x272] sm:$0xff]
  %v875 = vld [vmem:[#allocation2 + $0x27a] sm:$0xff]
  %v876 = vld [vmem:[#allocation2 + $0x28a] sm:$0xff]
  %v877 = vld [vmem:[#allocation2 + $0x292] sm:$0xff]
  %v878 = vld [vmem:[#allocation2 + $0x2a2] sm:$0xff]
  %v879 = vld [vmem:[#allocation2 + $0x2aa] sm:$0xff]
  %v880 = vld [vmem:[#allocation2 + $0x2ba] sm:$0xff]
  %v881 = vld [vmem:[#allocation2 + $0x2c2] sm:$0xff]
  %v882 = vld [vmem:[#allocation2 + $0x2d2] sm:$0xff]
  %v883 = vld [vmem:[#allocation2 + $0x2da] sm:$0xff]
  %v884 = vld [vmem:[#allocation2 + $0x2ea] sm:$0xff]
  %v885 = vld [vmem:[#allocation2 + $0x2f2] sm:$0xff]
  %v886 = vld [vmem:[#allocation2 + $0x302] sm:$0xff]
  %v887 = vld [vmem:[#allocation2 + $0x30a] sm:$0xff]
  %v888 = vld [vmem:[#allocation2 + $0x31a] sm:$0xff]
  %v889 = vld [vmem:[#allocation2 + $0x322] sm:$0xff]
  %954 = vrot.lane.b32.xlu0 %v826, 8
  %v955 = vpop.permute.xlu0 %954
  %956 = vrot.lane.b32.xlu0 %v827, 8
  %v957 = vpop.permute.xlu0 %956
  %958 = vrot.lane.b32.xlu0 %v828, 8
  %v959 = vpop.permute.xlu0 %958
  %960 = vrot.lane.b32.xlu0 %v829, 8
  %v961 = vpop.permute.xlu0 %960
  %962 = vrot.lane.b32.xlu0 %v830, 8
  %v963 = vpop.permute.xlu0 %962
  %964 = vrot.lane.b32.xlu0 %v831, 8
  %v965 = vpop.permute.xlu0 %964
  %966 = vrot.lane.b32.xlu0 %v832, 8
  %v967 = vpop.permute.xlu0 %966
  %968 = vrot.lane.b32.xlu0 %v833, 8
  %v969 = vpop.permute.xlu0 %968
  %970 = vrot.lane.b32.xlu0 %v834, 8
  %v971 = vpop.permute.xlu0 %970
  %972 = vrot.lane.b32.xlu0 %v835, 8
  %v973 = vpop.permute.xlu0 %972
  %974 = vrot.lane.b32.xlu0 %v836, 8
  %v975 = vpop.permute.xlu0 %974
  %976 = vrot.lane.b32.xlu0 %v837, 8
  %v977 = vpop.permute.xlu0 %976
  %978 = vrot.lane.b32.xlu0 %v838, 8
  %v979 = vpop.permute.xlu0 %978
  %980 = vrot.lane.b32.xlu0 %v839, 8
  %v981 = vpop.permute.xlu0 %980
  %982 = vrot.lane.b32.xlu0 %v840, 8
  %v983 = vpop.permute.xlu0 %982
  %984 = vrot.lane.b32.xlu0 %v841, 8
  %v985 = vpop.permute.xlu0 %984
  %986 = vrot.lane.b32.xlu0 %v842, 8
  %v987 = vpop.permute.xlu0 %986
  %988 = vrot.lane.b32.xlu0 %v843, 8
  %v989 = vpop.permute.xlu0 %988
  %990 = vrot.lane.b32.xlu0 %v844, 8
  %v991 = vpop.permute.xlu0 %990
  %992 = vrot.lane.b32.xlu0 %v845, 8
  %v993 = vpop.permute.xlu0 %992
  %994 = vrot.lane.b32.xlu0 %v846, 8
  %v995 = vpop.permute.xlu0 %994
  %996 = vrot.lane.b32.xlu0 %v847, 8
  %v997 = vpop.permute.xlu0 %996
  %998 = vrot.lane.b32.xlu0 %v848, 8
  %v999 = vpop.permute.xlu0 %998
  %1000 = vrot.lane.b32.xlu0 %v849, 8
  %v1001 = vpop.permute.xlu0 %1000
  %1002 = vrot.lane.b32.xlu0 %v850, 8
  %v1003 = vpop.permute.xlu0 %1002
  %1004 = vrot.lane.b32.xlu0 %v851, 8
  %v1005 = vpop.permute.xlu0 %1004
  %1006 = vrot.lane.b32.xlu0 %v852, 8
  %v1007 = vpop.permute.xlu0 %1006
  %1008 = vrot.lane.b32.xlu0 %v853, 8
  %v1009 = vpop.permute.xlu0 %1008
  %1010 = vrot.lane.b32.xlu0 %v854, 8
  %v1011 = vpop.permute.xlu0 %1010
  %1012 = vrot.lane.b32.xlu0 %v855, 8
  %v1013 = vpop.permute.xlu0 %1012
  %1014 = vrot.lane.b32.xlu0 %v856, 8
  %v1015 = vpop.permute.xlu0 %1014
  %1016 = vrot.lane.b32.xlu0 %v857, 8
  %v1017 = vpop.permute.xlu0 %1016
  %1018 = vrot.lane.b32.xlu0 %v858, 8
  %v1019 = vpop.permute.xlu0 %1018
  %1020 = vrot.lane.b32.xlu0 %v859, 8
  %v1021 = vpop.permute.xlu0 %1020
  %1022 = vrot.lane.b32.xlu0 %v860, 8
  %v1023 = vpop.permute.xlu0 %1022
  %1024 = vrot.lane.b32.xlu0 %v861, 8
  %v1025 = vpop.permute.xlu0 %1024
  %1026 = vrot.lane.b32.xlu0 %v862, 8
  %v1027 = vpop.permute.xlu0 %1026
  %1028 = vrot.lane.b32.xlu0 %v863, 8
  %v1029 = vpop.permute.xlu0 %1028
  %1030 = vrot.lane.b32.xlu0 %v864, 8
  %v1031 = vpop.permute.xlu0 %1030
  %1032 = vrot.lane.b32.xlu0 %v865, 8
  %v1033 = vpop.permute.xlu0 %1032
  %1034 = vrot.lane.b32.xlu0 %v866, 8
  %v1035 = vpop.permute.xlu0 %1034
  %1036 = vrot.lane.b32.xlu0 %v867, 8
  %v1037 = vpop.permute.xlu0 %1036
  %1038 = vrot.lane.b32.xlu0 %v868, 8
  %v1039 = vpop.permute.xlu0 %1038
  %1040 = vrot.lane.b32.xlu0 %v869, 8
  %v1041 = vpop.permute.xlu0 %1040
  %1042 = vrot.lane.b32.xlu0 %v870, 8
  %v1043 = vpop.permute.xlu0 %1042
  %1044 = vrot.lane.b32.xlu0 %v871, 8
  %v1045 = vpop.permute.xlu0 %1044
  %1046 = vrot.lane.b32.xlu0 %v872, 8
  %v1047 = vpop.permute.xlu0 %1046
  %1048 = vrot.lane.b32.xlu0 %v873, 8
  %v1049 = vpop.permute.xlu0 %1048
  %1050 = vrot.lane.b32.xlu0 %v874, 8
  %v1051 = vpop.permute.xlu0 %1050
  %1052 = vrot.lane.b32.xlu0 %v875, 8
  %v1053 = vpop.permute.xlu0 %1052
  %1054 = vrot.lane.b32.xlu0 %v876, 8
  %v1055 = vpop.permute.xlu0 %1054
  %1056 = vrot.lane.b32.xlu0 %v877, 8
  %v1057 = vpop.permute.xlu0 %1056
  %1058 = vrot.lane.b32.xlu0 %v878, 8
  %v1059 = vpop.permute.xlu0 %1058
  %1060 = vrot.lane.b32.xlu0 %v879, 8
  %v1061 = vpop.permute.xlu0 %1060
  %1062 = vrot.lane.b32.xlu0 %v880, 8
  %v1063 = vpop.permute.xlu0 %1062
  %1064 = vrot.lane.b32.xlu0 %v881, 8
  %v1065 = vpop.permute.xlu0 %1064
  %1066 = vrot.lane.b32.xlu0 %v882, 8
  %v1067 = vpop.permute.xlu0 %1066
  %1068 = vrot.lane.b32.xlu0 %v883, 8
  %v1069 = vpop.permute.xlu0 %1068
  %1070 = vrot.lane.b32.xlu0 %v884, 8
  %v1071 = vpop.permute.xlu0 %1070
  %1072 = vrot.lane.b32.xlu0 %v885, 8
  %v1073 = vpop.permute.xlu0 %1072
  %1074 = vrot.lane.b32.xlu0 %v886, 8
  %v1075 = vpop.permute.xlu0 %1074
  %1076 = vrot.lane.b32.xlu0 %v887, 8
  %v1077 = vpop.permute.xlu0 %1076
  %1078 = vrot.lane.b32.xlu0 %v888, 8
  %v1079 = vpop.permute.xlu0 %1078
  %1080 = vrot.lane.b32.xlu0 %v889, 8
  %v1081 = vpop.permute.xlu0 %1080
  %vm1146 = vcmask 97344
  %1147 = vst.msk [vmem:[#allocation4] sm:$0xff] %vm1146, %v955
  %1148 = vst.msk [vmem:[#allocation4 + $0x8] sm:$0xff] %vm1146, %v957
  %1149 = vst.msk [vmem:[#allocation4 + $0x10] sm:$0xff] %vm1146, %v959
  %1150 = vst.msk [vmem:[#allocation4 + $0x18] sm:$0xff] %vm1146, %v961
  %1151 = vst.msk [vmem:[#allocation4 + $0x20] sm:$0xff] %vm1146, %v963
  %1152 = vst.msk [vmem:[#allocation4 + $0x28] sm:$0xff] %vm1146, %v965
  %1153 = vst.msk [vmem:[#allocation4 + $0x30] sm:$0xff] %vm1146, %v967
  %1154 = vst.msk [vmem:[#allocation4 + $0x38] sm:$0xff] %vm1146, %v969
  %1155 = vst.msk [vmem:[#allocation4 + $0x40] sm:$0xff] %vm1146, %v971
  %1156 = vst.msk [vmem:[#allocation4 + $0x48] sm:$0xff] %vm1146, %v973
  %1157 = vst.msk [vmem:[#allocation4 + $0x50] sm:$0xff] %vm1146, %v975
  %1158 = vst.msk [vmem:[#allocation4 + $0x58] sm:$0xff] %vm1146, %v977
  %1159 = vst.msk [vmem:[#allocation4 + $0x60] sm:$0xff] %vm1146, %v979
  %1160 = vst.msk [vmem:[#allocation4 + $0x68] sm:$0xff] %vm1146, %v981
  %1161 = vst.msk [vmem:[#allocation4 + $0x70] sm:$0xff] %vm1146, %v983
  %1162 = vst.msk [vmem:[#allocation4 + $0x78] sm:$0xff] %vm1146, %v985
  %1163 = vst.msk [vmem:[#allocation4 + $0x80] sm:$0xff] %vm1146, %v987
  %1164 = vst.msk [vmem:[#allocation4 + $0x88] sm:$0xff] %vm1146, %v989
  %1165 = vst.msk [vmem:[#allocation4 + $0x90] sm:$0xff] %vm1146, %v991
  %1166 = vst.msk [vmem:[#allocation4 + $0x98] sm:$0xff] %vm1146, %v993
  %1167 = vst.msk [vmem:[#allocation4 + $0xa0] sm:$0xff] %vm1146, %v995
  %1168 = vst.msk [vmem:[#allocation4 + $0xa8] sm:$0xff] %vm1146, %v997
  %1169 = vst.msk [vmem:[#allocation4 + $0xb0] sm:$0xff] %vm1146, %v999
  %1170 = vst.msk [vmem:[#allocation4 + $0xb8] sm:$0xff] %vm1146, %v1001
  %1171 = vst.msk [vmem:[#allocation4 + $0xc0] sm:$0xff] %vm1146, %v1003
  %1172 = vst.msk [vmem:[#allocation4 + $0xc8] sm:$0xff] %vm1146, %v1005
  %1173 = vst.msk [vmem:[#allocation4 + $0xd0] sm:$0xff] %vm1146, %v1007
  %1174 = vst.msk [vmem:[#allocation4 + $0xd8] sm:$0xff] %vm1146, %v1009
  %1175 = vst.msk [vmem:[#allocation4 + $0xe0] sm:$0xff] %vm1146, %v1011
  %1176 = vst.msk [vmem:[#allocation4 + $0xe8] sm:$0xff] %vm1146, %v1013
  %1177 = vst.msk [vmem:[#allocation4 + $0xf0] sm:$0xff] %vm1146, %v1015
  %1178 = vst.msk [vmem:[#allocation4 + $0xf8] sm:$0xff] %vm1146, %v1017
  %1179 = vst.msk [vmem:[#allocation4 + $0x100] sm:$0xff] %vm1146, %v1019
  %1180 = vst.msk [vmem:[#allocation4 + $0x108] sm:$0xff] %vm1146, %v1021
  %1181 = vst.msk [vmem:[#allocation4 + $0x110] sm:$0xff] %vm1146, %v1023
  %1182 = vst.msk [vmem:[#allocation4 + $0x118] sm:$0xff] %vm1146, %v1025
  %1183 = vst.msk [vmem:[#allocation4 + $0x120] sm:$0xff] %vm1146, %v1027
  %1184 = vst.msk [vmem:[#allocation4 + $0x128] sm:$0xff] %vm1146, %v1029
  %1185 = vst.msk [vmem:[#allocation4 + $0x130] sm:$0xff] %vm1146, %v1031
  %1186 = vst.msk [vmem:[#allocation4 + $0x138] sm:$0xff] %vm1146, %v1033
  %1187 = vst.msk [vmem:[#allocation4 + $0x140] sm:$0xff] %vm1146, %v1035
  %1188 = vst.msk [vmem:[#allocation4 + $0x148] sm:$0xff] %vm1146, %v1037
  %1189 = vst.msk [vmem:[#allocation4 + $0x150] sm:$0xff] %vm1146, %v1039
  %1190 = vst.msk [vmem:[#allocation4 + $0x158] sm:$0xff] %vm1146, %v1041
  %1191 = vst.msk [vmem:[#allocation4 + $0x160] sm:$0xff] %vm1146, %v1043
  %1192 = vst.msk [vmem:[#allocation4 + $0x168] sm:$0xff] %vm1146, %v1045
  %1193 = vst.msk [vmem:[#allocation4 + $0x170] sm:$0xff] %vm1146, %v1047
  %1194 = vst.msk [vmem:[#allocation4 + $0x178] sm:$0xff] %vm1146, %v1049
  %1195 = vst.msk [vmem:[#allocation4 + $0x180] sm:$0xff] %vm1146, %v1051
  %1196 = vst.msk [vmem:[#allocation4 + $0x188] sm:$0xff] %vm1146, %v1053
  %1197 = vst.msk [vmem:[#allocation4 + $0x190] sm:$0xff] %vm1146, %v1055
  %1198 = vst.msk [vmem:[#allocation4 + $0x198] sm:$0xff] %vm1146, %v1057
  %1199 = vst.msk [vmem:[#allocation4 + $0x1a0] sm:$0xff] %vm1146, %v1059
  %1200 = vst.msk [vmem:[#allocation4 + $0x1a8] sm:$0xff] %vm1146, %v1061
  %1201 = vst.msk [vmem:[#allocation4 + $0x1b0] sm:$0xff] %vm1146, %v1063
  %1202 = vst.msk [vmem:[#allocation4 + $0x1b8] sm:$0xff] %vm1146, %v1065
  %1203 = vst.msk [vmem:[#allocation4 + $0x1c0] sm:$0xff] %vm1146, %v1067
  %1204 = vst.msk [vmem:[#allocation4 + $0x1c8] sm:$0xff] %vm1146, %v1069
  %1205 = vst.msk [vmem:[#allocation4 + $0x1d0] sm:$0xff] %vm1146, %v1071
  %1206 = vst.msk [vmem:[#allocation4 + $0x1d8] sm:$0xff] %vm1146, %v1073
  %1207 = vst.msk [vmem:[#allocation4 + $0x1e0] sm:$0xff] %vm1146, %v1075
  %1208 = vst.msk [vmem:[#allocation4 + $0x1e8] sm:$0xff] %vm1146, %v1077
  %1209 = vst.msk [vmem:[#allocation4 + $0x1f0] sm:$0xff] %vm1146, %v1079
  %1210 = vst.msk [vmem:[#allocation4 + $0x1f8] sm:$0xff] %vm1146, %v1081
  %v1211 = vld [vmem:[%s41] sm:$0xff]
  %v1212 = vld [vmem:[%s41 + $0x8] sm:$0xff]
  %v1213 = vld [vmem:[%s41 + $0x18] sm:$0xff]
  %v1214 = vld [vmem:[%s41 + $0x20] sm:$0xff]
  %v1215 = vld [vmem:[%s41 + $0x30] sm:$0xff]
  %v1216 = vld [vmem:[%s41 + $0x38] sm:$0xff]
  %v1217 = vld [vmem:[%s41 + $0x48] sm:$0xff]
  %v1218 = vld [vmem:[%s41 + $0x50] sm:$0xff]
  %v1219 = vld [vmem:[%s41 + $0x60] sm:$0xff]
  %v1220 = vld [vmem:[%s41 + $0x68] sm:$0xff]
  %v1221 = vld [vmem:[%s41 + $0x78] sm:$0xff]
  %v1222 = vld [vmem:[%s41 + $0x80] sm:$0xff]
  %v1223 = vld [vmem:[%s41 + $0x90] sm:$0xff]
  %v1224 = vld [vmem:[%s41 + $0x98] sm:$0xff]
  %v1225 = vld [vmem:[%s41 + $0xa8] sm:$0xff]
  %v1226 = vld [vmem:[%s41 + $0xb0] sm:$0xff]
  %v1227 = vld [vmem:[%s41 + $0xc0] sm:$0xff]
  %v1228 = vld [vmem:[%s41 + $0xc8] sm:$0xff]
  %v1229 = vld [vmem:[%s41 + $0xd8] sm:$0xff]
  %v1230 = vld [vmem:[%s41 + $0xe0] sm:$0xff]
  %v1231 = vld [vmem:[%s41 + $0xf0] sm:$0xff]
  %v1232 = vld [vmem:[%s41 + $0xf8] sm:$0xff]
  %v1233 = vld [vmem:[%s41 + $0x108] sm:$0xff]
  %v1234 = vld [vmem:[%s41 + $0x110] sm:$0xff]
  %v1235 = vld [vmem:[%s41 + $0x120] sm:$0xff]
  %v1236 = vld [vmem:[%s41 + $0x128] sm:$0xff]
  %v1237 = vld [vmem:[%s41 + $0x138] sm:$0xff]
  %v1238 = vld [vmem:[%s41 + $0x140] sm:$0xff]
  %v1239 = vld [vmem:[%s41 + $0x150] sm:$0xff]
  %v1240 = vld [vmem:[%s41 + $0x158] sm:$0xff]
  %v1241 = vld [vmem:[%s41 + $0x168] sm:$0xff]
  %v1242 = vld [vmem:[%s41 + $0x170] sm:$0xff]
  %v1243 = vld [vmem:[%s41 + $0x1b0] sm:$0xff]
  %v1244 = vld [vmem:[%s41 + $0x1b8] sm:$0xff]
  %v1245 = vld [vmem:[%s41 + $0x1c8] sm:$0xff]
  %v1246 = vld [vmem:[%s41 + $0x1d0] sm:$0xff]
  %v1247 = vld [vmem:[%s41 + $0x1e0] sm:$0xff]
  %v1248 = vld [vmem:[%s41 + $0x1e8] sm:$0xff]
  %v1249 = vld [vmem:[%s41 + $0x1f8] sm:$0xff]
  %v1250 = vld [vmem:[%s41 + $0x200] sm:$0xff]
  %v1251 = vld [vmem:[%s41 + $0x210] sm:$0xff]
  %v1252 = vld [vmem:[%s41 + $0x218] sm:$0xff]
  %v1253 = vld [vmem:[%s41 + $0x228] sm:$0xff]
  %v1254 = vld [vmem:[%s41 + $0x230] sm:$0xff]
  %v1255 = vld [vmem:[%s41 + $0x240] sm:$0xff]
  %v1256 = vld [vmem:[%s41 + $0x248] sm:$0xff]
  %v1257 = vld [vmem:[%s41 + $0x258] sm:$0xff]
  %v1258 = vld [vmem:[%s41 + $0x260] sm:$0xff]
  %v1259 = vld [vmem:[%s41 + $0x270] sm:$0xff]
  %v1260 = vld [vmem:[%s41 + $0x278] sm:$0xff]
  %v1261 = vld [vmem:[%s41 + $0x288] sm:$0xff]
  %v1262 = vld [vmem:[%s41 + $0x290] sm:$0xff]
  %v1263 = vld [vmem:[%s41 + $0x2a0] sm:$0xff]
  %v1264 = vld [vmem:[%s41 + $0x2a8] sm:$0xff]
  %v1265 = vld [vmem:[%s41 + $0x2b8] sm:$0xff]
  %v1266 = vld [vmem:[%s41 + $0x2c0] sm:$0xff]
  %v1267 = vld [vmem:[%s41 + $0x2d0] sm:$0xff]
  %v1268 = vld [vmem:[%s41 + $0x2d8] sm:$0xff]
  %v1269 = vld [vmem:[%s41 + $0x2e8] sm:$0xff]
  %v1270 = vld [vmem:[%s41 + $0x2f0] sm:$0xff]
  %v1271 = vld [vmem:[%s41 + $0x300] sm:$0xff]
  %v1272 = vld [vmem:[%s41 + $0x308] sm:$0xff]
  %v1273 = vld [vmem:[%s41 + $0x318] sm:$0xff]
  %v1274 = vld [vmem:[%s41 + $0x320] sm:$0xff]
  %1339 = vrot.lane.b32.xlu0 %v1211, 12
  %v1340 = vpop.permute.xlu0 %1339
  %1341 = vrot.lane.b32.xlu0 %v1212, 12
  %v1342 = vpop.permute.xlu0 %1341
  %1343 = vrot.lane.b32.xlu0 %v1213, 12
  %v1344 = vpop.permute.xlu0 %1343
  %1345 = vrot.lane.b32.xlu0 %v1214, 12
  %v1346 = vpop.permute.xlu0 %1345
  %1347 = vrot.lane.b32.xlu0 %v1215, 12
  %v1348 = vpop.permute.xlu0 %1347
  %1349 = vrot.lane.b32.xlu0 %v1216, 12
  %v1350 = vpop.permute.xlu0 %1349
  %1351 = vrot.lane.b32.xlu0 %v1217, 12
  %v1352 = vpop.permute.xlu0 %1351
  %1353 = vrot.lane.b32.xlu0 %v1218, 12
  %v1354 = vpop.permute.xlu0 %1353
  %1355 = vrot.lane.b32.xlu0 %v1219, 12
  %v1356 = vpop.permute.xlu0 %1355
  %1357 = vrot.lane.b32.xlu0 %v1220, 12
  %v1358 = vpop.permute.xlu0 %1357
  %1359 = vrot.lane.b32.xlu0 %v1221, 12
  %v1360 = vpop.permute.xlu0 %1359
  %1361 = vrot.lane.b32.xlu0 %v1222, 12
  %v1362 = vpop.permute.xlu0 %1361
  %1363 = vrot.lane.b32.xlu0 %v1223, 12
  %v1364 = vpop.permute.xlu0 %1363
  %1365 = vrot.lane.b32.xlu0 %v1224, 12
  %v1366 = vpop.permute.xlu0 %1365
  %1367 = vrot.lane.b32.xlu0 %v1225, 12
  %v1368 = vpop.permute.xlu0 %1367
  %1369 = vrot.lane.b32.xlu0 %v1226, 12
  %v1370 = vpop.permute.xlu0 %1369
  %1371 = vrot.lane.b32.xlu0 %v1227, 12
  %v1372 = vpop.permute.xlu0 %1371
  %1373 = vrot.lane.b32.xlu0 %v1228, 12
  %v1374 = vpop.permute.xlu0 %1373
  %1375 = vrot.lane.b32.xlu0 %v1229, 12
  %v1376 = vpop.permute.xlu0 %1375
  %1377 = vrot.lane.b32.xlu0 %v1230, 12
  %v1378 = vpop.permute.xlu0 %1377
  %1379 = vrot.lane.b32.xlu0 %v1231, 12
  %v1380 = vpop.permute.xlu0 %1379
  %1381 = vrot.lane.b32.xlu0 %v1232, 12
  %v1382 = vpop.permute.xlu0 %1381
  %1383 = vrot.lane.b32.xlu0 %v1233, 12
  %v1384 = vpop.permute.xlu0 %1383
  %1385 = vrot.lane.b32.xlu0 %v1234, 12
  %v1386 = vpop.permute.xlu0 %1385
  %1387 = vrot.lane.b32.xlu0 %v1235, 12
  %v1388 = vpop.permute.xlu0 %1387
  %1389 = vrot.lane.b32.xlu0 %v1236, 12
  %v1390 = vpop.permute.xlu0 %1389
  %1391 = vrot.lane.b32.xlu0 %v1237, 12
  %v1392 = vpop.permute.xlu0 %1391
  %1393 = vrot.lane.b32.xlu0 %v1238, 12
  %v1394 = vpop.permute.xlu0 %1393
  %1395 = vrot.lane.b32.xlu0 %v1239, 12
  %v1396 = vpop.permute.xlu0 %1395
  %1397 = vrot.lane.b32.xlu0 %v1240, 12
  %v1398 = vpop.permute.xlu0 %1397
  %1399 = vrot.lane.b32.xlu0 %v1241, 12
  %v1400 = vpop.permute.xlu0 %1399
  %1401 = vrot.lane.b32.xlu0 %v1242, 12
  %v1402 = vpop.permute.xlu0 %1401
  %1403 = vrot.lane.b32.xlu0 %v1243, 12
  %v1404 = vpop.permute.xlu0 %1403
  %1405 = vrot.lane.b32.xlu0 %v1244, 12
  %v1406 = vpop.permute.xlu0 %1405
  %1407 = vrot.lane.b32.xlu0 %v1245, 12
  %v1408 = vpop.permute.xlu0 %1407
  %1409 = vrot.lane.b32.xlu0 %v1246, 12
  %v1410 = vpop.permute.xlu0 %1409
  %1411 = vrot.lane.b32.xlu0 %v1247, 12
  %v1412 = vpop.permute.xlu0 %1411
  %1413 = vrot.lane.b32.xlu0 %v1248, 12
  %v1414 = vpop.permute.xlu0 %1413
  %1415 = vrot.lane.b32.xlu0 %v1249, 12
  %v1416 = vpop.permute.xlu0 %1415
  %1417 = vrot.lane.b32.xlu0 %v1250, 12
  %v1418 = vpop.permute.xlu0 %1417
  %1419 = vrot.lane.b32.xlu0 %v1251, 12
  %v1420 = vpop.permute.xlu0 %1419
  %1421 = vrot.lane.b32.xlu0 %v1252, 12
  %v1422 = vpop.permute.xlu0 %1421
  %1423 = vrot.lane.b32.xlu0 %v1253, 12
  %v1424 = vpop.permute.xlu0 %1423
  %1425 = vrot.lane.b32.xlu0 %v1254, 12
  %v1426 = vpop.permute.xlu0 %1425
  %1427 = vrot.lane.b32.xlu0 %v1255, 12
  %v1428 = vpop.permute.xlu0 %1427
  %1429 = vrot.lane.b32.xlu0 %v1256, 12
  %v1430 = vpop.permute.xlu0 %1429
  %1431 = vrot.lane.b32.xlu0 %v1257, 12
  %v1432 = vpop.permute.xlu0 %1431
  %1433 = vrot.lane.b32.xlu0 %v1258, 12
  %v1434 = vpop.permute.xlu0 %1433
  %1435 = vrot.lane.b32.xlu0 %v1259, 12
  %v1436 = vpop.permute.xlu0 %1435
  %1437 = vrot.lane.b32.xlu0 %v1260, 12
  %v1438 = vpop.permute.xlu0 %1437
  %1439 = vrot.lane.b32.xlu0 %v1261, 12
  %v1440 = vpop.permute.xlu0 %1439
  %1441 = vrot.lane.b32.xlu0 %v1262, 12
  %v1442 = vpop.permute.xlu0 %1441
  %1443 = vrot.lane.b32.xlu0 %v1263, 12
  %v1444 = vpop.permute.xlu0 %1443
  %1445 = vrot.lane.b32.xlu0 %v1264, 12
  %v1446 = vpop.permute.xlu0 %1445
  %1447 = vrot.lane.b32.xlu0 %v1265, 12
  %v1448 = vpop.permute.xlu0 %1447
  %1449 = vrot.lane.b32.xlu0 %v1266, 12
  %v1450 = vpop.permute.xlu0 %1449
  %1451 = vrot.lane.b32.xlu0 %v1267, 12
  %v1452 = vpop.permute.xlu0 %1451
  %1453 = vrot.lane.b32.xlu0 %v1268, 12
  %v1454 = vpop.permute.xlu0 %1453
  %1455 = vrot.lane.b32.xlu0 %v1269, 12
  %v1456 = vpop.permute.xlu0 %1455
  %1457 = vrot.lane.b32.xlu0 %v1270, 12
  %v1458 = vpop.permute.xlu0 %1457
  %1459 = vrot.lane.b32.xlu0 %v1271, 12
  %v1460 = vpop.permute.xlu0 %1459
  %1461 = vrot.lane.b32.xlu0 %v1272, 12
  %v1462 = vpop.permute.xlu0 %1461
  %1463 = vrot.lane.b32.xlu0 %v1273, 12
  %v1464 = vpop.permute.xlu0 %1463
  %1465 = vrot.lane.b32.xlu0 %v1274, 12
  %v1466 = vpop.permute.xlu0 %1465
  %vm1531 = vcmask 130144
  %1532 = vst.msk [vmem:[#allocation4] sm:$0xff] %vm1531, %v1340
  %1533 = vst.msk [vmem:[#allocation4 + $0x8] sm:$0xff] %vm1531, %v1342
  %1534 = vst.msk [vmem:[#allocation4 + $0x10] sm:$0xff] %vm1531, %v1344
  %1535 = vst.msk [vmem:[#allocation4 + $0x18] sm:$0xff] %vm1531, %v1346
  %1536 = vst.msk [vmem:[#allocation4 + $0x20] sm:$0xff] %vm1531, %v1348
  %1537 = vst.msk [vmem:[#allocation4 + $0x28] sm:$0xff] %vm1531, %v1350
  %1538 = vst.msk [vmem:[#allocation4 + $0x30] sm:$0xff] %vm1531, %v1352
  %1539 = vst.msk [vmem:[#allocation4 + $0x38] sm:$0xff] %vm1531, %v1354
  %1540 = vst.msk [vmem:[#allocation4 + $0x40] sm:$0xff] %vm1531, %v1356
  %1541 = vst.msk [vmem:[#allocation4 + $0x48] sm:$0xff] %vm1531, %v1358
  %1542 = vst.msk [vmem:[#allocation4 + $0x50] sm:$0xff] %vm1531, %v1360
  %1543 = vst.msk [vmem:[#allocation4 + $0x58] sm:$0xff] %vm1531, %v1362
  %1544 = vst.msk [vmem:[#allocation4 + $0x60] sm:$0xff] %vm1531, %v1364
  %1545 = vst.msk [vmem:[#allocation4 + $0x68] sm:$0xff] %vm1531, %v1366
  %1546 = vst.msk [vmem:[#allocation4 + $0x70] sm:$0xff] %vm1531, %v1368
  %1547 = vst.msk [vmem:[#allocation4 + $0x78] sm:$0xff] %vm1531, %v1370
  %1548 = vst.msk [vmem:[#allocation4 + $0x80] sm:$0xff] %vm1531, %v1372
  %1549 = vst.msk [vmem:[#allocation4 + $0x88] sm:$0xff] %vm1531, %v1374
  %1550 = vst.msk [vmem:[#allocation4 + $0x90] sm:$0xff] %vm1531, %v1376
  %1551 = vst.msk [vmem:[#allocation4 + $0x98] sm:$0xff] %vm1531, %v1378
  %1552 = vst.msk [vmem:[#allocation4 + $0xa0] sm:$0xff] %vm1531, %v1380
  %1553 = vst.msk [vmem:[#allocation4 + $0xa8] sm:$0xff] %vm1531, %v1382
  %1554 = vst.msk [vmem:[#allocation4 + $0xb0] sm:$0xff] %vm1531, %v1384
  %1555 = vst.msk [vmem:[#allocation4 + $0xb8] sm:$0xff] %vm1531, %v1386
  %1556 = vst.msk [vmem:[#allocation4 + $0xc0] sm:$0xff] %vm1531, %v1388
  %1557 = vst.msk [vmem:[#allocation4 + $0xc8] sm:$0xff] %vm1531, %v1390
  %1558 = vst.msk [vmem:[#allocation4 + $0xd0] sm:$0xff] %vm1531, %v1392
  %1559 = vst.msk [vmem:[#allocation4 + $0xd8] sm:$0xff] %vm1531, %v1394
  %1560 = vst.msk [vmem:[#allocation4 + $0xe0] sm:$0xff] %vm1531, %v1396
  %1561 = vst.msk [vmem:[#allocation4 + $0xe8] sm:$0xff] %vm1531, %v1398
  %1562 = vst.msk [vmem:[#allocation4 + $0xf0] sm:$0xff] %vm1531, %v1400
  %1563 = vst.msk [vmem:[#allocation4 + $0xf8] sm:$0xff] %vm1531, %v1402
  %1564 = vst.msk [vmem:[#allocation4 + $0x100] sm:$0xff] %vm1531, %v1404
  %1565 = vst.msk [vmem:[#allocation4 + $0x108] sm:$0xff] %vm1531, %v1406
  %1566 = vst.msk [vmem:[#allocation4 + $0x110] sm:$0xff] %vm1531, %v1408
  %1567 = vst.msk [vmem:[#allocation4 + $0x118] sm:$0xff] %vm1531, %v1410
  %1568 = vst.msk [vmem:[#allocation4 + $0x120] sm:$0xff] %vm1531, %v1412
  %1569 = vst.msk [vmem:[#allocation4 + $0x128] sm:$0xff] %vm1531, %v1414
  %1570 = vst.msk [vmem:[#allocation4 + $0x130] sm:$0xff] %vm1531, %v1416
  %1571 = vst.msk [vmem:[#allocation4 + $0x138] sm:$0xff] %vm1531, %v1418
  %1572 = vst.msk [vmem:[#allocation4 + $0x140] sm:$0xff] %vm1531, %v1420
  %1573 = vst.msk [vmem:[#allocation4 + $0x148] sm:$0xff] %vm1531, %v1422
  %1574 = vst.msk [vmem:[#allocation4 + $0x150] sm:$0xff] %vm1531, %v1424
  %1575 = vst.msk [vmem:[#allocation4 + $0x158] sm:$0xff] %vm1531, %v1426
  %1576 = vst.msk [vmem:[#allocation4 + $0x160] sm:$0xff] %vm1531, %v1428
  %1577 = vst.msk [vmem:[#allocation4 + $0x168] sm:$0xff] %vm1531, %v1430
  %1578 = vst.msk [vmem:[#allocation4 + $0x170] sm:$0xff] %vm1531, %v1432
  %1579 = vst.msk [vmem:[#allocation4 + $0x178] sm:$0xff] %vm1531, %v1434
  %1580 = vst.msk [vmem:[#allocation4 + $0x180] sm:$0xff] %vm1531, %v1436
  %1581 = vst.msk [vmem:[#allocation4 + $0x188] sm:$0xff] %vm1531, %v1438
  %1582 = vst.msk [vmem:[#allocation4 + $0x190] sm:$0xff] %vm1531, %v1440
  %1583 = vst.msk [vmem:[#allocation4 + $0x198] sm:$0xff] %vm1531, %v1442
  %1584 = vst.msk [vmem:[#allocation4 + $0x1a0] sm:$0xff] %vm1531, %v1444
  %1585 = vst.msk [vmem:[#allocation4 + $0x1a8] sm:$0xff] %vm1531, %v1446
  %1586 = vst.msk [vmem:[#allocation4 + $0x1b0] sm:$0xff] %vm1531, %v1448
  %1587 = vst.msk [vmem:[#allocation4 + $0x1b8] sm:$0xff] %vm1531, %v1450
  %1588 = vst.msk [vmem:[#allocation4 + $0x1c0] sm:$0xff] %vm1531, %v1452
  %1589 = vst.msk [vmem:[#allocation4 + $0x1c8] sm:$0xff] %vm1531, %v1454
  %1590 = vst.msk [vmem:[#allocation4 + $0x1d0] sm:$0xff] %vm1531, %v1456
  %1591 = vst.msk [vmem:[#allocation4 + $0x1d8] sm:$0xff] %vm1531, %v1458
  %1592 = vst.msk [vmem:[#allocation4 + $0x1e0] sm:$0xff] %vm1531, %v1460
  %1593 = vst.msk [vmem:[#allocation4 + $0x1e8] sm:$0xff] %vm1531, %v1462
  %1594 = vst.msk [vmem:[#allocation4 + $0x1f0] sm:$0xff] %vm1531, %v1464
  %1595 = vst.msk [vmem:[#allocation4 + $0x1f8] sm:$0xff] %vm1531, %v1466
  %v1596 = vld [vmem:[%s41 + $0x1] sm:$0xff]
  %v1597 = vld [vmem:[%s41 + $0x9] sm:$0xff]
  %v1598 = vld [vmem:[%s41 + $0x19] sm:$0xff]
  %v1599 = vld [vmem:[%s41 + $0x21] sm:$0xff]
  %v1600 = vld [vmem:[%s41 + $0x31] sm:$0xff]
  %v1601 = vld [vmem:[%s41 + $0x39] sm:$0xff]
  %v1602 = vld [vmem:[%s41 + $0x49] sm:$0xff]
  %v1603 = vld [vmem:[%s41 + $0x51] sm:$0xff]
  %v1604 = vld [vmem:[%s41 + $0x61] sm:$0xff]
  %v1605 = vld [vmem:[%s41 + $0x69] sm:$0xff]
  %v1606 = vld [vmem:[%s41 + $0x79] sm:$0xff]
  %v1607 = vld [vmem:[%s41 + $0x81] sm:$0xff]
  %v1608 = vld [vmem:[%s41 + $0x91] sm:$0xff]
  %v1609 = vld [vmem:[%s41 + $0x99] sm:$0xff]
  %v1610 = vld [vmem:[%s41 + $0xa9] sm:$0xff]
  %v1611 = vld [vmem:[%s41 + $0xb1] sm:$0xff]
  %v1612 = vld [vmem:[%s41 + $0xc1] sm:$0xff]
  %v1613 = vld [vmem:[%s41 + $0xc9] sm:$0xff]
  %v1614 = vld [vmem:[%s41 + $0xd9] sm:$0xff]
  %v1615 = vld [vmem:[%s41 + $0xe1] sm:$0xff]
  %v1616 = vld [vmem:[%s41 + $0xf1] sm:$0xff]
  %v1617 = vld [vmem:[%s41 + $0xf9] sm:$0xff]
  %v1618 = vld [vmem:[%s41 + $0x109] sm:$0xff]
  %v1619 = vld [vmem:[%s41 + $0x111] sm:$0xff]
  %v1620 = vld [vmem:[%s41 + $0x121] sm:$0xff]
  %v1621 = vld [vmem:[%s41 + $0x129] sm:$0xff]
  %v1622 = vld [vmem:[%s41 + $0x139] sm:$0xff]
  %v1623 = vld [vmem:[%s41 + $0x141] sm:$0xff]
  %v1624 = vld [vmem:[%s41 + $0x151] sm:$0xff]
  %v1625 = vld [vmem:[%s41 + $0x159] sm:$0xff]
  %v1626 = vld [vmem:[%s41 + $0x169] sm:$0xff]
  %v1627 = vld [vmem:[%s41 + $0x171] sm:$0xff]
  %v1628 = vld [vmem:[%s41 + $0x1b1] sm:$0xff]
  %v1629 = vld [vmem:[%s41 + $0x1b9] sm:$0xff]
  %v1630 = vld [vmem:[%s41 + $0x1c9] sm:$0xff]
  %v1631 = vld [vmem:[%s41 + $0x1d1] sm:$0xff]
  %v1632 = vld [vmem:[%s41 + $0x1e1] sm:$0xff]
  %v1633 = vld [vmem:[%s41 + $0x1e9] sm:$0xff]
  %v1634 = vld [vmem:[%s41 + $0x1f9] sm:$0xff]
  %v1635 = vld [vmem:[%s41 + $0x201] sm:$0xff]
  %v1636 = vld [vmem:[%s41 + $0x211] sm:$0xff]
  %v1637 = vld [vmem:[%s41 + $0x219] sm:$0xff]
  %v1638 = vld [vmem:[%s41 + $0x229] sm:$0xff]
  %v1639 = vld [vmem:[%s41 + $0x231] sm:$0xff]
  %v1640 = vld [vmem:[%s41 + $0x241] sm:$0xff]
  %v1641 = vld [vmem:[%s41 + $0x249] sm:$0xff]
  %v1642 = vld [vmem:[%s41 + $0x259] sm:$0xff]
  %v1643 = vld [vmem:[%s41 + $0x261] sm:$0xff]
  %v1644 = vld [vmem:[%s41 + $0x271] sm:$0xff]
  %v1645 = vld [vmem:[%s41 + $0x279] sm:$0xff]
  %v1646 = vld [vmem:[%s41 + $0x289] sm:$0xff]
  %v1647 = vld [vmem:[%s41 + $0x291] sm:$0xff]
  %v1648 = vld [vmem:[%s41 + $0x2a1] sm:$0xff]
  %v1649 = vld [vmem:[%s41 + $0x2a9] sm:$0xff]
  %v1650 = vld [vmem:[%s41 + $0x2b9] sm:$0xff]
  %v1651 = vld [vmem:[%s41 + $0x2c1] sm:$0xff]
  %v1652 = vld [vmem:[%s41 + $0x2d1] sm:$0xff]
  %v1653 = vld [vmem:[%s41 + $0x2d9] sm:$0xff]
  %v1654 = vld [vmem:[%s41 + $0x2e9] sm:$0xff]
  %v1655 = vld [vmem:[%s41 + $0x2f1] sm:$0xff]
  %v1656 = vld [vmem:[%s41 + $0x301] sm:$0xff]
  %v1657 = vld [vmem:[%s41 + $0x309] sm:$0xff]
  %v1658 = vld [vmem:[%s41 + $0x319] sm:$0xff]
  %v1659 = vld [vmem:[%s41 + $0x321] sm:$0xff]
  %1724 = vrot.lane.b32.xlu0 %v1596, 16
  %v1725 = vpop.permute.xlu0 %1724
  %1726 = vrot.lane.b32.xlu0 %v1597, 16
  %v1727 = vpop.permute.xlu0 %1726
  %1728 = vrot.lane.b32.xlu0 %v1598, 16
  %v1729 = vpop.permute.xlu0 %1728
  %1730 = vrot.lane.b32.xlu0 %v1599, 16
  %v1731 = vpop.permute.xlu0 %1730
  %1732 = vrot.lane.b32.xlu0 %v1600, 16
  %v1733 = vpop.permute.xlu0 %1732
  %1734 = vrot.lane.b32.xlu0 %v1601, 16
  %v1735 = vpop.permute.xlu0 %1734
  %1736 = vrot.lane.b32.xlu0 %v1602, 16
  %v1737 = vpop.permute.xlu0 %1736
  %1738 = vrot.lane.b32.xlu0 %v1603, 16
  %v1739 = vpop.permute.xlu0 %1738
  %1740 = vrot.lane.b32.xlu0 %v1604, 16
  %v1741 = vpop.permute.xlu0 %1740
  %1742 = vrot.lane.b32.xlu0 %v1605, 16
  %v1743 = vpop.permute.xlu0 %1742
  %1744 = vrot.lane.b32.xlu0 %v1606, 16
  %v1745 = vpop.permute.xlu0 %1744
  %1746 = vrot.lane.b32.xlu0 %v1607, 16
  %v1747 = vpop.permute.xlu0 %1746
  %1748 = vrot.lane.b32.xlu0 %v1608, 16
  %v1749 = vpop.permute.xlu0 %1748
  %1750 = vrot.lane.b32.xlu0 %v1609, 16
  %v1751 = vpop.permute.xlu0 %1750
  %1752 = vrot.lane.b32.xlu0 %v1610, 16
  %v1753 = vpop.permute.xlu0 %1752
  %1754 = vrot.lane.b32.xlu0 %v1611, 16
  %v1755 = vpop.permute.xlu0 %1754
  %1756 = vrot.lane.b32.xlu0 %v1612, 16
  %v1757 = vpop.permute.xlu0 %1756
  %1758 = vrot.lane.b32.xlu0 %v1613, 16
  %v1759 = vpop.permute.xlu0 %1758
  %1760 = vrot.lane.b32.xlu0 %v1614, 16
  %v1761 = vpop.permute.xlu0 %1760
  %1762 = vrot.lane.b32.xlu0 %v1615, 16
  %v1763 = vpop.permute.xlu0 %1762
  %1764 = vrot.lane.b32.xlu0 %v1616, 16
  %v1765 = vpop.permute.xlu0 %1764
  %1766 = vrot.lane.b32.xlu0 %v1617, 16
  %v1767 = vpop.permute.xlu0 %1766
  %1768 = vrot.lane.b32.xlu0 %v1618, 16
  %v1769 = vpop.permute.xlu0 %1768
  %1770 = vrot.lane.b32.xlu0 %v1619, 16
  %v1771 = vpop.permute.xlu0 %1770
  %1772 = vrot.lane.b32.xlu0 %v1620, 16
  %v1773 = vpop.permute.xlu0 %1772
  %1774 = vrot.lane.b32.xlu0 %v1621, 16
  %v1775 = vpop.permute.xlu0 %1774
  %1776 = vrot.lane.b32.xlu0 %v1622, 16
  %v1777 = vpop.permute.xlu0 %1776
  %1778 = vrot.lane.b32.xlu0 %v1623, 16
  %v1779 = vpop.permute.xlu0 %1778
  %1780 = vrot.lane.b32.xlu0 %v1624, 16
  %v1781 = vpop.permute.xlu0 %1780
  %1782 = vrot.lane.b32.xlu0 %v1625, 16
  %v1783 = vpop.permute.xlu0 %1782
  %1784 = vrot.lane.b32.xlu0 %v1626, 16
  %v1785 = vpop.permute.xlu0 %1784
  %1786 = vrot.lane.b32.xlu0 %v1627, 16
  %v1787 = vpop.permute.xlu0 %1786
  %1788 = vrot.lane.b32.xlu0 %v1628, 16
  %v1789 = vpop.permute.xlu0 %1788
  %1790 = vrot.lane.b32.xlu0 %v1629, 16
  %v1791 = vpop.permute.xlu0 %1790
  %1792 = vrot.lane.b32.xlu0 %v1630, 16
  %v1793 = vpop.permute.xlu0 %1792
  %1794 = vrot.lane.b32.xlu0 %v1631, 16
  %v1795 = vpop.permute.xlu0 %1794
  %1796 = vrot.lane.b32.xlu0 %v1632, 16
  %v1797 = vpop.permute.xlu0 %1796
  %1798 = vrot.lane.b32.xlu0 %v1633, 16
  %v1799 = vpop.permute.xlu0 %1798
  %1800 = vrot.lane.b32.xlu0 %v1634, 16
  %v1801 = vpop.permute.xlu0 %1800
  %1802 = vrot.lane.b32.xlu0 %v1635, 16
  %v1803 = vpop.permute.xlu0 %1802
  %1804 = vrot.lane.b32.xlu0 %v1636, 16
  %v1805 = vpop.permute.xlu0 %1804
  %1806 = vrot.lane.b32.xlu0 %v1637, 16
  %v1807 = vpop.permute.xlu0 %1806
  %1808 = vrot.lane.b32.xlu0 %v1638, 16
  %v1809 = vpop.permute.xlu0 %1808
  %1810 = vrot.lane.b32.xlu0 %v1639, 16
  %v1811 = vpop.permute.xlu0 %1810
  %1812 = vrot.lane.b32.xlu0 %v1640, 16
  %v1813 = vpop.permute.xlu0 %1812
  %1814 = vrot.lane.b32.xlu0 %v1641, 16
  %v1815 = vpop.permute.xlu0 %1814
  %1816 = vrot.lane.b32.xlu0 %v1642, 16
  %v1817 = vpop.permute.xlu0 %1816
  %1818 = vrot.lane.b32.xlu0 %v1643, 16
  %v1819 = vpop.permute.xlu0 %1818
  %1820 = vrot.lane.b32.xlu0 %v1644, 16
  %v1821 = vpop.permute.xlu0 %1820
  %1822 = vrot.lane.b32.xlu0 %v1645, 16
  %v1823 = vpop.permute.xlu0 %1822
  %1824 = vrot.lane.b32.xlu0 %v1646, 16
  %v1825 = vpop.permute.xlu0 %1824
  %1826 = vrot.lane.b32.xlu0 %v1647, 16
  %v1827 = vpop.permute.xlu0 %1826
  %1828 = vrot.lane.b32.xlu0 %v1648, 16
  %v1829 = vpop.permute.xlu0 %1828
  %1830 = vrot.lane.b32.xlu0 %v1649, 16
  %v1831 = vpop.permute.xlu0 %1830
  %1832 = vrot.lane.b32.xlu0 %v1650, 16
  %v1833 = vpop.permute.xlu0 %1832
  %1834 = vrot.lane.b32.xlu0 %v1651, 16
  %v1835 = vpop.permute.xlu0 %1834
  %1836 = vrot.lane.b32.xlu0 %v1652, 16
  %v1837 = vpop.permute.xlu0 %1836
  %1838 = vrot.lane.b32.xlu0 %v1653, 16
  %v1839 = vpop.permute.xlu0 %1838
  %1840 = vrot.lane.b32.xlu0 %v1654, 16
  %v1841 = vpop.permute.xlu0 %1840
  %1842 = vrot.lane.b32.xlu0 %v1655, 16
  %v1843 = vpop.permute.xlu0 %1842
  %1844 = vrot.lane.b32.xlu0 %v1656, 16
  %v1845 = vpop.permute.xlu0 %1844
  %1846 = vrot.lane.b32.xlu0 %v1657, 16
  %v1847 = vpop.permute.xlu0 %1846
  %1848 = vrot.lane.b32.xlu0 %v1658, 16
  %v1849 = vpop.permute.xlu0 %1848
  %1850 = vrot.lane.b32.xlu0 %v1659, 16
  %v1851 = vpop.permute.xlu0 %1850
  %vm1916 = vcmask 162944
  %1917 = vst.msk [vmem:[#allocation4] sm:$0xff] %vm1916, %v1725
  %1918 = vst.msk [vmem:[#allocation4 + $0x8] sm:$0xff] %vm1916, %v1727
  %1919 = vst.msk [vmem:[#allocation4 + $0x10] sm:$0xff] %vm1916, %v1729
  %1920 = vst.msk [vmem:[#allocation4 + $0x18] sm:$0xff] %vm1916, %v1731
  %1921 = vst.msk [vmem:[#allocation4 + $0x20] sm:$0xff] %vm1916, %v1733
  %1922 = vst.msk [vmem:[#allocation4 + $0x28] sm:$0xff] %vm1916, %v1735
  %1923 = vst.msk [vmem:[#allocation4 + $0x30] sm:$0xff] %vm1916, %v1737
  %1924 = vst.msk [vmem:[#allocation4 + $0x38] sm:$0xff] %vm1916, %v1739
  %1925 = vst.msk [vmem:[#allocation4 + $0x40] sm:$0xff] %vm1916, %v1741
  %1926 = vst.msk [vmem:[#allocation4 + $0x48] sm:$0xff] %vm1916, %v1743
  %1927 = vst.msk [vmem:[#allocation4 + $0x50] sm:$0xff] %vm1916, %v1745
  %1928 = vst.msk [vmem:[#allocation4 + $0x58] sm:$0xff] %vm1916, %v1747
  %1929 = vst.msk [vmem:[#allocation4 + $0x60] sm:$0xff] %vm1916, %v1749
  %1930 = vst.msk [vmem:[#allocation4 + $0x68] sm:$0xff] %vm1916, %v1751
  %1931 = vst.msk [vmem:[#allocation4 + $0x70] sm:$0xff] %vm1916, %v1753
  %1932 = vst.msk [vmem:[#allocation4 + $0x78] sm:$0xff] %vm1916, %v1755
  %1933 = vst.msk [vmem:[#allocation4 + $0x80] sm:$0xff] %vm1916, %v1757
  %1934 = vst.msk [vmem:[#allocation4 + $0x88] sm:$0xff] %vm1916, %v1759
  %1935 = vst.msk [vmem:[#allocation4 + $0x90] sm:$0xff] %vm1916, %v1761
  %1936 = vst.msk [vmem:[#allocation4 + $0x98] sm:$0xff] %vm1916, %v1763
  %1937 = vst.msk [vmem:[#allocation4 + $0xa0] sm:$0xff] %vm1916, %v1765
  %1938 = vst.msk [vmem:[#allocation4 + $0xa8] sm:$0xff] %vm1916, %v1767
  %1939 = vst.msk [vmem:[#allocation4 + $0xb0] sm:$0xff] %vm1916, %v1769
  %1940 = vst.msk [vmem:[#allocation4 + $0xb8] sm:$0xff] %vm1916, %v1771
  %1941 = vst.msk [vmem:[#allocation4 + $0xc0] sm:$0xff] %vm1916, %v1773
  %1942 = vst.msk [vmem:[#allocation4 + $0xc8] sm:$0xff] %vm1916, %v1775
  %1943 = vst.msk [vmem:[#allocation4 + $0xd0] sm:$0xff] %vm1916, %v1777
  %1944 = vst.msk [vmem:[#allocation4 + $0xd8] sm:$0xff] %vm1916, %v1779
  %1945 = vst.msk [vmem:[#allocation4 + $0xe0] sm:$0xff] %vm1916, %v1781
  %1946 = vst.msk [vmem:[#allocation4 + $0xe8] sm:$0xff] %vm1916, %v1783
  %1947 = vst.msk [vmem:[#allocation4 + $0xf0] sm:$0xff] %vm1916, %v1785
  %1948 = vst.msk [vmem:[#allocation4 + $0xf8] sm:$0xff] %vm1916, %v1787
  %1949 = vst.msk [vmem:[#allocation4 + $0x100] sm:$0xff] %vm1916, %v1789
  %1950 = vst.msk [vmem:[#allocation4 + $0x108] sm:$0xff] %vm1916, %v1791
  %1951 = vst.msk [vmem:[#allocation4 + $0x110] sm:$0xff] %vm1916, %v1793
  %1952 = vst.msk [vmem:[#allocation4 + $0x118] sm:$0xff] %vm1916, %v1795
  %1953 = vst.msk [vmem:[#allocation4 + $0x120] sm:$0xff] %vm1916, %v1797
  %1954 = vst.msk [vmem:[#allocation4 + $0x128] sm:$0xff] %vm1916, %v1799
  %1955 = vst.msk [vmem:[#allocation4 + $0x130] sm:$0xff] %vm1916, %v1801
  %1956 = vst.msk [vmem:[#allocation4 + $0x138] sm:$0xff] %vm1916, %v1803
  %1957 = vst.msk [vmem:[#allocation4 + $0x140] sm:$0xff] %vm1916, %v1805
  %1958 = vst.msk [vmem:[#allocation4 + $0x148] sm:$0xff] %vm1916, %v1807
  %1959 = vst.msk [vmem:[#allocation4 + $0x150] sm:$0xff] %vm1916, %v1809
  %1960 = vst.msk [vmem:[#allocation4 + $0x158] sm:$0xff] %vm1916, %v1811
  %1961 = vst.msk [vmem:[#allocation4 + $0x160] sm:$0xff] %vm1916, %v1813
  %1962 = vst.msk [vmem:[#allocation4 + $0x168] sm:$0xff] %vm1916, %v1815
  %1963 = vst.msk [vmem:[#allocation4 + $0x170] sm:$0xff] %vm1916, %v1817
  %1964 = vst.msk [vmem:[#allocation4 + $0x178] sm:$0xff] %vm1916, %v1819
  %1965 = vst.msk [vmem:[#allocation4 + $0x180] sm:$0xff] %vm1916, %v1821
  %1966 = vst.msk [vmem:[#allocation4 + $0x188] sm:$0xff] %vm1916, %v1823
  %1967 = vst.msk [vmem:[#allocation4 + $0x190] sm:$0xff] %vm1916, %v1825
  %1968 = vst.msk [vmem:[#allocation4 + $0x198] sm:$0xff] %vm1916, %v1827
  %1969 = vst.msk [vmem:[#allocation4 + $0x1a0] sm:$0xff] %vm1916, %v1829
  %1970 = vst.msk [vmem:[#allocation4 + $0x1a8] sm:$0xff] %vm1916, %v1831
  %1971 = vst.msk [vmem:[#allocation4 + $0x1b0] sm:$0xff] %vm1916, %v1833
  %1972 = vst.msk [vmem:[#allocation4 + $0x1b8] sm:$0xff] %vm1916, %v1835
  %1973 = vst.msk [vmem:[#allocation4 + $0x1c0] sm:$0xff] %vm1916, %v1837
  %1974 = vst.msk [vmem:[#allocation4 + $0x1c8] sm:$0xff] %vm1916, %v1839
  %1975 = vst.msk [vmem:[#allocation4 + $0x1d0] sm:$0xff] %vm1916, %v1841
  %1976 = vst.msk [vmem:[#allocation4 + $0x1d8] sm:$0xff] %vm1916, %v1843
  %1977 = vst.msk [vmem:[#allocation4 + $0x1e0] sm:$0xff] %vm1916, %v1845
  %1978 = vst.msk [vmem:[#allocation4 + $0x1e8] sm:$0xff] %vm1916, %v1847
  %1979 = vst.msk [vmem:[#allocation4 + $0x1f0] sm:$0xff] %vm1916, %v1849
  %1980 = vst.msk [vmem:[#allocation4 + $0x1f8] sm:$0xff] %vm1916, %v1851
  %v1981 = vld [vmem:[%s41 + $0x2] sm:$0xff]
  %v1982 = vld [vmem:[%s41 + $0xa] sm:$0xff]
  %v1983 = vld [vmem:[%s41 + $0x1a] sm:$0xff]
  %v1984 = vld [vmem:[%s41 + $0x22] sm:$0xff]
  %v1985 = vld [vmem:[%s41 + $0x32] sm:$0xff]
  %v1986 = vld [vmem:[%s41 + $0x3a] sm:$0xff]
  %v1987 = vld [vmem:[%s41 + $0x4a] sm:$0xff]
  %v1988 = vld [vmem:[%s41 + $0x52] sm:$0xff]
  %v1989 = vld [vmem:[%s41 + $0x62] sm:$0xff]
  %v1990 = vld [vmem:[%s41 + $0x6a] sm:$0xff]
  %v1991 = vld [vmem:[%s41 + $0x7a] sm:$0xff]
  %v1992 = vld [vmem:[%s41 + $0x82] sm:$0xff]
  %v1993 = vld [vmem:[%s41 + $0x92] sm:$0xff]
  %v1994 = vld [vmem:[%s41 + $0x9a] sm:$0xff]
  %v1995 = vld [vmem:[%s41 + $0xaa] sm:$0xff]
  %v1996 = vld [vmem:[%s41 + $0xb2] sm:$0xff]
  %v1997 = vld [vmem:[%s41 + $0xc2] sm:$0xff]
  %v1998 = vld [vmem:[%s41 + $0xca] sm:$0xff]
  %v1999 = vld [vmem:[%s41 + $0xda] sm:$0xff]
  %v2000 = vld [vmem:[%s41 + $0xe2] sm:$0xff]
  %v2001 = vld [vmem:[%s41 + $0xf2] sm:$0xff]
  %v2002 = vld [vmem:[%s41 + $0xfa] sm:$0xff]
  %v2003 = vld [vmem:[%s41 + $0x10a] sm:$0xff]
  %v2004 = vld [vmem:[%s41 + $0x112] sm:$0xff]
  %v2005 = vld [vmem:[%s41 + $0x122] sm:$0xff]
  %v2006 = vld [vmem:[%s41 + $0x12a] sm:$0xff]
  %v2007 = vld [vmem:[%s41 + $0x13a] sm:$0xff]
  %v2008 = vld [vmem:[%s41 + $0x142] sm:$0xff]
  %v2009 = vld [vmem:[%s41 + $0x152] sm:$0xff]
  %v2010 = vld [vmem:[%s41 + $0x15a] sm:$0xff]
  %v2011 = vld [vmem:[%s41 + $0x16a] sm:$0xff]
  %v2012 = vld [vmem:[%s41 + $0x172] sm:$0xff]
  %v2013 = vld [vmem:[%s41 + $0x1b2] sm:$0xff]
  %v2014 = vld [vmem:[%s41 + $0x1ba] sm:$0xff]
  %v2015 = vld [vmem:[%s41 + $0x1ca] sm:$0xff]
  %v2016 = vld [vmem:[%s41 + $0x1d2] sm:$0xff]
  %v2017 = vld [vmem:[%s41 + $0x1e2] sm:$0xff]
  %v2018 = vld [vmem:[%s41 + $0x1ea] sm:$0xff]
  %v2019 = vld [vmem:[%s41 + $0x1fa] sm:$0xff]
  %v2020 = vld [vmem:[%s41 + $0x202] sm:$0xff]
  %v2021 = vld [vmem:[%s41 + $0x212] sm:$0xff]
  %v2022 = vld [vmem:[%s41 + $0x21a] sm:$0xff]
  %v2023 = vld [vmem:[%s41 + $0x22a] sm:$0xff]
  %v2024 = vld [vmem:[%s41 + $0x232] sm:$0xff]
  %v2025 = vld [vmem:[%s41 + $0x242] sm:$0xff]
  %v2026 = vld [vmem:[%s41 + $0x24a] sm:$0xff]
  %v2027 = vld [vmem:[%s41 + $0x25a] sm:$0xff]
  %v2028 = vld [vmem:[%s41 + $0x262] sm:$0xff]
  %v2029 = vld [vmem:[%s41 + $0x272] sm:$0xff]
  %v2030 = vld [vmem:[%s41 + $0x27a] sm:$0xff]
  %v2031 = vld [vmem:[%s41 + $0x28a] sm:$0xff]
  %v2032 = vld [vmem:[%s41 + $0x292] sm:$0xff]
  %v2033 = vld [vmem:[%s41 + $0x2a2] sm:$0xff]
  %v2034 = vld [vmem:[%s41 + $0x2aa] sm:$0xff]
  %v2035 = vld [vmem:[%s41 + $0x2ba] sm:$0xff]
  %v2036 = vld [vmem:[%s41 + $0x2c2] sm:$0xff]
  %v2037 = vld [vmem:[%s41 + $0x2d2] sm:$0xff]
  %v2038 = vld [vmem:[%s41 + $0x2da] sm:$0xff]
  %v2039 = vld [vmem:[%s41 + $0x2ea] sm:$0xff]
  %v2040 = vld [vmem:[%s41 + $0x2f2] sm:$0xff]
  %v2041 = vld [vmem:[%s41 + $0x302] sm:$0xff]
  %v2042 = vld [vmem:[%s41 + $0x30a] sm:$0xff]
  %v2043 = vld [vmem:[%s41 + $0x31a] sm:$0xff]
  %v2044 = vld [vmem:[%s41 + $0x322] sm:$0xff]
  %2109 = vrot.lane.b32.xlu0 %v1981, 20
  %v2110 = vpop.permute.xlu0 %2109
  %2111 = vrot.lane.b32.xlu0 %v1982, 20
  %v2112 = vpop.permute.xlu0 %2111
  %2113 = vrot.lane.b32.xlu0 %v1983, 20
  %v2114 = vpop.permute.xlu0 %2113
  %2115 = vrot.lane.b32.xlu0 %v1984, 20
  %v2116 = vpop.permute.xlu0 %2115
  %2117 = vrot.lane.b32.xlu0 %v1985, 20
  %v2118 = vpop.permute.xlu0 %2117
  %2119 = vrot.lane.b32.xlu0 %v1986, 20
  %v2120 = vpop.permute.xlu0 %2119
  %2121 = vrot.lane.b32.xlu0 %v1987, 20
  %v2122 = vpop.permute.xlu0 %2121
  %2123 = vrot.lane.b32.xlu0 %v1988, 20
  %v2124 = vpop.permute.xlu0 %2123
  %2125 = vrot.lane.b32.xlu0 %v1989, 20
  %v2126 = vpop.permute.xlu0 %2125
  %2127 = vrot.lane.b32.xlu0 %v1990, 20
  %v2128 = vpop.permute.xlu0 %2127
  %2129 = vrot.lane.b32.xlu0 %v1991, 20
  %v2130 = vpop.permute.xlu0 %2129
  %2131 = vrot.lane.b32.xlu0 %v1992, 20
  %v2132 = vpop.permute.xlu0 %2131
  %2133 = vrot.lane.b32.xlu0 %v1993, 20
  %v2134 = vpop.permute.xlu0 %2133
  %2135 = vrot.lane.b32.xlu0 %v1994, 20
  %v2136 = vpop.permute.xlu0 %2135
  %2137 = vrot.lane.b32.xlu0 %v1995, 20
  %v2138 = vpop.permute.xlu0 %2137
  %2139 = vrot.lane.b32.xlu0 %v1996, 20
  %v2140 = vpop.permute.xlu0 %2139
  %2141 = vrot.lane.b32.xlu0 %v1997, 20
  %v2142 = vpop.permute.xlu0 %2141
  %2143 = vrot.lane.b32.xlu0 %v1998, 20
  %v2144 = vpop.permute.xlu0 %2143
  %2145 = vrot.lane.b32.xlu0 %v1999, 20
  %v2146 = vpop.permute.xlu0 %2145
  %2147 = vrot.lane.b32.xlu0 %v2000, 20
  %v2148 = vpop.permute.xlu0 %2147
  %2149 = vrot.lane.b32.xlu0 %v2001, 20
  %v2150 = vpop.permute.xlu0 %2149
  %2151 = vrot.lane.b32.xlu0 %v2002, 20
  %v2152 = vpop.permute.xlu0 %2151
  %2153 = vrot.lane.b32.xlu0 %v2003, 20
  %v2154 = vpop.permute.xlu0 %2153
  %2155 = vrot.lane.b32.xlu0 %v2004, 20
  %v2156 = vpop.permute.xlu0 %2155
  %2157 = vrot.lane.b32.xlu0 %v2005, 20
  %v2158 = vpop.permute.xlu0 %2157
  %2159 = vrot.lane.b32.xlu0 %v2006, 20
  %v2160 = vpop.permute.xlu0 %2159
  %2161 = vrot.lane.b32.xlu0 %v2007, 20
  %v2162 = vpop.permute.xlu0 %2161
  %2163 = vrot.lane.b32.xlu0 %v2008, 20
  %v2164 = vpop.permute.xlu0 %2163
  %2165 = vrot.lane.b32.xlu0 %v2009, 20
  %v2166 = vpop.permute.xlu0 %2165
  %2167 = vrot.lane.b32.xlu0 %v2010, 20
  %v2168 = vpop.permute.xlu0 %2167
  %2169 = vrot.lane.b32.xlu0 %v2011, 20
  %v2170 = vpop.permute.xlu0 %2169
  %2171 = vrot.lane.b32.xlu0 %v2012, 20
  %v2172 = vpop.permute.xlu0 %2171
  %2173 = vrot.lane.b32.xlu0 %v2013, 20
  %v2174 = vpop.permute.xlu0 %2173
  %2175 = vrot.lane.b32.xlu0 %v2014, 20
  %v2176 = vpop.permute.xlu0 %2175
  %2177 = vrot.lane.b32.xlu0 %v2015, 20
  %v2178 = vpop.permute.xlu0 %2177
  %2179 = vrot.lane.b32.xlu0 %v2016, 20
  %v2180 = vpop.permute.xlu0 %2179
  %2181 = vrot.lane.b32.xlu0 %v2017, 20
  %v2182 = vpop.permute.xlu0 %2181
  %2183 = vrot.lane.b32.xlu0 %v2018, 20
  %v2184 = vpop.permute.xlu0 %2183
  %2185 = vrot.lane.b32.xlu0 %v2019, 20
  %v2186 = vpop.permute.xlu0 %2185
  %2187 = vrot.lane.b32.xlu0 %v2020, 20
  %v2188 = vpop.permute.xlu0 %2187
  %2189 = vrot.lane.b32.xlu0 %v2021, 20
  %v2190 = vpop.permute.xlu0 %2189
  %2191 = vrot.lane.b32.xlu0 %v2022, 20
  %v2192 = vpop.permute.xlu0 %2191
  %2193 = vrot.lane.b32.xlu0 %v2023, 20
  %v2194 = vpop.permute.xlu0 %2193
  %2195 = vrot.lane.b32.xlu0 %v2024, 20
  %v2196 = vpop.permute.xlu0 %2195
  %2197 = vrot.lane.b32.xlu0 %v2025, 20
  %v2198 = vpop.permute.xlu0 %2197
  %2199 = vrot.lane.b32.xlu0 %v2026, 20
  %v2200 = vpop.permute.xlu0 %2199
  %2201 = vrot.lane.b32.xlu0 %v2027, 20
  %v2202 = vpop.permute.xlu0 %2201
  %2203 = vrot.lane.b32.xlu0 %v2028, 20
  %v2204 = vpop.permute.xlu0 %2203
  %2205 = vrot.lane.b32.xlu0 %v2029, 20
  %v2206 = vpop.permute.xlu0 %2205
  %2207 = vrot.lane.b32.xlu0 %v2030, 20
  %v2208 = vpop.permute.xlu0 %2207
  %2209 = vrot.lane.b32.xlu0 %v2031, 20
  %v2210 = vpop.permute.xlu0 %2209
  %2211 = vrot.lane.b32.xlu0 %v2032, 20
  %v2212 = vpop.permute.xlu0 %2211
  %2213 = vrot.lane.b32.xlu0 %v2033, 20
  %v2214 = vpop.permute.xlu0 %2213
  %2215 = vrot.lane.b32.xlu0 %v2034, 20
  %v2216 = vpop.permute.xlu0 %2215
  %2217 = vrot.lane.b32.xlu0 %v2035, 20
  %v2218 = vpop.permute.xlu0 %2217
  %2219 = vrot.lane.b32.xlu0 %v2036, 20
  %v2220 = vpop.permute.xlu0 %2219
  %2221 = vrot.lane.b32.xlu0 %v2037, 20
  %v2222 = vpop.permute.xlu0 %2221
  %2223 = vrot.lane.b32.xlu0 %v2038, 20
  %v2224 = vpop.permute.xlu0 %2223
  %2225 = vrot.lane.b32.xlu0 %v2039, 20
  %v2226 = vpop.permute.xlu0 %2225
  %2227 = vrot.lane.b32.xlu0 %v2040, 20
  %v2228 = vpop.permute.xlu0 %2227
  %2229 = vrot.lane.b32.xlu0 %v2041, 20
  %v2230 = vpop.permute.xlu0 %2229
  %2231 = vrot.lane.b32.xlu0 %v2042, 20
  %v2232 = vpop.permute.xlu0 %2231
  %2233 = vrot.lane.b32.xlu0 %v2043, 20
  %v2234 = vpop.permute.xlu0 %2233
  %2235 = vrot.lane.b32.xlu0 %v2044, 20
  %v2236 = vpop.permute.xlu0 %2235
  %vm2301 = vcmask 195744
  %2302 = vst.msk [vmem:[#allocation4] sm:$0xff] %vm2301, %v2110
  %2303 = vst.msk [vmem:[#allocation4 + $0x8] sm:$0xff] %vm2301, %v2112
  %2304 = vst.msk [vmem:[#allocation4 + $0x10] sm:$0xff] %vm2301, %v2114
  %2305 = vst.msk [vmem:[#allocation4 + $0x18] sm:$0xff] %vm2301, %v2116
  %2306 = vst.msk [vmem:[#allocation4 + $0x20] sm:$0xff] %vm2301, %v2118
  %2307 = vst.msk [vmem:[#allocation4 + $0x28] sm:$0xff] %vm2301, %v2120
  %2308 = vst.msk [vmem:[#allocation4 + $0x30] sm:$0xff] %vm2301, %v2122
  %2309 = vst.msk [vmem:[#allocation4 + $0x38] sm:$0xff] %vm2301, %v2124
  %2310 = vst.msk [vmem:[#allocation4 + $0x40] sm:$0xff] %vm2301, %v2126
  %2311 = vst.msk [vmem:[#allocation4 + $0x48] sm:$0xff] %vm2301, %v2128
  %2312 = vst.msk [vmem:[#allocation4 + $0x50] sm:$0xff] %vm2301, %v2130
  %2313 = vst.msk [vmem:[#allocation4 + $0x58] sm:$0xff] %vm2301, %v2132
  %2314 = vst.msk [vmem:[#allocation4 + $0x60] sm:$0xff] %vm2301, %v2134
  %2315 = vst.msk [vmem:[#allocation4 + $0x68] sm:$0xff] %vm2301, %v2136
  %2316 = vst.msk [vmem:[#allocation4 + $0x70] sm:$0xff] %vm2301, %v2138
  %2317 = vst.msk [vmem:[#allocation4 + $0x78] sm:$0xff] %vm2301, %v2140
  %2318 = vst.msk [vmem:[#allocation4 + $0x80] sm:$0xff] %vm2301, %v2142
  %2319 = vst.msk [vmem:[#allocation4 + $0x88] sm:$0xff] %vm2301, %v2144
  %2320 = vst.msk [vmem:[#allocation4 + $0x90] sm:$0xff] %vm2301, %v2146
  %2321 = vst.msk [vmem:[#allocation4 + $0x98] sm:$0xff] %vm2301, %v2148
  %2322 = vst.msk [vmem:[#allocation4 + $0xa0] sm:$0xff] %vm2301, %v2150
  %2323 = vst.msk [vmem:[#allocation4 + $0xa8] sm:$0xff] %vm2301, %v2152
  %2324 = vst.msk [vmem:[#allocation4 + $0xb0] sm:$0xff] %vm2301, %v2154
  %2325 = vst.msk [vmem:[#allocation4 + $0xb8] sm:$0xff] %vm2301, %v2156
  %2326 = vst.msk [vmem:[#allocation4 + $0xc0] sm:$0xff] %vm2301, %v2158
  %2327 = vst.msk [vmem:[#allocation4 + $0xc8] sm:$0xff] %vm2301, %v2160
  %2328 = vst.msk [vmem:[#allocation4 + $0xd0] sm:$0xff] %vm2301, %v2162
  %2329 = vst.msk [vmem:[#allocation4 + $0xd8] sm:$0xff] %vm2301, %v2164
  %2330 = vst.msk [vmem:[#allocation4 + $0xe0] sm:$0xff] %vm2301, %v2166
  %2331 = vst.msk [vmem:[#allocation4 + $0xe8] sm:$0xff] %vm2301, %v2168
  %2332 = vst.msk [vmem:[#allocation4 + $0xf0] sm:$0xff] %vm2301, %v2170
  %2333 = vst.msk [vmem:[#allocation4 + $0xf8] sm:$0xff] %vm2301, %v2172
  %2334 = vst.msk [vmem:[#allocation4 + $0x100] sm:$0xff] %vm2301, %v2174
  %2335 = vst.msk [vmem:[#allocation4 + $0x108] sm:$0xff] %vm2301, %v2176
  %2336 = vst.msk [vmem:[#allocation4 + $0x110] sm:$0xff] %vm2301, %v2178
  %2337 = vst.msk [vmem:[#allocation4 + $0x118] sm:$0xff] %vm2301, %v2180
  %2338 = vst.msk [vmem:[#allocation4 + $0x120] sm:$0xff] %vm2301, %v2182
  %2339 = vst.msk [vmem:[#allocation4 + $0x128] sm:$0xff] %vm2301, %v2184
  %2340 = vst.msk [vmem:[#allocation4 + $0x130] sm:$0xff] %vm2301, %v2186
  %2341 = vst.msk [vmem:[#allocation4 + $0x138] sm:$0xff] %vm2301, %v2188
  %2342 = vst.msk [vmem:[#allocation4 + $0x140] sm:$0xff] %vm2301, %v2190
  %2343 = vst.msk [vmem:[#allocation4 + $0x148] sm:$0xff] %vm2301, %v2192
  %2344 = vst.msk [vmem:[#allocation4 + $0x150] sm:$0xff] %vm2301, %v2194
  %2345 = vst.msk [vmem:[#allocation4 + $0x158] sm:$0xff] %vm2301, %v2196
  %2346 = vst.msk [vmem:[#allocation4 + $0x160] sm:$0xff] %vm2301, %v2198
  %2347 = vst.msk [vmem:[#allocation4 + $0x168] sm:$0xff] %vm2301, %v2200
  %2348 = vst.msk [vmem:[#allocation4 + $0x170] sm:$0xff] %vm2301, %v2202
  %2349 = vst.msk [vmem:[#allocation4 + $0x178] sm:$0xff] %vm2301, %v2204
  %2350 = vst.msk [vmem:[#allocation4 + $0x180] sm:$0xff] %vm2301, %v2206
  %2351 = vst.msk [vmem:[#allocation4 + $0x188] sm:$0xff] %vm2301, %v2208
  %2352 = vst.msk [vmem:[#allocation4 + $0x190] sm:$0xff] %vm2301, %v2210
  %2353 = vst.msk [vmem:[#allocation4 + $0x198] sm:$0xff] %vm2301, %v2212
  %2354 = vst.msk [vmem:[#allocation4 + $0x1a0] sm:$0xff] %vm2301, %v2214
  %2355 = vst.msk [vmem:[#allocation4 + $0x1a8] sm:$0xff] %vm2301, %v2216
  %2356 = vst.msk [vmem:[#allocation4 + $0x1b0] sm:$0xff] %vm2301, %v2218
  %2357 = vst.msk [vmem:[#allocation4 + $0x1b8] sm:$0xff] %vm2301, %v2220
  %2358 = vst.msk [vmem:[#allocation4 + $0x1c0] sm:$0xff] %vm2301, %v2222
  %2359 = vst.msk [vmem:[#allocation4 + $0x1c8] sm:$0xff] %vm2301, %v2224
  %2360 = vst.msk [vmem:[#allocation4 + $0x1d0] sm:$0xff] %vm2301, %v2226
  %2361 = vst.msk [vmem:[#allocation4 + $0x1d8] sm:$0xff] %vm2301, %v2228
  %2362 = vst.msk [vmem:[#allocation4 + $0x1e0] sm:$0xff] %vm2301, %v2230
  %2363 = vst.msk [vmem:[#allocation4 + $0x1e8] sm:$0xff] %vm2301, %v2232
  %2364 = vst.msk [vmem:[#allocation4 + $0x1f0] sm:$0xff] %vm2301, %v2234
  %2365 = vst.msk [vmem:[#allocation4 + $0x1f8] sm:$0xff] %vm2301, %v2236
  %s2366 = scalar_lea.vmem [#allocation2], 48
  %v2367 = vld [vmem:[%s2366] sm:$0xff]
  %v2368 = vld [vmem:[%s2366 + $0x8] sm:$0xff]
  %v2369 = vld [vmem:[%s2366 + $0x18] sm:$0xff]
  %v2370 = vld [vmem:[%s2366 + $0x20] sm:$0xff]
  %v2371 = vld [vmem:[%s2366 + $0x30] sm:$0xff]
  %v2372 = vld [vmem:[%s2366 + $0x38] sm:$0xff]
  %v2373 = vld [vmem:[%s2366 + $0x48] sm:$0xff]
  %v2374 = vld [vmem:[%s2366 + $0x50] sm:$0xff]
  %v2375 = vld [vmem:[%s2366 + $0x60] sm:$0xff]
  %v2376 = vld [vmem:[%s2366 + $0x68] sm:$0xff]
  %v2377 = vld [vmem:[%s2366 + $0x78] sm:$0xff]
  %v2378 = vld [vmem:[%s2366 + $0x80] sm:$0xff]
  %v2379 = vld [vmem:[%s2366 + $0x90] sm:$0xff]
  %v2380 = vld [vmem:[%s2366 + $0x98] sm:$0xff]
  %v2381 = vld [vmem:[%s2366 + $0xa8] sm:$0xff]
  %v2382 = vld [vmem:[%s2366 + $0xb0] sm:$0xff]
  %v2383 = vld [vmem:[%s2366 + $0xc0] sm:$0xff]
  %v2384 = vld [vmem:[%s2366 + $0xc8] sm:$0xff]
  %v2385 = vld [vmem:[%s2366 + $0xd8] sm:$0xff]
  %v2386 = vld [vmem:[%s2366 + $0xe0] sm:$0xff]
  %v2387 = vld [vmem:[%s2366 + $0xf0] sm:$0xff]
  %v2388 = vld [vmem:[%s2366 + $0xf8] sm:$0xff]
  %v2389 = vld [vmem:[%s2366 + $0x108] sm:$0xff]
  %v2390 = vld [vmem:[%s2366 + $0x110] sm:$0xff]
  %v2391 = vld [vmem:[%s2366 + $0x120] sm:$0xff]
  %v2392 = vld [vmem:[%s2366 + $0x128] sm:$0xff]
  %v2393 = vld [vmem:[%s2366 + $0x138] sm:$0xff]
  %v2394 = vld [vmem:[%s2366 + $0x140] sm:$0xff]
  %v2395 = vld [vmem:[%s2366 + $0x150] sm:$0xff]
  %v2396 = vld [vmem:[%s2366 + $0x158] sm:$0xff]
  %v2397 = vld [vmem:[%s2366 + $0x168] sm:$0xff]
  %v2398 = vld [vmem:[%s2366 + $0x170] sm:$0xff]
  %v2399 = vld [vmem:[%s2366 + $0x1b0] sm:$0xff]
  %v2400 = vld [vmem:[%s2366 + $0x1b8] sm:$0xff]
  %v2401 = vld [vmem:[%s2366 + $0x1c8] sm:$0xff]
  %v2402 = vld [vmem:[%s2366 + $0x1d0] sm:$0xff]
  %v2403 = vld [vmem:[%s2366 + $0x1e0] sm:$0xff]
  %v2404 = vld [vmem:[%s2366 + $0x1e8] sm:$0xff]
  %v2405 = vld [vmem:[%s2366 + $0x1f8] sm:$0xff]
  %v2406 = vld [vmem:[%s2366 + $0x200] sm:$0xff]
  %v2407 = vld [vmem:[%s2366 + $0x210] sm:$0xff]
  %v2408 = vld [vmem:[%s2366 + $0x218] sm:$0xff]
  %v2409 = vld [vmem:[%s2366 + $0x228] sm:$0xff]
  %v2410 = vld [vmem:[%s2366 + $0x230] sm:$0xff]
  %v2411 = vld [vmem:[%s2366 + $0x240] sm:$0xff]
  %v2412 = vld [vmem:[%s2366 + $0x248] sm:$0xff]
  %v2413 = vld [vmem:[%s2366 + $0x258] sm:$0xff]
  %v2414 = vld [vmem:[%s2366 + $0x260] sm:$0xff]
  %v2415 = vld [vmem:[%s2366 + $0x270] sm:$0xff]
  %v2416 = vld [vmem:[%s2366 + $0x278] sm:$0xff]
  %v2417 = vld [vmem:[%s2366 + $0x288] sm:$0xff]
  %v2418 = vld [vmem:[%s2366 + $0x290] sm:$0xff]
  %v2419 = vld [vmem:[%s2366 + $0x2a0] sm:$0xff]
  %v2420 = vld [vmem:[%s2366 + $0x2a8] sm:$0xff]
  %v2421 = vld [vmem:[%s2366 + $0x2b8] sm:$0xff]
  %v2422 = vld [vmem:[%s2366 + $0x2c0] sm:$0xff]
  %v2423 = vld [vmem:[%s2366 + $0x2d0] sm:$0xff]
  %v2424 = vld [vmem:[%s2366 + $0x2d8] sm:$0xff]
  %v2425 = vld [vmem:[%s2366 + $0x2e8] sm:$0xff]
  %v2426 = vld [vmem:[%s2366 + $0x2f0] sm:$0xff]
  %v2427 = vld [vmem:[%s2366 + $0x300] sm:$0xff]
  %v2428 = vld [vmem:[%s2366 + $0x308] sm:$0xff]
  %v2429 = vld [vmem:[%s2366 + $0x318] sm:$0xff]
  %v2430 = vld [vmem:[%s2366 + $0x320] sm:$0xff]
  %2495 = vrot.lane.b32.xlu0 %v2367, 24
  %v2496 = vpop.permute.xlu0 %2495
  %2497 = vrot.lane.b32.xlu0 %v2368, 24
  %v2498 = vpop.permute.xlu0 %2497
  %2499 = vrot.lane.b32.xlu0 %v2369, 24
  %v2500 = vpop.permute.xlu0 %2499
  %2501 = vrot.lane.b32.xlu0 %v2370, 24
  %v2502 = vpop.permute.xlu0 %2501
  %2503 = vrot.lane.b32.xlu0 %v2371, 24
  %v2504 = vpop.permute.xlu0 %2503
  %2505 = vrot.lane.b32.xlu0 %v2372, 24
  %v2506 = vpop.permute.xlu0 %2505
  %2507 = vrot.lane.b32.xlu0 %v2373, 24
  %v2508 = vpop.permute.xlu0 %2507
  %2509 = vrot.lane.b32.xlu0 %v2374, 24
  %v2510 = vpop.permute.xlu0 %2509
  %2511 = vrot.lane.b32.xlu0 %v2375, 24
  %v2512 = vpop.permute.xlu0 %2511
  %2513 = vrot.lane.b32.xlu0 %v2376, 24
  %v2514 = vpop.permute.xlu0 %2513
  %2515 = vrot.lane.b32.xlu0 %v2377, 24
  %v2516 = vpop.permute.xlu0 %2515
  %2517 = vrot.lane.b32.xlu0 %v2378, 24
  %v2518 = vpop.permute.xlu0 %2517
  %2519 = vrot.lane.b32.xlu0 %v2379, 24
  %v2520 = vpop.permute.xlu0 %2519
  %2521 = vrot.lane.b32.xlu0 %v2380, 24
  %v2522 = vpop.permute.xlu0 %2521
  %2523 = vrot.lane.b32.xlu0 %v2381, 24
  %v2524 = vpop.permute.xlu0 %2523
  %2525 = vrot.lane.b32.xlu0 %v2382, 24
  %v2526 = vpop.permute.xlu0 %2525
  %2527 = vrot.lane.b32.xlu0 %v2383, 24
  %v2528 = vpop.permute.xlu0 %2527
  %2529 = vrot.lane.b32.xlu0 %v2384, 24
  %v2530 = vpop.permute.xlu0 %2529
  %2531 = vrot.lane.b32.xlu0 %v2385, 24
  %v2532 = vpop.permute.xlu0 %2531
  %2533 = vrot.lane.b32.xlu0 %v2386, 24
  %v2534 = vpop.permute.xlu0 %2533
  %2535 = vrot.lane.b32.xlu0 %v2387, 24
  %v2536 = vpop.permute.xlu0 %2535
  %2537 = vrot.lane.b32.xlu0 %v2388, 24
  %v2538 = vpop.permute.xlu0 %2537
  %2539 = vrot.lane.b32.xlu0 %v2389, 24
  %v2540 = vpop.permute.xlu0 %2539
  %2541 = vrot.lane.b32.xlu0 %v2390, 24
  %v2542 = vpop.permute.xlu0 %2541
  %2543 = vrot.lane.b32.xlu0 %v2391, 24
  %v2544 = vpop.permute.xlu0 %2543
  %2545 = vrot.lane.b32.xlu0 %v2392, 24
  %v2546 = vpop.permute.xlu0 %2545
  %2547 = vrot.lane.b32.xlu0 %v2393, 24
  %v2548 = vpop.permute.xlu0 %2547
  %2549 = vrot.lane.b32.xlu0 %v2394, 24
  %v2550 = vpop.permute.xlu0 %2549
  %2551 = vrot.lane.b32.xlu0 %v2395, 24
  %v2552 = vpop.permute.xlu0 %2551
  %2553 = vrot.lane.b32.xlu0 %v2396, 24
  %v2554 = vpop.permute.xlu0 %2553
  %2555 = vrot.lane.b32.xlu0 %v2397, 24
  %v2556 = vpop.permute.xlu0 %2555
  %2557 = vrot.lane.b32.xlu0 %v2398, 24
  %v2558 = vpop.permute.xlu0 %2557
  %2559 = vrot.lane.b32.xlu0 %v2399, 24
  %v2560 = vpop.permute.xlu0 %2559
  %2561 = vrot.lane.b32.xlu0 %v2400, 24
  %v2562 = vpop.permute.xlu0 %2561
  %2563 = vrot.lane.b32.xlu0 %v2401, 24
  %v2564 = vpop.permute.xlu0 %2563
  %2565 = vrot.lane.b32.xlu0 %v2402, 24
  %v2566 = vpop.permute.xlu0 %2565
  %2567 = vrot.lane.b32.xlu0 %v2403, 24
  %v2568 = vpop.permute.xlu0 %2567
  %2569 = vrot.lane.b32.xlu0 %v2404, 24
  %v2570 = vpop.permute.xlu0 %2569
  %2571 = vrot.lane.b32.xlu0 %v2405, 24
  %v2572 = vpop.permute.xlu0 %2571
  %2573 = vrot.lane.b32.xlu0 %v2406, 24
  %v2574 = vpop.permute.xlu0 %2573
  %2575 = vrot.lane.b32.xlu0 %v2407, 24
  %v2576 = vpop.permute.xlu0 %2575
  %2577 = vrot.lane.b32.xlu0 %v2408, 24
  %v2578 = vpop.permute.xlu0 %2577
  %2579 = vrot.lane.b32.xlu0 %v2409, 24
  %v2580 = vpop.permute.xlu0 %2579
  %2581 = vrot.lane.b32.xlu0 %v2410, 24
  %v2582 = vpop.permute.xlu0 %2581
  %2583 = vrot.lane.b32.xlu0 %v2411, 24
  %v2584 = vpop.permute.xlu0 %2583
  %2585 = vrot.lane.b32.xlu0 %v2412, 24
  %v2586 = vpop.permute.xlu0 %2585
  %2587 = vrot.lane.b32.xlu0 %v2413, 24
  %v2588 = vpop.permute.xlu0 %2587
  %2589 = vrot.lane.b32.xlu0 %v2414, 24
  %v2590 = vpop.permute.xlu0 %2589
  %2591 = vrot.lane.b32.xlu0 %v2415, 24
  %v2592 = vpop.permute.xlu0 %2591
  %2593 = vrot.lane.b32.xlu0 %v2416, 24
  %v2594 = vpop.permute.xlu0 %2593
  %2595 = vrot.lane.b32.xlu0 %v2417, 24
  %v2596 = vpop.permute.xlu0 %2595
  %2597 = vrot.lane.b32.xlu0 %v2418, 24
  %v2598 = vpop.permute.xlu0 %2597
  %2599 = vrot.lane.b32.xlu0 %v2419, 24
  %v2600 = vpop.permute.xlu0 %2599
  %2601 = vrot.lane.b32.xlu0 %v2420, 24
  %v2602 = vpop.permute.xlu0 %2601
  %2603 = vrot.lane.b32.xlu0 %v2421, 24
  %v2604 = vpop.permute.xlu0 %2603
  %2605 = vrot.lane.b32.xlu0 %v2422, 24
  %v2606 = vpop.permute.xlu0 %2605
  %2607 = vrot.lane.b32.xlu0 %v2423, 24
  %v2608 = vpop.permute.xlu0 %2607
  %2609 = vrot.lane.b32.xlu0 %v2424, 24
  %v2610 = vpop.permute.xlu0 %2609
  %2611 = vrot.lane.b32.xlu0 %v2425, 24
  %v2612 = vpop.permute.xlu0 %2611
  %2613 = vrot.lane.b32.xlu0 %v2426, 24
  %v2614 = vpop.permute.xlu0 %2613
  %2615 = vrot.lane.b32.xlu0 %v2427, 24
  %v2616 = vpop.permute.xlu0 %2615
  %2617 = vrot.lane.b32.xlu0 %v2428, 24
  %v2618 = vpop.permute.xlu0 %2617
  %2619 = vrot.lane.b32.xlu0 %v2429, 24
  %v2620 = vpop.permute.xlu0 %2619
  %2621 = vrot.lane.b32.xlu0 %v2430, 24
  %v2622 = vpop.permute.xlu0 %2621
  %vm2687 = vcmask 228544
  %2688 = vst.msk [vmem:[#allocation4] sm:$0xff] %vm2687, %v2496
  %2689 = vst.msk [vmem:[#allocation4 + $0x8] sm:$0xff] %vm2687, %v2498
  %2690 = vst.msk [vmem:[#allocation4 + $0x10] sm:$0xff] %vm2687, %v2500
  %2691 = vst.msk [vmem:[#allocation4 + $0x18] sm:$0xff] %vm2687, %v2502
  %2692 = vst.msk [vmem:[#allocation4 + $0x20] sm:$0xff] %vm2687, %v2504
  %2693 = vst.msk [vmem:[#allocation4 + $0x28] sm:$0xff] %vm2687, %v2506
  %2694 = vst.msk [vmem:[#allocation4 + $0x30] sm:$0xff] %vm2687, %v2508
  %2695 = vst.msk [vmem:[#allocation4 + $0x38] sm:$0xff] %vm2687, %v2510
  %2696 = vst.msk [vmem:[#allocation4 + $0x40] sm:$0xff] %vm2687, %v2512
  %2697 = vst.msk [vmem:[#allocation4 + $0x48] sm:$0xff] %vm2687, %v2514
  %2698 = vst.msk [vmem:[#allocation4 + $0x50] sm:$0xff] %vm2687, %v2516
  %2699 = vst.msk [vmem:[#allocation4 + $0x58] sm:$0xff] %vm2687, %v2518
  %2700 = vst.msk [vmem:[#allocation4 + $0x60] sm:$0xff] %vm2687, %v2520
  %2701 = vst.msk [vmem:[#allocation4 + $0x68] sm:$0xff] %vm2687, %v2522
  %2702 = vst.msk [vmem:[#allocation4 + $0x70] sm:$0xff] %vm2687, %v2524
  %2703 = vst.msk [vmem:[#allocation4 + $0x78] sm:$0xff] %vm2687, %v2526
  %2704 = vst.msk [vmem:[#allocation4 + $0x80] sm:$0xff] %vm2687, %v2528
  %2705 = vst.msk [vmem:[#allocation4 + $0x88] sm:$0xff] %vm2687, %v2530
  %2706 = vst.msk [vmem:[#allocation4 + $0x90] sm:$0xff] %vm2687, %v2532
  %2707 = vst.msk [vmem:[#allocation4 + $0x98] sm:$0xff] %vm2687, %v2534
  %2708 = vst.msk [vmem:[#allocation4 + $0xa0] sm:$0xff] %vm2687, %v2536
  %2709 = vst.msk [vmem:[#allocation4 + $0xa8] sm:$0xff] %vm2687, %v2538
  %2710 = vst.msk [vmem:[#allocation4 + $0xb0] sm:$0xff] %vm2687, %v2540
  %2711 = vst.msk [vmem:[#allocation4 + $0xb8] sm:$0xff] %vm2687, %v2542
  %2712 = vst.msk [vmem:[#allocation4 + $0xc0] sm:$0xff] %vm2687, %v2544
  %2713 = vst.msk [vmem:[#allocation4 + $0xc8] sm:$0xff] %vm2687, %v2546
  %2714 = vst.msk [vmem:[#allocation4 + $0xd0] sm:$0xff] %vm2687, %v2548
  %2715 = vst.msk [vmem:[#allocation4 + $0xd8] sm:$0xff] %vm2687, %v2550
  %2716 = vst.msk [vmem:[#allocation4 + $0xe0] sm:$0xff] %vm2687, %v2552
  %2717 = vst.msk [vmem:[#allocation4 + $0xe8] sm:$0xff] %vm2687, %v2554
  %2718 = vst.msk [vmem:[#allocation4 + $0xf0] sm:$0xff] %vm2687, %v2556
  %2719 = vst.msk [vmem:[#allocation4 + $0xf8] sm:$0xff] %vm2687, %v2558
  %2720 = vst.msk [vmem:[#allocation4 + $0x100] sm:$0xff] %vm2687, %v2560
  %2721 = vst.msk [vmem:[#allocation4 + $0x108] sm:$0xff] %vm2687, %v2562
  %2722 = vst.msk [vmem:[#allocation4 + $0x110] sm:$0xff] %vm2687, %v2564
  %2723 = vst.msk [vmem:[#allocation4 + $0x118] sm:$0xff] %vm2687, %v2566
  %2724 = vst.msk [vmem:[#allocation4 + $0x120] sm:$0xff] %vm2687, %v2568
  %2725 = vst.msk [vmem:[#allocation4 + $0x128] sm:$0xff] %vm2687, %v2570
  %2726 = vst.msk [vmem:[#allocation4 + $0x130] sm:$0xff] %vm2687, %v2572
  %2727 = vst.msk [vmem:[#allocation4 + $0x138] sm:$0xff] %vm2687, %v2574
  %2728 = vst.msk [vmem:[#allocation4 + $0x140] sm:$0xff] %vm2687, %v2576
  %2729 = vst.msk [vmem:[#allocation4 + $0x148] sm:$0xff] %vm2687, %v2578
  %2730 = vst.msk [vmem:[#allocation4 + $0x150] sm:$0xff] %vm2687, %v2580
  %2731 = vst.msk [vmem:[#allocation4 + $0x158] sm:$0xff] %vm2687, %v2582
  %2732 = vst.msk [vmem:[#allocation4 + $0x160] sm:$0xff] %vm2687, %v2584
  %2733 = vst.msk [vmem:[#allocation4 + $0x168] sm:$0xff] %vm2687, %v2586
  %2734 = vst.msk [vmem:[#allocation4 + $0x170] sm:$0xff] %vm2687, %v2588
  %2735 = vst.msk [vmem:[#allocation4 + $0x178] sm:$0xff] %vm2687, %v2590
  %2736 = vst.msk [vmem:[#allocation4 + $0x180] sm:$0xff] %vm2687, %v2592
  %2737 = vst.msk [vmem:[#allocation4 + $0x188] sm:$0xff] %vm2687, %v2594
  %2738 = vst.msk [vmem:[#allocation4 + $0x190] sm:$0xff] %vm2687, %v2596
  %2739 = vst.msk [vmem:[#allocation4 + $0x198] sm:$0xff] %vm2687, %v2598
  %2740 = vst.msk [vmem:[#allocation4 + $0x1a0] sm:$0xff] %vm2687, %v2600
  %2741 = vst.msk [vmem:[#allocation4 + $0x1a8] sm:$0xff] %vm2687, %v2602
  %2742 = vst.msk [vmem:[#allocation4 + $0x1b0] sm:$0xff] %vm2687, %v2604
  %2743 = vst.msk [vmem:[#allocation4 + $0x1b8] sm:$0xff] %vm2687, %v2606
  %2744 = vst.msk [vmem:[#allocation4 + $0x1c0] sm:$0xff] %vm2687, %v2608
  %2745 = vst.msk [vmem:[#allocation4 + $0x1c8] sm:$0xff] %vm2687, %v2610
  %2746 = vst.msk [vmem:[#allocation4 + $0x1d0] sm:$0xff] %vm2687, %v2612
  %2747 = vst.msk [vmem:[#allocation4 + $0x1d8] sm:$0xff] %vm2687, %v2614
  %2748 = vst.msk [vmem:[#allocation4 + $0x1e0] sm:$0xff] %vm2687, %v2616
  %2749 = vst.msk [vmem:[#allocation4 + $0x1e8] sm:$0xff] %vm2687, %v2618
  %2750 = vst.msk [vmem:[#allocation4 + $0x1f0] sm:$0xff] %vm2687, %v2620
  %2751 = vst.msk [vmem:[#allocation4 + $0x1f8] sm:$0xff] %vm2687, %v2622
  %v2752 = vld [vmem:[%s2366 + $0x1] sm:$0xff]
  %v2753 = vld [vmem:[%s2366 + $0x9] sm:$0xff]
  %v2754 = vld [vmem:[%s2366 + $0x19] sm:$0xff]
  %v2755 = vld [vmem:[%s2366 + $0x21] sm:$0xff]
  %v2756 = vld [vmem:[%s2366 + $0x31] sm:$0xff]
  %v2757 = vld [vmem:[%s2366 + $0x39] sm:$0xff]
  %v2758 = vld [vmem:[%s2366 + $0x49] sm:$0xff]
  %v2759 = vld [vmem:[%s2366 + $0x51] sm:$0xff]
  %v2760 = vld [vmem:[%s2366 + $0x61] sm:$0xff]
  %v2761 = vld [vmem:[%s2366 + $0x69] sm:$0xff]
  %v2762 = vld [vmem:[%s2366 + $0x79] sm:$0xff]
  %v2763 = vld [vmem:[%s2366 + $0x81] sm:$0xff]
  %v2764 = vld [vmem:[%s2366 + $0x91] sm:$0xff]
  %v2765 = vld [vmem:[%s2366 + $0x99] sm:$0xff]
  %v2766 = vld [vmem:[%s2366 + $0xa9] sm:$0xff]
  %v2767 = vld [vmem:[%s2366 + $0xb1] sm:$0xff]
  %v2768 = vld [vmem:[%s2366 + $0xc1] sm:$0xff]
  %v2769 = vld [vmem:[%s2366 + $0xc9] sm:$0xff]
  %v2770 = vld [vmem:[%s2366 + $0xd9] sm:$0xff]
  %v2771 = vld [vmem:[%s2366 + $0xe1] sm:$0xff]
  %v2772 = vld [vmem:[%s2366 + $0xf1] sm:$0xff]
  %v2773 = vld [vmem:[%s2366 + $0xf9] sm:$0xff]
  %v2774 = vld [vmem:[%s2366 + $0x109] sm:$0xff]
  %v2775 = vld [vmem:[%s2366 + $0x111] sm:$0xff]
  %v2776 = vld [vmem:[%s2366 + $0x121] sm:$0xff]
  %v2777 = vld [vmem:[%s2366 + $0x129] sm:$0xff]
  %v2778 = vld [vmem:[%s2366 + $0x139] sm:$0xff]
  %v2779 = vld [vmem:[%s2366 + $0x141] sm:$0xff]
  %v2780 = vld [vmem:[%s2366 + $0x151] sm:$0xff]
  %v2781 = vld [vmem:[%s2366 + $0x159] sm:$0xff]
  %v2782 = vld [vmem:[%s2366 + $0x169] sm:$0xff]
  %v2783 = vld [vmem:[%s2366 + $0x171] sm:$0xff]
  %v2784 = vld [vmem:[%s2366 + $0x1b1] sm:$0xff]
  %v2785 = vld [vmem:[%s2366 + $0x1b9] sm:$0xff]
  %v2786 = vld [vmem:[%s2366 + $0x1c9] sm:$0xff]
  %v2787 = vld [vmem:[%s2366 + $0x1d1] sm:$0xff]
  %v2788 = vld [vmem:[%s2366 + $0x1e1] sm:$0xff]
  %v2789 = vld [vmem:[%s2366 + $0x1e9] sm:$0xff]
  %v2790 = vld [vmem:[%s2366 + $0x1f9] sm:$0xff]
  %v2791 = vld [vmem:[%s2366 + $0x201] sm:$0xff]
  %v2792 = vld [vmem:[%s2366 + $0x211] sm:$0xff]
  %v2793 = vld [vmem:[%s2366 + $0x219] sm:$0xff]
  %v2794 = vld [vmem:[%s2366 + $0x229] sm:$0xff]
  %v2795 = vld [vmem:[%s2366 + $0x231] sm:$0xff]
  %v2796 = vld [vmem:[%s2366 + $0x241] sm:$0xff]
  %v2797 = vld [vmem:[%s2366 + $0x249] sm:$0xff]
  %v2798 = vld [vmem:[%s2366 + $0x259] sm:$0xff]
  %v2799 = vld [vmem:[%s2366 + $0x261] sm:$0xff]
  %v2800 = vld [vmem:[%s2366 + $0x271] sm:$0xff]
  %v2801 = vld [vmem:[%s2366 + $0x279] sm:$0xff]
  %v2802 = vld [vmem:[%s2366 + $0x289] sm:$0xff]
  %v2803 = vld [vmem:[%s2366 + $0x291] sm:$0xff]
  %v2804 = vld [vmem:[%s2366 + $0x2a1] sm:$0xff]
  %v2805 = vld [vmem:[%s2366 + $0x2a9] sm:$0xff]
  %v2806 = vld [vmem:[%s2366 + $0x2b9] sm:$0xff]
  %v2807 = vld [vmem:[%s2366 + $0x2c1] sm:$0xff]
  %v2808 = vld [vmem:[%s2366 + $0x2d1] sm:$0xff]
  %v2809 = vld [vmem:[%s2366 + $0x2d9] sm:$0xff]
  %v2810 = vld [vmem:[%s2366 + $0x2e9] sm:$0xff]
  %v2811 = vld [vmem:[%s2366 + $0x2f1] sm:$0xff]
  %v2812 = vld [vmem:[%s2366 + $0x301] sm:$0xff]
  %v2813 = vld [vmem:[%s2366 + $0x309] sm:$0xff]
  %v2814 = vld [vmem:[%s2366 + $0x319] sm:$0xff]
  %v2815 = vld [vmem:[%s2366 + $0x321] sm:$0xff]
  %2880 = vrot.lane.b32.xlu0 %v2752, 28
  %v2881 = vpop.permute.xlu0 %2880
  %2882 = vrot.lane.b32.xlu0 %v2753, 28
  %v2883 = vpop.permute.xlu0 %2882
  %2884 = vrot.lane.b32.xlu0 %v2754, 28
  %v2885 = vpop.permute.xlu0 %2884
  %2886 = vrot.lane.b32.xlu0 %v2755, 28
  %v2887 = vpop.permute.xlu0 %2886
  %2888 = vrot.lane.b32.xlu0 %v2756, 28
  %v2889 = vpop.permute.xlu0 %2888
  %2890 = vrot.lane.b32.xlu0 %v2757, 28
  %v2891 = vpop.permute.xlu0 %2890
  %2892 = vrot.lane.b32.xlu0 %v2758, 28
  %v2893 = vpop.permute.xlu0 %2892
  %2894 = vrot.lane.b32.xlu0 %v2759, 28
  %v2895 = vpop.permute.xlu0 %2894
  %2896 = vrot.lane.b32.xlu0 %v2760, 28
  %v2897 = vpop.permute.xlu0 %2896
  %2898 = vrot.lane.b32.xlu0 %v2761, 28
  %v2899 = vpop.permute.xlu0 %2898
  %2900 = vrot.lane.b32.xlu0 %v2762, 28
  %v2901 = vpop.permute.xlu0 %2900
  %2902 = vrot.lane.b32.xlu0 %v2763, 28
  %v2903 = vpop.permute.xlu0 %2902
  %2904 = vrot.lane.b32.xlu0 %v2764, 28
  %v2905 = vpop.permute.xlu0 %2904
  %2906 = vrot.lane.b32.xlu0 %v2765, 28
  %v2907 = vpop.permute.xlu0 %2906
  %2908 = vrot.lane.b32.xlu0 %v2766, 28
  %v2909 = vpop.permute.xlu0 %2908
  %2910 = vrot.lane.b32.xlu0 %v2767, 28
  %v2911 = vpop.permute.xlu0 %2910
  %2912 = vrot.lane.b32.xlu0 %v2768, 28
  %v2913 = vpop.permute.xlu0 %2912
  %2914 = vrot.lane.b32.xlu0 %v2769, 28
  %v2915 = vpop.permute.xlu0 %2914
  %2916 = vrot.lane.b32.xlu0 %v2770, 28
  %v2917 = vpop.permute.xlu0 %2916
  %2918 = vrot.lane.b32.xlu0 %v2771, 28
  %v2919 = vpop.permute.xlu0 %2918
  %2920 = vrot.lane.b32.xlu0 %v2772, 28
  %v2921 = vpop.permute.xlu0 %2920
  %2922 = vrot.lane.b32.xlu0 %v2773, 28
  %v2923 = vpop.permute.xlu0 %2922
  %2924 = vrot.lane.b32.xlu0 %v2774, 28
  %v2925 = vpop.permute.xlu0 %2924
  %2926 = vrot.lane.b32.xlu0 %v2775, 28
  %v2927 = vpop.permute.xlu0 %2926
  %2928 = vrot.lane.b32.xlu0 %v2776, 28
  %v2929 = vpop.permute.xlu0 %2928
  %2930 = vrot.lane.b32.xlu0 %v2777, 28
  %v2931 = vpop.permute.xlu0 %2930
  %2932 = vrot.lane.b32.xlu0 %v2778, 28
  %v2933 = vpop.permute.xlu0 %2932
  %2934 = vrot.lane.b32.xlu0 %v2779, 28
  %v2935 = vpop.permute.xlu0 %2934
  %2936 = vrot.lane.b32.xlu0 %v2780, 28
  %v2937 = vpop.permute.xlu0 %2936
  %2938 = vrot.lane.b32.xlu0 %v2781, 28
  %v2939 = vpop.permute.xlu0 %2938
  %2940 = vrot.lane.b32.xlu0 %v2782, 28
  %v2941 = vpop.permute.xlu0 %2940
  %2942 = vrot.lane.b32.xlu0 %v2783, 28
  %v2943 = vpop.permute.xlu0 %2942
  %2944 = vrot.lane.b32.xlu0 %v2784, 28
  %v2945 = vpop.permute.xlu0 %2944
  %2946 = vrot.lane.b32.xlu0 %v2785, 28
  %v2947 = vpop.permute.xlu0 %2946
  %2948 = vrot.lane.b32.xlu0 %v2786, 28
  %v2949 = vpop.permute.xlu0 %2948
  %2950 = vrot.lane.b32.xlu0 %v2787, 28
  %v2951 = vpop.permute.xlu0 %2950
  %2952 = vrot.lane.b32.xlu0 %v2788, 28
  %v2953 = vpop.permute.xlu0 %2952
  %2954 = vrot.lane.b32.xlu0 %v2789, 28
  %v2955 = vpop.permute.xlu0 %2954
  %2956 = vrot.lane.b32.xlu0 %v2790, 28
  %v2957 = vpop.permute.xlu0 %2956
  %2958 = vrot.lane.b32.xlu0 %v2791, 28
  %v2959 = vpop.permute.xlu0 %2958
  %2960 = vrot.lane.b32.xlu0 %v2792, 28
  %v2961 = vpop.permute.xlu0 %2960
  %2962 = vrot.lane.b32.xlu0 %v2793, 28
  %v2963 = vpop.permute.xlu0 %2962
  %2964 = vrot.lane.b32.xlu0 %v2794, 28
  %v2965 = vpop.permute.xlu0 %2964
  %2966 = vrot.lane.b32.xlu0 %v2795, 28
  %v2967 = vpop.permute.xlu0 %2966
  %2968 = vrot.lane.b32.xlu0 %v2796, 28
  %v2969 = vpop.permute.xlu0 %2968
  %2970 = vrot.lane.b32.xlu0 %v2797, 28
  %v2971 = vpop.permute.xlu0 %2970
  %2972 = vrot.lane.b32.xlu0 %v2798, 28
  %v2973 = vpop.permute.xlu0 %2972
  %2974 = vrot.lane.b32.xlu0 %v2799, 28
  %v2975 = vpop.permute.xlu0 %2974
  %2976 = vrot.lane.b32.xlu0 %v2800, 28
  %v2977 = vpop.permute.xlu0 %2976
  %2978 = vrot.lane.b32.xlu0 %v2801, 28
  %v2979 = vpop.permute.xlu0 %2978
  %2980 = vrot.lane.b32.xlu0 %v2802, 28
  %v2981 = vpop.permute.xlu0 %2980
  %2982 = vrot.lane.b32.xlu0 %v2803, 28
  %v2983 = vpop.permute.xlu0 %2982
  %2984 = vrot.lane.b32.xlu0 %v2804, 28
  %v2985 = vpop.permute.xlu0 %2984
  %2986 = vrot.lane.b32.xlu0 %v2805, 28
  %v2987 = vpop.permute.xlu0 %2986
  %2988 = vrot.lane.b32.xlu0 %v2806, 28
  %v2989 = vpop.permute.xlu0 %2988
  %2990 = vrot.lane.b32.xlu0 %v2807, 28
  %v2991 = vpop.permute.xlu0 %2990
  %2992 = vrot.lane.b32.xlu0 %v2808, 28
  %v2993 = vpop.permute.xlu0 %2992
  %2994 = vrot.lane.b32.xlu0 %v2809, 28
  %v2995 = vpop.permute.xlu0 %2994
  %2996 = vrot.lane.b32.xlu0 %v2810, 28
  %v2997 = vpop.permute.xlu0 %2996
  %2998 = vrot.lane.b32.xlu0 %v2811, 28
  %v2999 = vpop.permute.xlu0 %2998
  %3000 = vrot.lane.b32.xlu0 %v2812, 28
  %v3001 = vpop.permute.xlu0 %3000
  %3002 = vrot.lane.b32.xlu0 %v2813, 28
  %v3003 = vpop.permute.xlu0 %3002
  %3004 = vrot.lane.b32.xlu0 %v2814, 28
  %v3005 = vpop.permute.xlu0 %3004
  %3006 = vrot.lane.b32.xlu0 %v2815, 28
  %v3007 = vpop.permute.xlu0 %3006
  %vm3072 = vcmask 261344
  %3073 = vst.msk [vmem:[#allocation4] sm:$0xff] %vm3072, %v2881
  %3074 = vst.msk [vmem:[#allocation4 + $0x8] sm:$0xff] %vm3072, %v2883
  %3075 = vst.msk [vmem:[#allocation4 + $0x10] sm:$0xff] %vm3072, %v2885
  %3076 = vst.msk [vmem:[#allocation4 + $0x18] sm:$0xff] %vm3072, %v2887
  %3077 = vst.msk [vmem:[#allocation4 + $0x20] sm:$0xff] %vm3072, %v2889
  %3078 = vst.msk [vmem:[#allocation4 + $0x28] sm:$0xff] %vm3072, %v2891
  %3079 = vst.msk [vmem:[#allocation4 + $0x30] sm:$0xff] %vm3072, %v2893
  %3080 = vst.msk [vmem:[#allocation4 + $0x38] sm:$0xff] %vm3072, %v2895
  %3081 = vst.msk [vmem:[#allocation4 + $0x40] sm:$0xff] %vm3072, %v2897
  %3082 = vst.msk [vmem:[#allocation4 + $0x48] sm:$0xff] %vm3072, %v2899
  %3083 = vst.msk [vmem:[#allocation4 + $0x50] sm:$0xff] %vm3072, %v2901
  %3084 = vst.msk [vmem:[#allocation4 + $0x58] sm:$0xff] %vm3072, %v2903
  %3085 = vst.msk [vmem:[#allocation4 + $0x60] sm:$0xff] %vm3072, %v2905
  %3086 = vst.msk [vmem:[#allocation4 + $0x68] sm:$0xff] %vm3072, %v2907
  %3087 = vst.msk [vmem:[#allocation4 + $0x70] sm:$0xff] %vm3072, %v2909
  %3088 = vst.msk [vmem:[#allocation4 + $0x78] sm:$0xff] %vm3072, %v2911
  %3089 = vst.msk [vmem:[#allocation4 + $0x80] sm:$0xff] %vm3072, %v2913
  %3090 = vst.msk [vmem:[#allocation4 + $0x88] sm:$0xff] %vm3072, %v2915
  %3091 = vst.msk [vmem:[#allocation4 + $0x90] sm:$0xff] %vm3072, %v2917
  %3092 = vst.msk [vmem:[#allocation4 + $0x98] sm:$0xff] %vm3072, %v2919
  %3093 = vst.msk [vmem:[#allocation4 + $0xa0] sm:$0xff] %vm3072, %v2921
  %3094 = vst.msk [vmem:[#allocation4 + $0xa8] sm:$0xff] %vm3072, %v2923
  %3095 = vst.msk [vmem:[#allocation4 + $0xb0] sm:$0xff] %vm3072, %v2925
  %3096 = vst.msk [vmem:[#allocation4 + $0xb8] sm:$0xff] %vm3072, %v2927
  %3097 = vst.msk [vmem:[#allocation4 + $0xc0] sm:$0xff] %vm3072, %v2929
  %3098 = vst.msk [vmem:[#allocation4 + $0xc8] sm:$0xff] %vm3072, %v2931
  %3099 = vst.msk [vmem:[#allocation4 + $0xd0] sm:$0xff] %vm3072, %v2933
  %3100 = vst.msk [vmem:[#allocation4 + $0xd8] sm:$0xff] %vm3072, %v2935
  %3101 = vst.msk [vmem:[#allocation4 + $0xe0] sm:$0xff] %vm3072, %v2937
  %3102 = vst.msk [vmem:[#allocation4 + $0xe8] sm:$0xff] %vm3072, %v2939
  %3103 = vst.msk [vmem:[#allocation4 + $0xf0] sm:$0xff] %vm3072, %v2941
  %3104 = vst.msk [vmem:[#allocation4 + $0xf8] sm:$0xff] %vm3072, %v2943
  %3105 = vst.msk [vmem:[#allocation4 + $0x100] sm:$0xff] %vm3072, %v2945
  %3106 = vst.msk [vmem:[#allocation4 + $0x108] sm:$0xff] %vm3072, %v2947
  %3107 = vst.msk [vmem:[#allocation4 + $0x110] sm:$0xff] %vm3072, %v2949
  %3108 = vst.msk [vmem:[#allocation4 + $0x118] sm:$0xff] %vm3072, %v2951
  %3109 = vst.msk [vmem:[#allocation4 + $0x120] sm:$0xff] %vm3072, %v2953
  %3110 = vst.msk [vmem:[#allocation4 + $0x128] sm:$0xff] %vm3072, %v2955
  %3111 = vst.msk [vmem:[#allocation4 + $0x130] sm:$0xff] %vm3072, %v2957
  %3112 = vst.msk [vmem:[#allocation4 + $0x138] sm:$0xff] %vm3072, %v2959
  %3113 = vst.msk [vmem:[#allocation4 + $0x140] sm:$0xff] %vm3072, %v2961
  %3114 = vst.msk [vmem:[#allocation4 + $0x148] sm:$0xff] %vm3072, %v2963
  %3115 = vst.msk [vmem:[#allocation4 + $0x150] sm:$0xff] %vm3072, %v2965
  %3116 = vst.msk [vmem:[#allocation4 + $0x158] sm:$0xff] %vm3072, %v2967
  %3117 = vst.msk [vmem:[#allocation4 + $0x160] sm:$0xff] %vm3072, %v2969
  %3118 = vst.msk [vmem:[#allocation4 + $0x168] sm:$0xff] %vm3072, %v2971
  %3119 = vst.msk [vmem:[#allocation4 + $0x170] sm:$0xff] %vm3072, %v2973
  %3120 = vst.msk [vmem:[#allocation4 + $0x178] sm:$0xff] %vm3072, %v2975
  %3121 = vst.msk [vmem:[#allocation4 + $0x180] sm:$0xff] %vm3072, %v2977
  %3122 = vst.msk [vmem:[#allocation4 + $0x188] sm:$0xff] %vm3072, %v2979
  %3123 = vst.msk [vmem:[#allocation4 + $0x190] sm:$0xff] %vm3072, %v2981
  %3124 = vst.msk [vmem:[#allocation4 + $0x198] sm:$0xff] %vm3072, %v2983
  %3125 = vst.msk [vmem:[#allocation4 + $0x1a0] sm:$0xff] %vm3072, %v2985
  %3126 = vst.msk [vmem:[#allocation4 + $0x1a8] sm:$0xff] %vm3072, %v2987
  %3127 = vst.msk [vmem:[#allocation4 + $0x1b0] sm:$0xff] %vm3072, %v2989
  %3128 = vst.msk [vmem:[#allocation4 + $0x1b8] sm:$0xff] %vm3072, %v2991
  %3129 = vst.msk [vmem:[#allocation4 + $0x1c0] sm:$0xff] %vm3072, %v2993
  %3130 = vst.msk [vmem:[#allocation4 + $0x1c8] sm:$0xff] %vm3072, %v2995
  %3131 = vst.msk [vmem:[#allocation4 + $0x1d0] sm:$0xff] %vm3072, %v2997
  %3132 = vst.msk [vmem:[#allocation4 + $0x1d8] sm:$0xff] %vm3072, %v2999
  %3133 = vst.msk [vmem:[#allocation4 + $0x1e0] sm:$0xff] %vm3072, %v3001
  %3134 = vst.msk [vmem:[#allocation4 + $0x1e8] sm:$0xff] %vm3072, %v3003
  %3135 = vst.msk [vmem:[#allocation4 + $0x1f0] sm:$0xff] %vm3072, %v3005
  %3136 = vst.msk [vmem:[#allocation4 + $0x1f8] sm:$0xff] %vm3072, %v3007
  %v3137 = vld [vmem:[%s2366 + $0x2] sm:$0xff]
  %v3138 = vld [vmem:[%s2366 + $0xa] sm:$0xff]
  %v3139 = vld [vmem:[%s2366 + $0x1a] sm:$0xff]
  %v3140 = vld [vmem:[%s2366 + $0x22] sm:$0xff]
  %v3141 = vld [vmem:[%s2366 + $0x32] sm:$0xff]
  %v3142 = vld [vmem:[%s2366 + $0x3a] sm:$0xff]
  %v3143 = vld [vmem:[%s2366 + $0x4a] sm:$0xff]
  %v3144 = vld [vmem:[%s2366 + $0x52] sm:$0xff]
  %v3145 = vld [vmem:[%s2366 + $0x62] sm:$0xff]
  %v3146 = vld [vmem:[%s2366 + $0x6a] sm:$0xff]
  %v3147 = vld [vmem:[%s2366 + $0x7a] sm:$0xff]
  %v3148 = vld [vmem:[%s2366 + $0x82] sm:$0xff]
  %v3149 = vld [vmem:[%s2366 + $0x92] sm:$0xff]
  %v3150 = vld [vmem:[%s2366 + $0x9a] sm:$0xff]
  %v3151 = vld [vmem:[%s2366 + $0xaa] sm:$0xff]
  %v3152 = vld [vmem:[%s2366 + $0xb2] sm:$0xff]
  %v3153 = vld [vmem:[%s2366 + $0xc2] sm:$0xff]
  %v3154 = vld [vmem:[%s2366 + $0xca] sm:$0xff]
  %v3155 = vld [vmem:[%s2366 + $0xda] sm:$0xff]
  %v3156 = vld [vmem:[%s2366 + $0xe2] sm:$0xff]
  %v3157 = vld [vmem:[%s2366 + $0xf2] sm:$0xff]
  %v3158 = vld [vmem:[%s2366 + $0xfa] sm:$0xff]
  %v3159 = vld [vmem:[%s2366 + $0x10a] sm:$0xff]
  %v3160 = vld [vmem:[%s2366 + $0x112] sm:$0xff]
  %v3161 = vld [vmem:[%s2366 + $0x122] sm:$0xff]
  %v3162 = vld [vmem:[%s2366 + $0x12a] sm:$0xff]
  %v3163 = vld [vmem:[%s2366 + $0x13a] sm:$0xff]
  %v3164 = vld [vmem:[%s2366 + $0x142] sm:$0xff]
  %v3165 = vld [vmem:[%s2366 + $0x152] sm:$0xff]
  %v3166 = vld [vmem:[%s2366 + $0x15a] sm:$0xff]
  %v3167 = vld [vmem:[%s2366 + $0x16a] sm:$0xff]
  %v3168 = vld [vmem:[%s2366 + $0x172] sm:$0xff]
  %v3169 = vld [vmem:[%s2366 + $0x1b2] sm:$0xff]
  %v3170 = vld [vmem:[%s2366 + $0x1ba] sm:$0xff]
  %v3171 = vld [vmem:[%s2366 + $0x1ca] sm:$0xff]
  %v3172 = vld [vmem:[%s2366 + $0x1d2] sm:$0xff]
  %v3173 = vld [vmem:[%s2366 + $0x1e2] sm:$0xff]
  %v3174 = vld [vmem:[%s2366 + $0x1ea] sm:$0xff]
  %v3175 = vld [vmem:[%s2366 + $0x1fa] sm:$0xff]
  %v3176 = vld [vmem:[%s2366 + $0x202] sm:$0xff]
  %v3177 = vld [vmem:[%s2366 + $0x212] sm:$0xff]
  %v3178 = vld [vmem:[%s2366 + $0x21a] sm:$0xff]
  %v3179 = vld [vmem:[%s2366 + $0x22a] sm:$0xff]
  %v3180 = vld [vmem:[%s2366 + $0x232] sm:$0xff]
  %v3181 = vld [vmem:[%s2366 + $0x242] sm:$0xff]
  %v3182 = vld [vmem:[%s2366 + $0x24a] sm:$0xff]
  %v3183 = vld [vmem:[%s2366 + $0x25a] sm:$0xff]
  %v3184 = vld [vmem:[%s2366 + $0x262] sm:$0xff]
  %v3185 = vld [vmem:[%s2366 + $0x272] sm:$0xff]
  %v3186 = vld [vmem:[%s2366 + $0x27a] sm:$0xff]
  %v3187 = vld [vmem:[%s2366 + $0x28a] sm:$0xff]
  %v3188 = vld [vmem:[%s2366 + $0x292] sm:$0xff]
  %v3189 = vld [vmem:[%s2366 + $0x2a2] sm:$0xff]
  %v3190 = vld [vmem:[%s2366 + $0x2aa] sm:$0xff]
  %v3191 = vld [vmem:[%s2366 + $0x2ba] sm:$0xff]
  %v3192 = vld [vmem:[%s2366 + $0x2c2] sm:$0xff]
  %v3193 = vld [vmem:[%s2366 + $0x2d2] sm:$0xff]
  %v3194 = vld [vmem:[%s2366 + $0x2da] sm:$0xff]
  %v3195 = vld [vmem:[%s2366 + $0x2ea] sm:$0xff]
  %v3196 = vld [vmem:[%s2366 + $0x2f2] sm:$0xff]
  %v3197 = vld [vmem:[%s2366 + $0x302] sm:$0xff]
  %v3198 = vld [vmem:[%s2366 + $0x30a] sm:$0xff]
  %v3199 = vld [vmem:[%s2366 + $0x31a] sm:$0xff]
  %v3200 = vld [vmem:[%s2366 + $0x322] sm:$0xff]
  %3265 = vrot.lane.b32.xlu0 %v3137, 32
  %v3266 = vpop.permute.xlu0 %3265
  %3267 = vrot.lane.b32.xlu0 %v3138, 32
  %v3268 = vpop.permute.xlu0 %3267
  %3269 = vrot.lane.b32.xlu0 %v3139, 32
  %v3270 = vpop.permute.xlu0 %3269
  %3271 = vrot.lane.b32.xlu0 %v3140, 32
  %v3272 = vpop.permute.xlu0 %3271
  %3273 = vrot.lane.b32.xlu0 %v3141, 32
  %v3274 = vpop.permute.xlu0 %3273
  %3275 = vrot.lane.b32.xlu0 %v3142, 32
  %v3276 = vpop.permute.xlu0 %3275
  %3277 = vrot.lane.b32.xlu0 %v3143, 32
  %v3278 = vpop.permute.xlu0 %3277
  %3279 = vrot.lane.b32.xlu0 %v3144, 32
  %v3280 = vpop.permute.xlu0 %3279
  %3281 = vrot.lane.b32.xlu0 %v3145, 32
  %v3282 = vpop.permute.xlu0 %3281
  %3283 = vrot.lane.b32.xlu0 %v3146, 32
  %v3284 = vpop.permute.xlu0 %3283
  %3285 = vrot.lane.b32.xlu0 %v3147, 32
  %v3286 = vpop.permute.xlu0 %3285
  %3287 = vrot.lane.b32.xlu0 %v3148, 32
  %v3288 = vpop.permute.xlu0 %3287
  %3289 = vrot.lane.b32.xlu0 %v3149, 32
  %v3290 = vpop.permute.xlu0 %3289
  %3291 = vrot.lane.b32.xlu0 %v3150, 32
  %v3292 = vpop.permute.xlu0 %3291
  %3293 = vrot.lane.b32.xlu0 %v3151, 32
  %v3294 = vpop.permute.xlu0 %3293
  %3295 = vrot.lane.b32.xlu0 %v3152, 32
  %v3296 = vpop.permute.xlu0 %3295
  %3297 = vrot.lane.b32.xlu0 %v3153, 32
  %v3298 = vpop.permute.xlu0 %3297
  %3299 = vrot.lane.b32.xlu0 %v3154, 32
  %v3300 = vpop.permute.xlu0 %3299
  %3301 = vrot.lane.b32.xlu0 %v3155, 32
  %v3302 = vpop.permute.xlu0 %3301
  %3303 = vrot.lane.b32.xlu0 %v3156, 32
  %v3304 = vpop.permute.xlu0 %3303
  %3305 = vrot.lane.b32.xlu0 %v3157, 32
  %v3306 = vpop.permute.xlu0 %3305
  %3307 = vrot.lane.b32.xlu0 %v3158, 32
  %v3308 = vpop.permute.xlu0 %3307
  %3309 = vrot.lane.b32.xlu0 %v3159, 32
  %v3310 = vpop.permute.xlu0 %3309
  %3311 = vrot.lane.b32.xlu0 %v3160, 32
  %v3312 = vpop.permute.xlu0 %3311
  %3313 = vrot.lane.b32.xlu0 %v3161, 32
  %v3314 = vpop.permute.xlu0 %3313
  %3315 = vrot.lane.b32.xlu0 %v3162, 32
  %v3316 = vpop.permute.xlu0 %3315
  %3317 = vrot.lane.b32.xlu0 %v3163, 32
  %v3318 = vpop.permute.xlu0 %3317
  %3319 = vrot.lane.b32.xlu0 %v3164, 32
  %v3320 = vpop.permute.xlu0 %3319
  %3321 = vrot.lane.b32.xlu0 %v3165, 32
  %v3322 = vpop.permute.xlu0 %3321
  %3323 = vrot.lane.b32.xlu0 %v3166, 32
  %v3324 = vpop.permute.xlu0 %3323
  %3325 = vrot.lane.b32.xlu0 %v3167, 32
  %v3326 = vpop.permute.xlu0 %3325
  %3327 = vrot.lane.b32.xlu0 %v3168, 32
  %v3328 = vpop.permute.xlu0 %3327
  %3329 = vrot.lane.b32.xlu0 %v3169, 32
  %v3330 = vpop.permute.xlu0 %3329
  %3331 = vrot.lane.b32.xlu0 %v3170, 32
  %v3332 = vpop.permute.xlu0 %3331
  %3333 = vrot.lane.b32.xlu0 %v3171, 32
  %v3334 = vpop.permute.xlu0 %3333
  %3335 = vrot.lane.b32.xlu0 %v3172, 32
  %v3336 = vpop.permute.xlu0 %3335
  %3337 = vrot.lane.b32.xlu0 %v3173, 32
  %v3338 = vpop.permute.xlu0 %3337
  %3339 = vrot.lane.b32.xlu0 %v3174, 32
  %v3340 = vpop.permute.xlu0 %3339
  %3341 = vrot.lane.b32.xlu0 %v3175, 32
  %v3342 = vpop.permute.xlu0 %3341
  %3343 = vrot.lane.b32.xlu0 %v3176, 32
  %v3344 = vpop.permute.xlu0 %3343
  %3345 = vrot.lane.b32.xlu0 %v3177, 32
  %v3346 = vpop.permute.xlu0 %3345
  %3347 = vrot.lane.b32.xlu0 %v3178, 32
  %v3348 = vpop.permute.xlu0 %3347
  %3349 = vrot.lane.b32.xlu0 %v3179, 32
  %v3350 = vpop.permute.xlu0 %3349
  %3351 = vrot.lane.b32.xlu0 %v3180, 32
  %v3352 = vpop.permute.xlu0 %3351
  %3353 = vrot.lane.b32.xlu0 %v3181, 32
  %v3354 = vpop.permute.xlu0 %3353
  %3355 = vrot.lane.b32.xlu0 %v3182, 32
  %v3356 = vpop.permute.xlu0 %3355
  %3357 = vrot.lane.b32.xlu0 %v3183, 32
  %v3358 = vpop.permute.xlu0 %3357
  %3359 = vrot.lane.b32.xlu0 %v3184, 32
  %v3360 = vpop.permute.xlu0 %3359
  %3361 = vrot.lane.b32.xlu0 %v3185, 32
  %v3362 = vpop.permute.xlu0 %3361
  %3363 = vrot.lane.b32.xlu0 %v3186, 32
  %v3364 = vpop.permute.xlu0 %3363
  %3365 = vrot.lane.b32.xlu0 %v3187, 32
  %v3366 = vpop.permute.xlu0 %3365
  %3367 = vrot.lane.b32.xlu0 %v3188, 32
  %v3368 = vpop.permute.xlu0 %3367
  %3369 = vrot.lane.b32.xlu0 %v3189, 32
  %v3370 = vpop.permute.xlu0 %3369
  %3371 = vrot.lane.b32.xlu0 %v3190, 32
  %v3372 = vpop.permute.xlu0 %3371
  %3373 = vrot.lane.b32.xlu0 %v3191, 32
  %v3374 = vpop.permute.xlu0 %3373
  %3375 = vrot.lane.b32.xlu0 %v3192, 32
  %v3376 = vpop.permute.xlu0 %3375
  %3377 = vrot.lane.b32.xlu0 %v3193, 32
  %v3378 = vpop.permute.xlu0 %3377
  %3379 = vrot.lane.b32.xlu0 %v3194, 32
  %v3380 = vpop.permute.xlu0 %3379
  %3381 = vrot.lane.b32.xlu0 %v3195, 32
  %v3382 = vpop.permute.xlu0 %3381
  %3383 = vrot.lane.b32.xlu0 %v3196, 32
  %v3384 = vpop.permute.xlu0 %3383
  %3385 = vrot.lane.b32.xlu0 %v3197, 32
  %v3386 = vpop.permute.xlu0 %3385
  %3387 = vrot.lane.b32.xlu0 %v3198, 32
  %v3388 = vpop.permute.xlu0 %3387
  %3389 = vrot.lane.b32.xlu0 %v3199, 32
  %v3390 = vpop.permute.xlu0 %3389
  %3391 = vrot.lane.b32.xlu0 %v3200, 32
  %v3392 = vpop.permute.xlu0 %3391
  %vm3457 = vcmask 294144
  %3458 = vst.msk [vmem:[#allocation4] sm:$0xff] %vm3457, %v3266
  %3459 = vst.msk [vmem:[#allocation4 + $0x8] sm:$0xff] %vm3457, %v3268
  %3460 = vst.msk [vmem:[#allocation4 + $0x10] sm:$0xff] %vm3457, %v3270
  %3461 = vst.msk [vmem:[#allocation4 + $0x18] sm:$0xff] %vm3457, %v3272
  %3462 = vst.msk [vmem:[#allocation4 + $0x20] sm:$0xff] %vm3457, %v3274
  %3463 = vst.msk [vmem:[#allocation4 + $0x28] sm:$0xff] %vm3457, %v3276
  %3464 = vst.msk [vmem:[#allocation4 + $0x30] sm:$0xff] %vm3457, %v3278
  %3465 = vst.msk [vmem:[#allocation4 + $0x38] sm:$0xff] %vm3457, %v3280
  %3466 = vst.msk [vmem:[#allocation4 + $0x40] sm:$0xff] %vm3457, %v3282
  %3467 = vst.msk [vmem:[#allocation4 + $0x48] sm:$0xff] %vm3457, %v3284
  %3468 = vst.msk [vmem:[#allocation4 + $0x50] sm:$0xff] %vm3457, %v3286
  %3469 = vst.msk [vmem:[#allocation4 + $0x58] sm:$0xff] %vm3457, %v3288
  %3470 = vst.msk [vmem:[#allocation4 + $0x60] sm:$0xff] %vm3457, %v3290
  %3471 = vst.msk [vmem:[#allocation4 + $0x68] sm:$0xff] %vm3457, %v3292
  %3472 = vst.msk [vmem:[#allocation4 + $0x70] sm:$0xff] %vm3457, %v3294
  %3473 = vst.msk [vmem:[#allocation4 + $0x78] sm:$0xff] %vm3457, %v3296
  %3474 = vst.msk [vmem:[#allocation4 + $0x80] sm:$0xff] %vm3457, %v3298
  %3475 = vst.msk [vmem:[#allocation4 + $0x88] sm:$0xff] %vm3457, %v3300
  %3476 = vst.msk [vmem:[#allocation4 + $0x90] sm:$0xff] %vm3457, %v3302
  %3477 = vst.msk [vmem:[#allocation4 + $0x98] sm:$0xff] %vm3457, %v3304
  %3478 = vst.msk [vmem:[#allocation4 + $0xa0] sm:$0xff] %vm3457, %v3306
  %3479 = vst.msk [vmem:[#allocation4 + $0xa8] sm:$0xff] %vm3457, %v3308
  %3480 = vst.msk [vmem:[#allocation4 + $0xb0] sm:$0xff] %vm3457, %v3310
  %3481 = vst.msk [vmem:[#allocation4 + $0xb8] sm:$0xff] %vm3457, %v3312
  %3482 = vst.msk [vmem:[#allocation4 + $0xc0] sm:$0xff] %vm3457, %v3314
  %3483 = vst.msk [vmem:[#allocation4 + $0xc8] sm:$0xff] %vm3457, %v3316
  %3484 = vst.msk [vmem:[#allocation4 + $0xd0] sm:$0xff] %vm3457, %v3318
  %3485 = vst.msk [vmem:[#allocation4 + $0xd8] sm:$0xff] %vm3457, %v3320
  %3486 = vst.msk [vmem:[#allocation4 + $0xe0] sm:$0xff] %vm3457, %v3322
  %3487 = vst.msk [vmem:[#allocation4 + $0xe8] sm:$0xff] %vm3457, %v3324
  %3488 = vst.msk [vmem:[#allocation4 + $0xf0] sm:$0xff] %vm3457, %v3326
  %3489 = vst.msk [vmem:[#allocation4 + $0xf8] sm:$0xff] %vm3457, %v3328
  %3490 = vst.msk [vmem:[#allocation4 + $0x100] sm:$0xff] %vm3457, %v3330
  %3491 = vst.msk [vmem:[#allocation4 + $0x108] sm:$0xff] %vm3457, %v3332
  %3492 = vst.msk [vmem:[#allocation4 + $0x110] sm:$0xff] %vm3457, %v3334
  %3493 = vst.msk [vmem:[#allocation4 + $0x118] sm:$0xff] %vm3457, %v3336
  %3494 = vst.msk [vmem:[#allocation4 + $0x120] sm:$0xff] %vm3457, %v3338
  %3495 = vst.msk [vmem:[#allocation4 + $0x128] sm:$0xff] %vm3457, %v3340
  %3496 = vst.msk [vmem:[#allocation4 + $0x130] sm:$0xff] %vm3457, %v3342
  %3497 = vst.msk [vmem:[#allocation4 + $0x138] sm:$0xff] %vm3457, %v3344
  %3498 = vst.msk [vmem:[#allocation4 + $0x140] sm:$0xff] %vm3457, %v3346
  %3499 = vst.msk [vmem:[#allocation4 + $0x148] sm:$0xff] %vm3457, %v3348
  %3500 = vst.msk [vmem:[#allocation4 + $0x150] sm:$0xff] %vm3457, %v3350
  %3501 = vst.msk [vmem:[#allocation4 + $0x158] sm:$0xff] %vm3457, %v3352
  %3502 = vst.msk [vmem:[#allocation4 + $0x160] sm:$0xff] %vm3457, %v3354
  %3503 = vst.msk [vmem:[#allocation4 + $0x168] sm:$0xff] %vm3457, %v3356
  %3504 = vst.msk [vmem:[#allocation4 + $0x170] sm:$0xff] %vm3457, %v3358
  %3505 = vst.msk [vmem:[#allocation4 + $0x178] sm:$0xff] %vm3457, %v3360
  %3506 = vst.msk [vmem:[#allocation4 + $0x180] sm:$0xff] %vm3457, %v3362
  %3507 = vst.msk [vmem:[#allocation4 + $0x188] sm:$0xff] %vm3457, %v3364
  %3508 = vst.msk [vmem:[#allocation4 + $0x190] sm:$0xff] %vm3457, %v3366
  %3509 = vst.msk [vmem:[#allocation4 + $0x198] sm:$0xff] %vm3457, %v3368
  %3510 = vst.msk [vmem:[#allocation4 + $0x1a0] sm:$0xff] %vm3457, %v3370
  %3511 = vst.msk [vmem:[#allocation4 + $0x1a8] sm:$0xff] %vm3457, %v3372
  %3512 = vst.msk [vmem:[#allocation4 + $0x1b0] sm:$0xff] %vm3457, %v3374
  %3513 = vst.msk [vmem:[#allocation4 + $0x1b8] sm:$0xff] %vm3457, %v3376
  %3514 = vst.msk [vmem:[#allocation4 + $0x1c0] sm:$0xff] %vm3457, %v3378
  %3515 = vst.msk [vmem:[#allocation4 + $0x1c8] sm:$0xff] %vm3457, %v3380
  %3516 = vst.msk [vmem:[#allocation4 + $0x1d0] sm:$0xff] %vm3457, %v3382
  %3517 = vst.msk [vmem:[#allocation4 + $0x1d8] sm:$0xff] %vm3457, %v3384
  %3518 = vst.msk [vmem:[#allocation4 + $0x1e0] sm:$0xff] %vm3457, %v3386
  %3519 = vst.msk [vmem:[#allocation4 + $0x1e8] sm:$0xff] %vm3457, %v3388
  %3520 = vst.msk [vmem:[#allocation4 + $0x1f0] sm:$0xff] %vm3457, %v3390
  %3521 = vst.msk [vmem:[#allocation4 + $0x1f8] sm:$0xff] %vm3457, %v3392
  %v3522 = vld [vmem:[#allocation4] sm:$0xff]
  %v3523 = vld [vmem:[#allocation4 + $0x8] sm:$0xff]
  %v3524 = vld [vmem:[#allocation4 + $0x10] sm:$0xff]
  %v3525 = vld [vmem:[#allocation4 + $0x18] sm:$0xff]
  %v3526 = vld [vmem:[#allocation4 + $0x20] sm:$0xff]
  %v3527 = vld [vmem:[#allocation4 + $0x28] sm:$0xff]
  %v3528 = vld [vmem:[#allocation4 + $0x30] sm:$0xff]
  %v3529 = vld [vmem:[#allocation4 + $0x38] sm:$0xff]
  %v3530 = vld [vmem:[#allocation4 + $0x40] sm:$0xff]
  %v3531 = vld [vmem:[#allocation4 + $0x48] sm:$0xff]
  %v3532 = vld [vmem:[#allocation4 + $0x50] sm:$0xff]
  %v3533 = vld [vmem:[#allocation4 + $0x58] sm:$0xff]
  %v3534 = vld [vmem:[#allocation4 + $0x60] sm:$0xff]
  %v3535 = vld [vmem:[#allocation4 + $0x68] sm:$0xff]
  %v3536 = vld [vmem:[#allocation4 + $0x70] sm:$0xff]
  %v3537 = vld [vmem:[#allocation4 + $0x78] sm:$0xff]
  %v3538 = vld [vmem:[#allocation4 + $0x80] sm:$0xff]
  %v3539 = vld [vmem:[#allocation4 + $0x88] sm:$0xff]
  %v3540 = vld [vmem:[#allocation4 + $0x90] sm:$0xff]
  %v3541 = vld [vmem:[#allocation4 + $0x98] sm:$0xff]
  %v3542 = vld [vmem:[#allocation4 + $0xa0] sm:$0xff]
  %v3543 = vld [vmem:[#allocation4 + $0xa8] sm:$0xff]
  %v3544 = vld [vmem:[#allocation4 + $0xb0] sm:$0xff]
  %v3545 = vld [vmem:[#allocation4 + $0xb8] sm:$0xff]
  %v3546 = vld [vmem:[#allocation4 + $0xc0] sm:$0xff]
  %v3547 = vld [vmem:[#allocation4 + $0xc8] sm:$0xff]
  %v3548 = vld [vmem:[#allocation4 + $0xd0] sm:$0xff]
  %v3549 = vld [vmem:[#allocation4 + $0xd8] sm:$0xff]
  %v3550 = vld [vmem:[#allocation4 + $0xe0] sm:$0xff]
  %v3551 = vld [vmem:[#allocation4 + $0xe8] sm:$0xff]
  %v3552 = vld [vmem:[#allocation4 + $0xf0] sm:$0xff]
  %v3553 = vld [vmem:[#allocation4 + $0xf8] sm:$0xff]
  %v3554 = vld [vmem:[#allocation4 + $0x100] sm:$0xff]
  %v3555 = vld [vmem:[#allocation4 + $0x108] sm:$0xff]
  %v3556 = vld [vmem:[#allocation4 + $0x110] sm:$0xff]
  %v3557 = vld [vmem:[#allocation4 + $0x118] sm:$0xff]
  %v3558 = vld [vmem:[#allocation4 + $0x120] sm:$0xff]
  %v3559 = vld [vmem:[#allocation4 + $0x128] sm:$0xff]
  %v3560 = vld [vmem:[#allocation4 + $0x130] sm:$0xff]
  %v3561 = vld [vmem:[#allocation4 + $0x138] sm:$0xff]
  %v3562 = vld [vmem:[#allocation4 + $0x140] sm:$0xff]
  %v3563 = vld [vmem:[#allocation4 + $0x148] sm:$0xff]
  %v3564 = vld [vmem:[#allocation4 + $0x150] sm:$0xff]
  %v3565 = vld [vmem:[#allocation4 + $0x158] sm:$0xff]
  %v3566 = vld [vmem:[#allocation4 + $0x160] sm:$0xff]
  %v3567 = vld [vmem:[#allocation4 + $0x168] sm:$0xff]
  %v3568 = vld [vmem:[#allocation4 + $0x170] sm:$0xff]
  %v3569 = vld [vmem:[#allocation4 + $0x178] sm:$0xff]
  %v3570 = vld [vmem:[#allocation4 + $0x180] sm:$0xff]
  %v3571 = vld [vmem:[#allocation4 + $0x188] sm:$0xff]
  %v3572 = vld [vmem:[#allocation4 + $0x190] sm:$0xff]
  %v3573 = vld [vmem:[#allocation4 + $0x198] sm:$0xff]
  %v3574 = vld [vmem:[#allocation4 + $0x1a0] sm:$0xff]
  %v3575 = vld [vmem:[#allocation4 + $0x1a8] sm:$0xff]
  %v3576 = vld [vmem:[#allocation4 + $0x1b0] sm:$0xff]
  %v3577 = vld [vmem:[#allocation4 + $0x1b8] sm:$0xff]
  %v3578 = vld [vmem:[#allocation4 + $0x1c0] sm:$0xff]
  %v3579 = vld [vmem:[#allocation4 + $0x1c8] sm:$0xff]
  %v3580 = vld [vmem:[#allocation4 + $0x1d0] sm:$0xff]
  %v3581 = vld [vmem:[#allocation4 + $0x1d8] sm:$0xff]
  %v3582 = vld [vmem:[#allocation4 + $0x1e0] sm:$0xff]
  %v3583 = vld [vmem:[#allocation4 + $0x1e8] sm:$0xff]
  %v3584 = vld [vmem:[#allocation4 + $0x1f0] sm:$0xff]
  %v3585 = vld [vmem:[#allocation4 + $0x1f8] sm:$0xff]
  %v3586 = vld [vmem:[%s1] sm:$0xff]
  %v3587 = vld [vmem:[%s1 + $0x8] sm:$0xff]
  %v3588 = vld [vmem:[%s1 + $0x10] sm:$0xff]
  %v3589 = vld [vmem:[%s1 + $0x18] sm:$0xff]
  %v3590 = vld [vmem:[%s1 + $0x20] sm:$0xf]
  %vm3591 = vcmask 293888
  %v3593 = vsel %vm3591, %v3522, 0
  %v3596 = vsel %vm3591, %v3523, 0
  %v3599 = vsel %vm3591, %v3524, 0
  %v3602 = vsel %vm3591, %v3525, 0
  %v3605 = vsel %vm3591, %v3526, 0
  %v3608 = vsel %vm3591, %v3527, 0
  %v3611 = vsel %vm3591, %v3528, 0
  %v3614 = vsel %vm3591, %v3529, 0
  %v3617 = vsel %vm3591, %v3530, 0
  %v3620 = vsel %vm3591, %v3531, 0
  %v3623 = vsel %vm3591, %v3532, 0
  %v3626 = vsel %vm3591, %v3533, 0
  %v3629 = vsel %vm3591, %v3534, 0
  %v3632 = vsel %vm3591, %v3535, 0
  %v3635 = vsel %vm3591, %v3536, 0
  %v3638 = vsel %vm3591, %v3537, 0
  %v3641 = vsel %vm3591, %v3538, 0
  %v3644 = vsel %vm3591, %v3539, 0
  %v3647 = vsel %vm3591, %v3540, 0
  %v3650 = vsel %vm3591, %v3541, 0
  %v3653 = vsel %vm3591, %v3542, 0
  %v3656 = vsel %vm3591, %v3543, 0
  %v3659 = vsel %vm3591, %v3544, 0
  %v3662 = vsel %vm3591, %v3545, 0
  %v3665 = vsel %vm3591, %v3546, 0
  %v3668 = vsel %vm3591, %v3547, 0
  %v3671 = vsel %vm3591, %v3548, 0
  %v3674 = vsel %vm3591, %v3549, 0
  %v3677 = vsel %vm3591, %v3550, 0
  %v3680 = vsel %vm3591, %v3551, 0
  %v3683 = vsel %vm3591, %v3552, 0
  %v3686 = vsel %vm3591, %v3553, 0
  %v3689 = vsel %vm3591, %v3554, 0
  %v3692 = vsel %vm3591, %v3555, 0
  %v3695 = vsel %vm3591, %v3556, 0
  %v3698 = vsel %vm3591, %v3557, 0
  %v3701 = vsel %vm3591, %v3558, 0
  %v3704 = vsel %vm3591, %v3559, 0
  %v3707 = vsel %vm3591, %v3560, 0
  %v3710 = vsel %vm3591, %v3561, 0
  %v3713 = vsel %vm3591, %v3562, 0
  %v3716 = vsel %vm3591, %v3563, 0
  %v3719 = vsel %vm3591, %v3564, 0
  %v3722 = vsel %vm3591, %v3565, 0
  %v3725 = vsel %vm3591, %v3566, 0
  %v3728 = vsel %vm3591, %v3567, 0
  %v3731 = vsel %vm3591, %v3568, 0
  %v3734 = vsel %vm3591, %v3569, 0
  %v3737 = vsel %vm3591, %v3570, 0
  %v3740 = vsel %vm3591, %v3571, 0
  %v3743 = vsel %vm3591, %v3572, 0
  %v3746 = vsel %vm3591, %v3573, 0
  %v3749 = vsel %vm3591, %v3574, 0
  %v3752 = vsel %vm3591, %v3575, 0
  %v3755 = vsel %vm3591, %v3576, 0
  %v3758 = vsel %vm3591, %v3577, 0
  %v3761 = vsel %vm3591, %v3578, 0
  %v3764 = vsel %vm3591, %v3579, 0
  %v3767 = vsel %vm3591, %v3580, 0
  %v3770 = vsel %vm3591, %v3581, 0
  %v3773 = vsel %vm3591, %v3582, 0
  %v3776 = vsel %vm3591, %v3583, 0
  %v3779 = vsel %vm3591, %v3584, 0
  %v3782 = vsel %vm3591, %v3585, 0
  %vm3784 = vcmask 1043456
  %v3786 = vsel %vm3784, %v3590, 0
  %3788 = vmatprep.subr.mxu0 0.0
  %3789 = vmatpush1.msra.mxu0 %v3586
  %3790 = vmatprep.subr.mxu0 0.0
  %3791 = vmatpush1.msra.mxu0 %v3587
  %3792 = vmatprep.subr.mxu0 0.0
  %3793 = vmatpush1.msra.mxu0 %v3588
  %3794 = vmatprep.subr.mxu0 0.0
  %3795 = vmatpush1.msra.mxu0 %v3589
  %3796 = vmatprep.subr.mxu0 0.0
  %3797 = vmatpush1.msra.mxu0 %v3786
  %3798 = vmatprep.subr.mxu0 0.0
  %3799 = vmatpush1.msra.mxu0 0.0
  %3800 = vmatprep.subr.mxu0 0.0
  %3801 = vmatpush1.msra.mxu0 0.0
  %3802 = vmatprep.subr.mxu0 0.0
  %3803 = vmatpush1.msra.mxu0 0.0
  %3804 = vmatprep.subr.mxu0 0.0
  %3805 = vmatpush1.msra.mxu0 0.0
  %3806 = vmatprep.subr.mxu0 0.0
  %3807 = vmatpush1.msra.mxu0 0.0
  %3808 = vmatprep.subr.mxu0 0.0
  %3809 = vmatpush1.msra.mxu0 0.0
  %3810 = vmatprep.subr.mxu0 0.0
  %3811 = vmatpush1.msra.mxu0 0.0
  %3812 = vmatprep.subr.mxu0 0.0
  %3813 = vmatpush1.msra.mxu0 0.0
  %3814 = vmatprep.subr.mxu0 0.0
  %3815 = vmatpush1.msra.mxu0 0.0
  %3816 = vmatprep.subr.mxu0 0.0
  %3817 = vmatpush1.msra.mxu0 0.0
  %3818 = vmatprep.subr.mxu0 0.0
  %3819 = vmatpush1.msra.mxu0 0.0
  %3820 = vmatprep.subr.mxu0 0.0
  %3821 = vmatpush1.msra.mxu0 0.0
  %3822 = vmatprep.subr.mxu0 0.0
  %3823 = vmatpush1.msra.mxu0 0.0
  %3824 = vmatprep.subr.mxu0 0.0
  %3825 = vmatpush1.msra.mxu0 0.0
  %3826 = vmatprep.subr.mxu0 0.0
  %3827 = vmatpush1.msra.mxu0 0.0
  %3828 = vmatprep.subr.mxu0 0.0
  %3829 = vmatpush1.msra.mxu0 0.0
  %3830 = vmatprep.subr.mxu0 0.0
  %3831 = vmatpush1.msra.mxu0 0.0
  %3832 = vmatprep.subr.mxu0 0.0
  %3833 = vmatpush1.msra.mxu0 0.0
  %3834 = vmatprep.subr.mxu0 0.0
  %3835 = vmatpush1.msra.mxu0 0.0
  %3836 = vmatprep.subr.mxu0 0.0
  %3837 = vmatpush1.msra.mxu0 0.0
  %3838 = vmatprep.subr.mxu0 0.0
  %3839 = vmatpush1.msra.mxu0 0.0
  %3840 = vmatprep.subr.mxu0 0.0
  %3841 = vmatpush1.msra.mxu0 0.0
  %3842 = vmatprep.subr.mxu0 0.0
  %3843 = vmatpush1.msra.mxu0 0.0
  %3844 = vmatprep.subr.mxu0 0.0
  %3845 = vmatpush1.msra.mxu0 0.0
  %3846 = vmatprep.subr.mxu0 0.0
  %3847 = vmatpush1.msra.mxu0 0.0
  %3848 = vmatprep.subr.mxu0 0.0
  %3849 = vmatpush1.msra.mxu0 0.0
  %3850 = vmatprep.subr.mxu0 0.0
  %3851 = vmatpush1.msra.mxu0 0.0
  %3852 = vmatprep.mubr.f32.mxu0 0.0
  %3853 = vmatmul.mubr.f32.gmra.mrb[0].mxu0 %v3593
  %v3854 = vpop.f32.mrb[0].mxu0
  %v3855 = vadd.f32 0.0, %v3854
  %v3856 = vpop.f32.mrb[0].mxu0
  %3857 = vmatprep.mubr.f32.mxu0 0.0
  %3858 = vmatmul.mubr.f32.gmra.mrb[0].mxu0 %v3596
  %v3859 = vpop.f32.mrb[0].mxu0
  %v3860 = vadd.f32 0.0, %v3859
  %v3861 = vpop.f32.mrb[0].mxu0
  %3862 = vmatprep.mubr.f32.mxu0 0.0
  %3863 = vmatmul.mubr.f32.gmra.mrb[0].mxu0 %v3599
  %v3864 = vpop.f32.mrb[0].mxu0
  %v3865 = vadd.f32 0.0, %v3864
  %v3866 = vpop.f32.mrb[0].mxu0
  %3867 = vmatprep.mubr.f32.mxu0 0.0
  %3868 = vmatmul.mubr.f32.gmra.mrb[0].mxu0 %v3602
  %v3869 = vpop.f32.mrb[0].mxu0
  %v3870 = vadd.f32 0.0, %v3869
  %v3871 = vpop.f32.mrb[0].mxu0
  %3872 = vmatprep.mubr.f32.mxu0 0.0
  %3873 = vmatmul.mubr.f32.gmra.mrb[0].mxu0 %v3605
  %v3874 = vpop.f32.mrb[0].mxu0
  %v3875 = vadd.f32 0.0, %v3874
  %v3876 = vpop.f32.mrb[0].mxu0
  %3877 = vmatprep.mubr.f32.mxu0 0.0
  %3878 = vmatmul.mubr.f32.gmra.mrb[0].mxu0 %v3608
  %v3879 = vpop.f32.mrb[0].mxu0
  %v3880 = vadd.f32 0.0, %v3879
  %v3881 = vpop.f32.mrb[0].mxu0
  %3882 = vmatprep.mubr.f32.mxu0 0.0
  %3883 = vmatmul.mubr.f32.gmra.mrb[0].mxu0 %v3611
  %v3884 = vpop.f32.mrb[0].mxu0
  %v3885 = vadd.f32 0.0, %v3884
  %v3886 = vpop.f32.mrb[0].mxu0
  %3887 = vmatprep.mubr.f32.mxu0 0.0
  %3888 = vmatmul.mubr.f32.gmra.mrb[0].mxu0 %v3614
  %v3889 = vpop.f32.mrb[0].mxu0
  %v3890 = vadd.f32 0.0, %v3889
  %v3891 = vpop.f32.mrb[0].mxu0
  %3892 = vmatprep.mubr.f32.mxu0 0.0
  %3893 = vmatmul.mubr.f32.gmra.mrb[0].mxu0 %v3617
  %v3894 = vpop.f32.mrb[0].mxu0
  %v3895 = vadd.f32 0.0, %v3894
  %v3896 = vpop.f32.mrb[0].mxu0
  %3897 = vmatprep.mubr.f32.mxu0 0.0
  %3898 = vmatmul.mubr.f32.gmra.mrb[0].mxu0 %v3620
  %v3899 = vpop.f32.mrb[0].mxu0
  %v3900 = vadd.f32 0.0, %v3899
  %v3901 = vpop.f32.mrb[0].mxu0
  %3902 = vmatprep.mubr.f32.mxu0 0.0
  %3903 = vmatmul.mubr.f32.gmra.mrb[0].mxu0 %v3623
  %v3904 = vpop.f32.mrb[0].mxu0
  %v3905 = vadd.f32 0.0, %v3904
  %v3906 = vpop.f32.mrb[0].mxu0
  %3907 = vmatprep.mubr.f32.mxu0 0.0
  %3908 = vmatmul.mubr.f32.gmra.mrb[0].mxu0 %v3626
  %v3909 = vpop.f32.mrb[0].mxu0
  %v3910 = vadd.f32 0.0, %v3909
  %v3911 = vpop.f32.mrb[0].mxu0
  %3912 = vmatprep.mubr.f32.mxu0 0.0
  %3913 = vmatmul.mubr.f32.gmra.mrb[0].mxu0 %v3629
  %v3914 = vpop.f32.mrb[0].mxu0
  %v3915 = vadd.f32 0.0, %v3914
  %v3916 = vpop.f32.mrb[0].mxu0
  %3917 = vmatprep.mubr.f32.mxu0 0.0
  %3918 = vmatmul.mubr.f32.gmra.mrb[0].mxu0 %v3632
  %v3919 = vpop.f32.mrb[0].mxu0
  %v3920 = vadd.f32 0.0, %v3919
  %v3921 = vpop.f32.mrb[0].mxu0
  %3922 = vmatprep.mubr.f32.mxu0 0.0
  %3923 = vmatmul.mubr.f32.gmra.mrb[0].mxu0 %v3635
  %v3924 = vpop.f32.mrb[0].mxu0
  %v3925 = vadd.f32 0.0, %v3924
  %v3926 = vpop.f32.mrb[0].mxu0
  %3927 = vmatprep.mubr.f32.mxu0 0.0
  %3928 = vmatmul.mubr.f32.gmra.mrb[0].mxu0 %v3638
  %v3929 = vpop.f32.mrb[0].mxu0
  %v3930 = vadd.f32 0.0, %v3929
  %v3931 = vpop.f32.mrb[0].mxu0
  %3932 = vmatprep.mubr.f32.mxu0 0.0
  %3933 = vmatmul.mubr.f32.gmra.mrb[0].mxu0 %v3641
  %v3934 = vpop.f32.mrb[0].mxu0
  %v3935 = vadd.f32 0.0, %v3934
  %v3936 = vpop.f32.mrb[0].mxu0
  %3937 = vmatprep.mubr.f32.mxu0 0.0
  %3938 = vmatmul.mubr.f32.gmra.mrb[0].mxu0 %v3644
  %v3939 = vpop.f32.mrb[0].mxu0
  %v3940 = vadd.f32 0.0, %v3939
  %v3941 = vpop.f32.mrb[0].mxu0
  %3942 = vmatprep.mubr.f32.mxu0 0.0
  %3943 = vmatmul.mubr.f32.gmra.mrb[0].mxu0 %v3647
  %v3944 = vpop.f32.mrb[0].mxu0
  %v3945 = vadd.f32 0.0, %v3944
  %v3946 = vpop.f32.mrb[0].mxu0
  %3947 = vmatprep.mubr.f32.mxu0 0.0
  %3948 = vmatmul.mubr.f32.gmra.mrb[0].mxu0 %v3650
  %v3949 = vpop.f32.mrb[0].mxu0
  %v3950 = vadd.f32 0.0, %v3949
  %v3951 = vpop.f32.mrb[0].mxu0
  %3952 = vmatprep.mubr.f32.mxu0 0.0
  %3953 = vmatmul.mubr.f32.gmra.mrb[0].mxu0 %v3653
  %v3954 = vpop.f32.mrb[0].mxu0
  %v3955 = vadd.f32 0.0, %v3954
  %v3956 = vpop.f32.mrb[0].mxu0
  %3957 = vmatprep.mubr.f32.mxu0 0.0
  %3958 = vmatmul.mubr.f32.gmra.mrb[0].mxu0 %v3656
  %v3959 = vpop.f32.mrb[0].mxu0
  %v3960 = vadd.f32 0.0, %v3959
  %v3961 = vpop.f32.mrb[0].mxu0
  %3962 = vmatprep.mubr.f32.mxu0 0.0
  %3963 = vmatmul.mubr.f32.gmra.mrb[0].mxu0 %v3659
  %v3964 = vpop.f32.mrb[0].mxu0
  %v3965 = vadd.f32 0.0, %v3964
  %v3966 = vpop.f32.mrb[0].mxu0
  %3967 = vmatprep.mubr.f32.mxu0 0.0
  %3968 = vmatmul.mubr.f32.gmra.mrb[0].mxu0 %v3662
  %v3969 = vpop.f32.mrb[0].mxu0
  %v3970 = vadd.f32 0.0, %v3969
  %v3971 = vpop.f32.mrb[0].mxu0
  %3972 = vmatprep.mubr.f32.mxu0 0.0
  %3973 = vmatmul.mubr.f32.gmra.mrb[0].mxu0 %v3665
  %v3974 = vpop.f32.mrb[0].mxu0
  %v3975 = vadd.f32 0.0, %v3974
  %v3976 = vpop.f32.mrb[0].mxu0
  %3977 = vmatprep.mubr.f32.mxu0 0.0
  %3978 = vmatmul.mubr.f32.gmra.mrb[0].mxu0 %v3668
  %v3979 = vpop.f32.mrb[0].mxu0
  %v3980 = vadd.f32 0.0, %v3979
  %v3981 = vpop.f32.mrb[0].mxu0
  %3982 = vmatprep.mubr.f32.mxu0 0.0
  %3983 = vmatmul.mubr.f32.gmra.mrb[0].mxu0 %v3671
  %v3984 = vpop.f32.mrb[0].mxu0
  %v3985 = vadd.f32 0.0, %v3984
  %v3986 = vpop.f32.mrb[0].mxu0
  %3987 = vmatprep.mubr.f32.mxu0 0.0
  %3988 = vmatmul.mubr.f32.gmra.mrb[0].mxu0 %v3674
  %v3989 = vpop.f32.mrb[0].mxu0
  %v3990 = vadd.f32 0.0, %v3989
  %v3991 = vpop.f32.mrb[0].mxu0
  %3992 = vmatprep.mubr.f32.mxu0 0.0
  %3993 = vmatmul.mubr.f32.gmra.mrb[0].mxu0 %v3677
  %v3994 = vpop.f32.mrb[0].mxu0
  %v3995 = vadd.f32 0.0, %v3994
  %v3996 = vpop.f32.mrb[0].mxu0
  %3997 = vmatprep.mubr.f32.mxu0 0.0
  %3998 = vmatmul.mubr.f32.gmra.mrb[0].mxu0 %v3680
  %v3999 = vpop.f32.mrb[0].mxu0
  %v4000 = vadd.f32 0.0, %v3999
  %v4001 = vpop.f32.mrb[0].mxu0
  %4002 = vmatprep.mubr.f32.mxu0 0.0
  %4003 = vmatmul.mubr.f32.gmra.mrb[0].mxu0 %v3683
  %v4004 = vpop.f32.mrb[0].mxu0
  %v4005 = vadd.f32 0.0, %v4004
  %v4006 = vpop.f32.mrb[0].mxu0
  %4007 = vmatprep.mubr.f32.mxu0 0.0
  %4008 = vmatmul.mubr.f32.gmra.mrb[0].mxu0 %v3686
  %v4009 = vpop.f32.mrb[0].mxu0
  %v4010 = vadd.f32 0.0, %v4009
  %v4011 = vpop.f32.mrb[0].mxu0
  %4012 = vmatprep.mubr.f32.mxu0 0.0
  %4013 = vmatmul.mubr.f32.gmra.mrb[0].mxu0 %v3689
  %v4014 = vpop.f32.mrb[0].mxu0
  %v4015 = vadd.f32 0.0, %v4014
  %v4016 = vpop.f32.mrb[0].mxu0
  %4017 = vmatprep.mubr.f32.mxu0 0.0
  %4018 = vmatmul.mubr.f32.gmra.mrb[0].mxu0 %v3692
  %v4019 = vpop.f32.mrb[0].mxu0
  %v4020 = vadd.f32 0.0, %v4019
  %v4021 = vpop.f32.mrb[0].mxu0
  %4022 = vmatprep.mubr.f32.mxu0 0.0
  %4023 = vmatmul.mubr.f32.gmra.mrb[0].mxu0 %v3695
  %v4024 = vpop.f32.mrb[0].mxu0
  %v4025 = vadd.f32 0.0, %v4024
  %v4026 = vpop.f32.mrb[0].mxu0
  %4027 = vmatprep.mubr.f32.mxu0 0.0
  %4028 = vmatmul.mubr.f32.gmra.mrb[0].mxu0 %v3698
  %v4029 = vpop.f32.mrb[0].mxu0
  %v4030 = vadd.f32 0.0, %v4029
  %v4031 = vpop.f32.mrb[0].mxu0
  %4032 = vmatprep.mubr.f32.mxu0 0.0
  %4033 = vmatmul.mubr.f32.gmra.mrb[0].mxu0 %v3701
  %v4034 = vpop.f32.mrb[0].mxu0
  %v4035 = vadd.f32 0.0, %v4034
  %v4036 = vpop.f32.mrb[0].mxu0
  %4037 = vmatprep.mubr.f32.mxu0 0.0
  %4038 = vmatmul.mubr.f32.gmra.mrb[0].mxu0 %v3704
  %v4039 = vpop.f32.mrb[0].mxu0
  %v4040 = vadd.f32 0.0, %v4039
  %v4041 = vpop.f32.mrb[0].mxu0
  %4042 = vmatprep.mubr.f32.mxu0 0.0
  %4043 = vmatmul.mubr.f32.gmra.mrb[0].mxu0 %v3707
  %v4044 = vpop.f32.mrb[0].mxu0
  %v4045 = vadd.f32 0.0, %v4044
  %v4046 = vpop.f32.mrb[0].mxu0
  %4047 = vmatprep.mubr.f32.mxu0 0.0
  %4048 = vmatmul.mubr.f32.gmra.mrb[0].mxu0 %v3710
  %v4049 = vpop.f32.mrb[0].mxu0
  %v4050 = vadd.f32 0.0, %v4049
  %v4051 = vpop.f32.mrb[0].mxu0
  %4052 = vmatprep.mubr.f32.mxu0 0.0
  %4053 = vmatmul.mubr.f32.gmra.mrb[0].mxu0 %v3713
  %v4054 = vpop.f32.mrb[0].mxu0
  %v4055 = vadd.f32 0.0, %v4054
  %v4056 = vpop.f32.mrb[0].mxu0
  %4057 = vmatprep.mubr.f32.mxu0 0.0
  %4058 = vmatmul.mubr.f32.gmra.mrb[0].mxu0 %v3716
  %v4059 = vpop.f32.mrb[0].mxu0
  %v4060 = vadd.f32 0.0, %v4059
  %v4061 = vpop.f32.mrb[0].mxu0
  %4062 = vmatprep.mubr.f32.mxu0 0.0
  %4063 = vmatmul.mubr.f32.gmra.mrb[0].mxu0 %v3719
  %v4064 = vpop.f32.mrb[0].mxu0
  %v4065 = vadd.f32 0.0, %v4064
  %v4066 = vpop.f32.mrb[0].mxu0
  %4067 = vmatprep.mubr.f32.mxu0 0.0
  %4068 = vmatmul.mubr.f32.gmra.mrb[0].mxu0 %v3722
  %v4069 = vpop.f32.mrb[0].mxu0
  %v4070 = vadd.f32 0.0, %v4069
  %v4071 = vpop.f32.mrb[0].mxu0
  %4072 = vmatprep.mubr.f32.mxu0 0.0
  %4073 = vmatmul.mubr.f32.gmra.mrb[0].mxu0 %v3725
  %v4074 = vpop.f32.mrb[0].mxu0
  %v4075 = vadd.f32 0.0, %v4074
  %v4076 = vpop.f32.mrb[0].mxu0
  %4077 = vmatprep.mubr.f32.mxu0 0.0
  %4078 = vmatmul.mubr.f32.gmra.mrb[0].mxu0 %v3728
  %v4079 = vpop.f32.mrb[0].mxu0
  %v4080 = vadd.f32 0.0, %v4079
  %v4081 = vpop.f32.mrb[0].mxu0
  %4082 = vmatprep.mubr.f32.mxu0 0.0
  %4083 = vmatmul.mubr.f32.gmra.mrb[0].mxu0 %v3731
  %v4084 = vpop.f32.mrb[0].mxu0
  %v4085 = vadd.f32 0.0, %v4084
  %v4086 = vpop.f32.mrb[0].mxu0
  %4087 = vmatprep.mubr.f32.mxu0 0.0
  %4088 = vmatmul.mubr.f32.gmra.mrb[0].mxu0 %v3734
  %v4089 = vpop.f32.mrb[0].mxu0
  %v4090 = vadd.f32 0.0, %v4089
  %v4091 = vpop.f32.mrb[0].mxu0
  %4092 = vmatprep.mubr.f32.mxu0 0.0
  %4093 = vmatmul.mubr.f32.gmra.mrb[0].mxu0 %v3737
  %v4094 = vpop.f32.mrb[0].mxu0
  %v4095 = vadd.f32 0.0, %v4094
  %v4096 = vpop.f32.mrb[0].mxu0
  %4097 = vmatprep.mubr.f32.mxu0 0.0
  %4098 = vmatmul.mubr.f32.gmra.mrb[0].mxu0 %v3740
  %v4099 = vpop.f32.mrb[0].mxu0
  %v4100 = vadd.f32 0.0, %v4099
  %v4101 = vpop.f32.mrb[0].mxu0
  %4102 = vmatprep.mubr.f32.mxu0 0.0
  %4103 = vmatmul.mubr.f32.gmra.mrb[0].mxu0 %v3743
  %v4104 = vpop.f32.mrb[0].mxu0
  %v4105 = vadd.f32 0.0, %v4104
  %v4106 = vpop.f32.mrb[0].mxu0
  %4107 = vmatprep.mubr.f32.mxu0 0.0
  %4108 = vmatmul.mubr.f32.gmra.mrb[0].mxu0 %v3746
  %v4109 = vpop.f32.mrb[0].mxu0
  %v4110 = vadd.f32 0.0, %v4109
  %v4111 = vpop.f32.mrb[0].mxu0
  %4112 = vmatprep.mubr.f32.mxu0 0.0
  %4113 = vmatmul.mubr.f32.gmra.mrb[0].mxu0 %v3749
  %v4114 = vpop.f32.mrb[0].mxu0
  %v4115 = vadd.f32 0.0, %v4114
  %v4116 = vpop.f32.mrb[0].mxu0
  %4117 = vmatprep.mubr.f32.mxu0 0.0
  %4118 = vmatmul.mubr.f32.gmra.mrb[0].mxu0 %v3752
  %v4119 = vpop.f32.mrb[0].mxu0
  %v4120 = vadd.f32 0.0, %v4119
  %v4121 = vpop.f32.mrb[0].mxu0
  %4122 = vmatprep.mubr.f32.mxu0 0.0
  %4123 = vmatmul.mubr.f32.gmra.mrb[0].mxu0 %v3755
  %v4124 = vpop.f32.mrb[0].mxu0
  %v4125 = vadd.f32 0.0, %v4124
  %v4126 = vpop.f32.mrb[0].mxu0
  %4127 = vmatprep.mubr.f32.mxu0 0.0
  %4128 = vmatmul.mubr.f32.gmra.mrb[0].mxu0 %v3758
  %v4129 = vpop.f32.mrb[0].mxu0
  %v4130 = vadd.f32 0.0, %v4129
  %v4131 = vpop.f32.mrb[0].mxu0
  %4132 = vmatprep.mubr.f32.mxu0 0.0
  %4133 = vmatmul.mubr.f32.gmra.mrb[0].mxu0 %v3761
  %v4134 = vpop.f32.mrb[0].mxu0
  %v4135 = vadd.f32 0.0, %v4134
  %v4136 = vpop.f32.mrb[0].mxu0
  %4137 = vmatprep.mubr.f32.mxu0 0.0
  %4138 = vmatmul.mubr.f32.gmra.mrb[0].mxu0 %v3764
  %v4139 = vpop.f32.mrb[0].mxu0
  %v4140 = vadd.f32 0.0, %v4139
  %v4141 = vpop.f32.mrb[0].mxu0
  %4142 = vmatprep.mubr.f32.mxu0 0.0
  %4143 = vmatmul.mubr.f32.gmra.mrb[0].mxu0 %v3767
  %v4144 = vpop.f32.mrb[0].mxu0
  %v4145 = vadd.f32 0.0, %v4144
  %v4146 = vpop.f32.mrb[0].mxu0
  %4147 = vmatprep.mubr.f32.mxu0 0.0
  %4148 = vmatmul.mubr.f32.gmra.mrb[0].mxu0 %v3770
  %v4149 = vpop.f32.mrb[0].mxu0
  %v4150 = vadd.f32 0.0, %v4149
  %v4151 = vpop.f32.mrb[0].mxu0
  %4152 = vmatprep.mubr.f32.mxu0 0.0
  %4153 = vmatmul.mubr.f32.gmra.mrb[0].mxu0 %v3773
  %v4154 = vpop.f32.mrb[0].mxu0
  %v4155 = vadd.f32 0.0, %v4154
  %v4156 = vpop.f32.mrb[0].mxu0
  %4157 = vmatprep.mubr.f32.mxu0 0.0
  %4158 = vmatmul.mubr.f32.gmra.mrb[0].mxu0 %v3776
  %v4159 = vpop.f32.mrb[0].mxu0
  %v4160 = vadd.f32 0.0, %v4159
  %v4161 = vpop.f32.mrb[0].mxu0
  %4162 = vmatprep.mubr.f32.mxu0 0.0
  %4163 = vmatmul.mubr.f32.gmra.mrb[0].mxu0 %v3779
  %v4164 = vpop.f32.mrb[0].mxu0
  %v4165 = vadd.f32 0.0, %v4164
  %v4166 = vpop.f32.mrb[0].mxu0
  %4167 = vmatprep.mubr.f32.mxu0 0.0
  %4168 = vmatmul.mubr.f32.gmra.mrb[0].mxu0 %v3782
  %v4169 = vpop.f32.mrb[0].mxu0
  %v4170 = vadd.f32 0.0, %v4169
  %v4171 = vpop.f32.mrb[0].mxu0
  %4172 = vdwg.mxu0
  %v4173 = vld [vmem:[%s2] sm:$0x1]
  %v4175 = vlaneseq
  %v4176 = vshrl.u32 %v4175, 7
  %v4177 = vsub.s32 0, %v4176
  %v4178 = vrot.slane %v4173, %v4177
  %v4180 = vmul.f32 %v3855, %v4178
  %v4181 = vmul.f32 %v3860, %v4178
  %v4182 = vmul.f32 %v3865, %v4178
  %v4183 = vmul.f32 %v3870, %v4178
  %v4184 = vmul.f32 %v3875, %v4178
  %v4185 = vmul.f32 %v3880, %v4178
  %v4186 = vmul.f32 %v3885, %v4178
  %v4187 = vmul.f32 %v3890, %v4178
  %v4188 = vmul.f32 %v3895, %v4178
  %v4189 = vmul.f32 %v3900, %v4178
  %v4190 = vmul.f32 %v3905, %v4178
  %v4191 = vmul.f32 %v3910, %v4178
  %v4192 = vmul.f32 %v3915, %v4178
  %v4193 = vmul.f32 %v3920, %v4178
  %v4194 = vmul.f32 %v3925, %v4178
  %v4195 = vmul.f32 %v3930, %v4178
  %v4196 = vmul.f32 %v3935, %v4178
  %v4197 = vmul.f32 %v3940, %v4178
  %v4198 = vmul.f32 %v3945, %v4178
  %v4199 = vmul.f32 %v3950, %v4178
  %v4200 = vmul.f32 %v3955, %v4178
  %v4201 = vmul.f32 %v3960, %v4178
  %v4202 = vmul.f32 %v3965, %v4178
  %v4203 = vmul.f32 %v3970, %v4178
  %v4204 = vmul.f32 %v3975, %v4178
  %v4205 = vmul.f32 %v3980, %v4178
  %v4206 = vmul.f32 %v3985, %v4178
  %v4207 = vmul.f32 %v3990, %v4178
  %v4208 = vmul.f32 %v3995, %v4178
  %v4209 = vmul.f32 %v4000, %v4178
  %v4210 = vmul.f32 %v4005, %v4178
  %v4211 = vmul.f32 %v4010, %v4178
  %v4212 = vmul.f32 %v4015, %v4178
  %v4213 = vmul.f32 %v4020, %v4178
  %v4214 = vmul.f32 %v4025, %v4178
  %v4215 = vmul.f32 %v4030, %v4178
  %v4216 = vmul.f32 %v4035, %v4178
  %v4217 = vmul.f32 %v4040, %v4178
  %v4218 = vmul.f32 %v4045, %v4178
  %v4219 = vmul.f32 %v4050, %v4178
  %v4220 = vmul.f32 %v4055, %v4178
  %v4221 = vmul.f32 %v4060, %v4178
  %v4222 = vmul.f32 %v4065, %v4178
  %v4223 = vmul.f32 %v4070, %v4178
  %v4224 = vmul.f32 %v4075, %v4178
  %v4225 = vmul.f32 %v4080, %v4178
  %v4226 = vmul.f32 %v4085, %v4178
  %v4227 = vmul.f32 %v4090, %v4178
  %v4228 = vmul.f32 %v4095, %v4178
  %v4229 = vmul.f32 %v4100, %v4178
  %v4230 = vmul.f32 %v4105, %v4178
  %v4231 = vmul.f32 %v4110, %v4178
  %v4232 = vmul.f32 %v4115, %v4178
  %v4233 = vmul.f32 %v4120, %v4178
  %v4234 = vmul.f32 %v4125, %v4178
  %v4235 = vmul.f32 %v4130, %v4178
  %v4236 = vmul.f32 %v4135, %v4178
  %v4237 = vmul.f32 %v4140, %v4178
  %v4238 = vmul.f32 %v4145, %v4178
  %v4239 = vmul.f32 %v4150, %v4178
  %v4240 = vmul.f32 %v4155, %v4178
  %v4241 = vmul.f32 %v4160, %v4178
  %v4242 = vmul.f32 %v4165, %v4178
  %v4243 = vmul.f32 %v4170, %v4178
  %v4244 = vld [vmem:[%s3] sm:$0x1]
  %v4246 = vlaneseq
  %v4247 = vshrl.u32 %v4246, 7
  %v4248 = vsub.s32 0, %v4247
  %v4249 = vrot.slane %v4244, %v4248
  %v4251 = vadd.f32 %v4180, %v4249
  %v4252 = vadd.f32 %v4181, %v4249
  %v4253 = vadd.f32 %v4182, %v4249
  %v4254 = vadd.f32 %v4183, %v4249
  %v4255 = vadd.f32 %v4184, %v4249
  %v4256 = vadd.f32 %v4185, %v4249
  %v4257 = vadd.f32 %v4186, %v4249
  %v4258 = vadd.f32 %v4187, %v4249
  %v4259 = vadd.f32 %v4188, %v4249
  %v4260 = vadd.f32 %v4189, %v4249
  %v4261 = vadd.f32 %v4190, %v4249
  %v4262 = vadd.f32 %v4191, %v4249
  %v4263 = vadd.f32 %v4192, %v4249
  %v4264 = vadd.f32 %v4193, %v4249
  %v4265 = vadd.f32 %v4194, %v4249
  %v4266 = vadd.f32 %v4195, %v4249
  %v4267 = vadd.f32 %v4196, %v4249
  %v4268 = vadd.f32 %v4197, %v4249
  %v4269 = vadd.f32 %v4198, %v4249
  %v4270 = vadd.f32 %v4199, %v4249
  %v4271 = vadd.f32 %v4200, %v4249
  %v4272 = vadd.f32 %v4201, %v4249
  %v4273 = vadd.f32 %v4202, %v4249
  %v4274 = vadd.f32 %v4203, %v4249
  %v4275 = vadd.f32 %v4204, %v4249
  %v4276 = vadd.f32 %v4205, %v4249
  %v4277 = vadd.f32 %v4206, %v4249
  %v4278 = vadd.f32 %v4207, %v4249
  %v4279 = vadd.f32 %v4208, %v4249
  %v4280 = vadd.f32 %v4209, %v4249
  %v4281 = vadd.f32 %v4210, %v4249
  %v4282 = vadd.f32 %v4211, %v4249
  %v4283 = vadd.f32 %v4212, %v4249
  %v4284 = vadd.f32 %v4213, %v4249
  %v4285 = vadd.f32 %v4214, %v4249
  %v4286 = vadd.f32 %v4215, %v4249
  %v4287 = vadd.f32 %v4216, %v4249
  %v4288 = vadd.f32 %v4217, %v4249
  %v4289 = vadd.f32 %v4218, %v4249
  %v4290 = vadd.f32 %v4219, %v4249
  %v4291 = vadd.f32 %v4220, %v4249
  %v4292 = vadd.f32 %v4221, %v4249
  %v4293 = vadd.f32 %v4222, %v4249
  %v4294 = vadd.f32 %v4223, %v4249
  %v4295 = vadd.f32 %v4224, %v4249
  %v4296 = vadd.f32 %v4225, %v4249
  %v4297 = vadd.f32 %v4226, %v4249
  %v4298 = vadd.f32 %v4227, %v4249
  %v4299 = vadd.f32 %v4228, %v4249
  %v4300 = vadd.f32 %v4229, %v4249
  %v4301 = vadd.f32 %v4230, %v4249
  %v4302 = vadd.f32 %v4231, %v4249
  %v4303 = vadd.f32 %v4232, %v4249
  %v4304 = vadd.f32 %v4233, %v4249
  %v4305 = vadd.f32 %v4234, %v4249
  %v4306 = vadd.f32 %v4235, %v4249
  %v4307 = vadd.f32 %v4236, %v4249
  %v4308 = vadd.f32 %v4237, %v4249
  %v4309 = vadd.f32 %v4238, %v4249
  %v4310 = vadd.f32 %v4239, %v4249
  %v4311 = vadd.f32 %v4240, %v4249
  %v4312 = vadd.f32 %v4241, %v4249
  %v4313 = vadd.f32 %v4242, %v4249
  %v4314 = vadd.f32 %v4243, %v4249
  %v4315 = vmax.f32 %v4251, 0.0
  %v4316 = vmax.f32 %v4252, 0.0
  %v4317 = vmax.f32 %v4253, 0.0
  %v4318 = vmax.f32 %v4254, 0.0
  %v4319 = vmax.f32 %v4255, 0.0
  %v4320 = vmax.f32 %v4256, 0.0
  %v4321 = vmax.f32 %v4257, 0.0
  %v4322 = vmax.f32 %v4258, 0.0
  %v4323 = vmax.f32 %v4259, 0.0
  %v4324 = vmax.f32 %v4260, 0.0
  %v4325 = vmax.f32 %v4261, 0.0
  %v4326 = vmax.f32 %v4262, 0.0
  %v4327 = vmax.f32 %v4263, 0.0
  %v4328 = vmax.f32 %v4264, 0.0
  %v4329 = vmax.f32 %v4265, 0.0
  %v4330 = vmax.f32 %v4266, 0.0
  %v4331 = vmax.f32 %v4267, 0.0
  %v4332 = vmax.f32 %v4268, 0.0
  %v4333 = vmax.f32 %v4269, 0.0
  %v4334 = vmax.f32 %v4270, 0.0
  %v4335 = vmax.f32 %v4271, 0.0
  %v4336 = vmax.f32 %v4272, 0.0
  %v4337 = vmax.f32 %v4273, 0.0
  %v4338 = vmax.f32 %v4274, 0.0
  %v4339 = vmax.f32 %v4275, 0.0
  %v4340 = vmax.f32 %v4276, 0.0
  %v4341 = vmax.f32 %v4277, 0.0
  %v4342 = vmax.f32 %v4278, 0.0
  %v4343 = vmax.f32 %v4279, 0.0
  %v4344 = vmax.f32 %v4280, 0.0
  %v4345 = vmax.f32 %v4281, 0.0
  %v4346 = vmax.f32 %v4282, 0.0
  %v4347 = vmax.f32 %v4283, 0.0
  %v4348 = vmax.f32 %v4284, 0.0
  %v4349 = vmax.f32 %v4285, 0.0
  %v4350 = vmax.f32 %v4286, 0.0
  %v4351 = vmax.f32 %v4287, 0.0
  %v4352 = vmax.f32 %v4288, 0.0
  %v4353 = vmax.f32 %v4289, 0.0
  %v4354 = vmax.f32 %v4290, 0.0
  %v4355 = vmax.f32 %v4291, 0.0
  %v4356 = vmax.f32 %v4292, 0.0
  %v4357 = vmax.f32 %v4293, 0.0
  %v4358 = vmax.f32 %v4294, 0.0
  %v4359 = vmax.f32 %v4295, 0.0
  %v4360 = vmax.f32 %v4296, 0.0
  %v4361 = vmax.f32 %v4297, 0.0
  %v4362 = vmax.f32 %v4298, 0.0
  %v4363 = vmax.f32 %v4299, 0.0
  %v4364 = vmax.f32 %v4300, 0.0
  %v4365 = vmax.f32 %v4301, 0.0
  %v4366 = vmax.f32 %v4302, 0.0
  %v4367 = vmax.f32 %v4303, 0.0
  %v4368 = vmax.f32 %v4304, 0.0
  %v4369 = vmax.f32 %v4305, 0.0
  %v4370 = vmax.f32 %v4306, 0.0
  %v4371 = vmax.f32 %v4307, 0.0
  %v4372 = vmax.f32 %v4308, 0.0
  %v4373 = vmax.f32 %v4309, 0.0
  %v4374 = vmax.f32 %v4310, 0.0
  %v4375 = vmax.f32 %v4311, 0.0
  %v4376 = vmax.f32 %v4312, 0.0
  %v4377 = vmax.f32 %v4313, 0.0
  %v4378 = vmax.f32 %v4314, 0.0
  %4379 = vst.msk [vmem:[%s120 + $0x1] sm:$0xff] %vm26, %v4315
  %4380 = vst.msk [vmem:[%s120 + $0x9] sm:$0xff] %vm26, %v4316
  %4381 = vst.msk [vmem:[%s120 + $0x19] sm:$0xff] %vm26, %v4317
  %4382 = vst.msk [vmem:[%s120 + $0x21] sm:$0xff] %vm26, %v4318
  %4383 = vst.msk [vmem:[%s120 + $0x31] sm:$0xff] %vm26, %v4319
  %4384 = vst.msk [vmem:[%s120 + $0x39] sm:$0xff] %vm26, %v4320
  %4385 = vst.msk [vmem:[%s120 + $0x49] sm:$0xff] %vm26, %v4321
  %4386 = vst.msk [vmem:[%s120 + $0x51] sm:$0xff] %vm26, %v4322
  %4387 = vst.msk [vmem:[%s120 + $0x61] sm:$0xff] %vm26, %v4323
  %4388 = vst.msk [vmem:[%s120 + $0x69] sm:$0xff] %vm26, %v4324
  %4389 = vst.msk [vmem:[%s120 + $0x79] sm:$0xff] %vm26, %v4325
  %4390 = vst.msk [vmem:[%s120 + $0x81] sm:$0xff] %vm26, %v4326
  %4391 = vst.msk [vmem:[%s120 + $0x91] sm:$0xff] %vm26, %v4327
  %4392 = vst.msk [vmem:[%s120 + $0x99] sm:$0xff] %vm26, %v4328
  %4393 = vst.msk [vmem:[%s120 + $0xa9] sm:$0xff] %vm26, %v4329
  %4394 = vst.msk [vmem:[%s120 + $0xb1] sm:$0xff] %vm26, %v4330
  %4395 = vst.msk [vmem:[%s120 + $0xc1] sm:$0xff] %vm26, %v4331
  %4396 = vst.msk [vmem:[%s120 + $0xc9] sm:$0xff] %vm26, %v4332
  %4397 = vst.msk [vmem:[%s120 + $0xd9] sm:$0xff] %vm26, %v4333
  %4398 = vst.msk [vmem:[%s120 + $0xe1] sm:$0xff] %vm26, %v4334
  %4399 = vst.msk [vmem:[%s120 + $0xf1] sm:$0xff] %vm26, %v4335
  %4400 = vst.msk [vmem:[%s120 + $0xf9] sm:$0xff] %vm26, %v4336
  %4401 = vst.msk [vmem:[%s120 + $0x109] sm:$0xff] %vm26, %v4337
  %4402 = vst.msk [vmem:[%s120 + $0x111] sm:$0xff] %vm26, %v4338
  %4403 = vst.msk [vmem:[%s120 + $0x121] sm:$0xff] %vm26, %v4339
  %4404 = vst.msk [vmem:[%s120 + $0x129] sm:$0xff] %vm26, %v4340
  %4405 = vst.msk [vmem:[%s120 + $0x139] sm:$0xff] %vm26, %v4341
  %4406 = vst.msk [vmem:[%s120 + $0x141] sm:$0xff] %vm26, %v4342
  %4407 = vst.msk [vmem:[%s120 + $0x151] sm:$0xff] %vm26, %v4343
  %4408 = vst.msk [vmem:[%s120 + $0x159] sm:$0xff] %vm26, %v4344
  %4409 = vst.msk [vmem:[%s120 + $0x169] sm:$0xff] %vm26, %v4345
  %4410 = vst.msk [vmem:[%s120 + $0x171] sm:$0xff] %vm26, %v4346
  %4411 = vst.msk [vmem:[%s120 + $0x1b1] sm:$0xff] %vm26, %v4347
  %4412 = vst.msk [vmem:[%s120 + $0x1b9] sm:$0xff] %vm26, %v4348
  %4413 = vst.msk [vmem:[%s120 + $0x1c9] sm:$0xff] %vm26, %v4349
  %4414 = vst.msk [vmem:[%s120 + $0x1d1] sm:$0xff] %vm26, %v4350
  %4415 = vst.msk [vmem:[%s120 + $0x1e1] sm:$0xff] %vm26, %v4351
  %4416 = vst.msk [vmem:[%s120 + $0x1e9] sm:$0xff] %vm26, %v4352
  %4417 = vst.msk [vmem:[%s120 + $0x1f9] sm:$0xff] %vm26, %v4353
  %4418 = vst.msk [vmem:[%s120 + $0x201] sm:$0xff] %vm26, %v4354
  %4419 = vst.msk [vmem:[%s120 + $0x211] sm:$0xff] %vm26, %v4355
  %4420 = vst.msk [vmem:[%s120 + $0x219] sm:$0xff] %vm26, %v4356
  %4421 = vst.msk [vmem:[%s120 + $0x229] sm:$0xff] %vm26, %v4357
  %4422 = vst.msk [vmem:[%s120 + $0x231] sm:$0xff] %vm26, %v4358
  %4423 = vst.msk [vmem:[%s120 + $0x241] sm:$0xff] %vm26, %v4359
  %4424 = vst.msk [vmem:[%s120 + $0x249] sm:$0xff] %vm26, %v4360
  %4425 = vst.msk [vmem:[%s120 + $0x259] sm:$0xff] %vm26, %v4361
  %4426 = vst.msk [vmem:[%s120 + $0x261] sm:$0xff] %vm26, %v4362
  %4427 = vst.msk [vmem:[%s120 + $0x271] sm:$0xff] %vm26, %v4363
  %4428 = vst.msk [vmem:[%s120 + $0x279] sm:$0xff] %vm26, %v4364
  %4429 = vst.msk [vmem:[%s120 + $0x289] sm:$0xff] %vm26, %v4365
  %4430 = vst.msk [vmem:[%s120 + $0x291] sm:$0xff] %vm26, %v4366
  %4431 = vst.msk [vmem:[%s120 + $0x2a1] sm:$0xff] %vm26, %v4367
  %4432 = vst.msk [vmem:[%s120 + $0x2a9] sm:$0xff] %vm26, %v4368
  %4433 = vst.msk [vmem:[%s120 + $0x2b9] sm:$0xff] %vm26, %v4369
  %4434 = vst.msk [vmem:[%s120 + $0x2c1] sm:$0xff] %vm26, %v4370
  %4435 = vst.msk [vmem:[%s120 + $0x2d1] sm:$0xff] %vm26, %v4371
  %4436 = vst.msk [vmem:[%s120 + $0x2d9] sm:$0xff] %vm26, %v4372
  %4437 = vst.msk [vmem:[%s120 + $0x2e9] sm:$0xff] %vm26, %v4373
  %4438 = vst.msk [vmem:[%s120 + $0x2f1] sm:$0xff] %vm26, %v4374
  %4439 = vst.msk [vmem:[%s120 + $0x301] sm:$0xff] %vm26, %v4375
  %4440 = vst.msk [vmem:[%s120 + $0x309] sm:$0xff] %vm26, %v4376
  %4441 = vst.msk [vmem:[%s120 + $0x319] sm:$0xff] %vm26, %v4377
  %4442 = vst.msk [vmem:[%s120 + $0x321] sm:$0xff] %vm26, %v4378
  %v4443 = vld [vmem:[#allocation3] sm:$0xff]
  %v4444 = vld [vmem:[#allocation3 + $0x8] sm:$0xff]
  %v4445 = vld [vmem:[#allocation3 + $0x18] sm:$0xff]
  %v4446 = vld [vmem:[#allocation3 + $0x20] sm:$0xff]
  %v4447 = vld [vmem:[#allocation3 + $0x30] sm:$0xff]
  %v4448 = vld [vmem:[#allocation3 + $0x38] sm:$0xff]
  %v4449 = vld [vmem:[#allocation3 + $0x48] sm:$0xff]
  %v4450 = vld [vmem:[#allocation3 + $0x50] sm:$0xff]
  %v4451 = vld [vmem:[#allocation3 + $0x60] sm:$0xff]
  %v4452 = vld [vmem:[#allocation3 + $0x68] sm:$0xff]
  %v4453 = vld [vmem:[#allocation3 + $0x78] sm:$0xff]
  %v4454 = vld [vmem:[#allocation3 + $0x80] sm:$0xff]
  %v4455 = vld [vmem:[#allocation3 + $0x90] sm:$0xff]
  %v4456 = vld [vmem:[#allocation3 + $0x98] sm:$0xff]
  %v4457 = vld [vmem:[#allocation3 + $0xa8] sm:$0xff]
  %v4458 = vld [vmem:[#allocation3 + $0xb0] sm:$0xff]
  %v4459 = vld [vmem:[#allocation3 + $0xc0] sm:$0xff]
  %v4460 = vld [vmem:[#allocation3 + $0xc8] sm:$0xff]
  %v4461 = vld [vmem:[#allocation3 + $0xd8] sm:$0xff]
  %v4462 = vld [vmem:[#allocation3 + $0xe0] sm:$0xff]
  %v4463 = vld [vmem:[#allocation3 + $0xf0] sm:$0xff]
  %v4464 = vld [vmem:[#allocation3 + $0xf8] sm:$0xff]
  %v4465 = vld [vmem:[#allocation3 + $0x108] sm:$0xff]
  %v4466 = vld [vmem:[#allocation3 + $0x110] sm:$0xff]
  %v4467 = vld [vmem:[#allocation3 + $0x120] sm:$0xff]
  %v4468 = vld [vmem:[#allocation3 + $0x128] sm:$0xff]
  %v4469 = vld [vmem:[#allocation3 + $0x138] sm:$0xff]
  %v4470 = vld [vmem:[#allocation3 + $0x140] sm:$0xff]
  %v4471 = vld [vmem:[#allocation3 + $0x150] sm:$0xff]
  %v4472 = vld [vmem:[#allocation3 + $0x158] sm:$0xff]
  %v4473 = vld [vmem:[#allocation3 + $0x168] sm:$0xff]
  %v4474 = vld [vmem:[#allocation3 + $0x170] sm:$0xff]
  %v4475 = vld [vmem:[#allocation3 + $0x1b0] sm:$0xff]
  %v4476 = vld [vmem:[#allocation3 + $0x1b8] sm:$0xff]
  %v4477 = vld [vmem:[#allocation3 + $0x1c8] sm:$0xff]
  %v4478 = vld [vmem:[#allocation3 + $0x1d0] sm:$0xff]
  %v4479 = vld [vmem:[#allocation3 + $0x1e0] sm:$0xff]
  %v4480 = vld [vmem:[#allocation3 + $0x1e8] sm:$0xff]
  %v4481 = vld [vmem:[#allocation3 + $0x1f8] sm:$0xff]
  %v4482 = vld [vmem:[#allocation3 + $0x200] sm:$0xff]
  %v4483 = vld [vmem:[#allocation3 + $0x210] sm:$0xff]
  %v4484 = vld [vmem:[#allocation3 + $0x218] sm:$0xff]
  %v4485 = vld [vmem:[#allocation3 + $0x228] sm:$0xff]
  %v4486 = vld [vmem:[#allocation3 + $0x230] sm:$0xff]
  %v4487 = vld [vmem:[#allocation3 + $0x240] sm:$0xff]
  %v4488 = vld [vmem:[#allocation3 + $0x248] sm:$0xff]
  %v4489 = vld [vmem:[#allocation3 + $0x258] sm:$0xff]
  %v4490 = vld [vmem:[#allocation3 + $0x260] sm:$0xff]
  %v4491 = vld [vmem:[#allocation3 + $0x270] sm:$0xff]
  %v4492 = vld [vmem:[#allocation3 + $0x278] sm:$0xff]
  %v4493 = vld [vmem:[#allocation3 + $0x288] sm:$0xff]
  %v4494 = vld [vmem:[#allocation3 + $0x290] sm:$0xff]
  %v4495 = vld [vmem:[#allocation3 + $0x2a0] sm:$0xff]
  %v4496 = vld [vmem:[#allocation3 + $0x2a8] sm:$0xff]
  %v4497 = vld [vmem:[#allocation3 + $0x2b8] sm:$0xff]
  %v4498 = vld [vmem:[#allocation3 + $0x2c0] sm:$0xff]
  %v4499 = vld [vmem:[#allocation3 + $0x2d0] sm:$0xff]
  %v4500 = vld [vmem:[#allocation3 + $0x2d8] sm:$0xff]
  %v4501 = vld [vmem:[#allocation3 + $0x2e8] sm:$0xff]
  %v4502 = vld [vmem:[#allocation3 + $0x2f0] sm:$0xff]
  %v4503 = vld [vmem:[#allocation3 + $0x300] sm:$0xff]
  %v4504 = vld [vmem:[#allocation3 + $0x308] sm:$0xff]
  %v4505 = vld [vmem:[#allocation3 + $0x318] sm:$0xff]
  %v4506 = vld [vmem:[#allocation3 + $0x320] sm:$0xff]
  %4507 = vst.msk [vmem:[#allocation4] sm:$0xff] %vm26, %v4443
  %4508 = vst.msk [vmem:[#allocation4 + $0x8] sm:$0xff] %vm26, %v4444
  %4509 = vst.msk [vmem:[#allocation4 + $0x10] sm:$0xff] %vm26, %v4445
  %4510 = vst.msk [vmem:[#allocation4 + $0x18] sm:$0xff] %vm26, %v4446
  %4511 = vst.msk [vmem:[#allocation4 + $0x20] sm:$0xff] %vm26, %v4447
  %4512 = vst.msk [vmem:[#allocation4 + $0x28] sm:$0xff] %vm26, %v4448
  %4513 = vst.msk [vmem:[#allocation4 + $0x30] sm:$0xff] %vm26, %v4449
  %4514 = vst.msk [vmem:[#allocation4 + $0x38] sm:$0xff] %vm26, %v4450
  %4515 = vst.msk [vmem:[#allocation4 + $0x40] sm:$0xff] %vm26, %v4451
  %4516 = vst.msk [vmem:[#allocation4 + $0x48] sm:$0xff] %vm26, %v4452
  %4517 = vst.msk [vmem:[#allocation4 + $0x50] sm:$0xff] %vm26, %v4453
  %4518 = vst.msk [vmem:[#allocation4 + $0x58] sm:$0xff] %vm26, %v4454
  %4519 = vst.msk [vmem:[#allocation4 + $0x60] sm:$0xff] %vm26, %v4455
  %4520 = vst.msk [vmem:[#allocation4 + $0x68] sm:$0xff] %vm26, %v4456
  %4521 = vst.msk [vmem:[#allocation4 + $0x70] sm:$0xff] %vm26, %v4457
  %4522 = vst.msk [vmem:[#allocation4 + $0x78] sm:$0xff] %vm26, %v4458
  %4523 = vst.msk [vmem:[#allocation4 + $0x80] sm:$0xff] %vm26, %v4459
  %4524 = vst.msk [vmem:[#allocation4 + $0x88] sm:$0xff] %vm26, %v4460
  %4525 = vst.msk [vmem:[#allocation4 + $0x90] sm:$0xff] %vm26, %v4461
  %4526 = vst.msk [vmem:[#allocation4 + $0x98] sm:$0xff] %vm26, %v4462
  %4527 = vst.msk [vmem:[#allocation4 + $0xa0] sm:$0xff] %vm26, %v4463
  %4528 = vst.msk [vmem:[#allocation4 + $0xa8] sm:$0xff] %vm26, %v4464
  %4529 = vst.msk [vmem:[#allocation4 + $0xb0] sm:$0xff] %vm26, %v4465
  %4530 = vst.msk [vmem:[#allocation4 + $0xb8] sm:$0xff] %vm26, %v4466
  %4531 = vst.msk [vmem:[#allocation4 + $0xc0] sm:$0xff] %vm26, %v4467
  %4532 = vst.msk [vmem:[#allocation4 + $0xc8] sm:$0xff] %vm26, %v4468
  %4533 = vst.msk [vmem:[#allocation4 + $0xd0] sm:$0xff] %vm26, %v4469
  %4534 = vst.msk [vmem:[#allocation4 + $0xd8] sm:$0xff] %vm26, %v4470
  %4535 = vst.msk [vmem:[#allocation4 + $0xe0] sm:$0xff] %vm26, %v4471
  %4536 = vst.msk [vmem:[#allocation4 + $0xe8] sm:$0xff] %vm26, %v4472
  %4537 = vst.msk [vmem:[#allocation4 + $0xf0] sm:$0xff] %vm26, %v4473
  %4538 = vst.msk [vmem:[#allocation4 + $0xf8] sm:$0xff] %vm26, %v4474
  %4539 = vst.msk [vmem:[#allocation4 + $0x100] sm:$0xff] %vm26, %v4475
  %4540 = vst.msk [vmem:[#allocation4 + $0x108] sm:$0xff] %vm26, %v4476
  %4541 = vst.msk [vmem:[#allocation4 + $0x110] sm:$0xff] %vm26, %v4477
  %4542 = vst.msk [vmem:[#allocation4 + $0x118] sm:$0xff] %vm26, %v4478
  %4543 = vst.msk [vmem:[#allocation4 + $0x120] sm:$0xff] %vm26, %v4479
  %4544 = vst.msk [vmem:[#allocation4 + $0x128] sm:$0xff] %vm26, %v4480
  %4545 = vst.msk [vmem:[#allocation4 + $0x130] sm:$0xff] %vm26, %v4481
  %4546 = vst.msk [vmem:[#allocation4 + $0x138] sm:$0xff] %vm26, %v4482
  %4547 = vst.msk [vmem:[#allocation4 + $0x140] sm:$0xff] %vm26, %v4483
  %4548 = vst.msk [vmem:[#allocation4 + $0x148] sm:$0xff] %vm26, %v4484
  %4549 = vst.msk [vmem:[#allocation4 + $0x150] sm:$0xff] %vm26, %v4485
  %4550 = vst.msk [vmem:[#allocation4 + $0x158] sm:$0xff] %vm26, %v4486
  %4551 = vst.msk [vmem:[#allocation4 + $0x160] sm:$0xff] %vm26, %v4487
  %4552 = vst.msk [vmem:[#allocation4 + $0x168] sm:$0xff] %vm26, %v4488
  %4553 = vst.msk [vmem:[#allocation4 + $0x170] sm:$0xff] %vm26, %v4489
  %4554 = vst.msk [vmem:[#allocation4 + $0x178] sm:$0xff] %vm26, %v4490
  %4555 = vst.msk [vmem:[#allocation4 + $0x180] sm:$0xff] %vm26, %v4491
  %4556 = vst.msk [vmem:[#allocation4 + $0x188] sm:$0xff] %vm26, %v4492
  %4557 = vst.msk [vmem:[#allocation4 + $0x190] sm:$0xff] %vm26, %v4493
  %4558 = vst.msk [vmem:[#allocation4 + $0x198] sm:$0xff] %vm26, %v4494
  %4559 = vst.msk [vmem:[#allocation4 + $0x1a0] sm:$0xff] %vm26, %v4495
  %4560 = vst.msk [vmem:[#allocation4 + $0x1a8] sm:$0xff] %vm26, %v4496
  %4561 = vst.msk [vmem:[#allocation4 + $0x1b0] sm:$0xff] %vm26, %v4497
  %4562 = vst.msk [vmem:[#allocation4 + $0x1b8] sm:$0xff] %vm26, %v4498
  %4563 = vst.msk [vmem:[#allocation4 + $0x1c0] sm:$0xff] %vm26, %v4499
  %4564 = vst.msk [vmem:[#allocation4 + $0x1c8] sm:$0xff] %vm26, %v4500
  %4565 = vst.msk [vmem:[#allocation4 + $0x1d0] sm:$0xff] %vm26, %v4501
  %4566 = vst.msk [vmem:[#allocation4 + $0x1d8] sm:$0xff] %vm26, %v4502
  %4567 = vst.msk [vmem:[#allocation4 + $0x1e0] sm:$0xff] %vm26, %v4503
  %4568 = vst.msk [vmem:[#allocation4 + $0x1e8] sm:$0xff] %vm26, %v4504
  %4569 = vst.msk [vmem:[#allocation4 + $0x1f0] sm:$0xff] %vm26, %v4505
  %4570 = vst.msk [vmem:[#allocation4 + $0x1f8] sm:$0xff] %vm26, %v4506
  %v4571 = vld [vmem:[#allocation3 + $0x1] sm:$0xff]
  %v4572 = vld [vmem:[#allocation3 + $0x9] sm:$0xff]
  %v4573 = vld [vmem:[#allocation3 + $0x19] sm:$0xff]
  %v4574 = vld [vmem:[#allocation3 + $0x21] sm:$0xff]
  %v4575 = vld [vmem:[#allocation3 + $0x31] sm:$0xff]
  %v4576 = vld [vmem:[#allocation3 + $0x39] sm:$0xff]
  %v4577 = vld [vmem:[#allocation3 + $0x49] sm:$0xff]
  %v4578 = vld [vmem:[#allocation3 + $0x51] sm:$0xff]
  %v4579 = vld [vmem:[#allocation3 + $0x61] sm:$0xff]
  %v4580 = vld [vmem:[#allocation3 + $0x69] sm:$0xff]
  %v4581 = vld [vmem:[#allocation3 + $0x79] sm:$0xff]
  %v4582 = vld [vmem:[#allocation3 + $0x81] sm:$0xff]
  %v4583 = vld [vmem:[#allocation3 + $0x91] sm:$0xff]
  %v4584 = vld [vmem:[#allocation3 + $0x99] sm:$0xff]
  %v4585 = vld [vmem:[#allocation3 + $0xa9] sm:$0xff]
  %v4586 = vld [vmem:[#allocation3 + $0xb1] sm:$0xff]
  %v4587 = vld [vmem:[#allocation3 + $0xc1] sm:$0xff]
  %v4588 = vld [vmem:[#allocation3 + $0xc9] sm:$0xff]
  %v4589 = vld [vmem:[#allocation3 + $0xd9] sm:$0xff]
  %v4590 = vld [vmem:[#allocation3 + $0xe1] sm:$0xff]
  %v4591 = vld [vmem:[#allocation3 + $0xf1] sm:$0xff]
  %v4592 = vld [vmem:[#allocation3 + $0xf9] sm:$0xff]
  %v4593 = vld [vmem:[#allocation3 + $0x109] sm:$0xff]
  %v4594 = vld [vmem:[#allocation3 + $0x111] sm:$0xff]
  %v4595 = vld [vmem:[#allocation3 + $0x121] sm:$0xff]
  %v4596 = vld [vmem:[#allocation3 + $0x129] sm:$0xff]
  %v4597 = vld [vmem:[#allocation3 + $0x139] sm:$0xff]
  %v4598 = vld [vmem:[#allocation3 + $0x141] sm:$0xff]
  %v4599 = vld [vmem:[#allocation3 + $0x151] sm:$0xff]
  %v4600 = vld [vmem:[#allocation3 + $0x159] sm:$0xff]
  %v4601 = vld [vmem:[#allocation3 + $0x169] sm:$0xff]
  %v4602 = vld [vmem:[#allocation3 + $0x171] sm:$0xff]
  %v4603 = vld [vmem:[#allocation3 + $0x1b1] sm:$0xff]
  %v4604 = vld [vmem:[#allocation3 + $0x1b9] sm:$0xff]
  %v4605 = vld [vmem:[#allocation3 + $0x1c9] sm:$0xff]
  %v4606 = vld [vmem:[#allocation3 + $0x1d1] sm:$0xff]
  %v4607 = vld [vmem:[#allocation3 + $0x1e1] sm:$0xff]
  %v4608 = vld [vmem:[#allocation3 + $0x1e9] sm:$0xff]
  %v4609 = vld [vmem:[#allocation3 + $0x1f9] sm:$0xff]
  %v4610 = vld [vmem:[#allocation3 + $0x201] sm:$0xff]
  %v4611 = vld [vmem:[#allocation3 + $0x211] sm:$0xff]
  %v4612 = vld [vmem:[#allocation3 + $0x219] sm:$0xff]
  %v4613 = vld [vmem:[#allocation3 + $0x229] sm:$0xff]
  %v4614 = vld [vmem:[#allocation3 + $0x231] sm:$0xff]
  %v4615 = vld [vmem:[#allocation3 + $0x241] sm:$0xff]
  %v4616 = vld [vmem:[#allocation3 + $0x249] sm:$0xff]
  %v4617 = vld [vmem:[#allocation3 + $0x259] sm:$0xff]
  %v4618 = vld [vmem:[#allocation3 + $0x261] sm:$0xff]
  %v4619 = vld [vmem:[#allocation3 + $0x271] sm:$0xff]
  %v4620 = vld [vmem:[#allocation3 + $0x279] sm:$0xff]
  %v4621 = vld [vmem:[#allocation3 + $0x289] sm:$0xff]
  %v4622 = vld [vmem:[#allocation3 + $0x291] sm:$0xff]
  %v4623 = vld [vmem:[#allocation3 + $0x2a1] sm:$0xff]
  %v4624 = vld [vmem:[#allocation3 + $0x2a9] sm:$0xff]
  %v4625 = vld [vmem:[#allocation3 + $0x2b9] sm:$0xff]
  %v4626 = vld [vmem:[#allocation3 + $0x2c1] sm:$0xff]
  %v4627 = vld [vmem:[#allocation3 + $0x2d1] sm:$0xff]
  %v4628 = vld [vmem:[#allocation3 + $0x2d9] sm:$0xff]
  %v4629 = vld [vmem:[#allocation3 + $0x2e9] sm:$0xff]
  %v4630 = vld [vmem:[#allocation3 + $0x2f1] sm:$0xff]
  %v4631 = vld [vmem:[#allocation3 + $0x301] sm:$0xff]
  %v4632 = vld [vmem:[#allocation3 + $0x309] sm:$0xff]
  %v4633 = vld [vmem:[#allocation3 + $0x319] sm:$0xff]
  %v4634 = vld [vmem:[#allocation3 + $0x321] sm:$0xff]
  %4699 = vrot.lane.b32.xlu0 %v4571, 4
  %v4700 = vpop.permute.xlu0 %4699
  %4701 = vrot.lane.b32.xlu0 %v4572, 4
  %v4702 = vpop.permute.xlu0 %4701
  %4703 = vrot.lane.b32.xlu0 %v4573, 4
  %v4704 = vpop.permute.xlu0 %4703
  %4705 = vrot.lane.b32.xlu0 %v4574, 4
  %v4706 = vpop.permute.xlu0 %4705
  %4707 = vrot.lane.b32.xlu0 %v4575, 4
  %v4708 = vpop.permute.xlu0 %4707
  %4709 = vrot.lane.b32.xlu0 %v4576, 4
  %v4710 = vpop.permute.xlu0 %4709
  %4711 = vrot.lane.b32.xlu0 %v4577, 4
  %v4712 = vpop.permute.xlu0 %4711
  %4713 = vrot.lane.b32.xlu0 %v4578, 4
  %v4714 = vpop.permute.xlu0 %4713
  %4715 = vrot.lane.b32.xlu0 %v4579, 4
  %v4716 = vpop.permute.xlu0 %4715
  %4717 = vrot.lane.b32.xlu0 %v4580, 4
  %v4718 = vpop.permute.xlu0 %4717
  %4719 = vrot.lane.b32.xlu0 %v4581, 4
  %v4720 = vpop.permute.xlu0 %4719
  %4721 = vrot.lane.b32.xlu0 %v4582, 4
  %v4722 = vpop.permute.xlu0 %4721
  %4723 = vrot.lane.b32.xlu0 %v4583, 4
  %v4724 = vpop.permute.xlu0 %4723
  %4725 = vrot.lane.b32.xlu0 %v4584, 4
  %v4726 = vpop.permute.xlu0 %4725
  %4727 = vrot.lane.b32.xlu0 %v4585, 4
  %v4728 = vpop.permute.xlu0 %4727
  %4729 = vrot.lane.b32.xlu0 %v4586, 4
  %v4730 = vpop.permute.xlu0 %4729
  %4731 = vrot.lane.b32.xlu0 %v4587, 4
  %v4732 = vpop.permute.xlu0 %4731
  %4733 = vrot.lane.b32.xlu0 %v4588, 4
  %v4734 = vpop.permute.xlu0 %4733
  %4735 = vrot.lane.b32.xlu0 %v4589, 4
  %v4736 = vpop.permute.xlu0 %4735
  %4737 = vrot.lane.b32.xlu0 %v4590, 4
  %v4738 = vpop.permute.xlu0 %4737
  %4739 = vrot.lane.b32.xlu0 %v4591, 4
  %v4740 = vpop.permute.xlu0 %4739
  %4741 = vrot.lane.b32.xlu0 %v4592, 4
  %v4742 = vpop.permute.xlu0 %4741
  %4743 = vrot.lane.b32.xlu0 %v4593, 4
  %v4744 = vpop.permute.xlu0 %4743
  %4745 = vrot.lane.b32.xlu0 %v4594, 4
  %v4746 = vpop.permute.xlu0 %4745
  %4747 = vrot.lane.b32.xlu0 %v4595, 4
  %v4748 = vpop.permute.xlu0 %4747
  %4749 = vrot.lane.b32.xlu0 %v4596, 4
  %v4750 = vpop.permute.xlu0 %4749
  %4751 = vrot.lane.b32.xlu0 %v4597, 4
  %v4752 = vpop.permute.xlu0 %4751
  %4753 = vrot.lane.b32.xlu0 %v4598, 4
  %v4754 = vpop.permute.xlu0 %4753
  %4755 = vrot.lane.b32.xlu0 %v4599, 4
  %v4756 = vpop.permute.xlu0 %4755
  %4757 = vrot.lane.b32.xlu0 %v4600, 4
  %v4758 = vpop.permute.xlu0 %4757
  %4759 = vrot.lane.b32.xlu0 %v4601, 4
  %v4760 = vpop.permute.xlu0 %4759
  %4761 = vrot.lane.b32.xlu0 %v4602, 4
  %v4762 = vpop.permute.xlu0 %4761
  %4763 = vrot.lane.b32.xlu0 %v4603, 4
  %v4764 = vpop.permute.xlu0 %4763
  %4765 = vrot.lane.b32.xlu0 %v4604, 4
  %v4766 = vpop.permute.xlu0 %4765
  %4767 = vrot.lane.b32.xlu0 %v4605, 4
  %v4768 = vpop.permute.xlu0 %4767
  %4769 = vrot.lane.b32.xlu0 %v4606, 4
  %v4770 = vpop.permute.xlu0 %4769
  %4771 = vrot.lane.b32.xlu0 %v4607, 4
  %v4772 = vpop.permute.xlu0 %4771
  %4773 = vrot.lane.b32.xlu0 %v4608, 4
  %v4774 = vpop.permute.xlu0 %4773
  %4775 = vrot.lane.b32.xlu0 %v4609, 4
  %v4776 = vpop.permute.xlu0 %4775
  %4777 = vrot.lane.b32.xlu0 %v4610, 4
  %v4778 = vpop.permute.xlu0 %4777
  %4779 = vrot.lane.b32.xlu0 %v4611, 4
  %v4780 = vpop.permute.xlu0 %4779
  %4781 = vrot.lane.b32.xlu0 %v4612, 4
  %v4782 = vpop.permute.xlu0 %4781
  %4783 = vrot.lane.b32.xlu0 %v4613, 4
  %v4784 = vpop.permute.xlu0 %4783
  %4785 = vrot.lane.b32.xlu0 %v4614, 4
  %v4786 = vpop.permute.xlu0 %4785
  %4787 = vrot.lane.b32.xlu0 %v4615, 4
  %v4788 = vpop.permute.xlu0 %4787
  %4789 = vrot.lane.b32.xlu0 %v4616, 4
  %v4790 = vpop.permute.xlu0 %4789
  %4791 = vrot.lane.b32.xlu0 %v4617, 4
  %v4792 = vpop.permute.xlu0 %4791
  %4793 = vrot.lane.b32.xlu0 %v4618, 4
  %v4794 = vpop.permute.xlu0 %4793
  %4795 = vrot.lane.b32.xlu0 %v4619, 4
  %v4796 = vpop.permute.xlu0 %4795
  %4797 = vrot.lane.b32.xlu0 %v4620, 4
  %v4798 = vpop.permute.xlu0 %4797
  %4799 = vrot.lane.b32.xlu0 %v4621, 4
  %v4800 = vpop.permute.xlu0 %4799
  %4801 = vrot.lane.b32.xlu0 %v4622, 4
  %v4802 = vpop.permute.xlu0 %4801
  %4803 = vrot.lane.b32.xlu0 %v4623, 4
  %v4804 = vpop.permute.xlu0 %4803
  %4805 = vrot.lane.b32.xlu0 %v4624, 4
  %v4806 = vpop.permute.xlu0 %4805
  %4807 = vrot.lane.b32.xlu0 %v4625, 4
  %v4808 = vpop.permute.xlu0 %4807
  %4809 = vrot.lane.b32.xlu0 %v4626, 4
  %v4810 = vpop.permute.xlu0 %4809
  %4811 = vrot.lane.b32.xlu0 %v4627, 4
  %v4812 = vpop.permute.xlu0 %4811
  %4813 = vrot.lane.b32.xlu0 %v4628, 4
  %v4814 = vpop.permute.xlu0 %4813
  %4815 = vrot.lane.b32.xlu0 %v4629, 4
  %v4816 = vpop.permute.xlu0 %4815
  %4817 = vrot.lane.b32.xlu0 %v4630, 4
  %v4818 = vpop.permute.xlu0 %4817
  %4819 = vrot.lane.b32.xlu0 %v4631, 4
  %v4820 = vpop.permute.xlu0 %4819
  %4821 = vrot.lane.b32.xlu0 %v4632, 4
  %v4822 = vpop.permute.xlu0 %4821
  %4823 = vrot.lane.b32.xlu0 %v4633, 4
  %v4824 = vpop.permute.xlu0 %4823
  %4825 = vrot.lane.b32.xlu0 %v4634, 4
  %v4826 = vpop.permute.xlu0 %4825
  %4891 = vst.msk [vmem:[#allocation4] sm:$0xff] %vm761, %v4700
  %4892 = vst.msk [vmem:[#allocation4 + $0x8] sm:$0xff] %vm761, %v4702
  %4893 = vst.msk [vmem:[#allocation4 + $0x10] sm:$0xff] %vm761, %v4704
  %4894 = vst.msk [vmem:[#allocation4 + $0x18] sm:$0xff] %vm761, %v4706
  %4895 = vst.msk [vmem:[#allocation4 + $0x20] sm:$0xff] %vm761, %v4708
  %4896 = vst.msk [vmem:[#allocation4 + $0x28] sm:$0xff] %vm761, %v4710
  %4897 = vst.msk [vmem:[#allocation4 + $0x30] sm:$0xff] %vm761, %v4712
  %4898 = vst.msk [vmem:[#allocation4 + $0x38] sm:$0xff] %vm761, %v4714
  %4899 = vst.msk [vmem:[#allocation4 + $0x40] sm:$0xff] %vm761, %v4716
  %4900 = vst.msk [vmem:[#allocation4 + $0x48] sm:$0xff] %vm761, %v4718
  %4901 = vst.msk [vmem:[#allocation4 + $0x50] sm:$0xff] %vm761, %v4720
  %4902 = vst.msk [vmem:[#allocation4 + $0x58] sm:$0xff] %vm761, %v4722
  %4903 = vst.msk [vmem:[#allocation4 + $0x60] sm:$0xff] %vm761, %v4724
  %4904 = vst.msk [vmem:[#allocation4 + $0x68] sm:$0xff] %vm761, %v4726
  %4905 = vst.msk [vmem:[#allocation4 + $0x70] sm:$0xff] %vm761, %v4728
  %4906 = vst.msk [vmem:[#allocation4 + $0x78] sm:$0xff] %vm761, %v4730
  %4907 = vst.msk [vmem:[#allocation4 + $0x80] sm:$0xff] %vm761, %v4732
  %4908 = vst.msk [vmem:[#allocation4 + $0x88] sm:$0xff] %vm761, %v4734
  %4909 = vst.msk [vmem:[#allocation4 + $0x90] sm:$0xff] %vm761, %v4736
  %4910 = vst.msk [vmem:[#allocation4 + $0x98] sm:$0xff] %vm761, %v4738
  %4911 = vst.msk [vmem:[#allocation4 + $0xa0] sm:$0xff] %vm761, %v4740
  %4912 = vst.msk [vmem:[#allocation4 + $0xa8] sm:$0xff] %vm761, %v4742
  %4913 = vst.msk [vmem:[#allocation4 + $0xb0] sm:$0xff] %vm761, %v4744
  %4914 = vst.msk [vmem:[#allocation4 + $0xb8] sm:$0xff] %vm761, %v4746
  %4915 = vst.msk [vmem:[#allocation4 + $0xc0] sm:$0xff] %vm761, %v4748
  %4916 = vst.msk [vmem:[#allocation4 + $0xc8] sm:$0xff] %vm761, %v4750
  %4917 = vst.msk [vmem:[#allocation4 + $0xd0] sm:$0xff] %vm761, %v4752
  %4918 = vst.msk [vmem:[#allocation4 + $0xd8] sm:$0xff] %vm761, %v4754
  %4919 = vst.msk [vmem:[#allocation4 + $0xe0] sm:$0xff] %vm761, %v4756
  %4920 = vst.msk [vmem:[#allocation4 + $0xe8] sm:$0xff] %vm761, %v4758
  %4921 = vst.msk [vmem:[#allocation4 + $0xf0] sm:$0xff] %vm761, %v4760
  %4922 = vst.msk [vmem:[#allocation4 + $0xf8] sm:$0xff] %vm761, %v4762
  %4923 = vst.msk [vmem:[#allocation4 + $0x100] sm:$0xff] %vm761, %v4764
  %4924 = vst.msk [vmem:[#allocation4 + $0x108] sm:$0xff] %vm761, %v4766
  %4925 = vst.msk [vmem:[#allocation4 + $0x110] sm:$0xff] %vm761, %v4768
  %4926 = vst.msk [vmem:[#allocation4 + $0x118] sm:$0xff] %vm761, %v4770
  %4927 = vst.msk [vmem:[#allocation4 + $0x120] sm:$0xff] %vm761, %v4772
  %4928 = vst.msk [vmem:[#allocation4 + $0x128] sm:$0xff] %vm761, %v4774
  %4929 = vst.msk [vmem:[#allocation4 + $0x130] sm:$0xff] %vm761, %v4776
  %4930 = vst.msk [vmem:[#allocation4 + $0x138] sm:$0xff] %vm761, %v4778
  %4931 = vst.msk [vmem:[#allocation4 + $0x140] sm:$0xff] %vm761, %v4780
  %4932 = vst.msk [vmem:[#allocation4 + $0x148] sm:$0xff] %vm761, %v4782
  %4933 = vst.msk [vmem:[#allocation4 + $0x150] sm:$0xff] %vm761, %v4784
  %4934 = vst.msk [vmem:[#allocation4 + $0x158] sm:$0xff] %vm761, %v4786
  %4935 = vst.msk [vmem:[#allocation4 + $0x160] sm:$0xff] %vm761, %v4788
  %4936 = vst.msk [vmem:[#allocation4 + $0x168] sm:$0xff] %vm761, %v4790
  %4937 = vst.msk [vmem:[#allocation4 + $0x170] sm:$0xff] %vm761, %v4792
  %4938 = vst.msk [vmem:[#allocation4 + $0x178] sm:$0xff] %vm761, %v4794
  %4939 = vst.msk [vmem:[#allocation4 + $0x180] sm:$0xff] %vm761, %v4796
  %4940 = vst.msk [vmem:[#allocation4 + $0x188] sm:$0xff] %vm761, %v4798
  %4941 = vst.msk [vmem:[#allocation4 + $0x190] sm:$0xff] %vm761, %v4800
  %4942 = vst.msk [vmem:[#allocation4 + $0x198] sm:$0xff] %vm761, %v4802
  %4943 = vst.msk [vmem:[#allocation4 + $0x1a0] sm:$0xff] %vm761, %v4804
  %4944 = vst.msk [vmem:[#allocation4 + $0x1a8] sm:$0xff] %vm761, %v4806
  %4945 = vst.msk [vmem:[#allocation4 + $0x1b0] sm:$0xff] %vm761, %v4808
  %4946 = vst.msk [vmem:[#allocation4 + $0x1b8] sm:$0xff] %vm761, %v4810
  %4947 = vst.msk [vmem:[#allocation4 + $0x1c0] sm:$0xff] %vm761, %v4812
  %4948 = vst.msk [vmem:[#allocation4 + $0x1c8] sm:$0xff] %vm761, %v4814
  %4949 = vst.msk [vmem:[#allocation4 + $0x1d0] sm:$0xff] %vm761, %v4816
  %4950 = vst.msk [vmem:[#allocation4 + $0x1d8] sm:$0xff] %vm761, %v4818
  %4951 = vst.msk [vmem:[#allocation4 + $0x1e0] sm:$0xff] %vm761, %v4820
  %4952 = vst.msk [vmem:[#allocation4 + $0x1e8] sm:$0xff] %vm761, %v4822
  %4953 = vst.msk [vmem:[#allocation4 + $0x1f0] sm:$0xff] %vm761, %v4824
  %4954 = vst.msk [vmem:[#allocation4 + $0x1f8] sm:$0xff] %vm761, %v4826
  %v4955 = vld [vmem:[#allocation3 + $0x2] sm:$0xff]
  %v4956 = vld [vmem:[#allocation3 + $0xa] sm:$0xff]
  %v4957 = vld [vmem:[#allocation3 + $0x1a] sm:$0xff]
  %v4958 = vld [vmem:[#allocation3 + $0x22] sm:$0xff]
  %v4959 = vld [vmem:[#allocation3 + $0x32] sm:$0xff]
  %v4960 = vld [vmem:[#allocation3 + $0x3a] sm:$0xff]
  %v4961 = vld [vmem:[#allocation3 + $0x4a] sm:$0xff]
  %v4962 = vld [vmem:[#allocation3 + $0x52] sm:$0xff]
  %v4963 = vld [vmem:[#allocation3 + $0x62] sm:$0xff]
  %v4964 = vld [vmem:[#allocation3 + $0x6a] sm:$0xff]
  %v4965 = vld [vmem:[#allocation3 + $0x7a] sm:$0xff]
  %v4966 = vld [vmem:[#allocation3 + $0x82] sm:$0xff]
  %v4967 = vld [vmem:[#allocation3 + $0x92] sm:$0xff]
  %v4968 = vld [vmem:[#allocation3 + $0x9a] sm:$0xff]
  %v4969 = vld [vmem:[#allocation3 + $0xaa] sm:$0xff]
  %v4970 = vld [vmem:[#allocation3 + $0xb2] sm:$0xff]
  %v4971 = vld [vmem:[#allocation3 + $0xc2] sm:$0xff]
  %v4972 = vld [vmem:[#allocation3 + $0xca] sm:$0xff]
  %v4973 = vld [vmem:[#allocation3 + $0xda] sm:$0xff]
  %v4974 = vld [vmem:[#allocation3 + $0xe2] sm:$0xff]
  %v4975 = vld [vmem:[#allocation3 + $0xf2] sm:$0xff]
  %v4976 = vld [vmem:[#allocation3 + $0xfa] sm:$0xff]
  %v4977 = vld [vmem:[#allocation3 + $0x10a] sm:$0xff]
  %v4978 = vld [vmem:[#allocation3 + $0x112] sm:$0xff]
  %v4979 = vld [vmem:[#allocation3 + $0x122] sm:$0xff]
  %v4980 = vld [vmem:[#allocation3 + $0x12a] sm:$0xff]
  %v4981 = vld [vmem:[#allocation3 + $0x13a] sm:$0xff]
  %v4982 = vld [vmem:[#allocation3 + $0x142] sm:$0xff]
  %v4983 = vld [vmem:[#allocation3 + $0x152] sm:$0xff]
  %v4984 = vld [vmem:[#allocation3 + $0x15a] sm:$0xff]
  %v4985 = vld [vmem:[#allocation3 + $0x16a] sm:$0xff]
  %v4986 = vld [vmem:[#allocation3 + $0x172] sm:$0xff]
  %v4987 = vld [vmem:[#allocation3 + $0x1b2] sm:$0xff]
  %v4988 = vld [vmem:[#allocation3 + $0x1ba] sm:$0xff]
  %v4989 = vld [vmem:[#allocation3 + $0x1ca] sm:$0xff]
  %v4990 = vld [vmem:[#allocation3 + $0x1d2] sm:$0xff]
  %v4991 = vld [vmem:[#allocation3 + $0x1e2] sm:$0xff]
  %v4992 = vld [vmem:[#allocation3 + $0x1ea] sm:$0xff]
  %v4993 = vld [vmem:[#allocation3 + $0x1fa] sm:$0xff]
  %v4994 = vld [vmem:[#allocation3 + $0x202] sm:$0xff]
  %v4995 = vld [vmem:[#allocation3 + $0x212] sm:$0xff]
  %v4996 = vld [vmem:[#allocation3 + $0x21a] sm:$0xff]
  %v4997 = vld [vmem:[#allocation3 + $0x22a] sm:$0xff]
  %v4998 = vld [vmem:[#allocation3 + $0x232] sm:$0xff]
  %v4999 = vld [vmem:[#allocation3 + $0x242] sm:$0xff]
  %v5000 = vld [vmem:[#allocation3 + $0x24a] sm:$0xff]
  %v5001 = vld [vmem:[#allocation3 + $0x25a] sm:$0xff]
  %v5002 = vld [vmem:[#allocation3 + $0x262] sm:$0xff]
  %v5003 = vld [vmem:[#allocation3 + $0x272] sm:$0xff]
  %v5004 = vld [vmem:[#allocation3 + $0x27a] sm:$0xff]
  %v5005 = vld [vmem:[#allocation3 + $0x28a] sm:$0xff]
  %v5006 = vld [vmem:[#allocation3 + $0x292] sm:$0xff]
  %v5007 = vld [vmem:[#allocation3 + $0x2a2] sm:$0xff]
  %v5008 = vld [vmem:[#allocation3 + $0x2aa] sm:$0xff]
  %v5009 = vld [vmem:[#allocation3 + $0x2ba] sm:$0xff]
  %v5010 = vld [vmem:[#allocation3 + $0x2c2] sm:$0xff]
  %v5011 = vld [vmem:[#allocation3 + $0x2d2] sm:$0xff]
  %v5012 = vld [vmem:[#allocation3 + $0x2da] sm:$0xff]
  %v5013 = vld [vmem:[#allocation3 + $0x2ea] sm:$0xff]
  %v5014 = vld [vmem:[#allocation3 + $0x2f2] sm:$0xff]
  %v5015 = vld [vmem:[#allocation3 + $0x302] sm:$0xff]
  %v5016 = vld [vmem:[#allocation3 + $0x30a] sm:$0xff]
  %v5017 = vld [vmem:[#allocation3 + $0x31a] sm:$0xff]
  %v5018 = vld [vmem:[#allocation3 + $0x322] sm:$0xff]
  %5083 = vrot.lane.b32.xlu0 %v4955, 8
  %v5084 = vpop.permute.xlu0 %5083
  %5085 = vrot.lane.b32.xlu0 %v4956, 8
  %v5086 = vpop.permute.xlu0 %5085
  %5087 = vrot.lane.b32.xlu0 %v4957, 8
  %v5088 = vpop.permute.xlu0 %5087
  %5089 = vrot.lane.b32.xlu0 %v4958, 8
  %v5090 = vpop.permute.xlu0 %5089
  %5091 = vrot.lane.b32.xlu0 %v4959, 8
  %v5092 = vpop.permute.xlu0 %5091
  %5093 = vrot.lane.b32.xlu0 %v4960, 8
  %v5094 = vpop.permute.xlu0 %5093
  %5095 = vrot.lane.b32.xlu0 %v4961, 8
  %v5096 = vpop.permute.xlu0 %5095
  %5097 = vrot.lane.b32.xlu0 %v4962, 8
  %v5098 = vpop.permute.xlu0 %5097
  %5099 = vrot.lane.b32.xlu0 %v4963, 8
  %v5100 = vpop.permute.xlu0 %5099
  %5101 = vrot.lane.b32.xlu0 %v4964, 8
  %v5102 = vpop.permute.xlu0 %5101
  %5103 = vrot.lane.b32.xlu0 %v4965, 8
  %v5104 = vpop.permute.xlu0 %5103
  %5105 = vrot.lane.b32.xlu0 %v4966, 8
  %v5106 = vpop.permute.xlu0 %5105
  %5107 = vrot.lane.b32.xlu0 %v4967, 8
  %v5108 = vpop.permute.xlu0 %5107
  %5109 = vrot.lane.b32.xlu0 %v4968, 8
  %v5110 = vpop.permute.xlu0 %5109
  %5111 = vrot.lane.b32.xlu0 %v4969, 8
  %v5112 = vpop.permute.xlu0 %5111
  %5113 = vrot.lane.b32.xlu0 %v4970, 8
  %v5114 = vpop.permute.xlu0 %5113
  %5115 = vrot.lane.b32.xlu0 %v4971, 8
  %v5116 = vpop.permute.xlu0 %5115
  %5117 = vrot.lane.b32.xlu0 %v4972, 8
  %v5118 = vpop.permute.xlu0 %5117
  %5119 = vrot.lane.b32.xlu0 %v4973, 8
  %v5120 = vpop.permute.xlu0 %5119
  %5121 = vrot.lane.b32.xlu0 %v4974, 8
  %v5122 = vpop.permute.xlu0 %5121
  %5123 = vrot.lane.b32.xlu0 %v4975, 8
  %v5124 = vpop.permute.xlu0 %5123
  %5125 = vrot.lane.b32.xlu0 %v4976, 8
  %v5126 = vpop.permute.xlu0 %5125
  %5127 = vrot.lane.b32.xlu0 %v4977, 8
  %v5128 = vpop.permute.xlu0 %5127
  %5129 = vrot.lane.b32.xlu0 %v4978, 8
  %v5130 = vpop.permute.xlu0 %5129
  %5131 = vrot.lane.b32.xlu0 %v4979, 8
  %v5132 = vpop.permute.xlu0 %5131
  %5133 = vrot.lane.b32.xlu0 %v4980, 8
  %v5134 = vpop.permute.xlu0 %5133
  %5135 = vrot.lane.b32.xlu0 %v4981, 8
  %v5136 = vpop.permute.xlu0 %5135
  %5137 = vrot.lane.b32.xlu0 %v4982, 8
  %v5138 = vpop.permute.xlu0 %5137
  %5139 = vrot.lane.b32.xlu0 %v4983, 8
  %v5140 = vpop.permute.xlu0 %5139
  %5141 = vrot.lane.b32.xlu0 %v4984, 8
  %v5142 = vpop.permute.xlu0 %5141
  %5143 = vrot.lane.b32.xlu0 %v4985, 8
  %v5144 = vpop.permute.xlu0 %5143
  %5145 = vrot.lane.b32.xlu0 %v4986, 8
  %v5146 = vpop.permute.xlu0 %5145
  %5147 = vrot.lane.b32.xlu0 %v4987, 8
  %v5148 = vpop.permute.xlu0 %5147
  %5149 = vrot.lane.b32.xlu0 %v4988, 8
  %v5150 = vpop.permute.xlu0 %5149
  %5151 = vrot.lane.b32.xlu0 %v4989, 8
  %v5152 = vpop.permute.xlu0 %5151
  %5153 = vrot.lane.b32.xlu0 %v4990, 8
  %v5154 = vpop.permute.xlu0 %5153
  %5155 = vrot.lane.b32.xlu0 %v4991, 8
  %v5156 = vpop.permute.xlu0 %5155
  %5157 = vrot.lane.b32.xlu0 %v4992, 8
  %v5158 = vpop.permute.xlu0 %5157
  %5159 = vrot.lane.b32.xlu0 %v4993, 8
  %v5160 = vpop.permute.xlu0 %5159
  %5161 = vrot.lane.b32.xlu0 %v4994, 8
  %v5162 = vpop.permute.xlu0 %5161
  %5163 = vrot.lane.b32.xlu0 %v4995, 8
  %v5164 = vpop.permute.xlu0 %5163
  %5165 = vrot.lane.b32.xlu0 %v4996, 8
  %v5166 = vpop.permute.xlu0 %5165
  %5167 = vrot.lane.b32.xlu0 %v4997, 8
  %v5168 = vpop.permute.xlu0 %5167
  %5169 = vrot.lane.b32.xlu0 %v4998, 8
  %v5170 = vpop.permute.xlu0 %5169
  %5171 = vrot.lane.b32.xlu0 %v4999, 8
  %v5172 = vpop.permute.xlu0 %5171
  %5173 = vrot.lane.b32.xlu0 %v5000, 8
  %v5174 = vpop.permute.xlu0 %5173
  %5175 = vrot.lane.b32.xlu0 %v5001, 8
  %v5176 = vpop.permute.xlu0 %5175
  %5177 = vrot.lane.b32.xlu0 %v5002, 8
  %v5178 = vpop.permute.xlu0 %5177
  %5179 = vrot.lane.b32.xlu0 %v5003, 8
  %v5180 = vpop.permute.xlu0 %5179
  %5181 = vrot.lane.b32.xlu0 %v5004, 8
  %v5182 = vpop.permute.xlu0 %5181
  %5183 = vrot.lane.b32.xlu0 %v5005, 8
  %v5184 = vpop.permute.xlu0 %5183
  %5185 = vrot.lane.b32.xlu0 %v5006, 8
  %v5186 = vpop.permute.xlu0 %5185
  %5187 = vrot.lane.b32.xlu0 %v5007, 8
  %v5188 = vpop.permute.xlu0 %5187
  %5189 = vrot.lane.b32.xlu0 %v5008, 8
  %v5190 = vpop.permute.xlu0 %5189
  %5191 = vrot.lane.b32.xlu0 %v5009, 8
  %v5192 = vpop.permute.xlu0 %5191
  %5193 = vrot.lane.b32.xlu0 %v5010, 8
  %v5194 = vpop.permute.xlu0 %5193
  %5195 = vrot.lane.b32.xlu0 %v5011, 8
  %v5196 = vpop.permute.xlu0 %5195
  %5197 = vrot.lane.b32.xlu0 %v5012, 8
  %v5198 = vpop.permute.xlu0 %5197
  %5199 = vrot.lane.b32.xlu0 %v5013, 8
  %v5200 = vpop.permute.xlu0 %5199
  %5201 = vrot.lane.b32.xlu0 %v5014, 8
  %v5202 = vpop.permute.xlu0 %5201
  %5203 = vrot.lane.b32.xlu0 %v5015, 8
  %v5204 = vpop.permute.xlu0 %5203
  %5205 = vrot.lane.b32.xlu0 %v5016, 8
  %v5206 = vpop.permute.xlu0 %5205
  %5207 = vrot.lane.b32.xlu0 %v5017, 8
  %v5208 = vpop.permute.xlu0 %5207
  %5209 = vrot.lane.b32.xlu0 %v5018, 8
  %v5210 = vpop.permute.xlu0 %5209
  %5275 = vst.msk [vmem:[#allocation4] sm:$0xff] %vm1146, %v5084
  %5276 = vst.msk [vmem:[#allocation4 + $0x8] sm:$0xff] %vm1146, %v5086
  %5277 = vst.msk [vmem:[#allocation4 + $0x10] sm:$0xff] %vm1146, %v5088
  %5278 = vst.msk [vmem:[#allocation4 + $0x18] sm:$0xff] %vm1146, %v5090
  %5279 = vst.msk [vmem:[#allocation4 + $0x20] sm:$0xff] %vm1146, %v5092
  %5280 = vst.msk [vmem:[#allocation4 + $0x28] sm:$0xff] %vm1146, %v5094
  %5281 = vst.msk [vmem:[#allocation4 + $0x30] sm:$0xff] %vm1146, %v5096
  %5282 = vst.msk [vmem:[#allocation4 + $0x38] sm:$0xff] %vm1146, %v5098
  %5283 = vst.msk [vmem:[#allocation4 + $0x40] sm:$0xff] %vm1146, %v5100
  %5284 = vst.msk [vmem:[#allocation4 + $0x48] sm:$0xff] %vm1146, %v5102
  %5285 = vst.msk [vmem:[#allocation4 + $0x50] sm:$0xff] %vm1146, %v5104
  %5286 = vst.msk [vmem:[#allocation4 + $0x58] sm:$0xff] %vm1146, %v5106
  %5287 = vst.msk [vmem:[#allocation4 + $0x60] sm:$0xff] %vm1146, %v5108
  %5288 = vst.msk [vmem:[#allocation4 + $0x68] sm:$0xff] %vm1146, %v5110
  %5289 = vst.msk [vmem:[#allocation4 + $0x70] sm:$0xff] %vm1146, %v5112
  %5290 = vst.msk [vmem:[#allocation4 + $0x78] sm:$0xff] %vm1146, %v5114
  %5291 = vst.msk [vmem:[#allocation4 + $0x80] sm:$0xff] %vm1146, %v5116
  %5292 = vst.msk [vmem:[#allocation4 + $0x88] sm:$0xff] %vm1146, %v5118
  %5293 = vst.msk [vmem:[#allocation4 + $0x90] sm:$0xff] %vm1146, %v5120
  %5294 = vst.msk [vmem:[#allocation4 + $0x98] sm:$0xff] %vm1146, %v5122
  %5295 = vst.msk [vmem:[#allocation4 + $0xa0] sm:$0xff] %vm1146, %v5124
  %5296 = vst.msk [vmem:[#allocation4 + $0xa8] sm:$0xff] %vm1146, %v5126
  %5297 = vst.msk [vmem:[#allocation4 + $0xb0] sm:$0xff] %vm1146, %v5128
  %5298 = vst.msk [vmem:[#allocation4 + $0xb8] sm:$0xff] %vm1146, %v5130
  %5299 = vst.msk [vmem:[#allocation4 + $0xc0] sm:$0xff] %vm1146, %v5132
  %5300 = vst.msk [vmem:[#allocation4 + $0xc8] sm:$0xff] %vm1146, %v5134
  %5301 = vst.msk [vmem:[#allocation4 + $0xd0] sm:$0xff] %vm1146, %v5136
  %5302 = vst.msk [vmem:[#allocation4 + $0xd8] sm:$0xff] %vm1146, %v5138
  %5303 = vst.msk [vmem:[#allocation4 + $0xe0] sm:$0xff] %vm1146, %v5140
  %5304 = vst.msk [vmem:[#allocation4 + $0xe8] sm:$0xff] %vm1146, %v5142
  %5305 = vst.msk [vmem:[#allocation4 + $0xf0] sm:$0xff] %vm1146, %v5144
  %5306 = vst.msk [vmem:[#allocation4 + $0xf8] sm:$0xff] %vm1146, %v5146
  %5307 = vst.msk [vmem:[#allocation4 + $0x100] sm:$0xff] %vm1146, %v5148
  %5308 = vst.msk [vmem:[#allocation4 + $0x108] sm:$0xff] %vm1146, %v5150
  %5309 = vst.msk [vmem:[#allocation4 + $0x110] sm:$0xff] %vm1146, %v5152
  %5310 = vst.msk [vmem:[#allocation4 + $0x118] sm:$0xff] %vm1146, %v5154
  %5311 = vst.msk [vmem:[#allocation4 + $0x120] sm:$0xff] %vm1146, %v5156
  %5312 = vst.msk [vmem:[#allocation4 + $0x128] sm:$0xff] %vm1146, %v5158
  %5313 = vst.msk [vmem:[#allocation4 + $0x130] sm:$0xff] %vm1146, %v5160
  %5314 = vst.msk [vmem:[#allocation4 + $0x138] sm:$0xff] %vm1146, %v5162
  %5315 = vst.msk [vmem:[#allocation4 + $0x140] sm:$0xff] %vm1146, %v5164
  %5316 = vst.msk [vmem:[#allocation4 + $0x148] sm:$0xff] %vm1146, %v5166
  %5317 = vst.msk [vmem:[#allocation4 + $0x150] sm:$0xff] %vm1146, %v5168
  %5318 = vst.msk [vmem:[#allocation4 + $0x158] sm:$0xff] %vm1146, %v5170
  %5319 = vst.msk [vmem:[#allocation4 + $0x160] sm:$0xff] %vm1146, %v5172
  %5320 = vst.msk [vmem:[#allocation4 + $0x168] sm:$0xff] %vm1146, %v5174
  %5321 = vst.msk [vmem:[#allocation4 + $0x170] sm:$0xff] %vm1146, %v5176
  %5322 = vst.msk [vmem:[#allocation4 + $0x178] sm:$0xff] %vm1146, %v5178
  %5323 = vst.msk [vmem:[#allocation4 + $0x180] sm:$0xff] %vm1146, %v5180
  %5324 = vst.msk [vmem:[#allocation4 + $0x188] sm:$0xff] %vm1146, %v5182
  %5325 = vst.msk [vmem:[#allocation4 + $0x190] sm:$0xff] %vm1146, %v5184
  %5326 = vst.msk [vmem:[#allocation4 + $0x198] sm:$0xff] %vm1146, %v5186
  %5327 = vst.msk [vmem:[#allocation4 + $0x1a0] sm:$0xff] %vm1146, %v5188
  %5328 = vst.msk [vmem:[#allocation4 + $0x1a8] sm:$0xff] %vm1146, %v5190
  %5329 = vst.msk [vmem:[#allocation4 + $0x1b0] sm:$0xff] %vm1146, %v5192
  %5330 = vst.msk [vmem:[#allocation4 + $0x1b8] sm:$0xff] %vm1146, %v5194
  %5331 = vst.msk [vmem:[#allocation4 + $0x1c0] sm:$0xff] %vm1146, %v5196
  %5332 = vst.msk [vmem:[#allocation4 + $0x1c8] sm:$0xff] %vm1146, %v5198
  %5333 = vst.msk [vmem:[#allocation4 + $0x1d0] sm:$0xff] %vm1146, %v5200
  %5334 = vst.msk [vmem:[#allocation4 + $0x1d8] sm:$0xff] %vm1146, %v5202
  %5335 = vst.msk [vmem:[#allocation4 + $0x1e0] sm:$0xff] %vm1146, %v5204
  %5336 = vst.msk [vmem:[#allocation4 + $0x1e8] sm:$0xff] %vm1146, %v5206
  %5337 = vst.msk [vmem:[#allocation4 + $0x1f0] sm:$0xff] %vm1146, %v5208
  %5338 = vst.msk [vmem:[#allocation4 + $0x1f8] sm:$0xff] %vm1146, %v5210
  %v5339 = vld [vmem:[%s120] sm:$0xff]
  %v5340 = vld [vmem:[%s120 + $0x8] sm:$0xff]
  %v5341 = vld [vmem:[%s120 + $0x18] sm:$0xff]
  %v5342 = vld [vmem:[%s120 + $0x20] sm:$0xff]
  %v5343 = vld [vmem:[%s120 + $0x30] sm:$0xff]
  %v5344 = vld [vmem:[%s120 + $0x38] sm:$0xff]
  %v5345 = vld [vmem:[%s120 + $0x48] sm:$0xff]
  %v5346 = vld [vmem:[%s120 + $0x50] sm:$0xff]
  %v5347 = vld [vmem:[%s120 + $0x60] sm:$0xff]
  %v5348 = vld [vmem:[%s120 + $0x68] sm:$0xff]
  %v5349 = vld [vmem:[%s120 + $0x78] sm:$0xff]
  %v5350 = vld [vmem:[%s120 + $0x80] sm:$0xff]
  %v5351 = vld [vmem:[%s120 + $0x90] sm:$0xff]
  %v5352 = vld [vmem:[%s120 + $0x98] sm:$0xff]
  %v5353 = vld [vmem:[%s120 + $0xa8] sm:$0xff]
  %v5354 = vld [vmem:[%s120 + $0xb0] sm:$0xff]
  %v5355 = vld [vmem:[%s120 + $0xc0] sm:$0xff]
  %v5356 = vld [vmem:[%s120 + $0xc8] sm:$0xff]
  %v5357 = vld [vmem:[%s120 + $0xd8] sm:$0xff]
  %v5358 = vld [vmem:[%s120 + $0xe0] sm:$0xff]
  %v5359 = vld [vmem:[%s120 + $0xf0] sm:$0xff]
  %v5360 = vld [vmem:[%s120 + $0xf8] sm:$0xff]
  %v5361 = vld [vmem:[%s120 + $0x108] sm:$0xff]
  %v5362 = vld [vmem:[%s120 + $0x110] sm:$0xff]
  %v5363 = vld [vmem:[%s120 + $0x120] sm:$0xff]
  %v5364 = vld [vmem:[%s120 + $0x128] sm:$0xff]
  %v5365 = vld [vmem:[%s120 + $0x138] sm:$0xff]
  %v5366 = vld [vmem:[%s120 + $0x140] sm:$0xff]
  %v5367 = vld [vmem:[%s120 + $0x150] sm:$0xff]
  %v5368 = vld [vmem:[%s120 + $0x158] sm:$0xff]
  %v5369 = vld [vmem:[%s120 + $0x168] sm:$0xff]
  %v5370 = vld [vmem:[%s120 + $0x170] sm:$0xff]
  %v5371 = vld [vmem:[%s120 + $0x1b0] sm:$0xff]
  %v5372 = vld [vmem:[%s120 + $0x1b8] sm:$0xff]
  %v5373 = vld [vmem:[%s120 + $0x1c8] sm:$0xff]
  %v5374 = vld [vmem:[%s120 + $0x1d0] sm:$0xff]
  %v5375 = vld [vmem:[%s120 + $0x1e0] sm:$0xff]
  %v5376 = vld [vmem:[%s120 + $0x1e8] sm:$0xff]
  %v5377 = vld [vmem:[%s120 + $0x1f8] sm:$0xff]
  %v5378 = vld [vmem:[%s120 + $0x200] sm:$0xff]
  %v5379 = vld [vmem:[%s120 + $0x210] sm:$0xff]
  %v5380 = vld [vmem:[%s120 + $0x218] sm:$0xff]
  %v5381 = vld [vmem:[%s120 + $0x228] sm:$0xff]
  %v5382 = vld [vmem:[%s120 + $0x230] sm:$0xff]
  %v5383 = vld [vmem:[%s120 + $0x240] sm:$0xff]
  %v5384 = vld [vmem:[%s120 + $0x248] sm:$0xff]
  %v5385 = vld [vmem:[%s120 + $0x258] sm:$0xff]
  %v5386 = vld [vmem:[%s120 + $0x260] sm:$0xff]
  %v5387 = vld [vmem:[%s120 + $0x270] sm:$0xff]
  %v5388 = vld [vmem:[%s120 + $0x278] sm:$0xff]
  %v5389 = vld [vmem:[%s120 + $0x288] sm:$0xff]
  %v5390 = vld [vmem:[%s120 + $0x290] sm:$0xff]
  %v5391 = vld [vmem:[%s120 + $0x2a0] sm:$0xff]
  %v5392 = vld [vmem:[%s120 + $0x2a8] sm:$0xff]
  %v5393 = vld [vmem:[%s120 + $0x2b8] sm:$0xff]
  %v5394 = vld [vmem:[%s120 + $0x2c0] sm:$0xff]
  %v5395 = vld [vmem:[%s120 + $0x2d0] sm:$0xff]
  %v5396 = vld [vmem:[%s120 + $0x2d8] sm:$0xff]
  %v5397 = vld [vmem:[%s120 + $0x2e8] sm:$0xff]
  %v5398 = vld [vmem:[%s120 + $0x2f0] sm:$0xff]
  %v5399 = vld [vmem:[%s120 + $0x300] sm:$0xff]
  %v5400 = vld [vmem:[%s120 + $0x308] sm:$0xff]
  %v5401 = vld [vmem:[%s120 + $0x318] sm:$0xff]
  %v5402 = vld [vmem:[%s120 + $0x320] sm:$0xff]
  %5467 = vrot.lane.b32.xlu0 %v5339, 12
  %v5468 = vpop.permute.xlu0 %5467
  %5469 = vrot.lane.b32.xlu0 %v5340, 12
  %v5470 = vpop.permute.xlu0 %5469
  %5471 = vrot.lane.b32.xlu0 %v5341, 12
  %v5472 = vpop.permute.xlu0 %5471
  %5473 = vrot.lane.b32.xlu0 %v5342, 12
  %v5474 = vpop.permute.xlu0 %5473
  %5475 = vrot.lane.b32.xlu0 %v5343, 12
  %v5476 = vpop.permute.xlu0 %5475
  %5477 = vrot.lane.b32.xlu0 %v5344, 12
  %v5478 = vpop.permute.xlu0 %5477
  %5479 = vrot.lane.b32.xlu0 %v5345, 12
  %v5480 = vpop.permute.xlu0 %5479
  %5481 = vrot.lane.b32.xlu0 %v5346, 12
  %v5482 = vpop.permute.xlu0 %5481
  %5483 = vrot.lane.b32.xlu0 %v5347, 12
  %v5484 = vpop.permute.xlu0 %5483
  %5485 = vrot.lane.b32.xlu0 %v5348, 12
  %v5486 = vpop.permute.xlu0 %5485
  %5487 = vrot.lane.b32.xlu0 %v5349, 12
  %v5488 = vpop.permute.xlu0 %5487
  %5489 = vrot.lane.b32.xlu0 %v5350, 12
  %v5490 = vpop.permute.xlu0 %5489
  %5491 = vrot.lane.b32.xlu0 %v5351, 12
  %v5492 = vpop.permute.xlu0 %5491
  %5493 = vrot.lane.b32.xlu0 %v5352, 12
  %v5494 = vpop.permute.xlu0 %5493
  %5495 = vrot.lane.b32.xlu0 %v5353, 12
  %v5496 = vpop.permute.xlu0 %5495
  %5497 = vrot.lane.b32.xlu0 %v5354, 12
  %v5498 = vpop.permute.xlu0 %5497
  %5499 = vrot.lane.b32.xlu0 %v5355, 12
  %v5500 = vpop.permute.xlu0 %5499
  %5501 = vrot.lane.b32.xlu0 %v5356, 12
  %v5502 = vpop.permute.xlu0 %5501
  %5503 = vrot.lane.b32.xlu0 %v5357, 12
  %v5504 = vpop.permute.xlu0 %5503
  %5505 = vrot.lane.b32.xlu0 %v5358, 12
  %v5506 = vpop.permute.xlu0 %5505
  %5507 = vrot.lane.b32.xlu0 %v5359, 12
  %v5508 = vpop.permute.xlu0 %5507
  %5509 = vrot.lane.b32.xlu0 %v5360, 12
  %v5510 = vpop.permute.xlu0 %5509
  %5511 = vrot.lane.b32.xlu0 %v5361, 12
  %v5512 = vpop.permute.xlu0 %5511
  %5513 = vrot.lane.b32.xlu0 %v5362, 12
  %v5514 = vpop.permute.xlu0 %5513
  %5515 = vrot.lane.b32.xlu0 %v5363, 12
  %v5516 = vpop.permute.xlu0 %5515
  %5517 = vrot.lane.b32.xlu0 %v5364, 12
  %v5518 = vpop.permute.xlu0 %5517
  %5519 = vrot.lane.b32.xlu0 %v5365, 12
  %v5520 = vpop.permute.xlu0 %5519
  %5521 = vrot.lane.b32.xlu0 %v5366, 12
  %v5522 = vpop.permute.xlu0 %5521
  %5523 = vrot.lane.b32.xlu0 %v5367, 12
  %v5524 = vpop.permute.xlu0 %5523
  %5525 = vrot.lane.b32.xlu0 %v5368, 12
  %v5526 = vpop.permute.xlu0 %5525
  %5527 = vrot.lane.b32.xlu0 %v5369, 12
  %v5528 = vpop.permute.xlu0 %5527
  %5529 = vrot.lane.b32.xlu0 %v5370, 12
  %v5530 = vpop.permute.xlu0 %5529
  %5531 = vrot.lane.b32.xlu0 %v5371, 12
  %v5532 = vpop.permute.xlu0 %5531
  %5533 = vrot.lane.b32.xlu0 %v5372, 12
  %v5534 = vpop.permute.xlu0 %5533
  %5535 = vrot.lane.b32.xlu0 %v5373, 12
  %v5536 = vpop.permute.xlu0 %5535
  %5537 = vrot.lane.b32.xlu0 %v5374, 12
  %v5538 = vpop.permute.xlu0 %5537
  %5539 = vrot.lane.b32.xlu0 %v5375, 12
  %v5540 = vpop.permute.xlu0 %5539
  %5541 = vrot.lane.b32.xlu0 %v5376, 12
  %v5542 = vpop.permute.xlu0 %5541
  %5543 = vrot.lane.b32.xlu0 %v5377, 12
  %v5544 = vpop.permute.xlu0 %5543
  %5545 = vrot.lane.b32.xlu0 %v5378, 12
  %v5546 = vpop.permute.xlu0 %5545
  %5547 = vrot.lane.b32.xlu0 %v5379, 12
  %v5548 = vpop.permute.xlu0 %5547
  %5549 = vrot.lane.b32.xlu0 %v5380, 12
  %v5550 = vpop.permute.xlu0 %5549
  %5551 = vrot.lane.b32.xlu0 %v5381, 12
  %v5552 = vpop.permute.xlu0 %5551
  %5553 = vrot.lane.b32.xlu0 %v5382, 12
  %v5554 = vpop.permute.xlu0 %5553
  %5555 = vrot.lane.b32.xlu0 %v5383, 12
  %v5556 = vpop.permute.xlu0 %5555
  %5557 = vrot.lane.b32.xlu0 %v5384, 12
  %v5558 = vpop.permute.xlu0 %5557
  %5559 = vrot.lane.b32.xlu0 %v5385, 12
  %v5560 = vpop.permute.xlu0 %5559
  %5561 = vrot.lane.b32.xlu0 %v5386, 12
  %v5562 = vpop.permute.xlu0 %5561
  %5563 = vrot.lane.b32.xlu0 %v5387, 12
  %v5564 = vpop.permute.xlu0 %5563
  %5565 = vrot.lane.b32.xlu0 %v5388, 12
  %v5566 = vpop.permute.xlu0 %5565
  %5567 = vrot.lane.b32.xlu0 %v5389, 12
  %v5568 = vpop.permute.xlu0 %5567
  %5569 = vrot.lane.b32.xlu0 %v5390, 12
  %v5570 = vpop.permute.xlu0 %5569
  %5571 = vrot.lane.b32.xlu0 %v5391, 12
  %v5572 = vpop.permute.xlu0 %5571
  %5573 = vrot.lane.b32.xlu0 %v5392, 12
  %v5574 = vpop.permute.xlu0 %5573
  %5575 = vrot.lane.b32.xlu0 %v5393, 12
  %v5576 = vpop.permute.xlu0 %5575
  %5577 = vrot.lane.b32.xlu0 %v5394, 12
  %v5578 = vpop.permute.xlu0 %5577
  %5579 = vrot.lane.b32.xlu0 %v5395, 12
  %v5580 = vpop.permute.xlu0 %5579
  %5581 = vrot.lane.b32.xlu0 %v5396, 12
  %v5582 = vpop.permute.xlu0 %5581
  %5583 = vrot.lane.b32.xlu0 %v5397, 12
  %v5584 = vpop.permute.xlu0 %5583
  %5585 = vrot.lane.b32.xlu0 %v5398, 12
  %v5586 = vpop.permute.xlu0 %5585
  %5587 = vrot.lane.b32.xlu0 %v5399, 12
  %v5588 = vpop.permute.xlu0 %5587
  %5589 = vrot.lane.b32.xlu0 %v5400, 12
  %v5590 = vpop.permute.xlu0 %5589
  %5591 = vrot.lane.b32.xlu0 %v5401, 12
  %v5592 = vpop.permute.xlu0 %5591
  %5593 = vrot.lane.b32.xlu0 %v5402, 12
  %v5594 = vpop.permute.xlu0 %5593
  %5659 = vst.msk [vmem:[#allocation4] sm:$0xff] %vm1531, %v5468
  %5660 = vst.msk [vmem:[#allocation4 + $0x8] sm:$0xff] %vm1531, %v5470
  %5661 = vst.msk [vmem:[#allocation4 + $0x10] sm:$0xff] %vm1531, %v5472
  %5662 = vst.msk [vmem:[#allocation4 + $0x18] sm:$0xff] %vm1531, %v5474
  %5663 = vst.msk [vmem:[#allocation4 + $0x20] sm:$0xff] %vm1531, %v5476
  %5664 = vst.msk [vmem:[#allocation4 + $0x28] sm:$0xff] %vm1531, %v5478
  %5665 = vst.msk [vmem:[#allocation4 + $0x30] sm:$0xff] %vm1531, %v5480
  %5666 = vst.msk [vmem:[#allocation4 + $0x38] sm:$0xff] %vm1531, %v5482
  %5667 = vst.msk [vmem:[#allocation4 + $0x40] sm:$0xff] %vm1531, %v5484
  %5668 = vst.msk [vmem:[#allocation4 + $0x48] sm:$0xff] %vm1531, %v5486
  %5669 = vst.msk [vmem:[#allocation4 + $0x50] sm:$0xff] %vm1531, %v5488
  %5670 = vst.msk [vmem:[#allocation4 + $0x58] sm:$0xff] %vm1531, %v5490
  %5671 = vst.msk [vmem:[#allocation4 + $0x60] sm:$0xff] %vm1531, %v5492
  %5672 = vst.msk [vmem:[#allocation4 + $0x68] sm:$0xff] %vm1531, %v5494
  %5673 = vst.msk [vmem:[#allocation4 + $0x70] sm:$0xff] %vm1531, %v5496
  %5674 = vst.msk [vmem:[#allocation4 + $0x78] sm:$0xff] %vm1531, %v5498
  %5675 = vst.msk [vmem:[#allocation4 + $0x80] sm:$0xff] %vm1531, %v5500
  %5676 = vst.msk [vmem:[#allocation4 + $0x88] sm:$0xff] %vm1531, %v5502
  %5677 = vst.msk [vmem:[#allocation4 + $0x90] sm:$0xff] %vm1531, %v5504
  %5678 = vst.msk [vmem:[#allocation4 + $0x98] sm:$0xff] %vm1531, %v5506
  %5679 = vst.msk [vmem:[#allocation4 + $0xa0] sm:$0xff] %vm1531, %v5508
  %5680 = vst.msk [vmem:[#allocation4 + $0xa8] sm:$0xff] %vm1531, %v5510
  %5681 = vst.msk [vmem:[#allocation4 + $0xb0] sm:$0xff] %vm1531, %v5512
  %5682 = vst.msk [vmem:[#allocation4 + $0xb8] sm:$0xff] %vm1531, %v5514
  %5683 = vst.msk [vmem:[#allocation4 + $0xc0] sm:$0xff] %vm1531, %v5516
  %5684 = vst.msk [vmem:[#allocation4 + $0xc8] sm:$0xff] %vm1531, %v5518
  %5685 = vst.msk [vmem:[#allocation4 + $0xd0] sm:$0xff] %vm1531, %v5520
  %5686 = vst.msk [vmem:[#allocation4 + $0xd8] sm:$0xff] %vm1531, %v5522
  %5687 = vst.msk [vmem:[#allocation4 + $0xe0] sm:$0xff] %vm1531, %v5524
  %5688 = vst.msk [vmem:[#allocation4 + $0xe8] sm:$0xff] %vm1531, %v5526
  %5689 = vst.msk [vmem:[#allocation4 + $0xf0] sm:$0xff] %vm1531, %v5528
  %5690 = vst.msk [vmem:[#allocation4 + $0xf8] sm:$0xff] %vm1531, %v5530
  %5691 = vst.msk [vmem:[#allocation4 + $0x100] sm:$0xff] %vm1531, %v5532
  %5692 = vst.msk [vmem:[#allocation4 + $0x108] sm:$0xff] %vm1531, %v5534
  %5693 = vst.msk [vmem:[#allocation4 + $0x110] sm:$0xff] %vm1531, %v5536
  %5694 = vst.msk [vmem:[#allocation4 + $0x118] sm:$0xff] %vm1531, %v5538
  %5695 = vst.msk [vmem:[#allocation4 + $0x120] sm:$0xff] %vm1531, %v5540
  %5696 = vst.msk [vmem:[#allocation4 + $0x128] sm:$0xff] %vm1531, %v5542
  %5697 = vst.msk [vmem:[#allocation4 + $0x130] sm:$0xff] %vm1531, %v5544
  %5698 = vst.msk [vmem:[#allocation4 + $0x138] sm:$0xff] %vm1531, %v5546
  %5699 = vst.msk [vmem:[#allocation4 + $0x140] sm:$0xff] %vm1531, %v5548
  %5700 = vst.msk [vmem:[#allocation4 + $0x148] sm:$0xff] %vm1531, %v5550
  %5701 = vst.msk [vmem:[#allocation4 + $0x150] sm:$0xff] %vm1531, %v5552
  %5702 = vst.msk [vmem:[#allocation4 + $0x158] sm:$0xff] %vm1531, %v5554
  %5703 = vst.msk [vmem:[#allocation4 + $0x160] sm:$0xff] %vm1531, %v5556
  %5704 = vst.msk [vmem:[#allocation4 + $0x168] sm:$0xff] %vm1531, %v5558
  %5705 = vst.msk [vmem:[#allocation4 + $0x170] sm:$0xff] %vm1531, %v5560
  %5706 = vst.msk [vmem:[#allocation4 + $0x178] sm:$0xff] %vm1531, %v5562
  %5707 = vst.msk [vmem:[#allocation4 + $0x180] sm:$0xff] %vm1531, %v5564
  %5708 = vst.msk [vmem:[#allocation4 + $0x188] sm:$0xff] %vm1531, %v5566
  %5709 = vst.msk [vmem:[#allocation4 + $0x190] sm:$0xff] %vm1531, %v5568
  %5710 = vst.msk [vmem:[#allocation4 + $0x198] sm:$0xff] %vm1531, %v5570
  %5711 = vst.msk [vmem:[#allocation4 + $0x1a0] sm:$0xff] %vm1531, %v5572
  %5712 = vst.msk [vmem:[#allocation4 + $0x1a8] sm:$0xff] %vm1531, %v5574
  %5713 = vst.msk [vmem:[#allocation4 + $0x1b0] sm:$0xff] %vm1531, %v5576
  %5714 = vst.msk [vmem:[#allocation4 + $0x1b8] sm:$0xff] %vm1531, %v5578
  %5715 = vst.msk [vmem:[#allocation4 + $0x1c0] sm:$0xff] %vm1531, %v5580
  %5716 = vst.msk [vmem:[#allocation4 + $0x1c8] sm:$0xff] %vm1531, %v5582
  %5717 = vst.msk [vmem:[#allocation4 + $0x1d0] sm:$0xff] %vm1531, %v5584
  %5718 = vst.msk [vmem:[#allocation4 + $0x1d8] sm:$0xff] %vm1531, %v5586
  %5719 = vst.msk [vmem:[#allocation4 + $0x1e0] sm:$0xff] %vm1531, %v5588
  %5720 = vst.msk [vmem:[#allocation4 + $0x1e8] sm:$0xff] %vm1531, %v5590
  %5721 = vst.msk [vmem:[#allocation4 + $0x1f0] sm:$0xff] %vm1531, %v5592
  %5722 = vst.msk [vmem:[#allocation4 + $0x1f8] sm:$0xff] %vm1531, %v5594
  %v5723 = vld [vmem:[%s120 + $0x1] sm:$0xff]
  %v5724 = vld [vmem:[%s120 + $0x9] sm:$0xff]
  %v5725 = vld [vmem:[%s120 + $0x19] sm:$0xff]
  %v5726 = vld [vmem:[%s120 + $0x21] sm:$0xff]
  %v5727 = vld [vmem:[%s120 + $0x31] sm:$0xff]
  %v5728 = vld [vmem:[%s120 + $0x39] sm:$0xff]
  %v5729 = vld [vmem:[%s120 + $0x49] sm:$0xff]
  %v5730 = vld [vmem:[%s120 + $0x51] sm:$0xff]
  %v5731 = vld [vmem:[%s120 + $0x61] sm:$0xff]
  %v5732 = vld [vmem:[%s120 + $0x69] sm:$0xff]
  %v5733 = vld [vmem:[%s120 + $0x79] sm:$0xff]
  %v5734 = vld [vmem:[%s120 + $0x81] sm:$0xff]
  %v5735 = vld [vmem:[%s120 + $0x91] sm:$0xff]
  %v5736 = vld [vmem:[%s120 + $0x99] sm:$0xff]
  %v5737 = vld [vmem:[%s120 + $0xa9] sm:$0xff]
  %v5738 = vld [vmem:[%s120 + $0xb1] sm:$0xff]
  %v5739 = vld [vmem:[%s120 + $0xc1] sm:$0xff]
  %v5740 = vld [vmem:[%s120 + $0xc9] sm:$0xff]
  %v5741 = vld [vmem:[%s120 + $0xd9] sm:$0xff]
  %v5742 = vld [vmem:[%s120 + $0xe1] sm:$0xff]
  %v5743 = vld [vmem:[%s120 + $0xf1] sm:$0xff]
  %v5744 = vld [vmem:[%s120 + $0xf9] sm:$0xff]
  %v5745 = vld [vmem:[%s120 + $0x109] sm:$0xff]
  %v5746 = vld [vmem:[%s120 + $0x111] sm:$0xff]
  %v5747 = vld [vmem:[%s120 + $0x121] sm:$0xff]
  %v5748 = vld [vmem:[%s120 + $0x129] sm:$0xff]
  %v5749 = vld [vmem:[%s120 + $0x139] sm:$0xff]
  %v5750 = vld [vmem:[%s120 + $0x141] sm:$0xff]
  %v5751 = vld [vmem:[%s120 + $0x151] sm:$0xff]
  %v5752 = vld [vmem:[%s120 + $0x159] sm:$0xff]
  %v5753 = vld [vmem:[%s120 + $0x169] sm:$0xff]
  %v5754 = vld [vmem:[%s120 + $0x171] sm:$0xff]
  %v5755 = vld [vmem:[%s120 + $0x1b1] sm:$0xff]
  %v5756 = vld [vmem:[%s120 + $0x1b9] sm:$0xff]
  %v5757 = vld [vmem:[%s120 + $0x1c9] sm:$0xff]
  %v5758 = vld [vmem:[%s120 + $0x1d1] sm:$0xff]
  %v5759 = vld [vmem:[%s120 + $0x1e1] sm:$0xff]
  %v5760 = vld [vmem:[%s120 + $0x1e9] sm:$0xff]
  %v5761 = vld [vmem:[%s120 + $0x1f9] sm:$0xff]
  %v5762 = vld [vmem:[%s120 + $0x201] sm:$0xff]
  %v5763 = vld [vmem:[%s120 + $0x211] sm:$0xff]
  %v5764 = vld [vmem:[%s120 + $0x219] sm:$0xff]
  %v5765 = vld [vmem:[%s120 + $0x229] sm:$0xff]
  %v5766 = vld [vmem:[%s120 + $0x231] sm:$0xff]
  %v5767 = vld [vmem:[%s120 + $0x241] sm:$0xff]
  %v5768 = vld [vmem:[%s120 + $0x249] sm:$0xff]
  %v5769 = vld [vmem:[%s120 + $0x259] sm:$0xff]
  %v5770 = vld [vmem:[%s120 + $0x261] sm:$0xff]
  %v5771 = vld [vmem:[%s120 + $0x271] sm:$0xff]
  %v5772 = vld [vmem:[%s120 + $0x279] sm:$0xff]
  %v5773 = vld [vmem:[%s120 + $0x289] sm:$0xff]
  %v5774 = vld [vmem:[%s120 + $0x291] sm:$0xff]
  %v5775 = vld [vmem:[%s120 + $0x2a1] sm:$0xff]
  %v5776 = vld [vmem:[%s120 + $0x2a9] sm:$0xff]
  %v5777 = vld [vmem:[%s120 + $0x2b9] sm:$0xff]
  %v5778 = vld [vmem:[%s120 + $0x2c1] sm:$0xff]
  %v5779 = vld [vmem:[%s120 + $0x2d1] sm:$0xff]
  %v5780 = vld [vmem:[%s120 + $0x2d9] sm:$0xff]
  %v5781 = vld [vmem:[%s120 + $0x2e9] sm:$0xff]
  %v5782 = vld [vmem:[%s120 + $0x2f1] sm:$0xff]
  %v5783 = vld [vmem:[%s120 + $0x301] sm:$0xff]
  %v5784 = vld [vmem:[%s120 + $0x309] sm:$0xff]
  %v5785 = vld [vmem:[%s120 + $0x319] sm:$0xff]
  %v5786 = vld [vmem:[%s120 + $0x321] sm:$0xff]
  %5851 = vrot.lane.b32.xlu0 %v5723, 16
  %v5852 = vpop.permute.xlu0 %5851
  %5853 = vrot.lane.b32.xlu0 %v5724, 16
  %v5854 = vpop.permute.xlu0 %5853
  %5855 = vrot.lane.b32.xlu0 %v5725, 16
  %v5856 = vpop.permute.xlu0 %5855
  %5857 = vrot.lane.b32.xlu0 %v5726, 16
  %v5858 = vpop.permute.xlu0 %5857
  %5859 = vrot.lane.b32.xlu0 %v5727, 16
  %v5860 = vpop.permute.xlu0 %5859
  %5861 = vrot.lane.b32.xlu0 %v5728, 16
  %v5862 = vpop.permute.xlu0 %5861
  %5863 = vrot.lane.b32.xlu0 %v5729, 16
  %v5864 = vpop.permute.xlu0 %5863
  %5865 = vrot.lane.b32.xlu0 %v5730, 16
  %v5866 = vpop.permute.xlu0 %5865
  %5867 = vrot.lane.b32.xlu0 %v5731, 16
  %v5868 = vpop.permute.xlu0 %5867
  %5869 = vrot.lane.b32.xlu0 %v5732, 16
  %v5870 = vpop.permute.xlu0 %5869
  %5871 = vrot.lane.b32.xlu0 %v5733, 16
  %v5872 = vpop.permute.xlu0 %5871
  %5873 = vrot.lane.b32.xlu0 %v5734, 16
  %v5874 = vpop.permute.xlu0 %5873
  %5875 = vrot.lane.b32.xlu0 %v5735, 16
  %v5876 = vpop.permute.xlu0 %5875
  %5877 = vrot.lane.b32.xlu0 %v5736, 16
  %v5878 = vpop.permute.xlu0 %5877
  %5879 = vrot.lane.b32.xlu0 %v5737, 16
  %v5880 = vpop.permute.xlu0 %5879
  %5881 = vrot.lane.b32.xlu0 %v5738, 16
  %v5882 = vpop.permute.xlu0 %5881
  %5883 = vrot.lane.b32.xlu0 %v5739, 16
  %v5884 = vpop.permute.xlu0 %5883
  %5885 = vrot.lane.b32.xlu0 %v5740, 16
  %v5886 = vpop.permute.xlu0 %5885
  %5887 = vrot.lane.b32.xlu0 %v5741, 16
  %v5888 = vpop.permute.xlu0 %5887
  %5889 = vrot.lane.b32.xlu0 %v5742, 16
  %v5890 = vpop.permute.xlu0 %5889
  %5891 = vrot.lane.b32.xlu0 %v5743, 16
  %v5892 = vpop.permute.xlu0 %5891
  %5893 = vrot.lane.b32.xlu0 %v5744, 16
  %v5894 = vpop.permute.xlu0 %5893
  %5895 = vrot.lane.b32.xlu0 %v5745, 16
  %v5896 = vpop.permute.xlu0 %5895
  %5897 = vrot.lane.b32.xlu0 %v5746, 16
  %v5898 = vpop.permute.xlu0 %5897
  %5899 = vrot.lane.b32.xlu0 %v5747, 16
  %v5900 = vpop.permute.xlu0 %5899
  %5901 = vrot.lane.b32.xlu0 %v5748, 16
  %v5902 = vpop.permute.xlu0 %5901
  %5903 = vrot.lane.b32.xlu0 %v5749, 16
  %v5904 = vpop.permute.xlu0 %5903
  %5905 = vrot.lane.b32.xlu0 %v5750, 16
  %v5906 = vpop.permute.xlu0 %5905
  %5907 = vrot.lane.b32.xlu0 %v5751, 16
  %v5908 = vpop.permute.xlu0 %5907
  %5909 = vrot.lane.b32.xlu0 %v5752, 16
  %v5910 = vpop.permute.xlu0 %5909
  %5911 = vrot.lane.b32.xlu0 %v5753, 16
  %v5912 = vpop.permute.xlu0 %5911
  %5913 = vrot.lane.b32.xlu0 %v5754, 16
  %v5914 = vpop.permute.xlu0 %5913
  %5915 = vrot.lane.b32.xlu0 %v5755, 16
  %v5916 = vpop.permute.xlu0 %5915
  %5917 = vrot.lane.b32.xlu0 %v5756, 16
  %v5918 = vpop.permute.xlu0 %5917
  %5919 = vrot.lane.b32.xlu0 %v5757, 16
  %v5920 = vpop.permute.xlu0 %5919
  %5921 = vrot.lane.b32.xlu0 %v5758, 16
  %v5922 = vpop.permute.xlu0 %5921
  %5923 = vrot.lane.b32.xlu0 %v5759, 16
  %v5924 = vpop.permute.xlu0 %5923
  %5925 = vrot.lane.b32.xlu0 %v5760, 16
  %v5926 = vpop.permute.xlu0 %5925
  %5927 = vrot.lane.b32.xlu0 %v5761, 16
  %v5928 = vpop.permute.xlu0 %5927
  %5929 = vrot.lane.b32.xlu0 %v5762, 16
  %v5930 = vpop.permute.xlu0 %5929
  %5931 = vrot.lane.b32.xlu0 %v5763, 16
  %v5932 = vpop.permute.xlu0 %5931
  %5933 = vrot.lane.b32.xlu0 %v5764, 16
  %v5934 = vpop.permute.xlu0 %5933
  %5935 = vrot.lane.b32.xlu0 %v5765, 16
  %v5936 = vpop.permute.xlu0 %5935
  %5937 = vrot.lane.b32.xlu0 %v5766, 16
  %v5938 = vpop.permute.xlu0 %5937
  %5939 = vrot.lane.b32.xlu0 %v5767, 16
  %v5940 = vpop.permute.xlu0 %5939
  %5941 = vrot.lane.b32.xlu0 %v5768, 16
  %v5942 = vpop.permute.xlu0 %5941
  %5943 = vrot.lane.b32.xlu0 %v5769, 16
  %v5944 = vpop.permute.xlu0 %5943
  %5945 = vrot.lane.b32.xlu0 %v5770, 16
  %v5946 = vpop.permute.xlu0 %5945
  %5947 = vrot.lane.b32.xlu0 %v5771, 16
  %v5948 = vpop.permute.xlu0 %5947
  %5949 = vrot.lane.b32.xlu0 %v5772, 16
  %v5950 = vpop.permute.xlu0 %5949
  %5951 = vrot.lane.b32.xlu0 %v5773, 16
  %v5952 = vpop.permute.xlu0 %5951
  %5953 = vrot.lane.b32.xlu0 %v5774, 16
  %v5954 = vpop.permute.xlu0 %5953
  %5955 = vrot.lane.b32.xlu0 %v5775, 16
  %v5956 = vpop.permute.xlu0 %5955
  %5957 = vrot.lane.b32.xlu0 %v5776, 16
  %v5958 = vpop.permute.xlu0 %5957
  %5959 = vrot.lane.b32.xlu0 %v5777, 16
  %v5960 = vpop.permute.xlu0 %5959
  %5961 = vrot.lane.b32.xlu0 %v5778, 16
  %v5962 = vpop.permute.xlu0 %5961
  %5963 = vrot.lane.b32.xlu0 %v5779, 16
  %v5964 = vpop.permute.xlu0 %5963
  %5965 = vrot.lane.b32.xlu0 %v5780, 16
  %v5966 = vpop.permute.xlu0 %5965
  %5967 = vrot.lane.b32.xlu0 %v5781, 16
  %v5968 = vpop.permute.xlu0 %5967
  %5969 = vrot.lane.b32.xlu0 %v5782, 16
  %v5970 = vpop.permute.xlu0 %5969
  %5971 = vrot.lane.b32.xlu0 %v5783, 16
  %v5972 = vpop.permute.xlu0 %5971
  %5973 = vrot.lane.b32.xlu0 %v5784, 16
  %v5974 = vpop.permute.xlu0 %5973
  %5975 = vrot.lane.b32.xlu0 %v5785, 16
  %v5976 = vpop.permute.xlu0 %5975
  %5977 = vrot.lane.b32.xlu0 %v5786, 16
  %v5978 = vpop.permute.xlu0 %5977
  %6043 = vst.msk [vmem:[#allocation4] sm:$0xff] %vm1916, %v5852
  %6044 = vst.msk [vmem:[#allocation4 + $0x8] sm:$0xff] %vm1916, %v5854
  %6045 = vst.msk [vmem:[#allocation4 + $0x10] sm:$0xff] %vm1916, %v5856
  %6046 = vst.msk [vmem:[#allocation4 + $0x18] sm:$0xff] %vm1916, %v5858
  %6047 = vst.msk [vmem:[#allocation4 + $0x20] sm:$0xff] %vm1916, %v5860
  %6048 = vst.msk [vmem:[#allocation4 + $0x28] sm:$0xff] %vm1916, %v5862
  %6049 = vst.msk [vmem:[#allocation4 + $0x30] sm:$0xff] %vm1916, %v5864
  %6050 = vst.msk [vmem:[#allocation4 + $0x38] sm:$0xff] %vm1916, %v5866
  %6051 = vst.msk [vmem:[#allocation4 + $0x40] sm:$0xff] %vm1916, %v5868
  %6052 = vst.msk [vmem:[#allocation4 + $0x48] sm:$0xff] %vm1916, %v5870
  %6053 = vst.msk [vmem:[#allocation4 + $0x50] sm:$0xff] %vm1916, %v5872
  %6054 = vst.msk [vmem:[#allocation4 + $0x58] sm:$0xff] %vm1916, %v5874
  %6055 = vst.msk [vmem:[#allocation4 + $0x60] sm:$0xff] %vm1916, %v5876
  %6056 = vst.msk [vmem:[#allocation4 + $0x68] sm:$0xff] %vm1916, %v5878
  %6057 = vst.msk [vmem:[#allocation4 + $0x70] sm:$0xff] %vm1916, %v5880
  %6058 = vst.msk [vmem:[#allocation4 + $0x78] sm:$0xff] %vm1916, %v5882
  %6059 = vst.msk [vmem:[#allocation4 + $0x80] sm:$0xff] %vm1916, %v5884
  %6060 = vst.msk [vmem:[#allocation4 + $0x88] sm:$0xff] %vm1916, %v5886
  %6061 = vst.msk [vmem:[#allocation4 + $0x90] sm:$0xff] %vm1916, %v5888
  %6062 = vst.msk [vmem:[#allocation4 + $0x98] sm:$0xff] %vm1916, %v5890
  %6063 = vst.msk [vmem:[#allocation4 + $0xa0] sm:$0xff] %vm1916, %v5892
  %6064 = vst.msk [vmem:[#allocation4 + $0xa8] sm:$0xff] %vm1916, %v5894
  %6065 = vst.msk [vmem:[#allocation4 + $0xb0] sm:$0xff] %vm1916, %v5896
  %6066 = vst.msk [vmem:[#allocation4 + $0xb8] sm:$0xff] %vm1916, %v5898
  %6067 = vst.msk [vmem:[#allocation4 + $0xc0] sm:$0xff] %vm1916, %v5900
  %6068 = vst.msk [vmem:[#allocation4 + $0xc8] sm:$0xff] %vm1916, %v5902
  %6069 = vst.msk [vmem:[#allocation4 + $0xd0] sm:$0xff] %vm1916, %v5904
  %6070 = vst.msk [vmem:[#allocation4 + $0xd8] sm:$0xff] %vm1916, %v5906
  %6071 = vst.msk [vmem:[#allocation4 + $0xe0] sm:$0xff] %vm1916, %v5908
  %6072 = vst.msk [vmem:[#allocation4 + $0xe8] sm:$0xff] %vm1916, %v5910
  %6073 = vst.msk [vmem:[#allocation4 + $0xf0] sm:$0xff] %vm1916, %v5912
  %6074 = vst.msk [vmem:[#allocation4 + $0xf8] sm:$0xff] %vm1916, %v5914
  %6075 = vst.msk [vmem:[#allocation4 + $0x100] sm:$0xff] %vm1916, %v5916
  %6076 = vst.msk [vmem:[#allocation4 + $0x108] sm:$0xff] %vm1916, %v5918
  %6077 = vst.msk [vmem:[#allocation4 + $0x110] sm:$0xff] %vm1916, %v5920
  %6078 = vst.msk [vmem:[#allocation4 + $0x118] sm:$0xff] %vm1916, %v5922
  %6079 = vst.msk [vmem:[#allocation4 + $0x120] sm:$0xff] %vm1916, %v5924
  %6080 = vst.msk [vmem:[#allocation4 + $0x128] sm:$0xff] %vm1916, %v5926
  %6081 = vst.msk [vmem:[#allocation4 + $0x130] sm:$0xff] %vm1916, %v5928
  %6082 = vst.msk [vmem:[#allocation4 + $0x138] sm:$0xff] %vm1916, %v5930
  %6083 = vst.msk [vmem:[#allocation4 + $0x140] sm:$0xff] %vm1916, %v5932
  %6084 = vst.msk [vmem:[#allocation4 + $0x148] sm:$0xff] %vm1916, %v5934
  %6085 = vst.msk [vmem:[#allocation4 + $0x150] sm:$0xff] %vm1916, %v5936
  %6086 = vst.msk [vmem:[#allocation4 + $0x158] sm:$0xff] %vm1916, %v5938
  %6087 = vst.msk [vmem:[#allocation4 + $0x160] sm:$0xff] %vm1916, %v5940
  %6088 = vst.msk [vmem:[#allocation4 + $0x168] sm:$0xff] %vm1916, %v5942
  %6089 = vst.msk [vmem:[#allocation4 + $0x170] sm:$0xff] %vm1916, %v5944
  %6090 = vst.msk [vmem:[#allocation4 + $0x178] sm:$0xff] %vm1916, %v5946
  %6091 = vst.msk [vmem:[#allocation4 + $0x180] sm:$0xff] %vm1916, %v5948
  %6092 = vst.msk [vmem:[#allocation4 + $0x188] sm:$0xff] %vm1916, %v5950
  %6093 = vst.msk [vmem:[#allocation4 + $0x190] sm:$0xff] %vm1916, %v5952
  %6094 = vst.msk [vmem:[#allocation4 + $0x198] sm:$0xff] %vm1916, %v5954
  %6095 = vst.msk [vmem:[#allocation4 + $0x1a0] sm:$0xff] %vm1916, %v5956
  %6096 = vst.msk [vmem:[#allocation4 + $0x1a8] sm:$0xff] %vm1916, %v5958
  %6097 = vst.msk [vmem:[#allocation4 + $0x1b0] sm:$0xff] %vm1916, %v5960
  %6098 = vst.msk [vmem:[#allocation4 + $0x1b8] sm:$0xff] %vm1916, %v5962
  %6099 = vst.msk [vmem:[#allocation4 + $0x1c0] sm:$0xff] %vm1916, %v5964
  %6100 = vst.msk [vmem:[#allocation4 + $0x1c8] sm:$0xff] %vm1916, %v5966
  %6101 = vst.msk [vmem:[#allocation4 + $0x1d0] sm:$0xff] %vm1916, %v5968
  %6102 = vst.msk [vmem:[#allocation4 + $0x1d8] sm:$0xff] %vm1916, %v5970
  %6103 = vst.msk [vmem:[#allocation4 + $0x1e0] sm:$0xff] %vm1916, %v5972
  %6104 = vst.msk [vmem:[#allocation4 + $0x1e8] sm:$0xff] %vm1916, %v5974
  %6105 = vst.msk [vmem:[#allocation4 + $0x1f0] sm:$0xff] %vm1916, %v5976
  %6106 = vst.msk [vmem:[#allocation4 + $0x1f8] sm:$0xff] %vm1916, %v5978
  %v6107 = vld [vmem:[%s120 + $0x2] sm:$0xff]
  %v6108 = vld [vmem:[%s120 + $0xa] sm:$0xff]
  %v6109 = vld [vmem:[%s120 + $0x1a] sm:$0xff]
  %v6110 = vld [vmem:[%s120 + $0x22] sm:$0xff]
  %v6111 = vld [vmem:[%s120 + $0x32] sm:$0xff]
  %v6112 = vld [vmem:[%s120 + $0x3a] sm:$0xff]
  %v6113 = vld [vmem:[%s120 + $0x4a] sm:$0xff]
  %v6114 = vld [vmem:[%s120 + $0x52] sm:$0xff]
  %v6115 = vld [vmem:[%s120 + $0x62] sm:$0xff]
  %v6116 = vld [vmem:[%s120 + $0x6a] sm:$0xff]
  %v6117 = vld [vmem:[%s120 + $0x7a] sm:$0xff]
  %v6118 = vld [vmem:[%s120 + $0x82] sm:$0xff]
  %v6119 = vld [vmem:[%s120 + $0x92] sm:$0xff]
  %v6120 = vld [vmem:[%s120 + $0x9a] sm:$0xff]
  %v6121 = vld [vmem:[%s120 + $0xaa] sm:$0xff]
  %v6122 = vld [vmem:[%s120 + $0xb2] sm:$0xff]
  %v6123 = vld [vmem:[%s120 + $0xc2] sm:$0xff]
  %v6124 = vld [vmem:[%s120 + $0xca] sm:$0xff]
  %v6125 = vld [vmem:[%s120 + $0xda] sm:$0xff]
  %v6126 = vld [vmem:[%s120 + $0xe2] sm:$0xff]
  %v6127 = vld [vmem:[%s120 + $0xf2] sm:$0xff]
  %v6128 = vld [vmem:[%s120 + $0xfa] sm:$0xff]
  %v6129 = vld [vmem:[%s120 + $0x10a] sm:$0xff]
  %v6130 = vld [vmem:[%s120 + $0x112] sm:$0xff]
  %v6131 = vld [vmem:[%s120 + $0x122] sm:$0xff]
  %v6132 = vld [vmem:[%s120 + $0x12a] sm:$0xff]
  %v6133 = vld [vmem:[%s120 + $0x13a] sm:$0xff]
  %v6134 = vld [vmem:[%s120 + $0x142] sm:$0xff]
  %v6135 = vld [vmem:[%s120 + $0x152] sm:$0xff]
  %v6136 = vld [vmem:[%s120 + $0x15a] sm:$0xff]
  %v6137 = vld [vmem:[%s120 + $0x16a] sm:$0xff]
  %v6138 = vld [vmem:[%s120 + $0x172] sm:$0xff]
  %v6139 = vld [vmem:[%s120 + $0x1b2] sm:$0xff]
  %v6140 = vld [vmem:[%s120 + $0x1ba] sm:$0xff]
  %v6141 = vld [vmem:[%s120 + $0x1ca] sm:$0xff]
  %v6142 = vld [vmem:[%s120 + $0x1d2] sm:$0xff]
  %v6143 = vld [vmem:[%s120 + $0x1e2] sm:$0xff]
  %v6144 = vld [vmem:[%s120 + $0x1ea] sm:$0xff]
  %v6145 = vld [vmem:[%s120 + $0x1fa] sm:$0xff]
  %v6146 = vld [vmem:[%s120 + $0x202] sm:$0xff]
  %v6147 = vld [vmem:[%s120 + $0x212] sm:$0xff]
  %v6148 = vld [vmem:[%s120 + $0x21a] sm:$0xff]
  %v6149 = vld [vmem:[%s120 + $0x22a] sm:$0xff]
  %v6150 = vld [vmem:[%s120 + $0x232] sm:$0xff]
  %v6151 = vld [vmem:[%s120 + $0x242] sm:$0xff]
  %v6152 = vld [vmem:[%s120 + $0x24a] sm:$0xff]
  %v6153 = vld [vmem:[%s120 + $0x25a] sm:$0xff]
  %v6154 = vld [vmem:[%s120 + $0x262] sm:$0xff]
  %v6155 = vld [vmem:[%s120 + $0x272] sm:$0xff]
  %v6156 = vld [vmem:[%s120 + $0x27a] sm:$0xff]
  %v6157 = vld [vmem:[%s120 + $0x28a] sm:$0xff]
  %v6158 = vld [vmem:[%s120 + $0x292] sm:$0xff]
  %v6159 = vld [vmem:[%s120 + $0x2a2] sm:$0xff]
  %v6160 = vld [vmem:[%s120 + $0x2aa] sm:$0xff]
  %v6161 = vld [vmem:[%s120 + $0x2ba] sm:$0xff]
  %v6162 = vld [vmem:[%s120 + $0x2c2] sm:$0xff]
  %v6163 = vld [vmem:[%s120 + $0x2d2] sm:$0xff]
  %v6164 = vld [vmem:[%s120 + $0x2da] sm:$0xff]
  %v6165 = vld [vmem:[%s120 + $0x2ea] sm:$0xff]
  %v6166 = vld [vmem:[%s120 + $0x2f2] sm:$0xff]
  %v6167 = vld [vmem:[%s120 + $0x302] sm:$0xff]
  %v6168 = vld [vmem:[%s120 + $0x30a] sm:$0xff]
  %v6169 = vld [vmem:[%s120 + $0x31a] sm:$0xff]
  %v6170 = vld [vmem:[%s120 + $0x322] sm:$0xff]
  %6235 = vrot.lane.b32.xlu0 %v6107, 20
  %v6236 = vpop.permute.xlu0 %6235
  %6237 = vrot.lane.b32.xlu0 %v6108, 20
  %v6238 = vpop.permute.xlu0 %6237
  %6239 = vrot.lane.b32.xlu0 %v6109, 20
  %v6240 = vpop.permute.xlu0 %6239
  %6241 = vrot.lane.b32.xlu0 %v6110, 20
  %v6242 = vpop.permute.xlu0 %6241
  %6243 = vrot.lane.b32.xlu0 %v6111, 20
  %v6244 = vpop.permute.xlu0 %6243
  %6245 = vrot.lane.b32.xlu0 %v6112, 20
  %v6246 = vpop.permute.xlu0 %6245
  %6247 = vrot.lane.b32.xlu0 %v6113, 20
  %v6248 = vpop.permute.xlu0 %6247
  %6249 = vrot.lane.b32.xlu0 %v6114, 20
  %v6250 = vpop.permute.xlu0 %6249
  %6251 = vrot.lane.b32.xlu0 %v6115, 20
  %v6252 = vpop.permute.xlu0 %6251
  %6253 = vrot.lane.b32.xlu0 %v6116, 20
  %v6254 = vpop.permute.xlu0 %6253
  %6255 = vrot.lane.b32.xlu0 %v6117, 20
  %v6256 = vpop.permute.xlu0 %6255
  %6257 = vrot.lane.b32.xlu0 %v6118, 20
  %v6258 = vpop.permute.xlu0 %6257
  %6259 = vrot.lane.b32.xlu0 %v6119, 20
  %v6260 = vpop.permute.xlu0 %6259
  %6261 = vrot.lane.b32.xlu0 %v6120, 20
  %v6262 = vpop.permute.xlu0 %6261
  %6263 = vrot.lane.b32.xlu0 %v6121, 20
  %v6264 = vpop.permute.xlu0 %6263
  %6265 = vrot.lane.b32.xlu0 %v6122, 20
  %v6266 = vpop.permute.xlu0 %6265
  %6267 = vrot.lane.b32.xlu0 %v6123, 20
  %v6268 = vpop.permute.xlu0 %6267
  %6269 = vrot.lane.b32.xlu0 %v6124, 20
  %v6270 = vpop.permute.xlu0 %6269
  %6271 = vrot.lane.b32.xlu0 %v6125, 20
  %v6272 = vpop.permute.xlu0 %6271
  %6273 = vrot.lane.b32.xlu0 %v6126, 20
  %v6274 = vpop.permute.xlu0 %6273
  %6275 = vrot.lane.b32.xlu0 %v6127, 20
  %v6276 = vpop.permute.xlu0 %6275
  %6277 = vrot.lane.b32.xlu0 %v6128, 20
  %v6278 = vpop.permute.xlu0 %6277
  %6279 = vrot.lane.b32.xlu0 %v6129, 20
  %v6280 = vpop.permute.xlu0 %6279
  %6281 = vrot.lane.b32.xlu0 %v6130, 20
  %v6282 = vpop.permute.xlu0 %6281
  %6283 = vrot.lane.b32.xlu0 %v6131, 20
  %v6284 = vpop.permute.xlu0 %6283
  %6285 = vrot.lane.b32.xlu0 %v6132, 20
  %v6286 = vpop.permute.xlu0 %6285
  %6287 = vrot.lane.b32.xlu0 %v6133, 20
  %v6288 = vpop.permute.xlu0 %6287
  %6289 = vrot.lane.b32.xlu0 %v6134, 20
  %v6290 = vpop.permute.xlu0 %6289
  %6291 = vrot.lane.b32.xlu0 %v6135, 20
  %v6292 = vpop.permute.xlu0 %6291
  %6293 = vrot.lane.b32.xlu0 %v6136, 20
  %v6294 = vpop.permute.xlu0 %6293
  %6295 = vrot.lane.b32.xlu0 %v6137, 20
  %v6296 = vpop.permute.xlu0 %6295
  %6297 = vrot.lane.b32.xlu0 %v6138, 20
  %v6298 = vpop.permute.xlu0 %6297
  %6299 = vrot.lane.b32.xlu0 %v6139, 20
  %v6300 = vpop.permute.xlu0 %6299
  %6301 = vrot.lane.b32.xlu0 %v6140, 20
  %v6302 = vpop.permute.xlu0 %6301
  %6303 = vrot.lane.b32.xlu0 %v6141, 20
  %v6304 = vpop.permute.xlu0 %6303
  %6305 = vrot.lane.b32.xlu0 %v6142, 20
  %v6306 = vpop.permute.xlu0 %6305
  %6307 = vrot.lane.b32.xlu0 %v6143, 20
  %v6308 = vpop.permute.xlu0 %6307
  %6309 = vrot.lane.b32.xlu0 %v6144, 20
  %v6310 = vpop.permute.xlu0 %6309
  %6311 = vrot.lane.b32.xlu0 %v6145, 20
  %v6312 = vpop.permute.xlu0 %6311
  %6313 = vrot.lane.b32.xlu0 %v6146, 20
  %v6314 = vpop.permute.xlu0 %6313
  %6315 = vrot.lane.b32.xlu0 %v6147, 20
  %v6316 = vpop.permute.xlu0 %6315
  %6317 = vrot.lane.b32.xlu0 %v6148, 20
  %v6318 = vpop.permute.xlu0 %6317
  %6319 = vrot.lane.b32.xlu0 %v6149, 20
  %v6320 = vpop.permute.xlu0 %6319
  %6321 = vrot.lane.b32.xlu0 %v6150, 20
  %v6322 = vpop.permute.xlu0 %6321
  %6323 = vrot.lane.b32.xlu0 %v6151, 20
  %v6324 = vpop.permute.xlu0 %6323
  %6325 = vrot.lane.b32.xlu0 %v6152, 20
  %v6326 = vpop.permute.xlu0 %6325
  %6327 = vrot.lane.b32.xlu0 %v6153, 20
  %v6328 = vpop.permute.xlu0 %6327
  %6329 = vrot.lane.b32.xlu0 %v6154, 20
  %v6330 = vpop.permute.xlu0 %6329
  %6331 = vrot.lane.b32.xlu0 %v6155, 20
  %v6332 = vpop.permute.xlu0 %6331
  %6333 = vrot.lane.b32.xlu0 %v6156, 20
  %v6334 = vpop.permute.xlu0 %6333
  %6335 = vrot.lane.b32.xlu0 %v6157, 20
  %v6336 = vpop.permute.xlu0 %6335
  %6337 = vrot.lane.b32.xlu0 %v6158, 20
  %v6338 = vpop.permute.xlu0 %6337
  %6339 = vrot.lane.b32.xlu0 %v6159, 20
  %v6340 = vpop.permute.xlu0 %6339
  %6341 = vrot.lane.b32.xlu0 %v6160, 20
  %v6342 = vpop.permute.xlu0 %6341
  %6343 = vrot.lane.b32.xlu0 %v6161, 20
  %v6344 = vpop.permute.xlu0 %6343
  %6345 = vrot.lane.b32.xlu0 %v6162, 20
  %v6346 = vpop.permute.xlu0 %6345
  %6347 = vrot.lane.b32.xlu0 %v6163, 20
  %v6348 = vpop.permute.xlu0 %6347
  %6349 = vrot.lane.b32.xlu0 %v6164, 20
  %v6350 = vpop.permute.xlu0 %6349
  %6351 = vrot.lane.b32.xlu0 %v6165, 20
  %v6352 = vpop.permute.xlu0 %6351
  %6353 = vrot.lane.b32.xlu0 %v6166, 20
  %v6354 = vpop.permute.xlu0 %6353
  %6355 = vrot.lane.b32.xlu0 %v6167, 20
  %v6356 = vpop.permute.xlu0 %6355
  %6357 = vrot.lane.b32.xlu0 %v6168, 20
  %v6358 = vpop.permute.xlu0 %6357
  %6359 = vrot.lane.b32.xlu0 %v6169, 20
  %v6360 = vpop.permute.xlu0 %6359
  %6361 = vrot.lane.b32.xlu0 %v6170, 20
  %v6362 = vpop.permute.xlu0 %6361
  %6427 = vst.msk [vmem:[#allocation4] sm:$0xff] %vm2301, %v6236
  %6428 = vst.msk [vmem:[#allocation4 + $0x8] sm:$0xff] %vm2301, %v6238
  %6429 = vst.msk [vmem:[#allocation4 + $0x10] sm:$0xff] %vm2301, %v6240
  %6430 = vst.msk [vmem:[#allocation4 + $0x18] sm:$0xff] %vm2301, %v6242
  %6431 = vst.msk [vmem:[#allocation4 + $0x20] sm:$0xff] %vm2301, %v6244
  %6432 = vst.msk [vmem:[#allocation4 + $0x28] sm:$0xff] %vm2301, %v6246
  %6433 = vst.msk [vmem:[#allocation4 + $0x30] sm:$0xff] %vm2301, %v6248
  %6434 = vst.msk [vmem:[#allocation4 + $0x38] sm:$0xff] %vm2301, %v6250
  %6435 = vst.msk [vmem:[#allocation4 + $0x40] sm:$0xff] %vm2301, %v6252
  %6436 = vst.msk [vmem:[#allocation4 + $0x48] sm:$0xff] %vm2301, %v6254
  %6437 = vst.msk [vmem:[#allocation4 + $0x50] sm:$0xff] %vm2301, %v6256
  %6438 = vst.msk [vmem:[#allocation4 + $0x58] sm:$0xff] %vm2301, %v6258
  %6439 = vst.msk [vmem:[#allocation4 + $0x60] sm:$0xff] %vm2301, %v6260
  %6440 = vst.msk [vmem:[#allocation4 + $0x68] sm:$0xff] %vm2301, %v6262
  %6441 = vst.msk [vmem:[#allocation4 + $0x70] sm:$0xff] %vm2301, %v6264
  %6442 = vst.msk [vmem:[#allocation4 + $0x78] sm:$0xff] %vm2301, %v6266
  %6443 = vst.msk [vmem:[#allocation4 + $0x80] sm:$0xff] %vm2301, %v6268
  %6444 = vst.msk [vmem:[#allocation4 + $0x88] sm:$0xff] %vm2301, %v6270
  %6445 = vst.msk [vmem:[#allocation4 + $0x90] sm:$0xff] %vm2301, %v6272
  %6446 = vst.msk [vmem:[#allocation4 + $0x98] sm:$0xff] %vm2301, %v6274
  %6447 = vst.msk [vmem:[#allocation4 + $0xa0] sm:$0xff] %vm2301, %v6276
  %6448 = vst.msk [vmem:[#allocation4 + $0xa8] sm:$0xff] %vm2301, %v6278
  %6449 = vst.msk [vmem:[#allocation4 + $0xb0] sm:$0xff] %vm2301, %v6280
  %6450 = vst.msk [vmem:[#allocation4 + $0xb8] sm:$0xff] %vm2301, %v6282
  %6451 = vst.msk [vmem:[#allocation4 + $0xc0] sm:$0xff] %vm2301, %v6284
  %6452 = vst.msk [vmem:[#allocation4 + $0xc8] sm:$0xff] %vm2301, %v6286
  %6453 = vst.msk [vmem:[#allocation4 + $0xd0] sm:$0xff] %vm2301, %v6288
  %6454 = vst.msk [vmem:[#allocation4 + $0xd8] sm:$0xff] %vm2301, %v6290
  %6455 = vst.msk [vmem:[#allocation4 + $0xe0] sm:$0xff] %vm2301, %v6292
  %6456 = vst.msk [vmem:[#allocation4 + $0xe8] sm:$0xff] %vm2301, %v6294
  %6457 = vst.msk [vmem:[#allocation4 + $0xf0] sm:$0xff] %vm2301, %v6296
  %6458 = vst.msk [vmem:[#allocation4 + $0xf8] sm:$0xff] %vm2301, %v6298
  %6459 = vst.msk [vmem:[#allocation4 + $0x100] sm:$0xff] %vm2301, %v6300
  %6460 = vst.msk [vmem:[#allocation4 + $0x108] sm:$0xff] %vm2301, %v6302
  %6461 = vst.msk [vmem:[#allocation4 + $0x110] sm:$0xff] %vm2301, %v6304
  %6462 = vst.msk [vmem:[#allocation4 + $0x118] sm:$0xff] %vm2301, %v6306
  %6463 = vst.msk [vmem:[#allocation4 + $0x120] sm:$0xff] %vm2301, %v6308
  %6464 = vst.msk [vmem:[#allocation4 + $0x128] sm:$0xff] %vm2301, %v6310
  %6465 = vst.msk [vmem:[#allocation4 + $0x130] sm:$0xff] %vm2301, %v6312
  %6466 = vst.msk [vmem:[#allocation4 + $0x138] sm:$0xff] %vm2301, %v6314
  %6467 = vst.msk [vmem:[#allocation4 + $0x140] sm:$0xff] %vm2301, %v6316
  %6468 = vst.msk [vmem:[#allocation4 + $0x148] sm:$0xff] %vm2301, %v6318
  %6469 = vst.msk [vmem:[#allocation4 + $0x150] sm:$0xff] %vm2301, %v6320
  %6470 = vst.msk [vmem:[#allocation4 + $0x158] sm:$0xff] %vm2301, %v6322
  %6471 = vst.msk [vmem:[#allocation4 + $0x160] sm:$0xff] %vm2301, %v6324
  %6472 = vst.msk [vmem:[#allocation4 + $0x168] sm:$0xff] %vm2301, %v6326
  %6473 = vst.msk [vmem:[#allocation4 + $0x170] sm:$0xff] %vm2301, %v6328
  %6474 = vst.msk [vmem:[#allocation4 + $0x178] sm:$0xff] %vm2301, %v6330
  %6475 = vst.msk [vmem:[#allocation4 + $0x180] sm:$0xff] %vm2301, %v6332
  %6476 = vst.msk [vmem:[#allocation4 + $0x188] sm:$0xff] %vm2301, %v6334
  %6477 = vst.msk [vmem:[#allocation4 + $0x190] sm:$0xff] %vm2301, %v6336
  %6478 = vst.msk [vmem:[#allocation4 + $0x198] sm:$0xff] %vm2301, %v6338
  %6479 = vst.msk [vmem:[#allocation4 + $0x1a0] sm:$0xff] %vm2301, %v6340
  %6480 = vst.msk [vmem:[#allocation4 + $0x1a8] sm:$0xff] %vm2301, %v6342
  %6481 = vst.msk [vmem:[#allocation4 + $0x1b0] sm:$0xff] %vm2301, %v6344
  %6482 = vst.msk [vmem:[#allocation4 + $0x1b8] sm:$0xff] %vm2301, %v6346
  %6483 = vst.msk [vmem:[#allocation4 + $0x1c0] sm:$0xff] %vm2301, %v6348
  %6484 = vst.msk [vmem:[#allocation4 + $0x1c8] sm:$0xff] %vm2301, %v6350
  %6485 = vst.msk [vmem:[#allocation4 + $0x1d0] sm:$0xff] %vm2301, %v6352
  %6486 = vst.msk [vmem:[#allocation4 + $0x1d8] sm:$0xff] %vm2301, %v6354
  %6487 = vst.msk [vmem:[#allocation4 + $0x1e0] sm:$0xff] %vm2301, %v6356
  %6488 = vst.msk [vmem:[#allocation4 + $0x1e8] sm:$0xff] %vm2301, %v6358
  %6489 = vst.msk [vmem:[#allocation4 + $0x1f0] sm:$0xff] %vm2301, %v6360
  %6490 = vst.msk [vmem:[#allocation4 + $0x1f8] sm:$0xff] %vm2301, %v6362
  %s6491 = scalar_lea.vmem [#allocation3], 48
  %v6492 = vld [vmem:[%s6491] sm:$0xff]
  %v6493 = vld [vmem:[%s6491 + $0x8] sm:$0xff]
  %v6494 = vld [vmem:[%s6491 + $0x18] sm:$0xff]
  %v6495 = vld [vmem:[%s6491 + $0x20] sm:$0xff]
  %v6496 = vld [vmem:[%s6491 + $0x30] sm:$0xff]
  %v6497 = vld [vmem:[%s6491 + $0x38] sm:$0xff]
  %v6498 = vld [vmem:[%s6491 + $0x48] sm:$0xff]
  %v6499 = vld [vmem:[%s6491 + $0x50] sm:$0xff]
  %v6500 = vld [vmem:[%s6491 + $0x60] sm:$0xff]
  %v6501 = vld [vmem:[%s6491 + $0x68] sm:$0xff]
  %v6502 = vld [vmem:[%s6491 + $0x78] sm:$0xff]
  %v6503 = vld [vmem:[%s6491 + $0x80] sm:$0xff]
  %v6504 = vld [vmem:[%s6491 + $0x90] sm:$0xff]
  %v6505 = vld [vmem:[%s6491 + $0x98] sm:$0xff]
  %v6506 = vld [vmem:[%s6491 + $0xa8] sm:$0xff]
  %v6507 = vld [vmem:[%s6491 + $0xb0] sm:$0xff]
  %v6508 = vld [vmem:[%s6491 + $0xc0] sm:$0xff]
  %v6509 = vld [vmem:[%s6491 + $0xc8] sm:$0xff]
  %v6510 = vld [vmem:[%s6491 + $0xd8] sm:$0xff]
  %v6511 = vld [vmem:[%s6491 + $0xe0] sm:$0xff]
  %v6512 = vld [vmem:[%s6491 + $0xf0] sm:$0xff]
  %v6513 = vld [vmem:[%s6491 + $0xf8] sm:$0xff]
  %v6514 = vld [vmem:[%s6491 + $0x108] sm:$0xff]
  %v6515 = vld [vmem:[%s6491 + $0x110] sm:$0xff]
  %v6516 = vld [vmem:[%s6491 + $0x120] sm:$0xff]
  %v6517 = vld [vmem:[%s6491 + $0x128] sm:$0xff]
  %v6518 = vld [vmem:[%s6491 + $0x138] sm:$0xff]
  %v6519 = vld [vmem:[%s6491 + $0x140] sm:$0xff]
  %v6520 = vld [vmem:[%s6491 + $0x150] sm:$0xff]
  %v6521 = vld [vmem:[%s6491 + $0x158] sm:$0xff]
  %v6522 = vld [vmem:[%s6491 + $0x168] sm:$0xff]
  %v6523 = vld [vmem:[%s6491 + $0x170] sm:$0xff]
  %v6524 = vld [vmem:[%s6491 + $0x1b0] sm:$0xff]
  %v6525 = vld [vmem:[%s6491 + $0x1b8] sm:$0xff]
  %v6526 = vld [vmem:[%s6491 + $0x1c8] sm:$0xff]
  %v6527 = vld [vmem:[%s6491 + $0x1d0] sm:$0xff]
  %v6528 = vld [vmem:[%s6491 + $0x1e0] sm:$0xff]
  %v6529 = vld [vmem:[%s6491 + $0x1e8] sm:$0xff]
  %v6530 = vld [vmem:[%s6491 + $0x1f8] sm:$0xff]
  %v6531 = vld [vmem:[%s6491 + $0x200] sm:$0xff]
  %v6532 = vld [vmem:[%s6491 + $0x210] sm:$0xff]
  %v6533 = vld [vmem:[%s6491 + $0x218] sm:$0xff]
  %v6534 = vld [vmem:[%s6491 + $0x228] sm:$0xff]
  %v6535 = vld [vmem:[%s6491 + $0x230] sm:$0xff]
  %v6536 = vld [vmem:[%s6491 + $0x240] sm:$0xff]
  %v6537 = vld [vmem:[%s6491 + $0x248] sm:$0xff]
  %v6538 = vld [vmem:[%s6491 + $0x258] sm:$0xff]
  %v6539 = vld [vmem:[%s6491 + $0x260] sm:$0xff]
  %v6540 = vld [vmem:[%s6491 + $0x270] sm:$0xff]
  %v6541 = vld [vmem:[%s6491 + $0x278] sm:$0xff]
  %v6542 = vld [vmem:[%s6491 + $0x288] sm:$0xff]
  %v6543 = vld [vmem:[%s6491 + $0x290] sm:$0xff]
  %v6544 = vld [vmem:[%s6491 + $0x2a0] sm:$0xff]
  %v6545 = vld [vmem:[%s6491 + $0x2a8] sm:$0xff]
  %v6546 = vld [vmem:[%s6491 + $0x2b8] sm:$0xff]
  %v6547 = vld [vmem:[%s6491 + $0x2c0] sm:$0xff]
  %v6548 = vld [vmem:[%s6491 + $0x2d0] sm:$0xff]
  %v6549 = vld [vmem:[%s6491 + $0x2d8] sm:$0xff]
  %v6550 = vld [vmem:[%s6491 + $0x2e8] sm:$0xff]
  %v6551 = vld [vmem:[%s6491 + $0x2f0] sm:$0xff]
  %v6552 = vld [vmem:[%s6491 + $0x300] sm:$0xff]
  %v6553 = vld [vmem:[%s6491 + $0x308] sm:$0xff]
  %v6554 = vld [vmem:[%s6491 + $0x318] sm:$0xff]
  %v6555 = vld [vmem:[%s6491 + $0x320] sm:$0xff]
  %6620 = vrot.lane.b32.xlu0 %v6492, 24
  %v6621 = vpop.permute.xlu0 %6620
  %6622 = vrot.lane.b32.xlu0 %v6493, 24
  %v6623 = vpop.permute.xlu0 %6622
  %6624 = vrot.lane.b32.xlu0 %v6494, 24
  %v6625 = vpop.permute.xlu0 %6624
  %6626 = vrot.lane.b32.xlu0 %v6495, 24
  %v6627 = vpop.permute.xlu0 %6626
  %6628 = vrot.lane.b32.xlu0 %v6496, 24
  %v6629 = vpop.permute.xlu0 %6628
  %6630 = vrot.lane.b32.xlu0 %v6497, 24
  %v6631 = vpop.permute.xlu0 %6630
  %6632 = vrot.lane.b32.xlu0 %v6498, 24
  %v6633 = vpop.permute.xlu0 %6632
  %6634 = vrot.lane.b32.xlu0 %v6499, 24
  %v6635 = vpop.permute.xlu0 %6634
  %6636 = vrot.lane.b32.xlu0 %v6500, 24
  %v6637 = vpop.permute.xlu0 %6636
  %6638 = vrot.lane.b32.xlu0 %v6501, 24
  %v6639 = vpop.permute.xlu0 %6638
  %6640 = vrot.lane.b32.xlu0 %v6502, 24
  %v6641 = vpop.permute.xlu0 %6640
  %6642 = vrot.lane.b32.xlu0 %v6503, 24
  %v6643 = vpop.permute.xlu0 %6642
  %6644 = vrot.lane.b32.xlu0 %v6504, 24
  %v6645 = vpop.permute.xlu0 %6644
  %6646 = vrot.lane.b32.xlu0 %v6505, 24
  %v6647 = vpop.permute.xlu0 %6646
  %6648 = vrot.lane.b32.xlu0 %v6506, 24
  %v6649 = vpop.permute.xlu0 %6648
  %6650 = vrot.lane.b32.xlu0 %v6507, 24
  %v6651 = vpop.permute.xlu0 %6650
  %6652 = vrot.lane.b32.xlu0 %v6508, 24
  %v6653 = vpop.permute.xlu0 %6652
  %6654 = vrot.lane.b32.xlu0 %v6509, 24
  %v6655 = vpop.permute.xlu0 %6654
  %6656 = vrot.lane.b32.xlu0 %v6510, 24
  %v6657 = vpop.permute.xlu0 %6656
  %6658 = vrot.lane.b32.xlu0 %v6511, 24
  %v6659 = vpop.permute.xlu0 %6658
  %6660 = vrot.lane.b32.xlu0 %v6512, 24
  %v6661 = vpop.permute.xlu0 %6660
  %6662 = vrot.lane.b32.xlu0 %v6513, 24
  %v6663 = vpop.permute.xlu0 %6662
  %6664 = vrot.lane.b32.xlu0 %v6514, 24
  %v6665 = vpop.permute.xlu0 %6664
  %6666 = vrot.lane.b32.xlu0 %v6515, 24
  %v6667 = vpop.permute.xlu0 %6666
  %6668 = vrot.lane.b32.xlu0 %v6516, 24
  %v6669 = vpop.permute.xlu0 %6668
  %6670 = vrot.lane.b32.xlu0 %v6517, 24
  %v6671 = vpop.permute.xlu0 %6670
  %6672 = vrot.lane.b32.xlu0 %v6518, 24
  %v6673 = vpop.permute.xlu0 %6672
  %6674 = vrot.lane.b32.xlu0 %v6519, 24
  %v6675 = vpop.permute.xlu0 %6674
  %6676 = vrot.lane.b32.xlu0 %v6520, 24
  %v6677 = vpop.permute.xlu0 %6676
  %6678 = vrot.lane.b32.xlu0 %v6521, 24
  %v6679 = vpop.permute.xlu0 %6678
  %6680 = vrot.lane.b32.xlu0 %v6522, 24
  %v6681 = vpop.permute.xlu0 %6680
  %6682 = vrot.lane.b32.xlu0 %v6523, 24
  %v6683 = vpop.permute.xlu0 %6682
  %6684 = vrot.lane.b32.xlu0 %v6524, 24
  %v6685 = vpop.permute.xlu0 %6684
  %6686 = vrot.lane.b32.xlu0 %v6525, 24
  %v6687 = vpop.permute.xlu0 %6686
  %6688 = vrot.lane.b32.xlu0 %v6526, 24
  %v6689 = vpop.permute.xlu0 %6688
  %6690 = vrot.lane.b32.xlu0 %v6527, 24
  %v6691 = vpop.permute.xlu0 %6690
  %6692 = vrot.lane.b32.xlu0 %v6528, 24
  %v6693 = vpop.permute.xlu0 %6692
  %6694 = vrot.lane.b32.xlu0 %v6529, 24
  %v6695 = vpop.permute.xlu0 %6694
  %6696 = vrot.lane.b32.xlu0 %v6530, 24
  %v6697 = vpop.permute.xlu0 %6696
  %6698 = vrot.lane.b32.xlu0 %v6531, 24
  %v6699 = vpop.permute.xlu0 %6698
  %6700 = vrot.lane.b32.xlu0 %v6532, 24
  %v6701 = vpop.permute.xlu0 %6700
  %6702 = vrot.lane.b32.xlu0 %v6533, 24
  %v6703 = vpop.permute.xlu0 %6702
  %6704 = vrot.lane.b32.xlu0 %v6534, 24
  %v6705 = vpop.permute.xlu0 %6704
  %6706 = vrot.lane.b32.xlu0 %v6535, 24
  %v6707 = vpop.permute.xlu0 %6706
  %6708 = vrot.lane.b32.xlu0 %v6536, 24
  %v6709 = vpop.permute.xlu0 %6708
  %6710 = vrot.lane.b32.xlu0 %v6537, 24
  %v6711 = vpop.permute.xlu0 %6710
  %6712 = vrot.lane.b32.xlu0 %v6538, 24
  %v6713 = vpop.permute.xlu0 %6712
  %6714 = vrot.lane.b32.xlu0 %v6539, 24
  %v6715 = vpop.permute.xlu0 %6714
  %6716 = vrot.lane.b32.xlu0 %v6540, 24
  %v6717 = vpop.permute.xlu0 %6716
  %6718 = vrot.lane.b32.xlu0 %v6541, 24
  %v6719 = vpop.permute.xlu0 %6718
  %6720 = vrot.lane.b32.xlu0 %v6542, 24
  %v6721 = vpop.permute.xlu0 %6720
  %6722 = vrot.lane.b32.xlu0 %v6543, 24
  %v6723 = vpop.permute.xlu0 %6722
  %6724 = vrot.lane.b32.xlu0 %v6544, 24
  %v6725 = vpop.permute.xlu0 %6724
  %6726 = vrot.lane.b32.xlu0 %v6545, 24
  %v6727 = vpop.permute.xlu0 %6726
  %6728 = vrot.lane.b32.xlu0 %v6546, 24
  %v6729 = vpop.permute.xlu0 %6728
  %6730 = vrot.lane.b32.xlu0 %v6547, 24
  %v6731 = vpop.permute.xlu0 %6730
  %6732 = vrot.lane.b32.xlu0 %v6548, 24
  %v6733 = vpop.permute.xlu0 %6732
  %6734 = vrot.lane.b32.xlu0 %v6549, 24
  %v6735 = vpop.permute.xlu0 %6734
  %6736 = vrot.lane.b32.xlu0 %v6550, 24
  %v6737 = vpop.permute.xlu0 %6736
  %6738 = vrot.lane.b32.xlu0 %v6551, 24
  %v6739 = vpop.permute.xlu0 %6738
  %6740 = vrot.lane.b32.xlu0 %v6552, 24
  %v6741 = vpop.permute.xlu0 %6740
  %6742 = vrot.lane.b32.xlu0 %v6553, 24
  %v6743 = vpop.permute.xlu0 %6742
  %6744 = vrot.lane.b32.xlu0 %v6554, 24
  %v6745 = vpop.permute.xlu0 %6744
  %6746 = vrot.lane.b32.xlu0 %v6555, 24
  %v6747 = vpop.permute.xlu0 %6746
  %6812 = vst.msk [vmem:[#allocation4] sm:$0xff] %vm2687, %v6621
  %6813 = vst.msk [vmem:[#allocation4 + $0x8] sm:$0xff] %vm2687, %v6623
  %6814 = vst.msk [vmem:[#allocation4 + $0x10] sm:$0xff] %vm2687, %v6625
  %6815 = vst.msk [vmem:[#allocation4 + $0x18] sm:$0xff] %vm2687, %v6627
  %6816 = vst.msk [vmem:[#allocation4 + $0x20] sm:$0xff] %vm2687, %v6629
  %6817 = vst.msk [vmem:[#allocation4 + $0x28] sm:$0xff] %vm2687, %v6631
  %6818 = vst.msk [vmem:[#allocation4 + $0x30] sm:$0xff] %vm2687, %v6633
  %6819 = vst.msk [vmem:[#allocation4 + $0x38] sm:$0xff] %vm2687, %v6635
  %6820 = vst.msk [vmem:[#allocation4 + $0x40] sm:$0xff] %vm2687, %v6637
  %6821 = vst.msk [vmem:[#allocation4 + $0x48] sm:$0xff] %vm2687, %v6639
  %6822 = vst.msk [vmem:[#allocation4 + $0x50] sm:$0xff] %vm2687, %v6641
  %6823 = vst.msk [vmem:[#allocation4 + $0x58] sm:$0xff] %vm2687, %v6643
  %6824 = vst.msk [vmem:[#allocation4 + $0x60] sm:$0xff] %vm2687, %v6645
  %6825 = vst.msk [vmem:[#allocation4 + $0x68] sm:$0xff] %vm2687, %v6647
  %6826 = vst.msk [vmem:[#allocation4 + $0x70] sm:$0xff] %vm2687, %v6649
  %6827 = vst.msk [vmem:[#allocation4 + $0x78] sm:$0xff] %vm2687, %v6651
  %6828 = vst.msk [vmem:[#allocation4 + $0x80] sm:$0xff] %vm2687, %v6653
  %6829 = vst.msk [vmem:[#allocation4 + $0x88] sm:$0xff] %vm2687, %v6655
  %6830 = vst.msk [vmem:[#allocation4 + $0x90] sm:$0xff] %vm2687, %v6657
  %6831 = vst.msk [vmem:[#allocation4 + $0x98] sm:$0xff] %vm2687, %v6659
  %6832 = vst.msk [vmem:[#allocation4 + $0xa0] sm:$0xff] %vm2687, %v6661
  %6833 = vst.msk [vmem:[#allocation4 + $0xa8] sm:$0xff] %vm2687, %v6663
  %6834 = vst.msk [vmem:[#allocation4 + $0xb0] sm:$0xff] %vm2687, %v6665
  %6835 = vst.msk [vmem:[#allocation4 + $0xb8] sm:$0xff] %vm2687, %v6667
  %6836 = vst.msk [vmem:[#allocation4 + $0xc0] sm:$0xff] %vm2687, %v6669
  %6837 = vst.msk [vmem:[#allocation4 + $0xc8] sm:$0xff] %vm2687, %v6671
  %6838 = vst.msk [vmem:[#allocation4 + $0xd0] sm:$0xff] %vm2687, %v6673
  %6839 = vst.msk [vmem:[#allocation4 + $0xd8] sm:$0xff] %vm2687, %v6675
  %6840 = vst.msk [vmem:[#allocation4 + $0xe0] sm:$0xff] %vm2687, %v6677
  %6841 = vst.msk [vmem:[#allocation4 + $0xe8] sm:$0xff] %vm2687, %v6679
  %6842 = vst.msk [vmem:[#allocation4 + $0xf0] sm:$0xff] %vm2687, %v6681
  %6843 = vst.msk [vmem:[#allocation4 + $0xf8] sm:$0xff] %vm2687, %v6683
  %6844 = vst.msk [vmem:[#allocation4 + $0x100] sm:$0xff] %vm2687, %v6685
  %6845 = vst.msk [vmem:[#allocation4 + $0x108] sm:$0xff] %vm2687, %v6687
  %6846 = vst.msk [vmem:[#allocation4 + $0x110] sm:$0xff] %vm2687, %v6689
  %6847 = vst.msk [vmem:[#allocation4 + $0x118] sm:$0xff] %vm2687, %v6691
  %6848 = vst.msk [vmem:[#allocation4 + $0x120] sm:$0xff] %vm2687, %v6693
  %6849 = vst.msk [vmem:[#allocation4 + $0x128] sm:$0xff] %vm2687, %v6695
  %6850 = vst.msk [vmem:[#allocation4 + $0x130] sm:$0xff] %vm2687, %v6697
  %6851 = vst.msk [vmem:[#allocation4 + $0x138] sm:$0xff] %vm2687, %v6699
  %6852 = vst.msk [vmem:[#allocation4 + $0x140] sm:$0xff] %vm2687, %v6701
  %6853 = vst.msk [vmem:[#allocation4 + $0x148] sm:$0xff] %vm2687, %v6703
  %6854 = vst.msk [vmem:[#allocation4 + $0x150] sm:$0xff] %vm2687, %v6705
  %6855 = vst.msk [vmem:[#allocation4 + $0x158] sm:$0xff] %vm2687, %v6707
  %6856 = vst.msk [vmem:[#allocation4 + $0x160] sm:$0xff] %vm2687, %v6709
  %6857 = vst.msk [vmem:[#allocation4 + $0x168] sm:$0xff] %vm2687, %v6711
  %6858 = vst.msk [vmem:[#allocation4 + $0x170] sm:$0xff] %vm2687, %v6713
  %6859 = vst.msk [vmem:[#allocation4 + $0x178] sm:$0xff] %vm2687, %v6715
  %6860 = vst.msk [vmem:[#allocation4 + $0x180] sm:$0xff] %vm2687, %v6717
  %6861 = vst.msk [vmem:[#allocation4 + $0x188] sm:$0xff] %vm2687, %v6719
  %6862 = vst.msk [vmem:[#allocation4 + $0x190] sm:$0xff] %vm2687, %v6721
  %6863 = vst.msk [vmem:[#allocation4 + $0x198] sm:$0xff] %vm2687, %v6723
  %6864 = vst.msk [vmem:[#allocation4 + $0x1a0] sm:$0xff] %vm2687, %v6725
  %6865 = vst.msk [vmem:[#allocation4 + $0x1a8] sm:$0xff] %vm2687, %v6727
  %6866 = vst.msk [vmem:[#allocation4 + $0x1b0] sm:$0xff] %vm2687, %v6729
  %6867 = vst.msk [vmem:[#allocation4 + $0x1b8] sm:$0xff] %vm2687, %v6731
  %6868 = vst.msk [vmem:[#allocation4 + $0x1c0] sm:$0xff] %vm2687, %v6733
  %6869 = vst.msk [vmem:[#allocation4 + $0x1c8] sm:$0xff] %vm2687, %v6735
  %6870 = vst.msk [vmem:[#allocation4 + $0x1d0] sm:$0xff] %vm2687, %v6737
  %6871 = vst.msk [vmem:[#allocation4 + $0x1d8] sm:$0xff] %vm2687, %v6739
  %6872 = vst.msk [vmem:[#allocation4 + $0x1e0] sm:$0xff] %vm2687, %v6741
  %6873 = vst.msk [vmem:[#allocation4 + $0x1e8] sm:$0xff] %vm2687, %v6743
  %6874 = vst.msk [vmem:[#allocation4 + $0x1f0] sm:$0xff] %vm2687, %v6745
  %6875 = vst.msk [vmem:[#allocation4 + $0x1f8] sm:$0xff] %vm2687, %v6747
  %v6876 = vld [vmem:[%s6491 + $0x1] sm:$0xff]
  %v6877 = vld [vmem:[%s6491 + $0x9] sm:$0xff]
  %v6878 = vld [vmem:[%s6491 + $0x19] sm:$0xff]
  %v6879 = vld [vmem:[%s6491 + $0x21] sm:$0xff]
  %v6880 = vld [vmem:[%s6491 + $0x31] sm:$0xff]
  %v6881 = vld [vmem:[%s6491 + $0x39] sm:$0xff]
  %v6882 = vld [vmem:[%s6491 + $0x49] sm:$0xff]
  %v6883 = vld [vmem:[%s6491 + $0x51] sm:$0xff]
  %v6884 = vld [vmem:[%s6491 + $0x61] sm:$0xff]
  %v6885 = vld [vmem:[%s6491 + $0x69] sm:$0xff]
  %v6886 = vld [vmem:[%s6491 + $0x79] sm:$0xff]
  %v6887 = vld [vmem:[%s6491 + $0x81] sm:$0xff]
  %v6888 = vld [vmem:[%s6491 + $0x91] sm:$0xff]
  %v6889 = vld [vmem:[%s6491 + $0x99] sm:$0xff]
  %v6890 = vld [vmem:[%s6491 + $0xa9] sm:$0xff]
  %v6891 = vld [vmem:[%s6491 + $0xb1] sm:$0xff]
  %v6892 = vld [vmem:[%s6491 + $0xc1] sm:$0xff]
  %v6893 = vld [vmem:[%s6491 + $0xc9] sm:$0xff]
  %v6894 = vld [vmem:[%s6491 + $0xd9] sm:$0xff]
  %v6895 = vld [vmem:[%s6491 + $0xe1] sm:$0xff]
  %v6896 = vld [vmem:[%s6491 + $0xf1] sm:$0xff]
  %v6897 = vld [vmem:[%s6491 + $0xf9] sm:$0xff]
  %v6898 = vld [vmem:[%s6491 + $0x109] sm:$0xff]
  %v6899 = vld [vmem:[%s6491 + $0x111] sm:$0xff]
  %v6900 = vld [vmem:[%s6491 + $0x121] sm:$0xff]
  %v6901 = vld [vmem:[%s6491 + $0x129] sm:$0xff]
  %v6902 = vld [vmem:[%s6491 + $0x139] sm:$0xff]
  %v6903 = vld [vmem:[%s6491 + $0x141] sm:$0xff]
  %v6904 = vld [vmem:[%s6491 + $0x151] sm:$0xff]
  %v6905 = vld [vmem:[%s6491 + $0x159] sm:$0xff]
  %v6906 = vld [vmem:[%s6491 + $0x169] sm:$0xff]
  %v6907 = vld [vmem:[%s6491 + $0x171] sm:$0xff]
  %v6908 = vld [vmem:[%s6491 + $0x1b1] sm:$0xff]
  %v6909 = vld [vmem:[%s6491 + $0x1b9] sm:$0xff]
  %v6910 = vld [vmem:[%s6491 + $0x1c9] sm:$0xff]
  %v6911 = vld [vmem:[%s6491 + $0x1d1] sm:$0xff]
  %v6912 = vld [vmem:[%s6491 + $0x1e1] sm:$0xff]
  %v6913 = vld [vmem:[%s6491 + $0x1e9] sm:$0xff]
  %v6914 = vld [vmem:[%s6491 + $0x1f9] sm:$0xff]
  %v6915 = vld [vmem:[%s6491 + $0x201] sm:$0xff]
  %v6916 = vld [vmem:[%s6491 + $0x211] sm:$0xff]
  %v6917 = vld [vmem:[%s6491 + $0x219] sm:$0xff]
  %v6918 = vld [vmem:[%s6491 + $0x229] sm:$0xff]
  %v6919 = vld [vmem:[%s6491 + $0x231] sm:$0xff]
  %v6920 = vld [vmem:[%s6491 + $0x241] sm:$0xff]
  %v6921 = vld [vmem:[%s6491 + $0x249] sm:$0xff]
  %v6922 = vld [vmem:[%s6491 + $0x259] sm:$0xff]
  %v6923 = vld [vmem:[%s6491 + $0x261] sm:$0xff]
  %v6924 = vld [vmem:[%s6491 + $0x271] sm:$0xff]
  %v6925 = vld [vmem:[%s6491 + $0x279] sm:$0xff]
  %v6926 = vld [vmem:[%s6491 + $0x289] sm:$0xff]
  %v6927 = vld [vmem:[%s6491 + $0x291] sm:$0xff]
  %v6928 = vld [vmem:[%s6491 + $0x2a1] sm:$0xff]
  %v6929 = vld [vmem:[%s6491 + $0x2a9] sm:$0xff]
  %v6930 = vld [vmem:[%s6491 + $0x2b9] sm:$0xff]
  %v6931 = vld [vmem:[%s6491 + $0x2c1] sm:$0xff]
  %v6932 = vld [vmem:[%s6491 + $0x2d1] sm:$0xff]
  %v6933 = vld [vmem:[%s6491 + $0x2d9] sm:$0xff]
  %v6934 = vld [vmem:[%s6491 + $0x2e9] sm:$0xff]
  %v6935 = vld [vmem:[%s6491 + $0x2f1] sm:$0xff]
  %v6936 = vld [vmem:[%s6491 + $0x301] sm:$0xff]
  %v6937 = vld [vmem:[%s6491 + $0x309] sm:$0xff]
  %v6938 = vld [vmem:[%s6491 + $0x319] sm:$0xff]
  %v6939 = vld [vmem:[%s6491 + $0x321] sm:$0xff]
  %7004 = vrot.lane.b32.xlu0 %v6876, 28
  %v7005 = vpop.permute.xlu0 %7004
  %7006 = vrot.lane.b32.xlu0 %v6877, 28
  %v7007 = vpop.permute.xlu0 %7006
  %7008 = vrot.lane.b32.xlu0 %v6878, 28
  %v7009 = vpop.permute.xlu0 %7008
  %7010 = vrot.lane.b32.xlu0 %v6879, 28
  %v7011 = vpop.permute.xlu0 %7010
  %7012 = vrot.lane.b32.xlu0 %v6880, 28
  %v7013 = vpop.permute.xlu0 %7012
  %7014 = vrot.lane.b32.xlu0 %v6881, 28
  %v7015 = vpop.permute.xlu0 %7014
  %7016 = vrot.lane.b32.xlu0 %v6882, 28
  %v7017 = vpop.permute.xlu0 %7016
  %7018 = vrot.lane.b32.xlu0 %v6883, 28
  %v7019 = vpop.permute.xlu0 %7018
  %7020 = vrot.lane.b32.xlu0 %v6884, 28
  %v7021 = vpop.permute.xlu0 %7020
  %7022 = vrot.lane.b32.xlu0 %v6885, 28
  %v7023 = vpop.permute.xlu0 %7022
  %7024 = vrot.lane.b32.xlu0 %v6886, 28
  %v7025 = vpop.permute.xlu0 %7024
  %7026 = vrot.lane.b32.xlu0 %v6887, 28
  %v7027 = vpop.permute.xlu0 %7026
  %7028 = vrot.lane.b32.xlu0 %v6888, 28
  %v7029 = vpop.permute.xlu0 %7028
  %7030 = vrot.lane.b32.xlu0 %v6889, 28
  %v7031 = vpop.permute.xlu0 %7030
  %7032 = vrot.lane.b32.xlu0 %v6890, 28
  %v7033 = vpop.permute.xlu0 %7032
  %7034 = vrot.lane.b32.xlu0 %v6891, 28
  %v7035 = vpop.permute.xlu0 %7034
  %7036 = vrot.lane.b32.xlu0 %v6892, 28
  %v7037 = vpop.permute.xlu0 %7036
  %7038 = vrot.lane.b32.xlu0 %v6893, 28
  %v7039 = vpop.permute.xlu0 %7038
  %7040 = vrot.lane.b32.xlu0 %v6894, 28
  %v7041 = vpop.permute.xlu0 %7040
  %7042 = vrot.lane.b32.xlu0 %v6895, 28
  %v7043 = vpop.permute.xlu0 %7042
  %7044 = vrot.lane.b32.xlu0 %v6896, 28
  %v7045 = vpop.permute.xlu0 %7044
  %7046 = vrot.lane.b32.xlu0 %v6897, 28
  %v7047 = vpop.permute.xlu0 %7046
  %7048 = vrot.lane.b32.xlu0 %v6898, 28
  %v7049 = vpop.permute.xlu0 %7048
  %7050 = vrot.lane.b32.xlu0 %v6899, 28
  %v7051 = vpop.permute.xlu0 %7050
  %7052 = vrot.lane.b32.xlu0 %v6900, 28
  %v7053 = vpop.permute.xlu0 %7052
  %7054 = vrot.lane.b32.xlu0 %v6901, 28
  %v7055 = vpop.permute.xlu0 %7054
  %7056 = vrot.lane.b32.xlu0 %v6902, 28
  %v7057 = vpop.permute.xlu0 %7056
  %7058 = vrot.lane.b32.xlu0 %v6903, 28
  %v7059 = vpop.permute.xlu0 %7058
  %7060 = vrot.lane.b32.xlu0 %v6904, 28
  %v7061 = vpop.permute.xlu0 %7060
  %7062 = vrot.lane.b32.xlu0 %v6905, 28
  %v7063 = vpop.permute.xlu0 %7062
  %7064 = vrot.lane.b32.xlu0 %v6906, 28
  %v7065 = vpop.permute.xlu0 %7064
  %7066 = vrot.lane.b32.xlu0 %v6907, 28
  %v7067 = vpop.permute.xlu0 %7066
  %7068 = vrot.lane.b32.xlu0 %v6908, 28
  %v7069 = vpop.permute.xlu0 %7068
  %7070 = vrot.lane.b32.xlu0 %v6909, 28
  %v7071 = vpop.permute.xlu0 %7070
  %7072 = vrot.lane.b32.xlu0 %v6910, 28
  %v7073 = vpop.permute.xlu0 %7072
  %7074 = vrot.lane.b32.xlu0 %v6911, 28
  %v7075 = vpop.permute.xlu0 %7074
  %7076 = vrot.lane.b32.xlu0 %v6912, 28
  %v7077 = vpop.permute.xlu0 %7076
  %7078 = vrot.lane.b32.xlu0 %v6913, 28
  %v7079 = vpop.permute.xlu0 %7078
  %7080 = vrot.lane.b32.xlu0 %v6914, 28
  %v7081 = vpop.permute.xlu0 %7080
  %7082 = vrot.lane.b32.xlu0 %v6915, 28
  %v7083 = vpop.permute.xlu0 %7082
  %7084 = vrot.lane.b32.xlu0 %v6916, 28
  %v7085 = vpop.permute.xlu0 %7084
  %7086 = vrot.lane.b32.xlu0 %v6917, 28
  %v7087 = vpop.permute.xlu0 %7086
  %7088 = vrot.lane.b32.xlu0 %v6918, 28
  %v7089 = vpop.permute.xlu0 %7088
  %7090 = vrot.lane.b32.xlu0 %v6919, 28
  %v7091 = vpop.permute.xlu0 %7090
  %7092 = vrot.lane.b32.xlu0 %v6920, 28
  %v7093 = vpop.permute.xlu0 %7092
  %7094 = vrot.lane.b32.xlu0 %v6921, 28
  %v7095 = vpop.permute.xlu0 %7094
  %7096 = vrot.lane.b32.xlu0 %v6922, 28
  %v7097 = vpop.permute.xlu0 %7096
  %7098 = vrot.lane.b32.xlu0 %v6923, 28
  %v7099 = vpop.permute.xlu0 %7098
  %7100 = vrot.lane.b32.xlu0 %v6924, 28
  %v7101 = vpop.permute.xlu0 %7100
  %7102 = vrot.lane.b32.xlu0 %v6925, 28
  %v7103 = vpop.permute.xlu0 %7102
  %7104 = vrot.lane.b32.xlu0 %v6926, 28
  %v7105 = vpop.permute.xlu0 %7104
  %7106 = vrot.lane.b32.xlu0 %v6927, 28
  %v7107 = vpop.permute.xlu0 %7106
  %7108 = vrot.lane.b32.xlu0 %v6928, 28
  %v7109 = vpop.permute.xlu0 %7108
  %7110 = vrot.lane.b32.xlu0 %v6929, 28
  %v7111 = vpop.permute.xlu0 %7110
  %7112 = vrot.lane.b32.xlu0 %v6930, 28
  %v7113 = vpop.permute.xlu0 %7112
  %7114 = vrot.lane.b32.xlu0 %v6931, 28
  %v7115 = vpop.permute.xlu0 %7114
  %7116 = vrot.lane.b32.xlu0 %v6932, 28
  %v7117 = vpop.permute.xlu0 %7116
  %7118 = vrot.lane.b32.xlu0 %v6933, 28
  %v7119 = vpop.permute.xlu0 %7118
  %7120 = vrot.lane.b32.xlu0 %v6934, 28
  %v7121 = vpop.permute.xlu0 %7120
  %7122 = vrot.lane.b32.xlu0 %v6935, 28
  %v7123 = vpop.permute.xlu0 %7122
  %7124 = vrot.lane.b32.xlu0 %v6936, 28
  %v7125 = vpop.permute.xlu0 %7124
  %7126 = vrot.lane.b32.xlu0 %v6937, 28
  %v7127 = vpop.permute.xlu0 %7126
  %7128 = vrot.lane.b32.xlu0 %v6938, 28
  %v7129 = vpop.permute.xlu0 %7128
  %7130 = vrot.lane.b32.xlu0 %v6939, 28
  %v7131 = vpop.permute.xlu0 %7130
  %7196 = vst.msk [vmem:[#allocation4] sm:$0xff] %vm3072, %v7005
  %7197 = vst.msk [vmem:[#allocation4 + $0x8] sm:$0xff] %vm3072, %v7007
  %7198 = vst.msk [vmem:[#allocation4 + $0x10] sm:$0xff] %vm3072, %v7009
  %7199 = vst.msk [vmem:[#allocation4 + $0x18] sm:$0xff] %vm3072, %v7011
  %7200 = vst.msk [vmem:[#allocation4 + $0x20] sm:$0xff] %vm3072, %v7013
  %7201 = vst.msk [vmem:[#allocation4 + $0x28] sm:$0xff] %vm3072, %v7015
  %7202 = vst.msk [vmem:[#allocation4 + $0x30] sm:$0xff] %vm3072, %v7017
  %7203 = vst.msk [vmem:[#allocation4 + $0x38] sm:$0xff] %vm3072, %v7019
  %7204 = vst.msk [vmem:[#allocation4 + $0x40] sm:$0xff] %vm3072, %v7021
  %7205 = vst.msk [vmem:[#allocation4 + $0x48] sm:$0xff] %vm3072, %v7023
  %7206 = vst.msk [vmem:[#allocation4 + $0x50] sm:$0xff] %vm3072, %v7025
  %7207 = vst.msk [vmem:[#allocation4 + $0x58] sm:$0xff] %vm3072, %v7027
  %7208 = vst.msk [vmem:[#allocation4 + $0x60] sm:$0xff] %vm3072, %v7029
  %7209 = vst.msk [vmem:[#allocation4 + $0x68] sm:$0xff] %vm3072, %v7031
  %7210 = vst.msk [vmem:[#allocation4 + $0x70] sm:$0xff] %vm3072, %v7033
  %7211 = vst.msk [vmem:[#allocation4 + $0x78] sm:$0xff] %vm3072, %v7035
  %7212 = vst.msk [vmem:[#allocation4 + $0x80] sm:$0xff] %vm3072, %v7037
  %7213 = vst.msk [vmem:[#allocation4 + $0x88] sm:$0xff] %vm3072, %v7039
  %7214 = vst.msk [vmem:[#allocation4 + $0x90] sm:$0xff] %vm3072, %v7041
  %7215 = vst.msk [vmem:[#allocation4 + $0x98] sm:$0xff] %vm3072, %v7043
  %7216 = vst.msk [vmem:[#allocation4 + $0xa0] sm:$0xff] %vm3072, %v7045
  %7217 = vst.msk [vmem:[#allocation4 + $0xa8] sm:$0xff] %vm3072, %v7047
  %7218 = vst.msk [vmem:[#allocation4 + $0xb0] sm:$0xff] %vm3072, %v7049
  %7219 = vst.msk [vmem:[#allocation4 + $0xb8] sm:$0xff] %vm3072, %v7051
  %7220 = vst.msk [vmem:[#allocation4 + $0xc0] sm:$0xff] %vm3072, %v7053
  %7221 = vst.msk [vmem:[#allocation4 + $0xc8] sm:$0xff] %vm3072, %v7055
  %7222 = vst.msk [vmem:[#allocation4 + $0xd0] sm:$0xff] %vm3072, %v7057
  %7223 = vst.msk [vmem:[#allocation4 + $0xd8] sm:$0xff] %vm3072, %v7059
  %7224 = vst.msk [vmem:[#allocation4 + $0xe0] sm:$0xff] %vm3072, %v7061
  %7225 = vst.msk [vmem:[#allocation4 + $0xe8] sm:$0xff] %vm3072, %v7063
  %7226 = vst.msk [vmem:[#allocation4 + $0xf0] sm:$0xff] %vm3072, %v7065
  %7227 = vst.msk [vmem:[#allocation4 + $0xf8] sm:$0xff] %vm3072, %v7067
  %7228 = vst.msk [vmem:[#allocation4 + $0x100] sm:$0xff] %vm3072, %v7069
  %7229 = vst.msk [vmem:[#allocation4 + $0x108] sm:$0xff] %vm3072, %v7071
  %7230 = vst.msk [vmem:[#allocation4 + $0x110] sm:$0xff] %vm3072, %v7073
  %7231 = vst.msk [vmem:[#allocation4 + $0x118] sm:$0xff] %vm3072, %v7075
  %7232 = vst.msk [vmem:[#allocation4 + $0x120] sm:$0xff] %vm3072, %v7077
  %7233 = vst.msk [vmem:[#allocation4 + $0x128] sm:$0xff] %vm3072, %v7079
  %7234 = vst.msk [vmem:[#allocation4 + $0x130] sm:$0xff] %vm3072, %v7081
  %7235 = vst.msk [vmem:[#allocation4 + $0x138] sm:$0xff] %vm3072, %v7083
  %7236 = vst.msk [vmem:[#allocation4 + $0x140] sm:$0xff] %vm3072, %v7085
  %7237 = vst.msk [vmem:[#allocation4 + $0x148] sm:$0xff] %vm3072, %v7087
  %7238 = vst.msk [vmem:[#allocation4 + $0x150] sm:$0xff] %vm3072, %v7089
  %7239 = vst.msk [vmem:[#allocation4 + $0x158] sm:$0xff] %vm3072, %v7091
  %7240 = vst.msk [vmem:[#allocation4 + $0x160] sm:$0xff] %vm3072, %v7093
  %7241 = vst.msk [vmem:[#allocation4 + $0x168] sm:$0xff] %vm3072, %v7095
  %7242 = vst.msk [vmem:[#allocation4 + $0x170] sm:$0xff] %vm3072, %v7097
  %7243 = vst.msk [vmem:[#allocation4 + $0x178] sm:$0xff] %vm3072, %v7099
  %7244 = vst.msk [vmem:[#allocation4 + $0x180] sm:$0xff] %vm3072, %v7101
  %7245 = vst.msk [vmem:[#allocation4 + $0x188] sm:$0xff] %vm3072, %v7103
  %7246 = vst.msk [vmem:[#allocation4 + $0x190] sm:$0xff] %vm3072, %v7105
  %7247 = vst.msk [vmem:[#allocation4 + $0x198] sm:$0xff] %vm3072, %v7107
  %7248 = vst.msk [vmem:[#allocation4 + $0x1a0] sm:$0xff] %vm3072, %v7109
  %7249 = vst.msk [vmem:[#allocation4 + $0x1a8] sm:$0xff] %vm3072, %v7111
  %7250 = vst.msk [vmem:[#allocation4 + $0x1b0] sm:$0xff] %vm3072, %v7113
  %7251 = vst.msk [vmem:[#allocation4 + $0x1b8] sm:$0xff] %vm3072, %v7115
  %7252 = vst.msk [vmem:[#allocation4 + $0x1c0] sm:$0xff] %vm3072, %v7117
  %7253 = vst.msk [vmem:[#allocation4 + $0x1c8] sm:$0xff] %vm3072, %v7119
  %7254 = vst.msk [vmem:[#allocation4 + $0x1d0] sm:$0xff] %vm3072, %v7121
  %7255 = vst.msk [vmem:[#allocation4 + $0x1d8] sm:$0xff] %vm3072, %v7123
  %7256 = vst.msk [vmem:[#allocation4 + $0x1e0] sm:$0xff] %vm3072, %v7125
  %7257 = vst.msk [vmem:[#allocation4 + $0x1e8] sm:$0xff] %vm3072, %v7127
  %7258 = vst.msk [vmem:[#allocation4 + $0x1f0] sm:$0xff] %vm3072, %v7129
  %7259 = vst.msk [vmem:[#allocation4 + $0x1f8] sm:$0xff] %vm3072, %v7131
  %v7260 = vld [vmem:[%s6491 + $0x2] sm:$0xff]
  %v7261 = vld [vmem:[%s6491 + $0xa] sm:$0xff]
  %v7262 = vld [vmem:[%s6491 + $0x1a] sm:$0xff]
  %v7263 = vld [vmem:[%s6491 + $0x22] sm:$0xff]
  %v7264 = vld [vmem:[%s6491 + $0x32] sm:$0xff]
  %v7265 = vld [vmem:[%s6491 + $0x3a] sm:$0xff]
  %v7266 = vld [vmem:[%s6491 + $0x4a] sm:$0xff]
  %v7267 = vld [vmem:[%s6491 + $0x52] sm:$0xff]
  %v7268 = vld [vmem:[%s6491 + $0x62] sm:$0xff]
  %v7269 = vld [vmem:[%s6491 + $0x6a] sm:$0xff]
  %v7270 = vld [vmem:[%s6491 + $0x7a] sm:$0xff]
  %v7271 = vld [vmem:[%s6491 + $0x82] sm:$0xff]
  %v7272 = vld [vmem:[%s6491 + $0x92] sm:$0xff]
  %v7273 = vld [vmem:[%s6491 + $0x9a] sm:$0xff]
  %v7274 = vld [vmem:[%s6491 + $0xaa] sm:$0xff]
  %v7275 = vld [vmem:[%s6491 + $0xb2] sm:$0xff]
  %v7276 = vld [vmem:[%s6491 + $0xc2] sm:$0xff]
  %v7277 = vld [vmem:[%s6491 + $0xca] sm:$0xff]
  %v7278 = vld [vmem:[%s6491 + $0xda] sm:$0xff]
  %v7279 = vld [vmem:[%s6491 + $0xe2] sm:$0xff]
  %v7280 = vld [vmem:[%s6491 + $0xf2] sm:$0xff]
  %v7281 = vld [vmem:[%s6491 + $0xfa] sm:$0xff]
  %v7282 = vld [vmem:[%s6491 + $0x10a] sm:$0xff]
  %v7283 = vld [vmem:[%s6491 + $0x112] sm:$0xff]
  %v7284 = vld [vmem:[%s6491 + $0x122] sm:$0xff]
  %v7285 = vld [vmem:[%s6491 + $0x12a] sm:$0xff]
  %v7286 = vld [vmem:[%s6491 + $0x13a] sm:$0xff]
  %v7287 = vld [vmem:[%s6491 + $0x142] sm:$0xff]
  %v7288 = vld [vmem:[%s6491 + $0x152] sm:$0xff]
  %v7289 = vld [vmem:[%s6491 + $0x15a] sm:$0xff]
  %v7290 = vld [vmem:[%s6491 + $0x16a] sm:$0xff]
  %v7291 = vld [vmem:[%s6491 + $0x172] sm:$0xff]
  %v7292 = vld [vmem:[%s6491 + $0x1b2] sm:$0xff]
  %v7293 = vld [vmem:[%s6491 + $0x1ba] sm:$0xff]
  %v7294 = vld [vmem:[%s6491 + $0x1ca] sm:$0xff]
  %v7295 = vld [vmem:[%s6491 + $0x1d2] sm:$0xff]
  %v7296 = vld [vmem:[%s6491 + $0x1e2] sm:$0xff]
  %v7297 = vld [vmem:[%s6491 + $0x1ea] sm:$0xff]
  %v7298 = vld [vmem:[%s6491 + $0x1fa] sm:$0xff]
  %v7299 = vld [vmem:[%s6491 + $0x202] sm:$0xff]
  %v7300 = vld [vmem:[%s6491 + $0x212] sm:$0xff]
  %v7301 = vld [vmem:[%s6491 + $0x21a] sm:$0xff]
  %v7302 = vld [vmem:[%s6491 + $0x22a] sm:$0xff]
  %v7303 = vld [vmem:[%s6491 + $0x232] sm:$0xff]
  %v7304 = vld [vmem:[%s6491 + $0x242] sm:$0xff]
  %v7305 = vld [vmem:[%s6491 + $0x24a] sm:$0xff]
  %v7306 = vld [vmem:[%s6491 + $0x25a] sm:$0xff]
  %v7307 = vld [vmem:[%s6491 + $0x262] sm:$0xff]
  %v7308 = vld [vmem:[%s6491 + $0x272] sm:$0xff]
  %v7309 = vld [vmem:[%s6491 + $0x27a] sm:$0xff]
  %v7310 = vld [vmem:[%s6491 + $0x28a] sm:$0xff]
  %v7311 = vld [vmem:[%s6491 + $0x292] sm:$0xff]
  %v7312 = vld [vmem:[%s6491 + $0x2a2] sm:$0xff]
  %v7313 = vld [vmem:[%s6491 + $0x2aa] sm:$0xff]
  %v7314 = vld [vmem:[%s6491 + $0x2ba] sm:$0xff]
  %v7315 = vld [vmem:[%s6491 + $0x2c2] sm:$0xff]
  %v7316 = vld [vmem:[%s6491 + $0x2d2] sm:$0xff]
  %v7317 = vld [vmem:[%s6491 + $0x2da] sm:$0xff]
  %v7318 = vld [vmem:[%s6491 + $0x2ea] sm:$0xff]
  %v7319 = vld [vmem:[%s6491 + $0x2f2] sm:$0xff]
  %v7320 = vld [vmem:[%s6491 + $0x302] sm:$0xff]
  %v7321 = vld [vmem:[%s6491 + $0x30a] sm:$0xff]
  %v7322 = vld [vmem:[%s6491 + $0x31a] sm:$0xff]
  %v7323 = vld [vmem:[%s6491 + $0x322] sm:$0xff]
  %7388 = vrot.lane.b32.xlu0 %v7260, 32
  %v7389 = vpop.permute.xlu0 %7388
  %7390 = vrot.lane.b32.xlu0 %v7261, 32
  %v7391 = vpop.permute.xlu0 %7390
  %7392 = vrot.lane.b32.xlu0 %v7262, 32
  %v7393 = vpop.permute.xlu0 %7392
  %7394 = vrot.lane.b32.xlu0 %v7263, 32
  %v7395 = vpop.permute.xlu0 %7394
  %7396 = vrot.lane.b32.xlu0 %v7264, 32
  %v7397 = vpop.permute.xlu0 %7396
  %7398 = vrot.lane.b32.xlu0 %v7265, 32
  %v7399 = vpop.permute.xlu0 %7398
  %7400 = vrot.lane.b32.xlu0 %v7266, 32
  %v7401 = vpop.permute.xlu0 %7400
  %7402 = vrot.lane.b32.xlu0 %v7267, 32
  %v7403 = vpop.permute.xlu0 %7402
  %7404 = vrot.lane.b32.xlu0 %v7268, 32
  %v7405 = vpop.permute.xlu0 %7404
  %7406 = vrot.lane.b32.xlu0 %v7269, 32
  %v7407 = vpop.permute.xlu0 %7406
  %7408 = vrot.lane.b32.xlu0 %v7270, 32
  %v7409 = vpop.permute.xlu0 %7408
  %7410 = vrot.lane.b32.xlu0 %v7271, 32
  %v7411 = vpop.permute.xlu0 %7410
  %7412 = vrot.lane.b32.xlu0 %v7272, 32
  %v7413 = vpop.permute.xlu0 %7412
  %7414 = vrot.lane.b32.xlu0 %v7273, 32
  %v7415 = vpop.permute.xlu0 %7414
  %7416 = vrot.lane.b32.xlu0 %v7274, 32
  %v7417 = vpop.permute.xlu0 %7416
  %7418 = vrot.lane.b32.xlu0 %v7275, 32
  %v7419 = vpop.permute.xlu0 %7418
  %7420 = vrot.lane.b32.xlu0 %v7276, 32
  %v7421 = vpop.permute.xlu0 %7420
  %7422 = vrot.lane.b32.xlu0 %v7277, 32
  %v7423 = vpop.permute.xlu0 %7422
  %7424 = vrot.lane.b32.xlu0 %v7278, 32
  %v7425 = vpop.permute.xlu0 %7424
  %7426 = vrot.lane.b32.xlu0 %v7279, 32
  %v7427 = vpop.permute.xlu0 %7426
  %7428 = vrot.lane.b32.xlu0 %v7280, 32
  %v7429 = vpop.permute.xlu0 %7428
  %7430 = vrot.lane.b32.xlu0 %v7281, 32
  %v7431 = vpop.permute.xlu0 %7430
  %7432 = vrot.lane.b32.xlu0 %v7282, 32
  %v7433 = vpop.permute.xlu0 %7432
  %7434 = vrot.lane.b32.xlu0 %v7283, 32
  %v7435 = vpop.permute.xlu0 %7434
  %7436 = vrot.lane.b32.xlu0 %v7284, 32
  %v7437 = vpop.permute.xlu0 %7436
  %7438 = vrot.lane.b32.xlu0 %v7285, 32
  %v7439 = vpop.permute.xlu0 %7438
  %7440 = vrot.lane.b32.xlu0 %v7286, 32
  %v7441 = vpop.permute.xlu0 %7440
  %7442 = vrot.lane.b32.xlu0 %v7287, 32
  %v7443 = vpop.permute.xlu0 %7442
  %7444 = vrot.lane.b32.xlu0 %v7288, 32
  %v7445 = vpop.permute.xlu0 %7444
  %7446 = vrot.lane.b32.xlu0 %v7289, 32
  %v7447 = vpop.permute.xlu0 %7446
  %7448 = vrot.lane.b32.xlu0 %v7290, 32
  %v7449 = vpop.permute.xlu0 %7448
  %7450 = vrot.lane.b32.xlu0 %v7291, 32
  %v7451 = vpop.permute.xlu0 %7450
  %7452 = vrot.lane.b32.xlu0 %v7292, 32
  %v7453 = vpop.permute.xlu0 %7452
  %7454 = vrot.lane.b32.xlu0 %v7293, 32
  %v7455 = vpop.permute.xlu0 %7454
  %7456 = vrot.lane.b32.xlu0 %v7294, 32
  %v7457 = vpop.permute.xlu0 %7456
  %7458 = vrot.lane.b32.xlu0 %v7295, 32
  %v7459 = vpop.permute.xlu0 %7458
  %7460 = vrot.lane.b32.xlu0 %v7296, 32
  %v7461 = vpop.permute.xlu0 %7460
  %7462 = vrot.lane.b32.xlu0 %v7297, 32
  %v7463 = vpop.permute.xlu0 %7462
  %7464 = vrot.lane.b32.xlu0 %v7298, 32
  %v7465 = vpop.permute.xlu0 %7464
  %7466 = vrot.lane.b32.xlu0 %v7299, 32
  %v7467 = vpop.permute.xlu0 %7466
  %7468 = vrot.lane.b32.xlu0 %v7300, 32
  %v7469 = vpop.permute.xlu0 %7468
  %7470 = vrot.lane.b32.xlu0 %v7301, 32
  %v7471 = vpop.permute.xlu0 %7470
  %7472 = vrot.lane.b32.xlu0 %v7302, 32
  %v7473 = vpop.permute.xlu0 %7472
  %7474 = vrot.lane.b32.xlu0 %v7303, 32
  %v7475 = vpop.permute.xlu0 %7474
  %7476 = vrot.lane.b32.xlu0 %v7304, 32
  %v7477 = vpop.permute.xlu0 %7476
  %7478 = vrot.lane.b32.xlu0 %v7305, 32
  %v7479 = vpop.permute.xlu0 %7478
  %7480 = vrot.lane.b32.xlu0 %v7306, 32
  %v7481 = vpop.permute.xlu0 %7480
  %7482 = vrot.lane.b32.xlu0 %v7307, 32
  %v7483 = vpop.permute.xlu0 %7482
  %7484 = vrot.lane.b32.xlu0 %v7308, 32
  %v7485 = vpop.permute.xlu0 %7484
  %7486 = vrot.lane.b32.xlu0 %v7309, 32
  %v7487 = vpop.permute.xlu0 %7486
  %7488 = vrot.lane.b32.xlu0 %v7310, 32
  %v7489 = vpop.permute.xlu0 %7488
  %7490 = vrot.lane.b32.xlu0 %v7311, 32
  %v7491 = vpop.permute.xlu0 %7490
  %7492 = vrot.lane.b32.xlu0 %v7312, 32
  %v7493 = vpop.permute.xlu0 %7492
  %7494 = vrot.lane.b32.xlu0 %v7313, 32
  %v7495 = vpop.permute.xlu0 %7494
  %7496 = vrot.lane.b32.xlu0 %v7314, 32
  %v7497 = vpop.permute.xlu0 %7496
  %7498 = vrot.lane.b32.xlu0 %v7315, 32
  %v7499 = vpop.permute.xlu0 %7498
  %7500 = vrot.lane.b32.xlu0 %v7316, 32
  %v7501 = vpop.permute.xlu0 %7500
  %7502 = vrot.lane.b32.xlu0 %v7317, 32
  %v7503 = vpop.permute.xlu0 %7502
  %7504 = vrot.lane.b32.xlu0 %v7318, 32
  %v7505 = vpop.permute.xlu0 %7504
  %7506 = vrot.lane.b32.xlu0 %v7319, 32
  %v7507 = vpop.permute.xlu0 %7506
  %7508 = vrot.lane.b32.xlu0 %v7320, 32
  %v7509 = vpop.permute.xlu0 %7508
  %7510 = vrot.lane.b32.xlu0 %v7321, 32
  %v7511 = vpop.permute.xlu0 %7510
  %7512 = vrot.lane.b32.xlu0 %v7322, 32
  %v7513 = vpop.permute.xlu0 %7512
  %7514 = vrot.lane.b32.xlu0 %v7323, 32
  %v7515 = vpop.permute.xlu0 %7514
  %7580 = vst.msk [vmem:[#allocation4] sm:$0xff] %vm3457, %v7389
  %7581 = vst.msk [vmem:[#allocation4 + $0x8] sm:$0xff] %vm3457, %v7391
  %7582 = vst.msk [vmem:[#allocation4 + $0x10] sm:$0xff] %vm3457, %v7393
  %7583 = vst.msk [vmem:[#allocation4 + $0x18] sm:$0xff] %vm3457, %v7395
  %7584 = vst.msk [vmem:[#allocation4 + $0x20] sm:$0xff] %vm3457, %v7397
  %7585 = vst.msk [vmem:[#allocation4 + $0x28] sm:$0xff] %vm3457, %v7399
  %7586 = vst.msk [vmem:[#allocation4 + $0x30] sm:$0xff] %vm3457, %v7401
  %7587 = vst.msk [vmem:[#allocation4 + $0x38] sm:$0xff] %vm3457, %v7403
  %7588 = vst.msk [vmem:[#allocation4 + $0x40] sm:$0xff] %vm3457, %v7405
  %7589 = vst.msk [vmem:[#allocation4 + $0x48] sm:$0xff] %vm3457, %v7407
  %7590 = vst.msk [vmem:[#allocation4 + $0x50] sm:$0xff] %vm3457, %v7409
  %7591 = vst.msk [vmem:[#allocation4 + $0x58] sm:$0xff] %vm3457, %v7411
  %7592 = vst.msk [vmem:[#allocation4 + $0x60] sm:$0xff] %vm3457, %v7413
  %7593 = vst.msk [vmem:[#allocation4 + $0x68] sm:$0xff] %vm3457, %v7415
  %7594 = vst.msk [vmem:[#allocation4 + $0x70] sm:$0xff] %vm3457, %v7417
  %7595 = vst.msk [vmem:[#allocation4 + $0x78] sm:$0xff] %vm3457, %v7419
  %7596 = vst.msk [vmem:[#allocation4 + $0x80] sm:$0xff] %vm3457, %v7421
  %7597 = vst.msk [vmem:[#allocation4 + $0x88] sm:$0xff] %vm3457, %v7423
  %7598 = vst.msk [vmem:[#allocation4 + $0x90] sm:$0xff] %vm3457, %v7425
  %7599 = vst.msk [vmem:[#allocation4 + $0x98] sm:$0xff] %vm3457, %v7427
  %7600 = vst.msk [vmem:[#allocation4 + $0xa0] sm:$0xff] %vm3457, %v7429
  %7601 = vst.msk [vmem:[#allocation4 + $0xa8] sm:$0xff] %vm3457, %v7431
  %7602 = vst.msk [vmem:[#allocation4 + $0xb0] sm:$0xff] %vm3457, %v7433
  %7603 = vst.msk [vmem:[#allocation4 + $0xb8] sm:$0xff] %vm3457, %v7435
  %7604 = vst.msk [vmem:[#allocation4 + $0xc0] sm:$0xff] %vm3457, %v7437
  %7605 = vst.msk [vmem:[#allocation4 + $0xc8] sm:$0xff] %vm3457, %v7439
  %7606 = vst.msk [vmem:[#allocation4 + $0xd0] sm:$0xff] %vm3457, %v7441
  %7607 = vst.msk [vmem:[#allocation4 + $0xd8] sm:$0xff] %vm3457, %v7443
  %7608 = vst.msk [vmem:[#allocation4 + $0xe0] sm:$0xff] %vm3457, %v7445
  %7609 = vst.msk [vmem:[#allocation4 + $0xe8] sm:$0xff] %vm3457, %v7447
  %7610 = vst.msk [vmem:[#allocation4 + $0xf0] sm:$0xff] %vm3457, %v7449
  %7611 = vst.msk [vmem:[#allocation4 + $0xf8] sm:$0xff] %vm3457, %v7451
  %7612 = vst.msk [vmem:[#allocation4 + $0x100] sm:$0xff] %vm3457, %v7453
  %7613 = vst.msk [vmem:[#allocation4 + $0x108] sm:$0xff] %vm3457, %v7455
  %7614 = vst.msk [vmem:[#allocation4 + $0x110] sm:$0xff] %vm3457, %v7457
  %7615 = vst.msk [vmem:[#allocation4 + $0x118] sm:$0xff] %vm3457, %v7459
  %7616 = vst.msk [vmem:[#allocation4 + $0x120] sm:$0xff] %vm3457, %v7461
  %7617 = vst.msk [vmem:[#allocation4 + $0x128] sm:$0xff] %vm3457, %v7463
  %7618 = vst.msk [vmem:[#allocation4 + $0x130] sm:$0xff] %vm3457, %v7465
  %7619 = vst.msk [vmem:[#allocation4 + $0x138] sm:$0xff] %vm3457, %v7467
  %7620 = vst.msk [vmem:[#allocation4 + $0x140] sm:$0xff] %vm3457, %v7469
  %7621 = vst.msk [vmem:[#allocation4 + $0x148] sm:$0xff] %vm3457, %v7471
  %7622 = vst.msk [vmem:[#allocation4 + $0x150] sm:$0xff] %vm3457, %v7473
  %7623 = vst.msk [vmem:[#allocation4 + $0x158] sm:$0xff] %vm3457, %v7475
  %7624 = vst.msk [vmem:[#allocation4 + $0x160] sm:$0xff] %vm3457, %v7477
  %7625 = vst.msk [vmem:[#allocation4 + $0x168] sm:$0xff] %vm3457, %v7479
  %7626 = vst.msk [vmem:[#allocation4 + $0x170] sm:$0xff] %vm3457, %v7481
  %7627 = vst.msk [vmem:[#allocation4 + $0x178] sm:$0xff] %vm3457, %v7483
  %7628 = vst.msk [vmem:[#allocation4 + $0x180] sm:$0xff] %vm3457, %v7485
  %7629 = vst.msk [vmem:[#allocation4 + $0x188] sm:$0xff] %vm3457, %v7487
  %7630 = vst.msk [vmem:[#allocation4 + $0x190] sm:$0xff] %vm3457, %v7489
  %7631 = vst.msk [vmem:[#allocation4 + $0x198] sm:$0xff] %vm3457, %v7491
  %7632 = vst.msk [vmem:[#allocation4 + $0x1a0] sm:$0xff] %vm3457, %v7493
  %7633 = vst.msk [vmem:[#allocation4 + $0x1a8] sm:$0xff] %vm3457, %v7495
  %7634 = vst.msk [vmem:[#allocation4 + $0x1b0] sm:$0xff] %vm3457, %v7497
  %7635 = vst.msk [vmem:[#allocation4 + $0x1b8] sm:$0xff] %vm3457, %v7499
  %7636 = vst.msk [vmem:[#allocation4 + $0x1c0] sm:$0xff] %vm3457, %v7501
  %7637 = vst.msk [vmem:[#allocation4 + $0x1c8] sm:$0xff] %vm3457, %v7503
  %7638 = vst.msk [vmem:[#allocation4 + $0x1d0] sm:$0xff] %vm3457, %v7505
  %7639 = vst.msk [vmem:[#allocation4 + $0x1d8] sm:$0xff] %vm3457, %v7507
  %7640 = vst.msk [vmem:[#allocation4 + $0x1e0] sm:$0xff] %vm3457, %v7509
  %7641 = vst.msk [vmem:[#allocation4 + $0x1e8] sm:$0xff] %vm3457, %v7511
  %7642 = vst.msk [vmem:[#allocation4 + $0x1f0] sm:$0xff] %vm3457, %v7513
  %7643 = vst.msk [vmem:[#allocation4 + $0x1f8] sm:$0xff] %vm3457, %v7515
  %v7644 = vld [vmem:[#allocation4] sm:$0xff]
  %v7645 = vld [vmem:[#allocation4 + $0x8] sm:$0xff]
  %v7646 = vld [vmem:[#allocation4 + $0x10] sm:$0xff]
  %v7647 = vld [vmem:[#allocation4 + $0x18] sm:$0xff]
  %v7648 = vld [vmem:[#allocation4 + $0x20] sm:$0xff]
  %v7649 = vld [vmem:[#allocation4 + $0x28] sm:$0xff]
  %v7650 = vld [vmem:[#allocation4 + $0x30] sm:$0xff]
  %v7651 = vld [vmem:[#allocation4 + $0x38] sm:$0xff]
  %v7652 = vld [vmem:[#allocation4 + $0x40] sm:$0xff]
  %v7653 = vld [vmem:[#allocation4 + $0x48] sm:$0xff]
  %v7654 = vld [vmem:[#allocation4 + $0x50] sm:$0xff]
  %v7655 = vld [vmem:[#allocation4 + $0x58] sm:$0xff]
  %v7656 = vld [vmem:[#allocation4 + $0x60] sm:$0xff]
  %v7657 = vld [vmem:[#allocation4 + $0x68] sm:$0xff]
  %v7658 = vld [vmem:[#allocation4 + $0x70] sm:$0xff]
  %v7659 = vld [vmem:[#allocation4 + $0x78] sm:$0xff]
  %v7660 = vld [vmem:[#allocation4 + $0x80] sm:$0xff]
  %v7661 = vld [vmem:[#allocation4 + $0x88] sm:$0xff]
  %v7662 = vld [vmem:[#allocation4 + $0x90] sm:$0xff]
  %v7663 = vld [vmem:[#allocation4 + $0x98] sm:$0xff]
  %v7664 = vld [vmem:[#allocation4 + $0xa0] sm:$0xff]
  %v7665 = vld [vmem:[#allocation4 + $0xa8] sm:$0xff]
  %v7666 = vld [vmem:[#allocation4 + $0xb0] sm:$0xff]
  %v7667 = vld [vmem:[#allocation4 + $0xb8] sm:$0xff]
  %v7668 = vld [vmem:[#allocation4 + $0xc0] sm:$0xff]
  %v7669 = vld [vmem:[#allocation4 + $0xc8] sm:$0xff]
  %v7670 = vld [vmem:[#allocation4 + $0xd0] sm:$0xff]
  %v7671 = vld [vmem:[#allocation4 + $0xd8] sm:$0xff]
  %v7672 = vld [vmem:[#allocation4 + $0xe0] sm:$0xff]
  %v7673 = vld [vmem:[#allocation4 + $0xe8] sm:$0xff]
  %v7674 = vld [vmem:[#allocation4 + $0xf0] sm:$0xff]
  %v7675 = vld [vmem:[#allocation4 + $0xf8] sm:$0xff]
  %v7676 = vld [vmem:[#allocation4 + $0x100] sm:$0xff]
  %v7677 = vld [vmem:[#allocation4 + $0x108] sm:$0xff]
  %v7678 = vld [vmem:[#allocation4 + $0x110] sm:$0xff]
  %v7679 = vld [vmem:[#allocation4 + $0x118] sm:$0xff]
  %v7680 = vld [vmem:[#allocation4 + $0x120] sm:$0xff]
  %v7681 = vld [vmem:[#allocation4 + $0x128] sm:$0xff]
  %v7682 = vld [vmem:[#allocation4 + $0x130] sm:$0xff]
  %v7683 = vld [vmem:[#allocation4 + $0x138] sm:$0xff]
  %v7684 = vld [vmem:[#allocation4 + $0x140] sm:$0xff]
  %v7685 = vld [vmem:[#allocation4 + $0x148] sm:$0xff]
  %v7686 = vld [vmem:[#allocation4 + $0x150] sm:$0xff]
  %v7687 = vld [vmem:[#allocation4 + $0x158] sm:$0xff]
  %v7688 = vld [vmem:[#allocation4 + $0x160] sm:$0xff]
  %v7689 = vld [vmem:[#allocation4 + $0x168] sm:$0xff]
  %v7690 = vld [vmem:[#allocation4 + $0x170] sm:$0xff]
  %v7691 = vld [vmem:[#allocation4 + $0x178] sm:$0xff]
  %v7692 = vld [vmem:[#allocation4 + $0x180] sm:$0xff]
  %v7693 = vld [vmem:[#allocation4 + $0x188] sm:$0xff]
  %v7694 = vld [vmem:[#allocation4 + $0x190] sm:$0xff]
  %v7695 = vld [vmem:[#allocation4 + $0x198] sm:$0xff]
  %v7696 = vld [vmem:[#allocation4 + $0x1a0] sm:$0xff]
  %v7697 = vld [vmem:[#allocation4 + $0x1a8] sm:$0xff]
  %v7698 = vld [vmem:[#allocation4 + $0x1b0] sm:$0xff]
  %v7699 = vld [vmem:[#allocation4 + $0x1b8] sm:$0xff]
  %v7700 = vld [vmem:[#allocation4 + $0x1c0] sm:$0xff]
  %v7701 = vld [vmem:[#allocation4 + $0x1c8] sm:$0xff]
  %v7702 = vld [vmem:[#allocation4 + $0x1d0] sm:$0xff]
  %v7703 = vld [vmem:[#allocation4 + $0x1d8] sm:$0xff]
  %v7704 = vld [vmem:[#allocation4 + $0x1e0] sm:$0xff]
  %v7705 = vld [vmem:[#allocation4 + $0x1e8] sm:$0xff]
  %v7706 = vld [vmem:[#allocation4 + $0x1f0] sm:$0xff]
  %v7707 = vld [vmem:[#allocation4 + $0x1f8] sm:$0xff]
  %v7708 = vld [vmem:[%s4] sm:$0xff]
  %v7709 = vld [vmem:[%s4 + $0x8] sm:$0xff]
  %v7710 = vld [vmem:[%s4 + $0x10] sm:$0xff]
  %v7711 = vld [vmem:[%s4 + $0x18] sm:$0xff]
  %v7712 = vld [vmem:[%s4 + $0x20] sm:$0xf]
  %v7714 = vsel %vm3591, %v7644, 0
  %v7717 = vsel %vm3591, %v7645, 0
  %v7720 = vsel %vm3591, %v7646, 0
  %v7723 = vsel %vm3591, %v7647, 0
  %v7726 = vsel %vm3591, %v7648, 0
  %v7729 = vsel %vm3591, %v7649, 0
  %v7732 = vsel %vm3591, %v7650, 0
  %v7735 = vsel %vm3591, %v7651, 0
  %v7738 = vsel %vm3591, %v7652, 0
  %v7741 = vsel %vm3591, %v7653, 0
  %v7744 = vsel %vm3591, %v7654, 0
  %v7747 = vsel %vm3591, %v7655, 0
  %v7750 = vsel %vm3591, %v7656, 0
  %v7753 = vsel %vm3591, %v7657, 0
  %v7756 = vsel %vm3591, %v7658, 0
  %v7759 = vsel %vm3591, %v7659, 0
  %v7762 = vsel %vm3591, %v7660, 0
  %v7765 = vsel %vm3591, %v7661, 0
  %v7768 = vsel %vm3591, %v7662, 0
  %v7771 = vsel %vm3591, %v7663, 0
  %v7774 = vsel %vm3591, %v7664, 0
  %v7777 = vsel %vm3591, %v7665, 0
  %v7780 = vsel %vm3591, %v7666, 0
  %v7783 = vsel %vm3591, %v7667, 0
  %v7786 = vsel %vm3591, %v7668, 0
  %v7789 = vsel %vm3591, %v7669, 0
  %v7792 = vsel %vm3591, %v7670, 0
  %v7795 = vsel %vm3591, %v7671, 0
  %v7798 = vsel %vm3591, %v7672, 0
  %v7801 = vsel %vm3591, %v7673, 0
  %v7804 = vsel %vm3591, %v7674, 0
  %v7807 = vsel %vm3591, %v7675, 0
  %v7810 = vsel %vm3591, %v7676, 0
  %v7813 = vsel %vm3591, %v7677, 0
  %v7816 = vsel %vm3591, %v7678, 0
  %v7819 = vsel %vm3591, %v7679, 0
  %v7822 = vsel %vm3591, %v7680, 0
  %v7825 = vsel %vm3591, %v7681, 0
  %v7828 = vsel %vm3591, %v7682, 0
  %v7831 = vsel %vm3591, %v7683, 0
  %v7834 = vsel %vm3591, %v7684, 0
  %v7837 = vsel %vm3591, %v7685, 0
  %v7840 = vsel %vm3591, %v7686, 0
  %v7843 = vsel %vm3591, %v7687, 0
  %v7846 = vsel %vm3591, %v7688, 0
  %v7849 = vsel %vm3591, %v7689, 0
  %v7852 = vsel %vm3591, %v7690, 0
  %v7855 = vsel %vm3591, %v7691, 0
  %v7858 = vsel %vm3591, %v7692, 0
  %v7861 = vsel %vm3591, %v7693, 0
  %v7864 = vsel %vm3591, %v7694, 0
  %v7867 = vsel %vm3591, %v7695, 0
  %v7870 = vsel %vm3591, %v7696, 0
  %v7873 = vsel %vm3591, %v7697, 0
  %v7876 = vsel %vm3591, %v7698, 0
  %v7879 = vsel %vm3591, %v7699, 0
  %v7882 = vsel %vm3591, %v7700, 0
  %v7885 = vsel %vm3591, %v7701, 0
  %v7888 = vsel %vm3591, %v7702, 0
  %v7891 = vsel %vm3591, %v7703, 0
  %v7894 = vsel %vm3591, %v7704, 0
  %v7897 = vsel %vm3591, %v7705, 0
  %v7900 = vsel %vm3591, %v7706, 0
  %v7903 = vsel %vm3591, %v7707, 0
  %v7906 = vsel %vm3784, %v7712, 0
  %7908 = vmatprep.subr.mxu0 0.0
  %7909 = vmatpush1.msra.mxu0 %v7708
  %7910 = vmatprep.subr.mxu0 0.0
  %7911 = vmatpush1.msra.mxu0 %v7709
  %7912 = vmatprep.subr.mxu0 0.0
  %7913 = vmatpush1.msra.mxu0 %v7710
  %7914 = vmatprep.subr.mxu0 0.0
  %7915 = vmatpush1.msra.mxu0 %v7711
  %7916 = vmatprep.subr.mxu0 0.0
  %7917 = vmatpush1.msra.mxu0 %v7906
  %7918 = vmatprep.subr.mxu0 0.0
  %7919 = vmatpush1.msra.mxu0 0.0
  %7920 = vmatprep.subr.mxu0 0.0
  %7921 = vmatpush1.msra.mxu0 0.0
  %7922 = vmatprep.subr.mxu0 0.0
  %7923 = vmatpush1.msra.mxu0 0.0
  %7924 = vmatprep.subr.mxu0 0.0
  %7925 = vmatpush1.msra.mxu0 0.0
  %7926 = vmatprep.subr.mxu0 0.0
  %7927 = vmatpush1.msra.mxu0 0.0
  %7928 = vmatprep.subr.mxu0 0.0
  %7929 = vmatpush1.msra.mxu0 0.0
  %7930 = vmatprep.subr.mxu0 0.0
  %7931 = vmatpush1.msra.mxu0 0.0
  %7932 = vmatprep.subr.mxu0 0.0
  %7933 = vmatpush1.msra.mxu0 0.0
  %7934 = vmatprep.subr.mxu0 0.0
  %7935 = vmatpush1.msra.mxu0 0.0
  %7936 = vmatprep.subr.mxu0 0.0
  %7937 = vmatpush1.msra.mxu0 0.0
  %7938 = vmatprep.subr.mxu0 0.0
  %7939 = vmatpush1.msra.mxu0 0.0
  %7940 = vmatprep.subr.mxu0 0.0
  %7941 = vmatpush1.msra.mxu0 0.0
  %7942 = vmatprep.subr.mxu0 0.0
  %7943 = vmatpush1.msra.mxu0 0.0
  %7944 = vmatprep.subr.mxu0 0.0
  %7945 = vmatpush1.msra.mxu0 0.0
  %7946 = vmatprep.subr.mxu0 0.0
  %7947 = vmatpush1.msra.mxu0 0.0
  %7948 = vmatprep.subr.mxu0 0.0
  %7949 = vmatpush1.msra.mxu0 0.0
  %7950 = vmatprep.subr.mxu0 0.0
  %7951 = vmatpush1.msra.mxu0 0.0
  %7952 = vmatprep.subr.mxu0 0.0
  %7953 = vmatpush1.msra.mxu0 0.0
  %7954 = vmatprep.subr.mxu0 0.0
  %7955 = vmatpush1.msra.mxu0 0.0
  %7956 = vmatprep.subr.mxu0 0.0
  %7957 = vmatpush1.msra.mxu0 0.0
  %7958 = vmatprep.subr.mxu0 0.0
  %7959 = vmatpush1.msra.mxu0 0.0
  %7960 = vmatprep.subr.mxu0 0.0
  %7961 = vmatpush1.msra.mxu0 0.0
  %7962 = vmatprep.subr.mxu0 0.0
  %7963 = vmatpush1.msra.mxu0 0.0
  %7964 = vmatprep.subr.mxu0 0.0
  %7965 = vmatpush1.msra.mxu0 0.0
  %7966 = vmatprep.subr.mxu0 0.0
  %7967 = vmatpush1.msra.mxu0 0.0
  %7968 = vmatprep.subr.mxu0 0.0
  %7969 = vmatpush1.msra.mxu0 0.0
  %7970 = vmatprep.subr.mxu0 0.0
  %7971 = vmatpush1.msra.mxu0 0.0
  %7972 = vmatprep.mubr.f32.mxu0 0.0
  %7973 = vmatmul.mubr.f32.gmra.mrb[0].mxu0 %v7714
  %v7974 = vpop.f32.mrb[0].mxu0
  %v7975 = vadd.f32 0.0, %v7974
  %v7976 = vpop.f32.mrb[0].mxu0
  %7977 = vmatprep.mubr.f32.mxu0 0.0
  %7978 = vmatmul.mubr.f32.gmra.mrb[0].mxu0 %v7717
  %v7979 = vpop.f32.mrb[0].mxu0
  %v7980 = vadd.f32 0.0, %v7979
  %v7981 = vpop.f32.mrb[0].mxu0
  %7982 = vmatprep.mubr.f32.mxu0 0.0
  %7983 = vmatmul.mubr.f32.gmra.mrb[0].mxu0 %v7720
  %v7984 = vpop.f32.mrb[0].mxu0
  %v7985 = vadd.f32 0.0, %v7984
  %v7986 = vpop.f32.mrb[0].mxu0
  %7987 = vmatprep.mubr.f32.mxu0 0.0
  %7988 = vmatmul.mubr.f32.gmra.mrb[0].mxu0 %v7723
  %v7989 = vpop.f32.mrb[0].mxu0
  %v7990 = vadd.f32 0.0, %v7989
  %v7991 = vpop.f32.mrb[0].mxu0
  %7992 = vmatprep.mubr.f32.mxu0 0.0
  %7993 = vmatmul.mubr.f32.gmra.mrb[0].mxu0 %v7726
  %v7994 = vpop.f32.mrb[0].mxu0
  %v7995 = vadd.f32 0.0, %v7994
  %v7996 = vpop.f32.mrb[0].mxu0
  %7997 = vmatprep.mubr.f32.mxu0 0.0
  %7998 = vmatmul.mubr.f32.gmra.mrb[0].mxu0 %v7729
  %v7999 = vpop.f32.mrb[0].mxu0
  %v8000 = vadd.f32 0.0, %v7999
  %v8001 = vpop.f32.mrb[0].mxu0
  %8002 = vmatprep.mubr.f32.mxu0 0.0
  %8003 = vmatmul.mubr.f32.gmra.mrb[0].mxu0 %v7732
  %v8004 = vpop.f32.mrb[0].mxu0
  %v8005 = vadd.f32 0.0, %v8004
  %v8006 = vpop.f32.mrb[0].mxu0
  %8007 = vmatprep.mubr.f32.mxu0 0.0
  %8008 = vmatmul.mubr.f32.gmra.mrb[0].mxu0 %v7735
  %v8009 = vpop.f32.mrb[0].mxu0
  %v8010 = vadd.f32 0.0, %v8009
  %v8011 = vpop.f32.mrb[0].mxu0
  %8012 = vmatprep.mubr.f32.mxu0 0.0
  %8013 = vmatmul.mubr.f32.gmra.mrb[0].mxu0 %v7738
  %v8014 = vpop.f32.mrb[0].mxu0
  %v8015 = vadd.f32 0.0, %v8014
  %v8016 = vpop.f32.mrb[0].mxu0
  %8017 = vmatprep.mubr.f32.mxu0 0.0
  %8018 = vmatmul.mubr.f32.gmra.mrb[0].mxu0 %v7741
  %v8019 = vpop.f32.mrb[0].mxu0
  %v8020 = vadd.f32 0.0, %v8019
  %v8021 = vpop.f32.mrb[0].mxu0
  %8022 = vmatprep.mubr.f32.mxu0 0.0
  %8023 = vmatmul.mubr.f32.gmra.mrb[0].mxu0 %v7744
  %v8024 = vpop.f32.mrb[0].mxu0
  %v8025 = vadd.f32 0.0, %v8024
  %v8026 = vpop.f32.mrb[0].mxu0
  %8027 = vmatprep.mubr.f32.mxu0 0.0
  %8028 = vmatmul.mubr.f32.gmra.mrb[0].mxu0 %v7747
  %v8029 = vpop.f32.mrb[0].mxu0
  %v8030 = vadd.f32 0.0, %v8029
  %v8031 = vpop.f32.mrb[0].mxu0
  %8032 = vmatprep.mubr.f32.mxu0 0.0
  %8033 = vmatmul.mubr.f32.gmra.mrb[0].mxu0 %v7750
  %v8034 = vpop.f32.mrb[0].mxu0
  %v8035 = vadd.f32 0.0, %v8034
  %v8036 = vpop.f32.mrb[0].mxu0
  %8037 = vmatprep.mubr.f32.mxu0 0.0
  %8038 = vmatmul.mubr.f32.gmra.mrb[0].mxu0 %v7753
  %v8039 = vpop.f32.mrb[0].mxu0
  %v8040 = vadd.f32 0.0, %v8039
  %v8041 = vpop.f32.mrb[0].mxu0
  %8042 = vmatprep.mubr.f32.mxu0 0.0
  %8043 = vmatmul.mubr.f32.gmra.mrb[0].mxu0 %v7756
  %v8044 = vpop.f32.mrb[0].mxu0
  %v8045 = vadd.f32 0.0, %v8044
  %v8046 = vpop.f32.mrb[0].mxu0
  %8047 = vmatprep.mubr.f32.mxu0 0.0
  %8048 = vmatmul.mubr.f32.gmra.mrb[0].mxu0 %v7759
  %v8049 = vpop.f32.mrb[0].mxu0
  %v8050 = vadd.f32 0.0, %v8049
  %v8051 = vpop.f32.mrb[0].mxu0
  %8052 = vmatprep.mubr.f32.mxu0 0.0
  %8053 = vmatmul.mubr.f32.gmra.mrb[0].mxu0 %v7762
  %v8054 = vpop.f32.mrb[0].mxu0
  %v8055 = vadd.f32 0.0, %v8054
  %v8056 = vpop.f32.mrb[0].mxu0
  %8057 = vmatprep.mubr.f32.mxu0 0.0
  %8058 = vmatmul.mubr.f32.gmra.mrb[0].mxu0 %v7765
  %v8059 = vpop.f32.mrb[0].mxu0
  %v8060 = vadd.f32 0.0, %v8059
  %v8061 = vpop.f32.mrb[0].mxu0
  %8062 = vmatprep.mubr.f32.mxu0 0.0
  %8063 = vmatmul.mubr.f32.gmra.mrb[0].mxu0 %v7768
  %v8064 = vpop.f32.mrb[0].mxu0
  %v8065 = vadd.f32 0.0, %v8064
  %v8066 = vpop.f32.mrb[0].mxu0
  %8067 = vmatprep.mubr.f32.mxu0 0.0
  %8068 = vmatmul.mubr.f32.gmra.mrb[0].mxu0 %v7771
  %v8069 = vpop.f32.mrb[0].mxu0
  %v8070 = vadd.f32 0.0, %v8069
  %v8071 = vpop.f32.mrb[0].mxu0
  %8072 = vmatprep.mubr.f32.mxu0 0.0
  %8073 = vmatmul.mubr.f32.gmra.mrb[0].mxu0 %v7774
  %v8074 = vpop.f32.mrb[0].mxu0
  %v8075 = vadd.f32 0.0, %v8074
  %v8076 = vpop.f32.mrb[0].mxu0
  %8077 = vmatprep.mubr.f32.mxu0 0.0
  %8078 = vmatmul.mubr.f32.gmra.mrb[0].mxu0 %v7777
  %v8079 = vpop.f32.mrb[0].mxu0
  %v8080 = vadd.f32 0.0, %v8079
  %v8081 = vpop.f32.mrb[0].mxu0
  %8082 = vmatprep.mubr.f32.mxu0 0.0
  %8083 = vmatmul.mubr.f32.gmra.mrb[0].mxu0 %v7780
  %v8084 = vpop.f32.mrb[0].mxu0
  %v8085 = vadd.f32 0.0, %v8084
  %v8086 = vpop.f32.mrb[0].mxu0
  %8087 = vmatprep.mubr.f32.mxu0 0.0
  %8088 = vmatmul.mubr.f32.gmra.mrb[0].mxu0 %v7783
  %v8089 = vpop.f32.mrb[0].mxu0
  %v8090 = vadd.f32 0.0, %v8089
  %v8091 = vpop.f32.mrb[0].mxu0
  %8092 = vmatprep.mubr.f32.mxu0 0.0
  %8093 = vmatmul.mubr.f32.gmra.mrb[0].mxu0 %v7786
  %v8094 = vpop.f32.mrb[0].mxu0
  %v8095 = vadd.f32 0.0, %v8094
  %v8096 = vpop.f32.mrb[0].mxu0
  %8097 = vmatprep.mubr.f32.mxu0 0.0
  %8098 = vmatmul.mubr.f32.gmra.mrb[0].mxu0 %v7789
  %v8099 = vpop.f32.mrb[0].mxu0
  %v8100 = vadd.f32 0.0, %v8099
  %v8101 = vpop.f32.mrb[0].mxu0
  %8102 = vmatprep.mubr.f32.mxu0 0.0
  %8103 = vmatmul.mubr.f32.gmra.mrb[0].mxu0 %v7792
  %v8104 = vpop.f32.mrb[0].mxu0
  %v8105 = vadd.f32 0.0, %v8104
  %v8106 = vpop.f32.mrb[0].mxu0
  %8107 = vmatprep.mubr.f32.mxu0 0.0
  %8108 = vmatmul.mubr.f32.gmra.mrb[0].mxu0 %v7795
  %v8109 = vpop.f32.mrb[0].mxu0
  %v8110 = vadd.f32 0.0, %v8109
  %v8111 = vpop.f32.mrb[0].mxu0
  %8112 = vmatprep.mubr.f32.mxu0 0.0
  %8113 = vmatmul.mubr.f32.gmra.mrb[0].mxu0 %v7798
  %v8114 = vpop.f32.mrb[0].mxu0
  %v8115 = vadd.f32 0.0, %v8114
  %v8116 = vpop.f32.mrb[0].mxu0
  %8117 = vmatprep.mubr.f32.mxu0 0.0
  %8118 = vmatmul.mubr.f32.gmra.mrb[0].mxu0 %v7801
  %v8119 = vpop.f32.mrb[0].mxu0
  %v8120 = vadd.f32 0.0, %v8119
  %v8121 = vpop.f32.mrb[0].mxu0
  %8122 = vmatprep.mubr.f32.mxu0 0.0
  %8123 = vmatmul.mubr.f32.gmra.mrb[0].mxu0 %v7804
  %v8124 = vpop.f32.mrb[0].mxu0
  %v8125 = vadd.f32 0.0, %v8124
  %v8126 = vpop.f32.mrb[0].mxu0
  %8127 = vmatprep.mubr.f32.mxu0 0.0
  %8128 = vmatmul.mubr.f32.gmra.mrb[0].mxu0 %v7807
  %v8129 = vpop.f32.mrb[0].mxu0
  %v8130 = vadd.f32 0.0, %v8129
  %v8131 = vpop.f32.mrb[0].mxu0
  %8132 = vmatprep.mubr.f32.mxu0 0.0
  %8133 = vmatmul.mubr.f32.gmra.mrb[0].mxu0 %v7810
  %v8134 = vpop.f32.mrb[0].mxu0
  %v8135 = vadd.f32 0.0, %v8134
  %v8136 = vpop.f32.mrb[0].mxu0
  %8137 = vmatprep.mubr.f32.mxu0 0.0
  %8138 = vmatmul.mubr.f32.gmra.mrb[0].mxu0 %v7813
  %v8139 = vpop.f32.mrb[0].mxu0
  %v8140 = vadd.f32 0.0, %v8139
  %v8141 = vpop.f32.mrb[0].mxu0
  %8142 = vmatprep.mubr.f32.mxu0 0.0
  %8143 = vmatmul.mubr.f32.gmra.mrb[0].mxu0 %v7816
  %v8144 = vpop.f32.mrb[0].mxu0
  %v8145 = vadd.f32 0.0, %v8144
  %v8146 = vpop.f32.mrb[0].mxu0
  %8147 = vmatprep.mubr.f32.mxu0 0.0
  %8148 = vmatmul.mubr.f32.gmra.mrb[0].mxu0 %v7819
  %v8149 = vpop.f32.mrb[0].mxu0
  %v8150 = vadd.f32 0.0, %v8149
  %v8151 = vpop.f32.mrb[0].mxu0
  %8152 = vmatprep.mubr.f32.mxu0 0.0
  %8153 = vmatmul.mubr.f32.gmra.mrb[0].mxu0 %v7822
  %v8154 = vpop.f32.mrb[0].mxu0
  %v8155 = vadd.f32 0.0, %v8154
  %v8156 = vpop.f32.mrb[0].mxu0
  %8157 = vmatprep.mubr.f32.mxu0 0.0
  %8158 = vmatmul.mubr.f32.gmra.mrb[0].mxu0 %v7825
  %v8159 = vpop.f32.mrb[0].mxu0
  %v8160 = vadd.f32 0.0, %v8159
  %v8161 = vpop.f32.mrb[0].mxu0
  %8162 = vmatprep.mubr.f32.mxu0 0.0
  %8163 = vmatmul.mubr.f32.gmra.mrb[0].mxu0 %v7828
  %v8164 = vpop.f32.mrb[0].mxu0
  %v8165 = vadd.f32 0.0, %v8164
  %v8166 = vpop.f32.mrb[0].mxu0
  %8167 = vmatprep.mubr.f32.mxu0 0.0
  %8168 = vmatmul.mubr.f32.gmra.mrb[0].mxu0 %v7831
  %v8169 = vpop.f32.mrb[0].mxu0
  %v8170 = vadd.f32 0.0, %v8169
  %v8171 = vpop.f32.mrb[0].mxu0
  %8172 = vmatprep.mubr.f32.mxu0 0.0
  %8173 = vmatmul.mubr.f32.gmra.mrb[0].mxu0 %v7834
  %v8174 = vpop.f32.mrb[0].mxu0
  %v8175 = vadd.f32 0.0, %v8174
  %v8176 = vpop.f32.mrb[0].mxu0
  %8177 = vmatprep.mubr.f32.mxu0 0.0
  %8178 = vmatmul.mubr.f32.gmra.mrb[0].mxu0 %v7837
  %v8179 = vpop.f32.mrb[0].mxu0
  %v8180 = vadd.f32 0.0, %v8179
  %v8181 = vpop.f32.mrb[0].mxu0
  %8182 = vmatprep.mubr.f32.mxu0 0.0
  %8183 = vmatmul.mubr.f32.gmra.mrb[0].mxu0 %v7840
  %v8184 = vpop.f32.mrb[0].mxu0
  %v8185 = vadd.f32 0.0, %v8184
  %v8186 = vpop.f32.mrb[0].mxu0
  %8187 = vmatprep.mubr.f32.mxu0 0.0
  %8188 = vmatmul.mubr.f32.gmra.mrb[0].mxu0 %v7843
  %v8189 = vpop.f32.mrb[0].mxu0
  %v8190 = vadd.f32 0.0, %v8189
  %v8191 = vpop.f32.mrb[0].mxu0
  %8192 = vmatprep.mubr.f32.mxu0 0.0
  %8193 = vmatmul.mubr.f32.gmra.mrb[0].mxu0 %v7846
  %v8194 = vpop.f32.mrb[0].mxu0
  %v8195 = vadd.f32 0.0, %v8194
  %v8196 = vpop.f32.mrb[0].mxu0
  %8197 = vmatprep.mubr.f32.mxu0 0.0
  %8198 = vmatmul.mubr.f32.gmra.mrb[0].mxu0 %v7849
  %v8199 = vpop.f32.mrb[0].mxu0
  %v8200 = vadd.f32 0.0, %v8199
  %v8201 = vpop.f32.mrb[0].mxu0
  %8202 = vmatprep.mubr.f32.mxu0 0.0
  %8203 = vmatmul.mubr.f32.gmra.mrb[0].mxu0 %v7852
  %v8204 = vpop.f32.mrb[0].mxu0
  %v8205 = vadd.f32 0.0, %v8204
  %v8206 = vpop.f32.mrb[0].mxu0
  %8207 = vmatprep.mubr.f32.mxu0 0.0
  %8208 = vmatmul.mubr.f32.gmra.mrb[0].mxu0 %v7855
  %v8209 = vpop.f32.mrb[0].mxu0
  %v8210 = vadd.f32 0.0, %v8209
  %v8211 = vpop.f32.mrb[0].mxu0
  %8212 = vmatprep.mubr.f32.mxu0 0.0
  %8213 = vmatmul.mubr.f32.gmra.mrb[0].mxu0 %v7858
  %v8214 = vpop.f32.mrb[0].mxu0
  %v8215 = vadd.f32 0.0, %v8214
  %v8216 = vpop.f32.mrb[0].mxu0
  %8217 = vmatprep.mubr.f32.mxu0 0.0
  %8218 = vmatmul.mubr.f32.gmra.mrb[0].mxu0 %v7861
  %v8219 = vpop.f32.mrb[0].mxu0
  %v8220 = vadd.f32 0.0, %v8219
  %v8221 = vpop.f32.mrb[0].mxu0
  %8222 = vmatprep.mubr.f32.mxu0 0.0
  %8223 = vmatmul.mubr.f32.gmra.mrb[0].mxu0 %v7864
  %v8224 = vpop.f32.mrb[0].mxu0
  %v8225 = vadd.f32 0.0, %v8224
  %v8226 = vpop.f32.mrb[0].mxu0
  %8227 = vmatprep.mubr.f32.mxu0 0.0
  %8228 = vmatmul.mubr.f32.gmra.mrb[0].mxu0 %v7867
  %v8229 = vpop.f32.mrb[0].mxu0
  %v8230 = vadd.f32 0.0, %v8229
  %v8231 = vpop.f32.mrb[0].mxu0
  %8232 = vmatprep.mubr.f32.mxu0 0.0
  %8233 = vmatmul.mubr.f32.gmra.mrb[0].mxu0 %v7870
  %v8234 = vpop.f32.mrb[0].mxu0
  %v8235 = vadd.f32 0.0, %v8234
  %v8236 = vpop.f32.mrb[0].mxu0
  %8237 = vmatprep.mubr.f32.mxu0 0.0
  %8238 = vmatmul.mubr.f32.gmra.mrb[0].mxu0 %v7873
  %v8239 = vpop.f32.mrb[0].mxu0
  %v8240 = vadd.f32 0.0, %v8239
  %v8241 = vpop.f32.mrb[0].mxu0
  %8242 = vmatprep.mubr.f32.mxu0 0.0
  %8243 = vmatmul.mubr.f32.gmra.mrb[0].mxu0 %v7876
  %v8244 = vpop.f32.mrb[0].mxu0
  %v8245 = vadd.f32 0.0, %v8244
  %v8246 = vpop.f32.mrb[0].mxu0
  %8247 = vmatprep.mubr.f32.mxu0 0.0
  %8248 = vmatmul.mubr.f32.gmra.mrb[0].mxu0 %v7879
  %v8249 = vpop.f32.mrb[0].mxu0
  %v8250 = vadd.f32 0.0, %v8249
  %v8251 = vpop.f32.mrb[0].mxu0
  %8252 = vmatprep.mubr.f32.mxu0 0.0
  %8253 = vmatmul.mubr.f32.gmra.mrb[0].mxu0 %v7882
  %v8254 = vpop.f32.mrb[0].mxu0
  %v8255 = vadd.f32 0.0, %v8254
  %v8256 = vpop.f32.mrb[0].mxu0
  %8257 = vmatprep.mubr.f32.mxu0 0.0
  %8258 = vmatmul.mubr.f32.gmra.mrb[0].mxu0 %v7885
  %v8259 = vpop.f32.mrb[0].mxu0
  %v8260 = vadd.f32 0.0, %v8259
  %v8261 = vpop.f32.mrb[0].mxu0
  %8262 = vmatprep.mubr.f32.mxu0 0.0
  %8263 = vmatmul.mubr.f32.gmra.mrb[0].mxu0 %v7888
  %v8264 = vpop.f32.mrb[0].mxu0
  %v8265 = vadd.f32 0.0, %v8264
  %v8266 = vpop.f32.mrb[0].mxu0
  %8267 = vmatprep.mubr.f32.mxu0 0.0
  %8268 = vmatmul.mubr.f32.gmra.mrb[0].mxu0 %v7891
  %v8269 = vpop.f32.mrb[0].mxu0
  %v8270 = vadd.f32 0.0, %v8269
  %v8271 = vpop.f32.mrb[0].mxu0
  %8272 = vmatprep.mubr.f32.mxu0 0.0
  %8273 = vmatmul.mubr.f32.gmra.mrb[0].mxu0 %v7894
  %v8274 = vpop.f32.mrb[0].mxu0
  %v8275 = vadd.f32 0.0, %v8274
  %v8276 = vpop.f32.mrb[0].mxu0
  %8277 = vmatprep.mubr.f32.mxu0 0.0
  %8278 = vmatmul.mubr.f32.gmra.mrb[0].mxu0 %v7897
  %v8279 = vpop.f32.mrb[0].mxu0
  %v8280 = vadd.f32 0.0, %v8279
  %v8281 = vpop.f32.mrb[0].mxu0
  %8282 = vmatprep.mubr.f32.mxu0 0.0
  %8283 = vmatmul.mubr.f32.gmra.mrb[0].mxu0 %v7900
  %v8284 = vpop.f32.mrb[0].mxu0
  %v8285 = vadd.f32 0.0, %v8284
  %v8286 = vpop.f32.mrb[0].mxu0
  %8287 = vmatprep.mubr.f32.mxu0 0.0
  %8288 = vmatmul.mubr.f32.gmra.mrb[0].mxu0 %v7903
  %v8289 = vpop.f32.mrb[0].mxu0
  %v8290 = vadd.f32 0.0, %v8289
  %v8291 = vpop.f32.mrb[0].mxu0
  %8292 = vdwg.mxu0
  %v8293 = vld [vmem:[%s5] sm:$0x1]
  %v8295 = vlaneseq
  %v8296 = vshrl.u32 %v8295, 7
  %v8297 = vsub.s32 0, %v8296
  %v8298 = vrot.slane %v8293, %v8297
  %v8300 = vmul.f32 %v7975, %v8298
  %v8301 = vmul.f32 %v7980, %v8298
  %v8302 = vmul.f32 %v7985, %v8298
  %v8303 = vmul.f32 %v7990, %v8298
  %v8304 = vmul.f32 %v7995, %v8298
  %v8305 = vmul.f32 %v8000, %v8298
  %v8306 = vmul.f32 %v8005, %v8298
  %v8307 = vmul.f32 %v8010, %v8298
  %v8308 = vmul.f32 %v8015, %v8298
  %v8309 = vmul.f32 %v8020, %v8298
  %v8310 = vmul.f32 %v8025, %v8298
  %v8311 = vmul.f32 %v8030, %v8298
  %v8312 = vmul.f32 %v8035, %v8298
  %v8313 = vmul.f32 %v8040, %v8298
  %v8314 = vmul.f32 %v8045, %v8298
  %v8315 = vmul.f32 %v8050, %v8298
  %v8316 = vmul.f32 %v8055, %v8298
  %v8317 = vmul.f32 %v8060, %v8298
  %v8318 = vmul.f32 %v8065, %v8298
  %v8319 = vmul.f32 %v8070, %v8298
  %v8320 = vmul.f32 %v8075, %v8298
  %v8321 = vmul.f32 %v8080, %v8298
  %v8322 = vmul.f32 %v8085, %v8298
  %v8323 = vmul.f32 %v8090, %v8298
  %v8324 = vmul.f32 %v8095, %v8298
  %v8325 = vmul.f32 %v8100, %v8298
  %v8326 = vmul.f32 %v8105, %v8298
  %v8327 = vmul.f32 %v8110, %v8298
  %v8328 = vmul.f32 %v8115, %v8298
  %v8329 = vmul.f32 %v8120, %v8298
  %v8330 = vmul.f32 %v8125, %v8298
  %v8331 = vmul.f32 %v8130, %v8298
  %v8332 = vmul.f32 %v8135, %v8298
  %v8333 = vmul.f32 %v8140, %v8298
  %v8334 = vmul.f32 %v8145, %v8298
  %v8335 = vmul.f32 %v8150, %v8298
  %v8336 = vmul.f32 %v8155, %v8298
  %v8337 = vmul.f32 %v8160, %v8298
  %v8338 = vmul.f32 %v8165, %v8298
  %v8339 = vmul.f32 %v8170, %v8298
  %v8340 = vmul.f32 %v8175, %v8298
  %v8341 = vmul.f32 %v8180, %v8298
  %v8342 = vmul.f32 %v8185, %v8298
  %v8343 = vmul.f32 %v8190, %v8298
  %v8344 = vmul.f32 %v8195, %v8298
  %v8345 = vmul.f32 %v8200, %v8298
  %v8346 = vmul.f32 %v8205, %v8298
  %v8347 = vmul.f32 %v8210, %v8298
  %v8348 = vmul.f32 %v8215, %v8298
  %v8349 = vmul.f32 %v8220, %v8298
  %v8350 = vmul.f32 %v8225, %v8298
  %v8351 = vmul.f32 %v8230, %v8298
  %v8352 = vmul.f32 %v8235, %v8298
  %v8353 = vmul.f32 %v8240, %v8298
  %v8354 = vmul.f32 %v8245, %v8298
  %v8355 = vmul.f32 %v8250, %v8298
  %v8356 = vmul.f32 %v8255, %v8298
  %v8357 = vmul.f32 %v8260, %v8298
  %v8358 = vmul.f32 %v8265, %v8298
  %v8359 = vmul.f32 %v8270, %v8298
  %v8360 = vmul.f32 %v8275, %v8298
  %v8361 = vmul.f32 %v8280, %v8298
  %v8362 = vmul.f32 %v8285, %v8298
  %v8363 = vmul.f32 %v8290, %v8298
  %v8364 = vld [vmem:[%s6] sm:$0x1]
  %v8366 = vlaneseq
  %v8367 = vshrl.u32 %v8366, 7
  %v8368 = vsub.s32 0, %v8367
  %v8369 = vrot.slane %v8364, %v8368
  %v8371 = vadd.f32 %v8300, %v8369
  %v8372 = vadd.f32 %v8301, %v8369
  %v8373 = vadd.f32 %v8302, %v8369
  %v8374 = vadd.f32 %v8303, %v8369
  %v8375 = vadd.f32 %v8304, %v8369
  %v8376 = vadd.f32 %v8305, %v8369
  %v8377 = vadd.f32 %v8306, %v8369
  %v8378 = vadd.f32 %v8307, %v8369
  %v8379 = vadd.f32 %v8308, %v8369
  %v8380 = vadd.f32 %v8309, %v8369
  %v8381 = vadd.f32 %v8310, %v8369
  %v8382 = vadd.f32 %v8311, %v8369
  %v8383 = vadd.f32 %v8312, %v8369
  %v8384 = vadd.f32 %v8313, %v8369
  %v8385 = vadd.f32 %v8314, %v8369
  %v8386 = vadd.f32 %v8315, %v8369
  %v8387 = vadd.f32 %v8316, %v8369
  %v8388 = vadd.f32 %v8317, %v8369
  %v8389 = vadd.f32 %v8318, %v8369
  %v8390 = vadd.f32 %v8319, %v8369
  %v8391 = vadd.f32 %v8320, %v8369
  %v8392 = vadd.f32 %v8321, %v8369
  %v8393 = vadd.f32 %v8322, %v8369
  %v8394 = vadd.f32 %v8323, %v8369
  %v8395 = vadd.f32 %v8324, %v8369
  %v8396 = vadd.f32 %v8325, %v8369
  %v8397 = vadd.f32 %v8326, %v8369
  %v8398 = vadd.f32 %v8327, %v8369
  %v8399 = vadd.f32 %v8328, %v8369
  %v8400 = vadd.f32 %v8329, %v8369
  %v8401 = vadd.f32 %v8330, %v8369
  %v8402 = vadd.f32 %v8331, %v8369
  %v8403 = vadd.f32 %v8332, %v8369
  %v8404 = vadd.f32 %v8333, %v8369
  %v8405 = vadd.f32 %v8334, %v8369
  %v8406 = vadd.f32 %v8335, %v8369
  %v8407 = vadd.f32 %v8336, %v8369
  %v8408 = vadd.f32 %v8337, %v8369
  %v8409 = vadd.f32 %v8338, %v8369
  %v8410 = vadd.f32 %v8339, %v8369
  %v8411 = vadd.f32 %v8340, %v8369
  %v8412 = vadd.f32 %v8341, %v8369
  %v8413 = vadd.f32 %v8342, %v8369
  %v8414 = vadd.f32 %v8343, %v8369
  %v8415 = vadd.f32 %v8344, %v8369
  %v8416 = vadd.f32 %v8345, %v8369
  %v8417 = vadd.f32 %v8346, %v8369
  %v8418 = vadd.f32 %v8347, %v8369
  %v8419 = vadd.f32 %v8348, %v8369
  %v8420 = vadd.f32 %v8349, %v8369
  %v8421 = vadd.f32 %v8350, %v8369
  %v8422 = vadd.f32 %v8351, %v8369
  %v8423 = vadd.f32 %v8352, %v8369
  %v8424 = vadd.f32 %v8353, %v8369
  %v8425 = vadd.f32 %v8354, %v8369
  %v8426 = vadd.f32 %v8355, %v8369
  %v8427 = vadd.f32 %v8356, %v8369
  %v8428 = vadd.f32 %v8357, %v8369
  %v8429 = vadd.f32 %v8358, %v8369
  %v8430 = vadd.f32 %v8359, %v8369
  %v8431 = vadd.f32 %v8360, %v8369
  %v8432 = vadd.f32 %v8361, %v8369
  %v8433 = vadd.f32 %v8362, %v8369
  %v8434 = vadd.f32 %v8363, %v8369
  %v8435 = vld [vmem:[%s0] sm:$0xff]
  %v8436 = vld [vmem:[%s0 + $0x8] sm:$0xff]
  %v8437 = vld [vmem:[%s0 + $0x10] sm:$0xff]
  %v8438 = vld [vmem:[%s0 + $0x18] sm:$0xff]
  %v8439 = vld [vmem:[%s0 + $0x20] sm:$0xff]
  %v8440 = vld [vmem:[%s0 + $0x28] sm:$0xff]
  %v8441 = vld [vmem:[%s0 + $0x30] sm:$0xff]
  %v8442 = vld [vmem:[%s0 + $0x38] sm:$0xff]
  %v8443 = vld [vmem:[%s0 + $0x40] sm:$0xff]
  %v8444 = vld [vmem:[%s0 + $0x48] sm:$0xff]
  %v8445 = vld [vmem:[%s0 + $0x50] sm:$0xff]
  %v8446 = vld [vmem:[%s0 + $0x58] sm:$0xff]
  %v8447 = vld [vmem:[%s0 + $0x60] sm:$0xff]
  %v8448 = vld [vmem:[%s0 + $0x68] sm:$0xff]
  %v8449 = vld [vmem:[%s0 + $0x70] sm:$0xff]
  %v8450 = vld [vmem:[%s0 + $0x78] sm:$0xff]
  %v8451 = vld [vmem:[%s0 + $0x80] sm:$0xff]
  %v8452 = vld [vmem:[%s0 + $0x88] sm:$0xff]
  %v8453 = vld [vmem:[%s0 + $0x90] sm:$0xff]
  %v8454 = vld [vmem:[%s0 + $0x98] sm:$0xff]
  %v8455 = vld [vmem:[%s0 + $0xa0] sm:$0xff]
  %v8456 = vld [vmem:[%s0 + $0xa8] sm:$0xff]
  %v8457 = vld [vmem:[%s0 + $0xb0] sm:$0xff]
  %v8458 = vld [vmem:[%s0 + $0xb8] sm:$0xff]
  %v8459 = vld [vmem:[%s0 + $0xc0] sm:$0xff]
  %v8460 = vld [vmem:[%s0 + $0xc8] sm:$0xff]
  %v8461 = vld [vmem:[%s0 + $0xd0] sm:$0xff]
  %v8462 = vld [vmem:[%s0 + $0xd8] sm:$0xff]
  %v8463 = vld [vmem:[%s0 + $0xe0] sm:$0xff]
  %v8464 = vld [vmem:[%s0 + $0xe8] sm:$0xff]
  %v8465 = vld [vmem:[%s0 + $0xf0] sm:$0xff]
  %v8466 = vld [vmem:[%s0 + $0xf8] sm:$0xff]
  %v8467 = vld [vmem:[%s0 + $0x100] sm:$0xff]
  %v8468 = vld [vmem:[%s0 + $0x108] sm:$0xff]
  %v8469 = vld [vmem:[%s0 + $0x110] sm:$0xff]
  %v8470 = vld [vmem:[%s0 + $0x118] sm:$0xff]
  %v8471 = vld [vmem:[%s0 + $0x120] sm:$0xff]
  %v8472 = vld [vmem:[%s0 + $0x128] sm:$0xff]
  %v8473 = vld [vmem:[%s0 + $0x130] sm:$0xff]
  %v8474 = vld [vmem:[%s0 + $0x138] sm:$0xff]
  %v8475 = vld [vmem:[%s0 + $0x140] sm:$0xff]
  %v8476 = vld [vmem:[%s0 + $0x148] sm:$0xff]
  %v8477 = vld [vmem:[%s0 + $0x150] sm:$0xff]
  %v8478 = vld [vmem:[%s0 + $0x158] sm:$0xff]
  %v8479 = vld [vmem:[%s0 + $0x160] sm:$0xff]
  %v8480 = vld [vmem:[%s0 + $0x168] sm:$0xff]
  %v8481 = vld [vmem:[%s0 + $0x170] sm:$0xff]
  %v8482 = vld [vmem:[%s0 + $0x178] sm:$0xff]
  %v8483 = vld [vmem:[%s0 + $0x180] sm:$0xff]
  %v8484 = vld [vmem:[%s0 + $0x188] sm:$0xff]
  %v8485 = vld [vmem:[%s0 + $0x190] sm:$0xff]
  %v8486 = vld [vmem:[%s0 + $0x198] sm:$0xff]
  %v8487 = vld [vmem:[%s0 + $0x1a0] sm:$0xff]
  %v8488 = vld [vmem:[%s0 + $0x1a8] sm:$0xff]
  %v8489 = vld [vmem:[%s0 + $0x1b0] sm:$0xff]
  %v8490 = vld [vmem:[%s0 + $0x1b8] sm:$0xff]
  %v8491 = vld [vmem:[%s0 + $0x1c0] sm:$0xff]
  %v8492 = vld [vmem:[%s0 + $0x1c8] sm:$0xff]
  %v8493 = vld [vmem:[%s0 + $0x1d0] sm:$0xff]
  %v8494 = vld [vmem:[%s0 + $0x1d8] sm:$0xff]
  %v8495 = vld [vmem:[%s0 + $0x1e0] sm:$0xff]
  %v8496 = vld [vmem:[%s0 + $0x1e8] sm:$0xff]
  %v8497 = vld [vmem:[%s0 + $0x1f0] sm:$0xff]
  %v8498 = vld [vmem:[%s0 + $0x1f8] sm:$0xff]
  %v8499 = vadd.f32 %v8371, %v8435
  %v8500 = vadd.f32 %v8372, %v8436
  %v8501 = vadd.f32 %v8373, %v8437
  %v8502 = vadd.f32 %v8374, %v8438
  %v8503 = vadd.f32 %v8375, %v8439
  %v8504 = vadd.f32 %v8376, %v8440
  %v8505 = vadd.f32 %v8377, %v8441
  %v8506 = vadd.f32 %v8378, %v8442
  %v8507 = vadd.f32 %v8379, %v8443
  %v8508 = vadd.f32 %v8380, %v8444
  %v8509 = vadd.f32 %v8381, %v8445
  %v8510 = vadd.f32 %v8382, %v8446
  %v8511 = vadd.f32 %v8383, %v8447
  %v8512 = vadd.f32 %v8384, %v8448
  %v8513 = vadd.f32 %v8385, %v8449
  %v8514 = vadd.f32 %v8386, %v8450
  %v8515 = vadd.f32 %v8387, %v8451
  %v8516 = vadd.f32 %v8388, %v8452
  %v8517 = vadd.f32 %v8389, %v8453
  %v8518 = vadd.f32 %v8390, %v8454
  %v8519 = vadd.f32 %v8391, %v8455
  %v8520 = vadd.f32 %v8392, %v8456
  %v8521 = vadd.f32 %v8393, %v8457
  %v8522 = vadd.f32 %v8394, %v8458
  %v8523 = vadd.f32 %v8395, %v8459
  %v8524 = vadd.f32 %v8396, %v8460
  %v8525 = vadd.f32 %v8397, %v8461
  %v8526 = vadd.f32 %v8398, %v8462
  %v8527 = vadd.f32 %v8399, %v8463
  %v8528 = vadd.f32 %v8400, %v8464
  %v8529 = vadd.f32 %v8401, %v8465
  %v8530 = vadd.f32 %v8402, %v8466
  %v8531 = vadd.f32 %v8403, %v8467
  %v8532 = vadd.f32 %v8404, %v8468
  %v8533 = vadd.f32 %v8405, %v8469
  %v8534 = vadd.f32 %v8406, %v8470
  %v8535 = vadd.f32 %v8407, %v8471
  %v8536 = vadd.f32 %v8408, %v8472
  %v8537 = vadd.f32 %v8409, %v8473
  %v8538 = vadd.f32 %v8410, %v8474
  %v8539 = vadd.f32 %v8411, %v8475
  %v8540 = vadd.f32 %v8412, %v8476
  %v8541 = vadd.f32 %v8413, %v8477
  %v8542 = vadd.f32 %v8414, %v8478
  %v8543 = vadd.f32 %v8415, %v8479
  %v8544 = vadd.f32 %v8416, %v8480
  %v8545 = vadd.f32 %v8417, %v8481
  %v8546 = vadd.f32 %v8418, %v8482
  %v8547 = vadd.f32 %v8419, %v8483
  %v8548 = vadd.f32 %v8420, %v8484
  %v8549 = vadd.f32 %v8421, %v8485
  %v8550 = vadd.f32 %v8422, %v8486
  %v8551 = vadd.f32 %v8423, %v8487
  %v8552 = vadd.f32 %v8424, %v8488
  %v8553 = vadd.f32 %v8425, %v8489
  %v8554 = vadd.f32 %v8426, %v8490
  %v8555 = vadd.f32 %v8427, %v8491
  %v8556 = vadd.f32 %v8428, %v8492
  %v8557 = vadd.f32 %v8429, %v8493
  %v8558 = vadd.f32 %v8430, %v8494
  %v8559 = vadd.f32 %v8431, %v8495
  %v8560 = vadd.f32 %v8432, %v8496
  %v8561 = vadd.f32 %v8433, %v8497
  %v8562 = vadd.f32 %v8434, %v8498
  %v8563 = vmax.f32 %v8499, 0.0
  %v8564 = vmax.f32 %v8500, 0.0
  %v8565 = vmax.f32 %v8501, 0.0
  %v8566 = vmax.f32 %v8502, 0.0
  %v8567 = vmax.f32 %v8503, 0.0
  %v8568 = vmax.f32 %v8504, 0.0
  %v8569 = vmax.f32 %v8505, 0.0
  %v8570 = vmax.f32 %v8506, 0.0
  %v8571 = vmax.f32 %v8507, 0.0
  %v8572 = vmax.f32 %v8508, 0.0
  %v8573 = vmax.f32 %v8509, 0.0
  %v8574 = vmax.f32 %v8510, 0.0
  %v8575 = vmax.f32 %v8511, 0.0
  %v8576 = vmax.f32 %v8512, 0.0
  %v8577 = vmax.f32 %v8513, 0.0
  %v8578 = vmax.f32 %v8514, 0.0
  %v8579 = vmax.f32 %v8515, 0.0
  %v8580 = vmax.f32 %v8516, 0.0
  %v8581 = vmax.f32 %v8517, 0.0
  %v8582 = vmax.f32 %v8518, 0.0
  %v8583 = vmax.f32 %v8519, 0.0
  %v8584 = vmax.f32 %v8520, 0.0
  %v8585 = vmax.f32 %v8521, 0.0
  %v8586 = vmax.f32 %v8522, 0.0
  %v8587 = vmax.f32 %v8523, 0.0
  %v8588 = vmax.f32 %v8524, 0.0
  %v8589 = vmax.f32 %v8525, 0.0
  %v8590 = vmax.f32 %v8526, 0.0
  %v8591 = vmax.f32 %v8527, 0.0
  %v8592 = vmax.f32 %v8528, 0.0
  %v8593 = vmax.f32 %v8529, 0.0
  %v8594 = vmax.f32 %v8530, 0.0
  %v8595 = vmax.f32 %v8531, 0.0
  %v8596 = vmax.f32 %v8532, 0.0
  %v8597 = vmax.f32 %v8533, 0.0
  %v8598 = vmax.f32 %v8534, 0.0
  %v8599 = vmax.f32 %v8535, 0.0
  %v8600 = vmax.f32 %v8536, 0.0
  %v8601 = vmax.f32 %v8537, 0.0
  %v8602 = vmax.f32 %v8538, 0.0
  %v8603 = vmax.f32 %v8539, 0.0
  %v8604 = vmax.f32 %v8540, 0.0
  %v8605 = vmax.f32 %v8541, 0.0
  %v8606 = vmax.f32 %v8542, 0.0
  %v8607 = vmax.f32 %v8543, 0.0
  %v8608 = vmax.f32 %v8544, 0.0
  %v8609 = vmax.f32 %v8545, 0.0
  %v8610 = vmax.f32 %v8546, 0.0
  %v8611 = vmax.f32 %v8547, 0.0
  %v8612 = vmax.f32 %v8548, 0.0
  %v8613 = vmax.f32 %v8549, 0.0
  %v8614 = vmax.f32 %v8550, 0.0
  %v8615 = vmax.f32 %v8551, 0.0
  %v8616 = vmax.f32 %v8552, 0.0
  %v8617 = vmax.f32 %v8553, 0.0
  %v8618 = vmax.f32 %v8554, 0.0
  %v8619 = vmax.f32 %v8555, 0.0
  %v8620 = vmax.f32 %v8556, 0.0
  %v8621 = vmax.f32 %v8557, 0.0
  %v8622 = vmax.f32 %v8558, 0.0
  %v8623 = vmax.f32 %v8559, 0.0
  %v8624 = vmax.f32 %v8560, 0.0
  %v8625 = vmax.f32 %v8561, 0.0
  %v8626 = vmax.f32 %v8562, 0.0
  %8627 = vst.msk [vmem:[%s7] sm:$0xff] %vm26, %v8563
  %8628 = vst.msk [vmem:[%s7 + $0x8] sm:$0xff] %vm26, %v8564
  %8629 = vst.msk [vmem:[%s7 + $0x10] sm:$0xff] %vm26, %v8565
  %8630 = vst.msk [vmem:[%s7 + $0x18] sm:$0xff] %vm26, %v8566
  %8631 = vst.msk [vmem:[%s7 + $0x20] sm:$0xff] %vm26, %v8567
  %8632 = vst.msk [vmem:[%s7 + $0x28] sm:$0xff] %vm26, %v8568
  %8633 = vst.msk [vmem:[%s7 + $0x30] sm:$0xff] %vm26, %v8569
  %8634 = vst.msk [vmem:[%s7 + $0x38] sm:$0xff] %vm26, %v8570
  %8635 = vst.msk [vmem:[%s7 + $0x40] sm:$0xff] %vm26, %v8571
  %8636 = vst.msk [vmem:[%s7 + $0x48] sm:$0xff] %vm26, %v8572
  %8637 = vst.msk [vmem:[%s7 + $0x50] sm:$0xff] %vm26, %v8573
  %8638 = vst.msk [vmem:[%s7 + $0x58] sm:$0xff] %vm26, %v8574
  %8639 = vst.msk [vmem:[%s7 + $0x60] sm:$0xff] %vm26, %v8575
  %8640 = vst.msk [vmem:[%s7 + $0x68] sm:$0xff] %vm26, %v8576
  %8641 = vst.msk [vmem:[%s7 + $0x70] sm:$0xff] %vm26, %v8577
  %8642 = vst.msk [vmem:[%s7 + $0x78] sm:$0xff] %vm26, %v8578
  %8643 = vst.msk [vmem:[%s7 + $0x80] sm:$0xff] %vm26, %v8579
  %8644 = vst.msk [vmem:[%s7 + $0x88] sm:$0xff] %vm26, %v8580
  %8645 = vst.msk [vmem:[%s7 + $0x90] sm:$0xff] %vm26, %v8581
  %8646 = vst.msk [vmem:[%s7 + $0x98] sm:$0xff] %vm26, %v8582
  %8647 = vst.msk [vmem:[%s7 + $0xa0] sm:$0xff] %vm26, %v8583
  %8648 = vst.msk [vmem:[%s7 + $0xa8] sm:$0xff] %vm26, %v8584
  %8649 = vst.msk [vmem:[%s7 + $0xb0] sm:$0xff] %vm26, %v8585
  %8650 = vst.msk [vmem:[%s7 + $0xb8] sm:$0xff] %vm26, %v8586
  %8651 = vst.msk [vmem:[%s7 + $0xc0] sm:$0xff] %vm26, %v8587
  %8652 = vst.msk [vmem:[%s7 + $0xc8] sm:$0xff] %vm26, %v8588
  %8653 = vst.msk [vmem:[%s7 + $0xd0] sm:$0xff] %vm26, %v8589
  %8654 = vst.msk [vmem:[%s7 + $0xd8] sm:$0xff] %vm26, %v8590
  %8655 = vst.msk [vmem:[%s7 + $0xe0] sm:$0xff] %vm26, %v8591
  %8656 = vst.msk [vmem:[%s7 + $0xe8] sm:$0xff] %vm26, %v8592
  %8657 = vst.msk [vmem:[%s7 + $0xf0] sm:$0xff] %vm26, %v8593
  %8658 = vst.msk [vmem:[%s7 + $0xf8] sm:$0xff] %vm26, %v8594
  %8659 = vst.msk [vmem:[%s7 + $0x100] sm:$0xff] %vm26, %v8595
  %8660 = vst.msk [vmem:[%s7 + $0x108] sm:$0xff] %vm26, %v8596
  %8661 = vst.msk [vmem:[%s7 + $0x110] sm:$0xff] %vm26, %v8597
  %8662 = vst.msk [vmem:[%s7 + $0x118] sm:$0xff] %vm26, %v8598
  %8663 = vst.msk [vmem:[%s7 + $0x120] sm:$0xff] %vm26, %v8599
  %8664 = vst.msk [vmem:[%s7 + $0x128] sm:$0xff] %vm26, %v8600
  %8665 = vst.msk [vmem:[%s7 + $0x130] sm:$0xff] %vm26, %v8601
  %8666 = vst.msk [vmem:[%s7 + $0x138] sm:$0xff] %vm26, %v8602
  %8667 = vst.msk [vmem:[%s7 + $0x140] sm:$0xff] %vm26, %v8603
  %8668 = vst.msk [vmem:[%s7 + $0x148] sm:$0xff] %vm26, %v8604
  %8669 = vst.msk [vmem:[%s7 + $0x150] sm:$0xff] %vm26, %v8605
  %8670 = vst.msk [vmem:[%s7 + $0x158] sm:$0xff] %vm26, %v8606
  %8671 = vst.msk [vmem:[%s7 + $0x160] sm:$0xff] %vm26, %v8607
  %8672 = vst.msk [vmem:[%s7 + $0x168] sm:$0xff] %vm26, %v8608
  %8673 = vst.msk [vmem:[%s7 + $0x170] sm:$0xff] %vm26, %v8609
  %8674 = vst.msk [vmem:[%s7 + $0x178] sm:$0xff] %vm26, %v8610
  %8675 = vst.msk [vmem:[%s7 + $0x180] sm:$0xff] %vm26, %v8611
  %8676 = vst.msk [vmem:[%s7 + $0x188] sm:$0xff] %vm26, %v8612
  %8677 = vst.msk [vmem:[%s7 + $0x190] sm:$0xff] %vm26, %v8613
  %8678 = vst.msk [vmem:[%s7 + $0x198] sm:$0xff] %vm26, %v8614
  %8679 = vst.msk [vmem:[%s7 + $0x1a0] sm:$0xff] %vm26, %v8615
  %8680 = vst.msk [vmem:[%s7 + $0x1a8] sm:$0xff] %vm26, %v8616
  %8681 = vst.msk [vmem:[%s7 + $0x1b0] sm:$0xff] %vm26, %v8617
  %8682 = vst.msk [vmem:[%s7 + $0x1b8] sm:$0xff] %vm26, %v8618
  %8683 = vst.msk [vmem:[%s7 + $0x1c0] sm:$0xff] %vm26, %v8619
  %8684 = vst.msk [vmem:[%s7 + $0x1c8] sm:$0xff] %vm26, %v8620
  %8685 = vst.msk [vmem:[%s7 + $0x1d0] sm:$0xff] %vm26, %v8621
  %8686 = vst.msk [vmem:[%s7 + $0x1d8] sm:$0xff] %vm26, %v8622
  %8687 = vst.msk [vmem:[%s7 + $0x1e0] sm:$0xff] %vm26, %v8623
  %8688 = vst.msk [vmem:[%s7 + $0x1e8] sm:$0xff] %vm26, %v8624
  %8689 = vst.msk [vmem:[%s7 + $0x1f0] sm:$0xff] %vm26, %v8625
  %8690 = vst.msk [vmem:[%s7 + $0x1f8] sm:$0xff] %vm26, %v8626
  // Predicated region
  $region30: #{basic_block_forward.1} parent=0 // pred_check
    _
  $region31: #{basic_block_forward.1} parent=0 // pred_check_branch
    %8692 = sbr.rel (0) target = $region33
  $region32: #{basic_block_forward.1} parent=0 // pred_region
    _
  $region33: #{basic_block_forward.1} parent=0 // pred_fallthru
    _
  // Predicated region
  $region34: #{basic_block_forward.1} parent=0 // pred_check
    _
  $region35: #{basic_block_forward.1} parent=0 // pred_check_branch
    %8694 = sbr.rel (0) target = $region37
  $region36: #{basic_block_forward.1} parent=0 // pred_region
    _
  $region37: #{basic_block_forward.1} parent=0 // pred_fallthru
    _

</llo_original>
